<compile_context>
chip_gen: v5e
topology: v5e:2x2
jax: 0.10.0
libtpu: 0.0.40
codegen_flags: <defaults>
</compile_context>

<pallas_src>
import functools

import jax
import jax.numpy as jnp
import numpy as np
from jax.experimental import pallas as pl
from jax.experimental.pallas import tpu as pltpu

N_ACTIONS = 6
FRAMES = 4
VMEM_LIMIT = 32 * 1024 * 1024  # plenty: peak resident weight is ~3.3 MB (bf16 fc)


def _cdiv(a, b):
    return -(-a // b)


def _round_up(x, m):
    return ((x + m - 1) // m) * m


def _pick_tm(m_rows):
    """Row-tile size: multiple of 8 (sublane), <=~256 rows/tile, and >=2 grid
    steps when possible so v7x's second TensorCore gets work."""
    n_tiles = max(2, _cdiv(m_rows, 256))
    return max(8, _round_up(_cdiv(m_rows, n_tiles), 8))


# ----------------------------------------------------------------------------
# Kernel 1: fused GEMM + bias + optional ReLU (bf16 operands, f32 accumulate)
# ----------------------------------------------------------------------------
def _gemm_bias_act_kernel(a_ref, b_ref, bias_ref, o_ref, *, relu):
    acc = jnp.dot(a_ref[...], b_ref[...], preferred_element_type=jnp.float32)
    acc = acc + bias_ref[...]          # bias: (1, Npad), broadcasts over rows
    if relu:
        acc = jnp.maximum(acc, 0.0)
    o_ref[...] = acc.astype(o_ref.dtype)


def pallas_gemm(a, b_p, bias_p, *, relu, tm, out_dtype=jnp.bfloat16):
    """relu(A @ B + bias).  A:(M,K) any float dtype; B pre-padded (Kpad,Npad)
    bf16; bias pre-padded (1,Npad) f32.  Returns the padded (Mpad,Npad) result
    (caller slices)."""
    M, K = a.shape
    Kpad, Npad = b_p.shape
    Mpad = _round_up(M, tm)
    a_p = a.astype(jnp.bfloat16)
    if (Mpad, Kpad) != (M, K):
        a_p = jnp.pad(a_p, ((0, Mpad - M), (0, Kpad - K)))
    return pl.pallas_call(
        functools.partial(_gemm_bias_act_kernel, relu=relu),
        out_shape=jax.ShapeDtypeStruct((Mpad, Npad), out_dtype),
        grid=(Mpad // tm,),
        in_specs=[
            pl.BlockSpec((tm, Kpad), lambda i: (i, 0)),    # A tile (pipelined)
            pl.BlockSpec((Kpad, Npad), lambda i: (0, 0)),  # B resident in VMEM
            pl.BlockSpec((1, Npad), lambda i: (0, 0)),     # bias resident
        ],
        out_specs=pl.BlockSpec((tm, Npad), lambda i: (i, 0)),
        compiler_params=pltpu.CompilerParams(
            dimension_semantics=("parallel",),
            vmem_limit_bytes=VMEM_LIMIT,
        ),
    )(a_p, b_p, bias_p)


# ----------------------------------------------------------------------------
# Kernel 2: fused Linear(3136,512)+ReLU and actor/critic heads (one call)
# ----------------------------------------------------------------------------
def _fc_heads_kernel(a_ref, w1_ref, b1_ref, w2_ref, b2_ref, hid_ref, out_ref):
    h = jnp.dot(a_ref[...], w1_ref[...], preferred_element_type=jnp.float32)
    h = jnp.maximum(h + b1_ref[...], 0.0)
    hid_ref[...] = h.astype(hid_ref.dtype)
    y = jnp.dot(h.astype(w2_ref.dtype), w2_ref[...],
                preferred_element_type=jnp.float32)
    out_ref[...] = (y + b2_ref[...]).astype(out_ref.dtype)


def pallas_fc_heads(a, w1_p, b1_p, w2_p, b2_p, *, tm=8):
    """hidden = relu(A @ W1 + b1); heads = hidden @ W2 + b2 (actor||critic)."""
    M, K = a.shape
    K1pad, N1 = w1_p.shape
    K2, N2pad = w2_p.shape
    Mpad = _round_up(M, tm)
    a_p = a.astype(jnp.bfloat16)
    if (Mpad, K1pad) != (M, K):
        a_p = jnp.pad(a_p, ((0, Mpad - M), (0, K1pad - K)))
    hidden, heads = pl.pallas_call(
        _fc_heads_kernel,
        out_shape=(jax.ShapeDtypeStruct((Mpad, N1), jnp.float32),
                   jax.ShapeDtypeStruct((Mpad, N2pad), jnp.float32)),
        grid=(Mpad // tm,),
        in_specs=[
            pl.BlockSpec((tm, K1pad), lambda i: (i, 0)),   # activations tile
            pl.BlockSpec((K1pad, N1), lambda i: (0, 0)),   # fc weight resident
            pl.BlockSpec((1, N1), lambda i: (0, 0)),
            pl.BlockSpec((K2, N2pad), lambda i: (0, 0)),   # fused head weight
            pl.BlockSpec((1, N2pad), lambda i: (0, 0)),
        ],
        out_specs=(pl.BlockSpec((tm, N1), lambda i: (i, 0)),
                   pl.BlockSpec((tm, N2pad), lambda i: (i, 0))),
        compiler_params=pltpu.CompilerParams(
            dimension_semantics=("parallel",),
            vmem_limit_bytes=VMEM_LIMIT,
        ),
    )(a_p, w1_p, b1_p, w2_p, b2_p)
    return hidden[:M], heads[:M]


# ----------------------------------------------------------------------------
# Conv2d (NHWC activations, VALID) = one-op patch extraction + Pallas GEMM
# ----------------------------------------------------------------------------
def conv2d_pallas(x_nhwc, w_p, bias_p, *, kh, stride, n_out):
    """x_nhwc: (B,H,W,C) bf16; w_p: pre-padded (Kpad,Npad) bf16 (channel-major
    rows); bias_p: (1,Npad) f32.  Returns (B,Ho,Wo,n_out) bf16."""
    B = x_nhwc.shape[0]
    patches = jax.lax.conv_general_dilated_patches(
        x_nhwc, (kh, kh), (stride, stride), "VALID",
        dimension_numbers=("NHWC", "HWIO", "NHWC"))
    _, Ho, Wo, K = patches.shape          # features ordered c*kh*kw + i*kw + j
    M = B * Ho * Wo
    out = pallas_gemm(patches.reshape(M, K), w_p, bias_p,
                      relu=True, tm=_pick_tm(M))
    return out[:M, :n_out].reshape(B, Ho, Wo, n_out)


# ----------------------------------------------------------------------------
# Parameters: deterministic init + one-time GEMM-layout preparation
# ----------------------------------------------------------------------------
def init_params(key):
    ks = jax.random.split(key, 6)
    s = 0.05  # small deterministic scale (stand-in for orthogonal init)
    return {
        "c1_w": jax.random.normal(ks[0], (32, FRAMES, 8, 8), jnp.float32) * s,
        "c1_b": jnp.zeros((32,), jnp.float32),
        "c2_w": jax.random.normal(ks[1], (64, 32, 4, 4), jnp.float32) * s,
        "c2_b": jnp.zeros((64,), jnp.float32),
        "c3_w": jax.random.normal(ks[2], (64, 64, 3, 3), jnp.float32) * s,
        "c3_b": jnp.zeros((64,), jnp.float32),
        "fc_w": jax.random.normal(ks[3], (512, 3136), jnp.float32) * s,  # torch (out,in)
        "fc_b": jnp.zeros((512,), jnp.float32),
        "actor_w": jax.random.normal(ks[4], (N_ACTIONS, 512), jnp.float32) * 0.01,
        "actor_b": jnp.zeros((N_ACTIONS,), jnp.float32),
        "critic_w": jax.random.normal(ks[5], (1, 512), jnp.float32) * s,
        "critic_b": jnp.zeros((1,), jnp.float32),
    }


def prepare_params(params):
    """One-time preprocessing (run outside the hot path): fold 1/255 into conv1,
    transpose to (K,N) GEMM layout, permute fc columns to NHWC-flatten order,
    concatenate actor+critic into a single head GEMM, pad to lane/sublane tiles
    and cast weights to bf16 (biases stay f32)."""
    def conv_prep(w, b, scale=1.0):
        O, C, kh, kw = w.shape
        K = C * kh * kw
        Kp, Np = _round_up(K, 128), _round_up(O, 128)
        wt = (w.astype(jnp.float32) * scale).reshape(O, K).T       # (K,O), channel-major
        wt = jnp.pad(wt, ((0, Kp - K), (0, Np - O))).astype(jnp.bfloat16)
        bp = jnp.pad(b.astype(jnp.float32).reshape(1, O), ((0, 0), (0, Np - O)))
        return wt, bp

    c1_w, c1_b = conv_prep(params["c1_w"], params["c1_b"], scale=1.0 / 255.0)
    c2_w, c2_b = conv_prep(params["c2_w"], params["c2_b"])
    c3_w, c3_b = conv_prep(params["c3_w"], params["c3_b"])

    # fc: torch columns are NCHW-flatten (c*49 + y*7 + x); our activations are
    # NHWC-flatten (y*7*64 + x*64 + c) -> permute the columns once.
    fc_w = params["fc_w"].astype(jnp.float32)
    fc_w = fc_w.reshape(512, 64, 7, 7).transpose(0, 2, 3, 1).reshape(512, 3136)
    K, Kp = 3136, _round_up(3136, 128)                              # 3200
    fc_wt = jnp.pad(fc_w.T, ((0, Kp - K), (0, 0))).astype(jnp.bfloat16)  # (3200,512)
    fc_b = params["fc_b"].astype(jnp.float32).reshape(1, 512)

    # actor + critic fused into one (512, 7) head GEMM, N padded 7 -> 128.
    hw = jnp.concatenate([params["actor_w"], params["critic_w"]], axis=0)  # (7,512)
    hb = jnp.concatenate([params["actor_b"], params["critic_b"]], axis=0)  # (7,)
    Nh, Nhp = hw.shape[0], _round_up(hw.shape[0], 128)
    head_wt = jnp.pad(hw.astype(jnp.float32).T,
                      ((0, 0), (0, Nhp - Nh))).astype(jnp.bfloat16)        # (512,128)
    head_b = jnp.pad(hb.astype(jnp.float32).reshape(1, Nh), ((0, 0), (0, Nhp - Nh)))

    return {"c1_w": c1_w, "c1_b": c1_b, "c2_w": c2_w, "c2_b": c2_b,
            "c3_w": c3_w, "c3_b": c3_b, "fc_w": fc_wt, "fc_b": fc_b,
            "head_w": head_wt, "head_b": head_b}


# ----------------------------------------------------------------------------
# Forward pass (Agent.forward + actor/critic heads)
# ----------------------------------------------------------------------------
def agent_forward_pallas(prep, x):
    """x: (B,4,84,84) f32, pixels in [0,255] (PyTorch NCHW).  Returns
    (hidden, logits, value) == (Agent.forward, actor, critic)."""
    B = x.shape[0]
    h = jnp.transpose(x, (0, 2, 3, 1)).astype(jnp.bfloat16)          # NHWC once
    h = conv2d_pallas(h, prep["c1_w"], prep["c1_b"], kh=8, stride=4, n_out=32)   # (B,20,20,32)
    h = conv2d_pallas(h, prep["c2_w"], prep["c2_b"], kh=4, stride=2, n_out=64)   # (B,9,9,64)
    h = conv2d_pallas(h, prep["c3_w"], prep["c3_b"], kh=3, stride=1, n_out=64)   # (B,7,7,64)
    h = h.reshape(B, 7 * 7 * 64)       # NHWC flatten (fc columns pre-permuted to match)
    hidden, heads = pallas_fc_heads(h, prep["fc_w"], prep["fc_b"],
                                    prep["head_w"], prep["head_b"], tm=8)
    logits = heads[:, :N_ACTIONS]
    value = heads[:, N_ACTIONS:N_ACTIONS + 1]
    return hidden, logits, value


# ----------------------------------------------------------------------------
# Pure-JAX f32 reference (torch semantics) for verification
# ----------------------------------------------------------------------------
def agent_forward_ref(params, x):
    dn = ("NCHW", "OIHW", "NCHW")
    h = x / 255.0
    h = jax.lax.conv_general_dilated(h, params["c1_w"], (4, 4), "VALID",
                                     dimension_numbers=dn) + params["c1_b"][None, :, None, None]
    h = jnp.maximum(h, 0.0)
    h = jax.lax.conv_general_dilated(h, params["c2_w"], (2, 2), "VALID",
                                     dimension_numbers=dn) + params["c2_b"][None, :, None, None]
    h = jnp.maximum(h, 0.0)
    h = jax.lax.conv_general_dilated(h, params["c3_w"], (1, 1), "VALID",
                                     dimension_numbers=dn) + params["c3_b"][None, :, None, None]
    h = jnp.maximum(h, 0.0)
    h = h.reshape(h.shape[0], -1)                                    # NCHW flatten
    hidden = jnp.maximum(h @ params["fc_w"].T + params["fc_b"], 0.0)
    logits = hidden @ params["actor_w"].T + params["actor_b"]
    value = hidden @ params["critic_w"].T + params["critic_b"]
    return hidden, logits, value


# ----------------------------------------------------------------------------
if __name__ == "__main__":
    key = jax.random.PRNGKey(0)
    k_param, k_x = jax.random.split(key)
    params = init_params(k_param)
    prep = prepare_params(params)          # one-time weight prep, outside hot path

    # Atari observation: batch=2, 4 stacked 84x84 frames, pixel values [0,255].
    # (spatial size is fixed by Linear(3136,512) == 64*7*7 in the module)
    x = jax.random.uniform(k_x, (2, FRAMES, 84, 84), jnp.float32, 0.0, 255.0)

    fwd = jax.jit(agent_forward_pallas)
    hidden, logits, value = fwd(prep, x)
    jax.block_until_ready((hidden, logits, value))

    hidden_ref, logits_ref, value_ref = agent_forward_ref(params, x)
    # bf16 MXU operands -> compare against the pure-f32 reference with
    # bf16-level tolerance (layout/ordering bugs would show O(1) errors).
    np.testing.assert_allclose(np.asarray(hidden), np.asarray(hidden_ref),
                               rtol=2e-2, atol=3e-2)
    np.testing.assert_allclose(np.asarray(logits), np.asarray(logits_ref),
                               rtol=2e-2, atol=3e-2)
    np.testing.assert_allclose(np.asarray(value), np.asarray(value_ref),
                               rtol=2e-2, atol=3e-2)

    print("KERNEL_OK")
</pallas_src>

<mosaic_0001>
module attributes {stable_mosaic.version = 11 : i64} {
  func.func @_gemm_bias_act_kernel(%arg0: i32, %arg1: memref<200x256xbf16, #tpu.memory_space<vmem>>, %arg2: memref<256x128xbf16, #tpu.memory_space<vmem>>, %arg3: memref<1x128xf32, #tpu.memory_space<vmem>>, %arg4: memref<200x128xbf16, #tpu.memory_space<vmem>>) attributes {dimension_semantics = [#tpu.dimension_semantics<parallel>], iteration_bounds = array<i64: 4>, scalar_prefetch = 0 : i64, scratch_operands = 0 : i64, tpu.core_type = #tpu.core_type<tc>, window_params = [{transform_indices = @transform_0, window_bounds = array<i64: 200, 256>}, {pipeline_mode = #tpu.pipeline_mode<synchronous>, transform_indices = @transform_1, window_bounds = array<i64: 256, 128>}, {pipeline_mode = #tpu.pipeline_mode<synchronous>, transform_indices = @transform_2, window_bounds = array<i64: 1, 128>}, {transform_indices = @transform_3, window_bounds = array<i64: 200, 128>}]} {
    %c0 = arith.constant 0 : index
    %c0_0 = arith.constant 0 : index
    %0 = vector.load %arg1[%c0, %c0_0] : memref<200x256xbf16, #tpu.memory_space<vmem>>, vector<200x256xbf16>
    %c0_1 = arith.constant 0 : index
    %c0_2 = arith.constant 0 : index
    %1 = vector.load %arg2[%c0_1, %c0_2] : memref<256x128xbf16, #tpu.memory_space<vmem>>, vector<256x128xbf16>
    %cst = arith.constant dense<0.000000e+00> : vector<200x128xf32>
    %2 = tpu.matmul %0, %1, %cst {dimension_numbers = #tpu.dot_dimension_numbers<[1], [0], [0], [1], [0, 0, 1, 1], [], []>} : vector<200x256xbf16>, vector<256x128xbf16>, vector<200x128xf32> -> vector<200x128xf32>
    %c0_3 = arith.constant 0 : index
    %c0_4 = arith.constant 0 : index
    %3 = vector.load %arg3[%c0_3, %c0_4] : memref<1x128xf32, #tpu.memory_space<vmem>>, vector<1x128xf32>
    %4 = vector.broadcast %3 : vector<1x128xf32> to vector<200x128xf32>
    %5 = arith.addf %2, %4 : vector<200x128xf32>
    %cst_5 = arith.constant 0.000000e+00 : f32
    %6 = vector.broadcast %cst_5 : f32 to vector<200x128xf32>
    %7 = arith.maximumf %5, %6 : vector<200x128xf32>
    %8 = arith.truncf %7 : vector<200x128xf32> to vector<200x128xbf16>
    %c0_6 = arith.constant 0 : index
    %c0_7 = arith.constant 0 : index
    %9 = vector.load %arg4[%c0_6, %c0_7] : memref<200x128xbf16, #tpu.memory_space<vmem>>, vector<200x128xbf16>
    tpu.vector_store %arg4[%c0_6, %c0_7], %8 {strides = array<i32>} : memref<200x128xbf16, #tpu.memory_space<vmem>>, vector<200x128xbf16>,
    return
  }
  func.func @transform_0(%arg0: i32) -> (i32, i32) {
    %c0_i32 = arith.constant 0 : i32
    %c0_i32_0 = arith.constant 0 : i32
    return %arg0, %c0_i32 : i32, i32
  }
  func.func @transform_1(%arg0: i32) -> (i32, i32) {
    %c0_i32 = arith.constant 0 : i32
    %c0_i32_0 = arith.constant 0 : i32
    %c0_i32_1 = arith.constant 0 : i32
    return %c0_i32, %c0_i32_0 : i32, i32
  }
  func.func @transform_2(%arg0: i32) -> (i32, i32) {
    %c0_i32 = arith.constant 0 : i32
    %c0_i32_0 = arith.constant 0 : i32
    %c0_i32_1 = arith.constant 0 : i32
    return %c0_i32, %c0_i32_0 : i32, i32
  }
  func.func @transform_3(%arg0: i32) -> (i32, i32) {
    %c0_i32 = arith.constant 0 : i32
    %c0_i32_0 = arith.constant 0 : i32
    return %arg0, %c0_i32 : i32, i32
  }
}

module attributes {stable_mosaic.version = 11 : i64} {
  func.func @_gemm_bias_act_kernel(%arg0: i32, %arg1: memref<88x512xbf16, #tpu.memory_space<vmem>>, %arg2: memref<512x128xbf16, #tpu.memory_space<vmem>>, %arg3: memref<1x128xf32, #tpu.memory_space<vmem>>, %arg4: memref<88x128xbf16, #tpu.memory_space<vmem>>) attributes {dimension_semantics = [#tpu.dimension_semantics<parallel>], iteration_bounds = array<i64: 2>, scalar_prefetch = 0 : i64, scratch_operands = 0 : i64, tpu.core_type = #tpu.core_type<tc>, window_params = [{transform_indices = @transform_0, window_bounds = array<i64: 88, 512>}, {pipeline_mode = #tpu.pipeline_mode<synchronous>, transform_indices = @transform_1, window_bounds = array<i64: 512, 128>}, {pipeline_mode = #tpu.pipeline_mode<synchronous>, transform_indices = @transform_2, window_bounds = array<i64: 1, 128>}, {transform_indices = @transform_3, window_bounds = array<i64: 88, 128>}]} {
    %c0 = arith.constant 0 : index
    %c0_0 = arith.constant 0 : index
    %0 = vector.load %arg1[%c0, %c0_0] : memref<88x512xbf16, #tpu.memory_space<vmem>>, vector<88x512xbf16>
    %c0_1 = arith.constant 0 : index
    %c0_2 = arith.constant 0 : index
    %1 = vector.load %arg2[%c0_1, %c0_2] : memref<512x128xbf16, #tpu.memory_space<vmem>>, vector<512x128xbf16>
    %cst = arith.constant dense<0.000000e+00> : vector<88x128xf32>
    %2 = tpu.matmul %0, %1, %cst {dimension_numbers = #tpu.dot_dimension_numbers<[1], [0], [0], [1], [0, 0, 1, 1], [], []>} : vector<88x512xbf16>, vector<512x128xbf16>, vector<88x128xf32> -> vector<88x128xf32>
    %c0_3 = arith.constant 0 : index
    %c0_4 = arith.constant 0 : index
    %3 = vector.load %arg3[%c0_3, %c0_4] : memref<1x128xf32, #tpu.memory_space<vmem>>, vector<1x128xf32>
    %4 = vector.broadcast %3 : vector<1x128xf32> to vector<88x128xf32>
    %5 = arith.addf %2, %4 : vector<88x128xf32>
    %cst_5 = arith.constant 0.000000e+00 : f32
    %6 = vector.broadcast %cst_5 : f32 to vector<88x128xf32>
    %7 = arith.maximumf %5, %6 : vector<88x128xf32>
    %8 = arith.truncf %7 : vector<88x128xf32> to vector<88x128xbf16>
    %c0_6 = arith.constant 0 : index
    %c0_7 = arith.constant 0 : index
    %9 = vector.load %arg4[%c0_6, %c0_7] : memref<88x128xbf16, #tpu.memory_space<vmem>>, vector<88x128xbf16>
    tpu.vector_store %arg4[%c0_6, %c0_7], %8 {strides = array<i32>} : memref<88x128xbf16, #tpu.memory_space<vmem>>, vector<88x128xbf16>,
    return
  }
  func.func @transform_0(%arg0: i32) -> (i32, i32) {
    %c0_i32 = arith.constant 0 : i32
    %c0_i32_0 = arith.constant 0 : i32
    return %arg0, %c0_i32 : i32, i32
  }
  func.func @transform_1(%arg0: i32) -> (i32, i32) {
    %c0_i32 = arith.constant 0 : i32
    %c0_i32_0 = arith.constant 0 : i32
    %c0_i32_1 = arith.constant 0 : i32
    return %c0_i32, %c0_i32_0 : i32, i32
  }
  func.func @transform_2(%arg0: i32) -> (i32, i32) {
    %c0_i32 = arith.constant 0 : i32
    %c0_i32_0 = arith.constant 0 : i32
    %c0_i32_1 = arith.constant 0 : i32
    return %c0_i32, %c0_i32_0 : i32, i32
  }
  func.func @transform_3(%arg0: i32) -> (i32, i32) {
    %c0_i32 = arith.constant 0 : i32
    %c0_i32_0 = arith.constant 0 : i32
    return %arg0, %c0_i32 : i32, i32
  }
}

module attributes {stable_mosaic.version = 11 : i64} {
  func.func @_gemm_bias_act_kernel(%arg0: i32, %arg1: memref<56x640xbf16, #tpu.memory_space<vmem>>, %arg2: memref<640x128xbf16, #tpu.memory_space<vmem>>, %arg3: memref<1x128xf32, #tpu.memory_space<vmem>>, %arg4: memref<56x128xbf16, #tpu.memory_space<vmem>>) attributes {dimension_semantics = [#tpu.dimension_semantics<parallel>], iteration_bounds = array<i64: 2>, scalar_prefetch = 0 : i64, scratch_operands = 0 : i64, tpu.core_type = #tpu.core_type<tc>, window_params = [{transform_indices = @transform_0, window_bounds = array<i64: 56, 640>}, {pipeline_mode = #tpu.pipeline_mode<synchronous>, transform_indices = @transform_1, window_bounds = array<i64: 640, 128>}, {pipeline_mode = #tpu.pipeline_mode<synchronous>, transform_indices = @transform_2, window_bounds = array<i64: 1, 128>}, {transform_indices = @transform_3, window_bounds = array<i64: 56, 128>}]} {
    %c0 = arith.constant 0 : index
    %c0_0 = arith.constant 0 : index
    %0 = vector.load %arg1[%c0, %c0_0] : memref<56x640xbf16, #tpu.memory_space<vmem>>, vector<56x640xbf16>
    %c0_1 = arith.constant 0 : index
    %c0_2 = arith.constant 0 : index
    %1 = vector.load %arg2[%c0_1, %c0_2] : memref<640x128xbf16, #tpu.memory_space<vmem>>, vector<640x128xbf16>
    %cst = arith.constant dense<0.000000e+00> : vector<56x128xf32>
    %2 = tpu.matmul %0, %1, %cst {dimension_numbers = #tpu.dot_dimension_numbers<[1], [0], [0], [1], [0, 0, 1, 1], [], []>} : vector<56x640xbf16>, vector<640x128xbf16>, vector<56x128xf32> -> vector<56x128xf32>
    %c0_3 = arith.constant 0 : index
    %c0_4 = arith.constant 0 : index
    %3 = vector.load %arg3[%c0_3, %c0_4] : memref<1x128xf32, #tpu.memory_space<vmem>>, vector<1x128xf32>
    %4 = vector.broadcast %3 : vector<1x128xf32> to vector<56x128xf32>
    %5 = arith.addf %2, %4 : vector<56x128xf32>
    %cst_5 = arith.constant 0.000000e+00 : f32
    %6 = vector.broadcast %cst_5 : f32 to vector<56x128xf32>
    %7 = arith.maximumf %5, %6 : vector<56x128xf32>
    %8 = arith.truncf %7 : vector<56x128xf32> to vector<56x128xbf16>
    %c0_6 = arith.constant 0 : index
    %c0_7 = arith.constant 0 : index
    %9 = vector.load %arg4[%c0_6, %c0_7] : memref<56x128xbf16, #tpu.memory_space<vmem>>, vector<56x128xbf16>
    tpu.vector_store %arg4[%c0_6, %c0_7], %8 {strides = array<i32>} : memref<56x128xbf16, #tpu.memory_space<vmem>>, vector<56x128xbf16>,
    return
  }
  func.func @transform_0(%arg0: i32) -> (i32, i32) {
    %c0_i32 = arith.constant 0 : i32
    %c0_i32_0 = arith.constant 0 : i32
    return %arg0, %c0_i32 : i32, i32
  }
  func.func @transform_1(%arg0: i32) -> (i32, i32) {
    %c0_i32 = arith.constant 0 : i32
    %c0_i32_0 = arith.constant 0 : i32
    %c0_i32_1 = arith.constant 0 : i32
    return %c0_i32, %c0_i32_0 : i32, i32
  }
  func.func @transform_2(%arg0: i32) -> (i32, i32) {
    %c0_i32 = arith.constant 0 : i32
    %c0_i32_0 = arith.constant 0 : i32
    %c0_i32_1 = arith.constant 0 : i32
    return %c0_i32, %c0_i32_0 : i32, i32
  }
  func.func @transform_3(%arg0: i32) -> (i32, i32) {
    %c0_i32 = arith.constant 0 : i32
    %c0_i32_0 = arith.constant 0 : i32
    return %arg0, %c0_i32 : i32, i32
  }
}

module attributes {stable_mosaic.version = 11 : i64} {
  func.func @_fc_heads_kernel(%arg0: i32, %arg1: memref<8x3200xbf16, #tpu.memory_space<vmem>>, %arg2: memref<3200x512xbf16, #tpu.memory_space<vmem>>, %arg3: memref<1x512xf32, #tpu.memory_space<vmem>>, %arg4: memref<512x128xbf16, #tpu.memory_space<vmem>>, %arg5: memref<1x128xf32, #tpu.memory_space<vmem>>, %arg6: memref<8x512xf32, #tpu.memory_space<vmem>>, %arg7: memref<8x128xf32, #tpu.memory_space<vmem>>) attributes {dimension_semantics = [#tpu.dimension_semantics<parallel>], iteration_bounds = array<i64: 1>, scalar_prefetch = 0 : i64, scratch_operands = 0 : i64, tpu.core_type = #tpu.core_type<tc>, window_params = [{transform_indices = @transform_0, window_bounds = array<i64: 8, 3200>}, {pipeline_mode = #tpu.pipeline_mode<synchronous>, transform_indices = @transform_1, window_bounds = array<i64: 3200, 512>}, {pipeline_mode = #tpu.pipeline_mode<synchronous>, transform_indices = @transform_2, window_bounds = array<i64: 1, 512>}, {pipeline_mode = #tpu.pipeline_mode<synchronous>, transform_indices = @transform_3, window_bounds = array<i64: 512, 128>}, {pipeline_mode = #tpu.pipeline_mode<synchronous>, transform_indices = @transform_4, window_bounds = array<i64: 1, 128>}, {transform_indices = @transform_5, window_bounds = array<i64: 8, 512>}, {transform_indices = @transform_6, window_bounds = array<i64: 8, 128>}]} {
    %c0 = arith.constant 0 : index
    %c0_0 = arith.constant 0 : index
    %0 = vector.load %arg1[%c0, %c0_0] : memref<8x3200xbf16, #tpu.memory_space<vmem>>, vector<8x3200xbf16>
    %c0_1 = arith.constant 0 : index
    %c0_2 = arith.constant 0 : index
    %1 = vector.load %arg2[%c0_1, %c0_2] : memref<3200x512xbf16, #tpu.memory_space<vmem>>, vector<3200x512xbf16>
    %cst = arith.constant dense<0.000000e+00> : vector<8x512xf32>
    %2 = tpu.matmul %0, %1, %cst {dimension_numbers = #tpu.dot_dimension_numbers<[1], [0], [0], [1], [0, 0, 1, 1], [], []>} : vector<8x3200xbf16>, vector<3200x512xbf16>, vector<8x512xf32> -> vector<8x512xf32>
    %c0_3 = arith.constant 0 : index
    %c0_4 = arith.constant 0 : index
    %3 = vector.load %arg3[%c0_3, %c0_4] : memref<1x512xf32, #tpu.memory_space<vmem>>, vector<1x512xf32>
    %4 = vector.broadcast %3 : vector<1x512xf32> to vector<8x512xf32>
    %5 = arith.addf %2, %4 : vector<8x512xf32>
    %cst_5 = arith.constant 0.000000e+00 : f32
    %6 = vector.broadcast %cst_5 : f32 to vector<8x512xf32>
    %7 = arith.maximumf %5, %6 : vector<8x512xf32>
    %c0_6 = arith.constant 0 : index
    %c0_7 = arith.constant 0 : index
    %8 = vector.load %arg6[%c0_6, %c0_7] : memref<8x512xf32, #tpu.memory_space<vmem>>, vector<8x512xf32>
    tpu.vector_store %arg6[%c0_6, %c0_7], %7 {strides = array<i32>} : memref<8x512xf32, #tpu.memory_space<vmem>>, vector<8x512xf32>,
    %9 = arith.truncf %7 : vector<8x512xf32> to vector<8x512xbf16>
    %c0_8 = arith.constant 0 : index
    %c0_9 = arith.constant 0 : index
    %10 = vector.load %arg4[%c0_8, %c0_9] : memref<512x128xbf16, #tpu.memory_space<vmem>>, vector<512x128xbf16>
    %cst_10 = arith.constant dense<0.000000e+00> : vector<8x128xf32>
    %11 = tpu.matmul %9, %10, %cst_10 {dimension_numbers = #tpu.dot_dimension_numbers<[1], [0], [0], [1], [0, 0, 1, 1], [], []>} : vector<8x512xbf16>, vector<512x128xbf16>, vector<8x128xf32> -> vector<8x128xf32>
    %c0_11 = arith.constant 0 : index
    %c0_12 = arith.constant 0 : index
    %12 = vector.load %arg5[%c0_11, %c0_12] : memref<1x128xf32, #tpu.memory_space<vmem>>, vector<1x128xf32>
    %13 = vector.broadcast %12 : vector<1x128xf32> to vector<8x128xf32>
    %14 = arith.addf %11, %13 : vector<8x128xf32>
    %c0_13 = arith.constant 0 : index
    %c0_14 = arith.constant 0 : index
    %15 = vector.load %arg7[%c0_13, %c0_14] : memref<8x128xf32, #tpu.memory_space<vmem>>, vector<8x128xf32>
    tpu.vector_store %arg7[%c0_13, %c0_14], %14 {strides = array<i32>} : memref<8x128xf32, #tpu.memory_space<vmem>>, vector<8x128xf32>,
    return
  }
  func.func @transform_0(%arg0: i32) -> (i32, i32) {
    %c0_i32 = arith.constant 0 : i32
    %c0_i32_0 = arith.constant 0 : i32
    return %arg0, %c0_i32 : i32, i32
  }
  func.func @transform_1(%arg0: i32) -> (i32, i32) {
    %c0_i32 = arith.constant 0 : i32
    %c0_i32_0 = arith.constant 0 : i32
    %c0_i32_1 = arith.constant 0 : i32
    return %c0_i32, %c0_i32_0 : i32, i32
  }
  func.func @transform_2(%arg0: i32) -> (i32, i32) {
    %c0_i32 = arith.constant 0 : i32
    %c0_i32_0 = arith.constant 0 : i32
    %c0_i32_1 = arith.constant 0 : i32
    return %c0_i32, %c0_i32_0 : i32, i32
  }
  func.func @transform_3(%arg0: i32) -> (i32, i32) {
    %c0_i32 = arith.constant 0 : i32
    %c0_i32_0 = arith.constant 0 : i32
    %c0_i32_1 = arith.constant 0 : i32
    return %c0_i32, %c0_i32_0 : i32, i32
  }
  func.func @transform_4(%arg0: i32) -> (i32, i32) {
    %c0_i32 = arith.constant 0 : i32
    %c0_i32_0 = arith.constant 0 : i32
    %c0_i32_1 = arith.constant 0 : i32
    return %c0_i32, %c0_i32_0 : i32, i32
  }
  func.func @transform_5(%arg0: i32) -> (i32, i32) {
    %c0_i32 = arith.constant 0 : i32
    %c0_i32_0 = arith.constant 0 : i32
    return %arg0, %c0_i32 : i32, i32
  }
  func.func @transform_6(%arg0: i32) -> (i32, i32) {
    %c0_i32 = arith.constant 0 : i32
    %c0_i32_0 = arith.constant 0 : i32
    return %arg0, %c0_i32 : i32, i32
  }
}

</mosaic_0001>

<llo_original>
// kernel: agent_forward_pallas.4
$region0: #{agent_forward_pallas.4}
  #allocation0 [shape = 'u32[]', space=smem, size = 0x4, offset = 0x4, fixed_abs, tag = 'smem constant byte address 0x4 - core index']
  #allocation1 [shape = 'u32[72,128]{1,0:T(1,128)}', space=vmem, size = 0x9000, scoped, tag = 'internal scratch']
  %s0 = inlined_call_operand.vmem [shape: bf16[800,256], index: 0, kind: input, shape index: {}]
  %s1 = inlined_call_operand.vmem [shape: bf16[256,128], index: 1, kind: input, shape index: {}]
  %s2 = inlined_call_operand.vmem [shape: f32[1,128], index: 2, kind: input, shape index: {}]
  %s3 = inlined_call_operand.vmem [shape: bf16[800,128], index: 3, kind: output, shape index: {}]
  %s4 = sld [smem:[#allocation0]]
  $region45: #{agent_forward_pallas.4} parent=0
    _
  %s6 = ssub.s32 1, %s4
  %s7 = scalar_select 0, %s6, %s4
  loop: start=0, step=1, limit=6
  $region2: #{agent_forward_pallas.4} parent=0 // loop_pre_header
    _
  $region3: #{agent_forward_pallas.4} parent=0 // loop_header
    %s9 = sphi 0, %s13
    %p10 = scmp.ge.s32.totalorder %s9, 6
    %s19 = sphi 0, %s21
    %s22 = sphi 0, %s19
    %s23 = sphi 0, %s22
    %s39 = sphi 0, %s23
    %s43 = sphi 0, %s43
    %s45 = sphi 0, %s43
    %s46 = sphi 0, %s45
    %s60 = sphi 0, %s46
    %s64 = sphi 0, %s64
    %s66 = sphi 0, %s64
    %s67 = sphi 0, %s66
    %s81 = sphi 0, %s67
    %s87 = sphi 0, %s89
    %s90 = sphi 0, %s87
    %s91 = sphi 0, %s90
    %s107 = sphi 0, %s91
  $region4: #{agent_forward_pallas.4} parent=0 // loop_header_branch
    %12 = sbr.rel (%p10) target = $region8
  $region5: #{agent_forward_pallas.4} parent=0 // loop_body
    %s14 = ssub.s32 %s9, 1
    %s15 = ssub.s32 %s9, 2
    %s16 = sadd.s32 %s9, 1
    %s17 = ssub.s32 %s9, %s16
    %p18 = scmp.eq.s32.totalorder %s17, 0
    %s20 = sadd.s32 %s19, 1
    %s21 = scalar_select %p18, %s19, %s20
    %p24 = pneg %p18
    %p25 = scmp.eq.s32.totalorder %s9, 3
    %p26 = por %p24, %p25
    %p27 = scmp.ne.s32.totalorder %s19, %s22
    %p28 = scmp.eq.s32.totalorder %s9, 0
    %p29 = por %p27, %p28
    %p30 = scmp.ne.s32.totalorder %s19, %s22
    %p31 = scmp.eq.s32.totalorder %s14, 3
    %p32 = por %p30, %p31
    %p33 = scmp.ne.s32.totalorder %s22, %s23
    %p34 = scmp.eq.s32.totalorder %s14, 0
    %p35 = por %p33, %p34
    %p36 = scmp.ne.s32.totalorder %s22, %s23
    %p37 = scmp.eq.s32.totalorder %s15, 3
    %p38 = por %p36, %p37
    %p40 = scmp.ne.s32.totalorder %s23, %s39
    %p41 = scmp.eq.s32.totalorder %s15, 0
    %p42 = por %p40, %p41
    %s44 = sadd.s32 %s43, 1
    %p47 = scmp.eq.s32.totalorder %s9, 3
    %p48 = scmp.ne.s32.totalorder %s43, %s45
    %p49 = scmp.eq.s32.totalorder %s9, 0
    %p50 = por %p48, %p49
    %p51 = scmp.ne.s32.totalorder %s43, %s45
    %p52 = scmp.eq.s32.totalorder %s14, 3
    %p53 = por %p51, %p52
    %p54 = scmp.ne.s32.totalorder %s45, %s46
    %p55 = scmp.eq.s32.totalorder %s14, 0
    %p56 = por %p54, %p55
    %p57 = scmp.ne.s32.totalorder %s45, %s46
    %p58 = scmp.eq.s32.totalorder %s15, 3
    %p59 = por %p57, %p58
    %p61 = scmp.ne.s32.totalorder %s46, %s60
    %p62 = scmp.eq.s32.totalorder %s15, 0
    %p63 = por %p61, %p62
    %s65 = sadd.s32 %s64, 1
    %p68 = scmp.eq.s32.totalorder %s9, 3
    %p69 = scmp.ne.s32.totalorder %s64, %s66
    %p70 = scmp.eq.s32.totalorder %s9, 0
    %p71 = por %p69, %p70
    %p72 = scmp.ne.s32.totalorder %s64, %s66
    %p73 = scmp.eq.s32.totalorder %s14, 3
    %p74 = por %p72, %p73
    %p75 = scmp.ne.s32.totalorder %s66, %s67
    %p76 = scmp.eq.s32.totalorder %s14, 0
    %p77 = por %p75, %p76
    %p78 = scmp.ne.s32.totalorder %s66, %s67
    %p79 = scmp.eq.s32.totalorder %s15, 3
    %p80 = por %p78, %p79
    %p82 = scmp.ne.s32.totalorder %s67, %s81
    %p83 = scmp.eq.s32.totalorder %s15, 0
    %p84 = por %p82, %p83
    %s85 = ssub.s32 %s9, %s16
    %p86 = scmp.eq.s32.totalorder %s85, 0
    %s88 = sadd.s32 %s87, 1
    %s89 = scalar_select %p86, %s87, %s88
    %p92 = pneg %p86
    %p93 = scmp.eq.s32.totalorder %s9, 3
    %p94 = por %p92, %p93
    %p95 = scmp.ne.s32.totalorder %s87, %s90
    %p96 = scmp.eq.s32.totalorder %s9, 0
    %p97 = por %p95, %p96
    %p98 = scmp.ne.s32.totalorder %s87, %s90
    %p99 = scmp.eq.s32.totalorder %s14, 3
    %p100 = por %p98, %p99
    %p101 = scmp.ne.s32.totalorder %s90, %s91
    %p102 = scmp.eq.s32.totalorder %s14, 0
    %p103 = por %p101, %p102
    %p104 = scmp.ne.s32.totalorder %s90, %s91
    %p105 = scmp.eq.s32.totalorder %s15, 3
    %p106 = por %p104, %p105
    %p108 = scmp.ne.s32.totalorder %s91, %s107
    %p109 = scmp.eq.s32.totalorder %s15, 0
    %p110 = por %p108, %p109
    %p111 = scmp.le.s32.totalorder 1, %s9
    %p112 = scmp.lt.s32.totalorder %s9, 5
    %p113 = pnand %p111, %p112
    %p114 = pneg %p113
    // Predicated region
    $region9: #{agent_forward_pallas.4} parent=5 // pred_check
      _
    $region10: #{agent_forward_pallas.4} parent=5 // pred_check_branch
      %116 = sbr.rel (%p113) target = $region12
    $region11: #{agent_forward_pallas.4} parent=5 // pred_region
      %s117 = ssub.s32 %s9, 1
      // Predicated region
      $region13: #{agent_forward_pallas.4} parent=11 // pred_check
        %p118 = pneg %p56
      $region14: #{agent_forward_pallas.4} parent=11 // pred_check_branch
        %120 = sbr.rel (%p118) target = $region16
      $region15: #{agent_forward_pallas.4} parent=11 // pred_region
        _
      $region16: #{agent_forward_pallas.4} parent=11 // pred_fallthru
        _
      // Predicated region
      $region17: #{agent_forward_pallas.4} parent=11 // pred_check
        %p121 = pneg %p77
      $region18: #{agent_forward_pallas.4} parent=11 // pred_check_branch
        %123 = sbr.rel (%p121) target = $region20
      $region19: #{agent_forward_pallas.4} parent=11 // pred_region
        _
      $region20: #{agent_forward_pallas.4} parent=11 // pred_fallthru
        _
    $region12: #{agent_forward_pallas.4} parent=5 // pred_fallthru
      _
    %p124 = scmp.lt.s32.totalorder %s9, 4
    // Predicated region
    $region21: #{agent_forward_pallas.4} parent=5 // pred_check
      %p125 = pneg %p124
    $region22: #{agent_forward_pallas.4} parent=5 // pred_check_branch
      %127 = sbr.rel (%p125) target = $region24
    $region23: #{agent_forward_pallas.4} parent=5 // pred_region
      // Predicated region
      $region25: #{agent_forward_pallas.4} parent=23 // pred_check
        %p128 = pneg %p29
      $region26: #{agent_forward_pallas.4} parent=23 // pred_check_branch
        %130 = sbr.rel (%p128) target = $region28
      $region27: #{agent_forward_pallas.4} parent=23 // pred_region
        %s131 = smul.u32 25, %s9
        %p132 = scmp.lt.s32.totalorder %s131, 99
        %s133 = scalar_select %p132, %s131, 99
        %s134 = smul.addr %s133, 2
        %s135 = smul.addr %s134, 4
        %s136 = scalar_lea.vmem %s0, %s135
        %s137 = smul.u32 25, %s9
      $region28: #{agent_forward_pallas.4} parent=23 // pred_fallthru
        _
    $region24: #{agent_forward_pallas.4} parent=5 // pred_fallthru
      _
    %p138 = scmp.le.s32.totalorder 1, %s9
    %p139 = scmp.lt.s32.totalorder %s9, 5
    %p140 = pnand %p138, %p139
    %p141 = pneg %p140
    // Predicated region
    $region29: #{agent_forward_pallas.4} parent=5 // pred_check
      _
    $region30: #{agent_forward_pallas.4} parent=5 // pred_check_branch
      %143 = sbr.rel (%p140) target = $region32
    $region31: #{agent_forward_pallas.4} parent=5 // pred_region
      %s144 = ssub.s32 %s9, 1
      %s145 = smul.u32 25, %s14
      %p146 = scmp.lt.s32.totalorder %s145, 99
      %s147 = scalar_select %p146, %s145, 99
      %s148 = smul.addr %s147, 2
      %s149 = smul.addr %s148, 4
      %s150 = scalar_lea.vmem %s0, %s149
      %p151 = pneg %p35
      %p152 = pneg %p32
      %p153 = pneg %p56
      %p154 = pneg %p53
      %p155 = pneg %p77
      %p156 = pneg %p74
      %p157 = pneg %p103
      %p158 = pneg %p100
      %s159 = smul.u32 25, %s14
      %p160 = scmp.lt.s32.totalorder %s159, 99
      %s161 = scalar_select %p160, %s159, 99
      %s162 = smul.addr %s161, 4
      %s163 = scalar_lea.vmem %s3, %s162
      %s164 = smul.u32 25, %s14
      %p165 = scmp.lt.s32.totalorder %s164, 99
      %s166 = scalar_select %p165, %s164, 99
      %s167 = smul.addr %s166, 2
      %s168 = smul.addr %s167, 4
      %s169 = scalar_lea.vmem %s0, %s168
      %s170 = smul.u32 25, %s14
      %s171 = smul.u32 25, %s14
      %p172 = scmp.lt.s32.totalorder %s171, 99
      %s173 = scalar_select %p172, %s171, 99
      %s174 = smul.addr %s173, 4
      %s175 = scalar_lea.vmem %s3, %s174
      %s176 = smul.u32 25, %s14
      %v177 = vld [vmem:[%s169] sm:$0xff]
      %v178 = vld [vmem:[%s169 + $0x8] sm:$0xff]
      %v179 = vld [vmem:[%s169 + $0x10] sm:$0xff]
      %v180 = vld [vmem:[%s169 + $0x18] sm:$0xff]
      %v181 = vld [vmem:[%s169 + $0x20] sm:$0xff]
      %v182 = vld [vmem:[%s169 + $0x28] sm:$0xff]
      %v183 = vld [vmem:[%s169 + $0x30] sm:$0xff]
      %v184 = vld [vmem:[%s169 + $0x38] sm:$0xff]
      %v185 = vld [vmem:[%s169 + $0x40] sm:$0xff]
      %v186 = vld [vmem:[%s169 + $0x48] sm:$0xff]
      %v187 = vld [vmem:[%s169 + $0x50] sm:$0xff]
      %v188 = vld [vmem:[%s169 + $0x58] sm:$0xff]
      %v189 = vld [vmem:[%s169 + $0x60] sm:$0xff]
      %v190 = vld [vmem:[%s169 + $0x68] sm:$0xff]
      %v191 = vld [vmem:[%s169 + $0x70] sm:$0xff]
      %v192 = vld [vmem:[%s169 + $0x78] sm:$0xff]
      %v193 = vld [vmem:[%s169 + $0x80] sm:$0xff]
      %v194 = vld [vmem:[%s169 + $0x88] sm:$0xff]
      %v195 = vld [vmem:[%s169 + $0x90] sm:$0xff]
      %v196 = vld [vmem:[%s169 + $0x98] sm:$0xff]
      %v197 = vld [vmem:[%s169 + $0xa0] sm:$0xff]
      %v198 = vld [vmem:[%s169 + $0xa8] sm:$0xff]
      %v199 = vld [vmem:[%s169 + $0xb0] sm:$0xff]
      %v200 = vld [vmem:[%s169 + $0xb8] sm:$0xff]
      %v201 = vld [vmem:[%s169 + $0xc0] sm:$0xff]
      %v202 = vld [vmem:[%s1] sm:$0xf]
      %v203 = vld [vmem:[%s1 + $0x4] sm:$0xf]
      %v204 = vld [vmem:[%s1 + $0x8] sm:$0xf]
      %v205 = vld [vmem:[%s1 + $0xc] sm:$0xf]
      %v206 = vld [vmem:[%s1 + $0x10] sm:$0xf]
      %v207 = vld [vmem:[%s1 + $0x14] sm:$0xf]
      %v208 = vld [vmem:[%s1 + $0x18] sm:$0xf]
      %v209 = vld [vmem:[%s1 + $0x1c] sm:$0xf]
      %v210 = vld [vmem:[%s1 + $0x20] sm:$0xf]
      %v211 = vld [vmem:[%s1 + $0x24] sm:$0xf]
      %v212 = vld [vmem:[%s1 + $0x28] sm:$0xf]
      %v213 = vld [vmem:[%s1 + $0x2c] sm:$0xf]
      %v214 = vld [vmem:[%s1 + $0x30] sm:$0xf]
      %v215 = vld [vmem:[%s1 + $0x34] sm:$0xf]
      %v216 = vld [vmem:[%s1 + $0x38] sm:$0xf]
      %v217 = vld [vmem:[%s1 + $0x3c] sm:$0xf]
      %v218 = vld [vmem:[%s1 + $0x40] sm:$0xf]
      %v219 = vld [vmem:[%s1 + $0x44] sm:$0xf]
      %v220 = vld [vmem:[%s1 + $0x48] sm:$0xf]
      %v221 = vld [vmem:[%s1 + $0x4c] sm:$0xf]
      %v222 = vld [vmem:[%s1 + $0x50] sm:$0xf]
      %v223 = vld [vmem:[%s1 + $0x54] sm:$0xf]
      %v224 = vld [vmem:[%s1 + $0x58] sm:$0xf]
      %v225 = vld [vmem:[%s1 + $0x5c] sm:$0xf]
      %v226 = vld [vmem:[%s1 + $0x60] sm:$0xf]
      %v227 = vld [vmem:[%s1 + $0x64] sm:$0xf]
      %v228 = vld [vmem:[%s1 + $0x68] sm:$0xf]
      %v229 = vld [vmem:[%s1 + $0x6c] sm:$0xf]
      %v230 = vld [vmem:[%s1 + $0x70] sm:$0xf]
      %v231 = vld [vmem:[%s1 + $0x74] sm:$0xf]
      %v232 = vld [vmem:[%s1 + $0x78] sm:$0xf]
      %v233 = vld [vmem:[%s1 + $0x7c] sm:$0xf]
      %v234 = vld [vmem:[%s2] sm:$0x1]
      %v236 = vperm.slane %v234, 0
      %v263 = vunpack.c.l.b16 %v177
      %v264 = vunpack.c.h.b16 %v177
      %v265 = vunpack.c.l.b16 %v178
      %v266 = vunpack.c.h.b16 %v178
      %v267 = vunpack.c.l.b16 %v179
      %v268 = vunpack.c.h.b16 %v179
      %v269 = vunpack.c.l.b16 %v180
      %v270 = vunpack.c.h.b16 %v180
      %v271 = vunpack.c.l.b16 %v181
      %v272 = vunpack.c.h.b16 %v181
      %v273 = vunpack.c.l.b16 %v182
      %v274 = vunpack.c.h.b16 %v182
      %v275 = vunpack.c.l.b16 %v183
      %v276 = vunpack.c.h.b16 %v183
      %v277 = vunpack.c.l.b16 %v184
      %v278 = vunpack.c.h.b16 %v184
      %v279 = vunpack.c.l.b16 %v185
      %v280 = vunpack.c.h.b16 %v185
      %v281 = vunpack.c.l.b16 %v186
      %v282 = vunpack.c.h.b16 %v186
      %v283 = vunpack.c.l.b16 %v187
      %v284 = vunpack.c.h.b16 %v187
      %v285 = vunpack.c.l.b16 %v188
      %v286 = vunpack.c.h.b16 %v188
      %v287 = vunpack.c.l.b16 %v189
      %v288 = vunpack.c.h.b16 %v189
      %v289 = vunpack.c.l.b16 %v190
      %v290 = vunpack.c.h.b16 %v190
      %v291 = vunpack.c.l.b16 %v191
      %v292 = vunpack.c.h.b16 %v191
      %v293 = vunpack.c.l.b16 %v192
      %v294 = vunpack.c.h.b16 %v192
      %v295 = vunpack.c.l.b16 %v193
      %v296 = vunpack.c.h.b16 %v193
      %v297 = vunpack.c.l.b16 %v194
      %v298 = vunpack.c.h.b16 %v194
      %v299 = vunpack.c.l.b16 %v195
      %v300 = vunpack.c.h.b16 %v195
      %v301 = vunpack.c.l.b16 %v196
      %v302 = vunpack.c.h.b16 %v196
      %v303 = vunpack.c.l.b16 %v197
      %v304 = vunpack.c.h.b16 %v197
      %v305 = vunpack.c.l.b16 %v198
      %v306 = vunpack.c.h.b16 %v198
      %v307 = vunpack.c.l.b16 %v199
      %v308 = vunpack.c.h.b16 %v199
      %v309 = vunpack.c.l.b16 %v200
      %v310 = vunpack.c.h.b16 %v200
      %v311 = vunpack.c.l.b16 %v201
      %v312 = vunpack.c.h.b16 %v201
      %v313 = vpack.c.b16 %v265, %v263
      %v314 = vpack.c.b16 %v266, %v264
      %v315 = vpack.c.b16 %v269, %v267
      %v316 = vpack.c.b16 %v270, %v268
      %v317 = vpack.c.b16 %v273, %v271
      %v318 = vpack.c.b16 %v274, %v272
      %v319 = vpack.c.b16 %v277, %v275
      %v320 = vpack.c.b16 %v278, %v276
      %v321 = vpack.c.b16 %v281, %v279
      %v322 = vpack.c.b16 %v282, %v280
      %v323 = vpack.c.b16 %v285, %v283
      %v324 = vpack.c.b16 %v286, %v284
      %v325 = vpack.c.b16 %v289, %v287
      %v326 = vpack.c.b16 %v290, %v288
      %v327 = vpack.c.b16 %v293, %v291
      %v328 = vpack.c.b16 %v294, %v292
      %v329 = vpack.c.b16 %v297, %v295
      %v330 = vpack.c.b16 %v298, %v296
      %v331 = vpack.c.b16 %v301, %v299
      %v332 = vpack.c.b16 %v302, %v300
      %v333 = vpack.c.b16 %v305, %v303
      %v334 = vpack.c.b16 %v306, %v304
      %v335 = vpack.c.b16 %v309, %v307
      %v336 = vpack.c.b16 %v310, %v308
      %v337 = vpack.c.b16 %v311, %v311
      %v338 = vpack.c.b16 %v312, %v312
      %v397 = vunpack.c.l.b16 %v202
      %v398 = vunpack.c.l.b16 %v203
      %v399 = vunpack.c.l.b16 %v204
      %v400 = vunpack.c.l.b16 %v205
      %v401 = vunpack.c.l.b16 %v206
      %v402 = vunpack.c.l.b16 %v207
      %v403 = vunpack.c.l.b16 %v208
      %v404 = vunpack.c.l.b16 %v209
      %v405 = vunpack.c.l.b16 %v210
      %v406 = vunpack.c.l.b16 %v211
      %v407 = vunpack.c.l.b16 %v212
      %v408 = vunpack.c.l.b16 %v213
      %v409 = vunpack.c.l.b16 %v214
      %v410 = vunpack.c.l.b16 %v215
      %v411 = vunpack.c.l.b16 %v216
      %v412 = vunpack.c.l.b16 %v217
      %v413 = vunpack.c.l.b16 %v218
      %v414 = vunpack.c.l.b16 %v219
      %v415 = vunpack.c.l.b16 %v220
      %v416 = vunpack.c.l.b16 %v221
      %v417 = vunpack.c.l.b16 %v222
      %v418 = vunpack.c.l.b16 %v223
      %v419 = vunpack.c.l.b16 %v224
      %v420 = vunpack.c.l.b16 %v225
      %v421 = vunpack.c.l.b16 %v226
      %v422 = vunpack.c.l.b16 %v227
      %v423 = vunpack.c.l.b16 %v228
      %v424 = vunpack.c.l.b16 %v229
      %v425 = vunpack.c.l.b16 %v230
      %v426 = vunpack.c.l.b16 %v231
      %v427 = vunpack.c.l.b16 %v232
      %v428 = vunpack.c.l.b16 %v233
      %v429 = vpack.c.b16 %v398, %v397
      %v430 = vpack.c.b16 %v400, %v399
      %v431 = vpack.c.b16 %v402, %v401
      %v432 = vpack.c.b16 %v404, %v403
      %v433 = vpack.c.b16 %v406, %v405
      %v434 = vpack.c.b16 %v408, %v407
      %v435 = vpack.c.b16 %v410, %v409
      %v436 = vpack.c.b16 %v412, %v411
      %v437 = vpack.c.b16 %v414, %v413
      %v438 = vpack.c.b16 %v416, %v415
      %v439 = vpack.c.b16 %v418, %v417
      %v440 = vpack.c.b16 %v420, %v419
      %v441 = vpack.c.b16 %v422, %v421
      %v442 = vpack.c.b16 %v424, %v423
      %v443 = vpack.c.b16 %v426, %v425
      %v444 = vpack.c.b16 %v428, %v427
      %461 = vmatpush.bf16.msra.mxu0 %v436
      %462 = vmatpush.bf16.msra.mxu0 %v435
      %463 = vmatpush.bf16.msra.mxu0 %v434
      %464 = vmatpush.bf16.msra.mxu0 %v433
      %465 = vmatpush.bf16.msra.mxu0 %v432
      %466 = vmatpush.bf16.msra.mxu0 %v431
      %467 = vmatpush.bf16.msra.mxu0 %v430
      %468 = vmatpush.bf16.msra.mxu0 %v429
      %469 = vmatmul.bf16.gmra.mxu0 %v313
      %v470 = vpop.f32.mrf.mxu0
      %v471 = vadd.f32 %v236, %v470
      %v472 = vpop.f32.mrf.mxu0
      %v473 = vadd.f32 %v236, %v472
      %474 = vmatmul.bf16.gmra.mxu0 %v315
      %v475 = vpop.f32.mrf.mxu0
      %v476 = vadd.f32 %v236, %v475
      %v477 = vpop.f32.mrf.mxu0
      %v478 = vadd.f32 %v236, %v477
      %479 = vmatmul.bf16.gmra.mxu0 %v317
      %v480 = vpop.f32.mrf.mxu0
      %v481 = vadd.f32 %v236, %v480
      %v482 = vpop.f32.mrf.mxu0
      %v483 = vadd.f32 %v236, %v482
      %484 = vmatmul.bf16.gmra.mxu0 %v319
      %v485 = vpop.f32.mrf.mxu0
      %v486 = vadd.f32 %v236, %v485
      %v487 = vpop.f32.mrf.mxu0
      %v488 = vadd.f32 %v236, %v487
      %489 = vmatmul.bf16.gmra.mxu0 %v321
      %v490 = vpop.f32.mrf.mxu0
      %v491 = vadd.f32 %v236, %v490
      %v492 = vpop.f32.mrf.mxu0
      %v493 = vadd.f32 %v236, %v492
      %494 = vmatmul.bf16.gmra.mxu0 %v323
      %v495 = vpop.f32.mrf.mxu0
      %v496 = vadd.f32 %v236, %v495
      %v497 = vpop.f32.mrf.mxu0
      %v498 = vadd.f32 %v236, %v497
      %499 = vmatmul.bf16.gmra.mxu0 %v325
      %v500 = vpop.f32.mrf.mxu0
      %v501 = vadd.f32 %v236, %v500
      %v502 = vpop.f32.mrf.mxu0
      %v503 = vadd.f32 %v236, %v502
      %504 = vmatmul.bf16.gmra.mxu0 %v327
      %v505 = vpop.f32.mrf.mxu0
      %v506 = vadd.f32 %v236, %v505
      %v507 = vpop.f32.mrf.mxu0
      %v508 = vadd.f32 %v236, %v507
      %509 = vmatmul.bf16.gmra.mxu0 %v329
      %v510 = vpop.f32.mrf.mxu0
      %v511 = vadd.f32 %v236, %v510
      %v512 = vpop.f32.mrf.mxu0
      %v513 = vadd.f32 %v236, %v512
      %514 = vmatmul.bf16.gmra.mxu0 %v331
      %v515 = vpop.f32.mrf.mxu0
      %v516 = vadd.f32 %v236, %v515
      %v517 = vpop.f32.mrf.mxu0
      %v518 = vadd.f32 %v236, %v517
      %519 = vmatmul.bf16.gmra.mxu0 %v333
      %v520 = vpop.f32.mrf.mxu0
      %v521 = vadd.f32 %v236, %v520
      %v522 = vpop.f32.mrf.mxu0
      %v523 = vadd.f32 %v236, %v522
      %524 = vmatmul.bf16.gmra.mxu0 %v335
      %v525 = vpop.f32.mrf.mxu0
      %v526 = vadd.f32 %v236, %v525
      %v527 = vpop.f32.mrf.mxu0
      %v528 = vadd.f32 %v236, %v527
      %529 = vmatmul.bf16.gmra.mxu0 %v337
      %v530 = vpop.f32.mrf.mxu0
      %v531 = vadd.f32 %v236, %v530
      %v532 = vpop.f32.mrf.mxu0
      %533 = vdwg.mxu0
      %534 = vmatpush.bf16.msra.mxu0 %v444
      %535 = vmatpush.bf16.msra.mxu0 %v443
      %536 = vmatpush.bf16.msra.mxu0 %v442
      %537 = vmatpush.bf16.msra.mxu0 %v441
      %538 = vmatpush.bf16.msra.mxu0 %v440
      %539 = vmatpush.bf16.msra.mxu0 %v439
      %540 = vmatpush.bf16.msra.mxu0 %v438
      %541 = vmatpush.bf16.msra.mxu0 %v437
      %542 = vmatmul.bf16.gmra.mxu0 %v314
      %v543 = vpop.f32.mrf.mxu0
      %v544 = vadd.f32 %v471, %v543
      %v545 = vpop.f32.mrf.mxu0
      %v546 = vadd.f32 %v473, %v545
      %547 = vmatmul.bf16.gmra.mxu0 %v316
      %v548 = vpop.f32.mrf.mxu0
      %v549 = vadd.f32 %v476, %v548
      %v550 = vpop.f32.mrf.mxu0
      %v551 = vadd.f32 %v478, %v550
      %552 = vmatmul.bf16.gmra.mxu0 %v318
      %v553 = vpop.f32.mrf.mxu0
      %v554 = vadd.f32 %v481, %v553
      %v555 = vpop.f32.mrf.mxu0
      %v556 = vadd.f32 %v483, %v555
      %557 = vmatmul.bf16.gmra.mxu0 %v320
      %v558 = vpop.f32.mrf.mxu0
      %v559 = vadd.f32 %v486, %v558
      %v560 = vpop.f32.mrf.mxu0
      %v561 = vadd.f32 %v488, %v560
      %562 = vmatmul.bf16.gmra.mxu0 %v322
      %v563 = vpop.f32.mrf.mxu0
      %v564 = vadd.f32 %v491, %v563
      %v565 = vpop.f32.mrf.mxu0
      %v566 = vadd.f32 %v493, %v565
      %567 = vmatmul.bf16.gmra.mxu0 %v324
      %v568 = vpop.f32.mrf.mxu0
      %v569 = vadd.f32 %v496, %v568
      %v570 = vpop.f32.mrf.mxu0
      %v571 = vadd.f32 %v498, %v570
      %572 = vmatmul.bf16.gmra.mxu0 %v326
      %v573 = vpop.f32.mrf.mxu0
      %v574 = vadd.f32 %v501, %v573
      %v575 = vpop.f32.mrf.mxu0
      %v576 = vadd.f32 %v503, %v575
      %577 = vmatmul.bf16.gmra.mxu0 %v328
      %v578 = vpop.f32.mrf.mxu0
      %v579 = vadd.f32 %v506, %v578
      %v580 = vpop.f32.mrf.mxu0
      %v581 = vadd.f32 %v508, %v580
      %582 = vmatmul.bf16.gmra.mxu0 %v330
      %v583 = vpop.f32.mrf.mxu0
      %v584 = vadd.f32 %v511, %v583
      %v585 = vpop.f32.mrf.mxu0
      %v586 = vadd.f32 %v513, %v585
      %587 = vmatmul.bf16.gmra.mxu0 %v332
      %v588 = vpop.f32.mrf.mxu0
      %v589 = vadd.f32 %v516, %v588
      %v590 = vpop.f32.mrf.mxu0
      %v591 = vadd.f32 %v518, %v590
      %592 = vmatmul.bf16.gmra.mxu0 %v334
      %v593 = vpop.f32.mrf.mxu0
      %v594 = vadd.f32 %v521, %v593
      %v595 = vpop.f32.mrf.mxu0
      %v596 = vadd.f32 %v523, %v595
      %597 = vmatmul.bf16.gmra.mxu0 %v336
      %v598 = vpop.f32.mrf.mxu0
      %v599 = vadd.f32 %v526, %v598
      %v600 = vpop.f32.mrf.mxu0
      %v601 = vadd.f32 %v528, %v600
      %602 = vmatmul.bf16.gmra.mxu0 %v338
      %v603 = vpop.f32.mrf.mxu0
      %v604 = vadd.f32 %v531, %v603
      %v605 = vpop.f32.mrf.mxu0
      %606 = vdwg.mxu0
      %v607 = vmax.f32 %v544, 0.0
      %v608 = vmax.f32 %v546, 0.0
      %v609 = vmax.f32 %v549, 0.0
      %v610 = vmax.f32 %v551, 0.0
      %v611 = vmax.f32 %v554, 0.0
      %v612 = vmax.f32 %v556, 0.0
      %v613 = vmax.f32 %v559, 0.0
      %v614 = vmax.f32 %v561, 0.0
      %v615 = vmax.f32 %v564, 0.0
      %v616 = vmax.f32 %v566, 0.0
      %v617 = vmax.f32 %v569, 0.0
      %v618 = vmax.f32 %v571, 0.0
      %v619 = vmax.f32 %v574, 0.0
      %v620 = vmax.f32 %v576, 0.0
      %v621 = vmax.f32 %v579, 0.0
      %v622 = vmax.f32 %v581, 0.0
      %v623 = vmax.f32 %v584, 0.0
      %v624 = vmax.f32 %v586, 0.0
      %v625 = vmax.f32 %v589, 0.0
      %v626 = vmax.f32 %v591, 0.0
      %v627 = vmax.f32 %v594, 0.0
      %v628 = vmax.f32 %v596, 0.0
      %v629 = vmax.f32 %v599, 0.0
      %v630 = vmax.f32 %v601, 0.0
      %v631 = vmax.f32 %v604, 0.0
      %v632 = vpack.c.bf16 %v607, %v607
      %v633 = vpack.c.bf16 %v608, %v608
      %v634 = vpack.c.bf16 %v609, %v609
      %v635 = vpack.c.bf16 %v610, %v610
      %v636 = vpack.c.bf16 %v611, %v611
      %v637 = vpack.c.bf16 %v612, %v612
      %v638 = vpack.c.bf16 %v613, %v613
      %v639 = vpack.c.bf16 %v614, %v614
      %v640 = vpack.c.bf16 %v615, %v615
      %v641 = vpack.c.bf16 %v616, %v616
      %v642 = vpack.c.bf16 %v617, %v617
      %v643 = vpack.c.bf16 %v618, %v618
      %v644 = vpack.c.bf16 %v619, %v619
      %v645 = vpack.c.bf16 %v620, %v620
      %v646 = vpack.c.bf16 %v621, %v621
      %v647 = vpack.c.bf16 %v622, %v622
      %v648 = vpack.c.bf16 %v623, %v623
      %v649 = vpack.c.bf16 %v624, %v624
      %v650 = vpack.c.bf16 %v625, %v625
      %v651 = vpack.c.bf16 %v626, %v626
      %v652 = vpack.c.bf16 %v627, %v627
      %v653 = vpack.c.bf16 %v628, %v628
      %v654 = vpack.c.bf16 %v629, %v629
      %v655 = vpack.c.bf16 %v630, %v630
      %v656 = vpack.c.bf16 %v631, %v631
      %657 = vst [vmem:[%s175] sm:$0xf] %v632
      %658 = vst [vmem:[%s175 + $0x4] sm:$0xf] %v633
      %659 = vst [vmem:[%s175 + $0x8] sm:$0xf] %v634
      %660 = vst [vmem:[%s175 + $0xc] sm:$0xf] %v635
      %661 = vst [vmem:[%s175 + $0x10] sm:$0xf] %v636
      %662 = vst [vmem:[%s175 + $0x14] sm:$0xf] %v637
      %663 = vst [vmem:[%s175 + $0x18] sm:$0xf] %v638
      %664 = vst [vmem:[%s175 + $0x1c] sm:$0xf] %v639
      %665 = vst [vmem:[%s175 + $0x20] sm:$0xf] %v640
      %666 = vst [vmem:[%s175 + $0x24] sm:$0xf] %v641
      %667 = vst [vmem:[%s175 + $0x28] sm:$0xf] %v642
      %668 = vst [vmem:[%s175 + $0x2c] sm:$0xf] %v643
      %669 = vst [vmem:[%s175 + $0x30] sm:$0xf] %v644
      %670 = vst [vmem:[%s175 + $0x34] sm:$0xf] %v645
      %671 = vst [vmem:[%s175 + $0x38] sm:$0xf] %v646
      %672 = vst [vmem:[%s175 + $0x3c] sm:$0xf] %v647
      %673 = vst [vmem:[%s175 + $0x40] sm:$0xf] %v648
      %674 = vst [vmem:[%s175 + $0x44] sm:$0xf] %v649
      %675 = vst [vmem:[%s175 + $0x48] sm:$0xf] %v650
      %676 = vst [vmem:[%s175 + $0x4c] sm:$0xf] %v651
      %677 = vst [vmem:[%s175 + $0x50] sm:$0xf] %v652
      %678 = vst [vmem:[%s175 + $0x54] sm:$0xf] %v653
      %679 = vst [vmem:[%s175 + $0x58] sm:$0xf] %v654
      %680 = vst [vmem:[%s175 + $0x5c] sm:$0xf] %v655
      %681 = vst [vmem:[%s175 + $0x60] sm:$0xf] %v656
      %s682 = smul.u32 25, %s14
      %p683 = scmp.lt.s32.totalorder %s682, 99
      %s684 = scalar_select %p683, %s682, 99
      %s685 = smul.addr %s684, 4
      %s686 = scalar_lea.vmem %s3, %s685
      // Predicated region
      $region33: #{agent_forward_pallas.4} parent=31 // pred_check
        %p687 = pneg %p100
      $region34: #{agent_forward_pallas.4} parent=31 // pred_check_branch
        %689 = sbr.rel (%p687) target = $region36
      $region35: #{agent_forward_pallas.4} parent=31 // pred_region
        %s690 = smul.u32 25, %s14
      $region36: #{agent_forward_pallas.4} parent=31 // pred_fallthru
        _
    $region32: #{agent_forward_pallas.4} parent=5 // pred_fallthru
      _
    %p691 = scmp.le.s32.totalorder 2, %s9
    // Predicated region
    $region37: #{agent_forward_pallas.4} parent=5 // pred_check
      %p692 = pneg %p691
    $region38: #{agent_forward_pallas.4} parent=5 // pred_check_branch
      %694 = sbr.rel (%p692) target = $region40
    $region39: #{agent_forward_pallas.4} parent=5 // pred_region
      %s695 = ssub.s32 %s9, 2
      // Predicated region
      $region41: #{agent_forward_pallas.4} parent=39 // pred_check
        %p696 = pneg %p106
      $region42: #{agent_forward_pallas.4} parent=39 // pred_check_branch
        %698 = sbr.rel (%p696) target = $region44
      $region43: #{agent_forward_pallas.4} parent=39 // pred_region
        %s699 = smul.u32 25, %s15
        %p700 = scmp.lt.s32.totalorder %s699, 99
        %s701 = scalar_select %p700, %s699, 99
        %s702 = smul.addr %s701, 4
        %s703 = scalar_lea.vmem %s3, %s702
      $region44: #{agent_forward_pallas.4} parent=39 // pred_fallthru
        _
    $region40: #{agent_forward_pallas.4} parent=5 // pred_fallthru
      _
  $region6: #{agent_forward_pallas.4} parent=0 // loop_footer
    %s13 = sadd.s32 1, %s9
  $region7: #{agent_forward_pallas.4} parent=0 // loop_footer_branch
    %8 = sbr.rel target = $region3
  $region8: #{agent_forward_pallas.4} parent=0 // loop_exit
    _

// kernel: agent_forward_pallas.5
$region0: #{agent_forward_pallas.5}
  #allocation0 [shape = 'u32[]', space=smem, size = 0x4, offset = 0x4, fixed_abs, tag = 'smem constant byte address 0x4 - core index']
  #allocation1 [shape = 'u32[72,128]{1,0:T(1,128)}', space=vmem, size = 0x9000, scoped, tag = 'internal scratch']
  %s0 = inlined_call_operand.vmem [shape: bf16[176,512], index: 0, kind: input, shape index: {}]
  %s1 = inlined_call_operand.vmem [shape: bf16[512,128], index: 1, kind: input, shape index: {}]
  %s2 = inlined_call_operand.vmem [shape: f32[1,128], index: 2, kind: input, shape index: {}]
  %s3 = inlined_call_operand.vmem [shape: bf16[176,128], index: 3, kind: output, shape index: {}]
  %s4 = sld [smem:[#allocation0]]
  $region45: #{agent_forward_pallas.5} parent=0
    _
  %s6 = ssub.s32 1, %s4
  %s7 = scalar_select 0, %s6, %s4
  loop: start=0, step=1, limit=4
  $region2: #{agent_forward_pallas.5} parent=0 // loop_pre_header
    _
  $region3: #{agent_forward_pallas.5} parent=0 // loop_header
    %s9 = sphi 0, %s13
    %p10 = scmp.ge.s32.totalorder %s9, 4
    %s19 = sphi 0, %s21
    %s22 = sphi 0, %s19
    %s23 = sphi 0, %s22
    %s39 = sphi 0, %s23
    %s43 = sphi 0, %s43
    %s45 = sphi 0, %s43
    %s46 = sphi 0, %s45
    %s60 = sphi 0, %s46
    %s64 = sphi 0, %s64
    %s66 = sphi 0, %s64
    %s67 = sphi 0, %s66
    %s81 = sphi 0, %s67
    %s87 = sphi 0, %s89
    %s90 = sphi 0, %s87
    %s91 = sphi 0, %s90
    %s107 = sphi 0, %s91
  $region4: #{agent_forward_pallas.5} parent=0 // loop_header_branch
    %12 = sbr.rel (%p10) target = $region8
  $region5: #{agent_forward_pallas.5} parent=0 // loop_body
    %s14 = ssub.s32 %s9, 1
    %s15 = ssub.s32 %s9, 2
    %s16 = sadd.s32 %s9, 1
    %s17 = ssub.s32 %s9, %s16
    %p18 = scmp.eq.s32.totalorder %s17, 0
    %s20 = sadd.s32 %s19, 1
    %s21 = scalar_select %p18, %s19, %s20
    %p24 = pneg %p18
    %p25 = scmp.eq.s32.totalorder %s9, 1
    %p26 = por %p24, %p25
    %p27 = scmp.ne.s32.totalorder %s19, %s22
    %p28 = scmp.eq.s32.totalorder %s9, 0
    %p29 = por %p27, %p28
    %p30 = scmp.ne.s32.totalorder %s19, %s22
    %p31 = scmp.eq.s32.totalorder %s14, 1
    %p32 = por %p30, %p31
    %p33 = scmp.ne.s32.totalorder %s22, %s23
    %p34 = scmp.eq.s32.totalorder %s14, 0
    %p35 = por %p33, %p34
    %p36 = scmp.ne.s32.totalorder %s22, %s23
    %p37 = scmp.eq.s32.totalorder %s15, 1
    %p38 = por %p36, %p37
    %p40 = scmp.ne.s32.totalorder %s23, %s39
    %p41 = scmp.eq.s32.totalorder %s15, 0
    %p42 = por %p40, %p41
    %s44 = sadd.s32 %s43, 1
    %p47 = scmp.eq.s32.totalorder %s9, 1
    %p48 = scmp.ne.s32.totalorder %s43, %s45
    %p49 = scmp.eq.s32.totalorder %s9, 0
    %p50 = por %p48, %p49
    %p51 = scmp.ne.s32.totalorder %s43, %s45
    %p52 = scmp.eq.s32.totalorder %s14, 1
    %p53 = por %p51, %p52
    %p54 = scmp.ne.s32.totalorder %s45, %s46
    %p55 = scmp.eq.s32.totalorder %s14, 0
    %p56 = por %p54, %p55
    %p57 = scmp.ne.s32.totalorder %s45, %s46
    %p58 = scmp.eq.s32.totalorder %s15, 1
    %p59 = por %p57, %p58
    %p61 = scmp.ne.s32.totalorder %s46, %s60
    %p62 = scmp.eq.s32.totalorder %s15, 0
    %p63 = por %p61, %p62
    %s65 = sadd.s32 %s64, 1
    %p68 = scmp.eq.s32.totalorder %s9, 1
    %p69 = scmp.ne.s32.totalorder %s64, %s66
    %p70 = scmp.eq.s32.totalorder %s9, 0
    %p71 = por %p69, %p70
    %p72 = scmp.ne.s32.totalorder %s64, %s66
    %p73 = scmp.eq.s32.totalorder %s14, 1
    %p74 = por %p72, %p73
    %p75 = scmp.ne.s32.totalorder %s66, %s67
    %p76 = scmp.eq.s32.totalorder %s14, 0
    %p77 = por %p75, %p76
    %p78 = scmp.ne.s32.totalorder %s66, %s67
    %p79 = scmp.eq.s32.totalorder %s15, 1
    %p80 = por %p78, %p79
    %p82 = scmp.ne.s32.totalorder %s67, %s81
    %p83 = scmp.eq.s32.totalorder %s15, 0
    %p84 = por %p82, %p83
    %s85 = ssub.s32 %s9, %s16
    %p86 = scmp.eq.s32.totalorder %s85, 0
    %s88 = sadd.s32 %s87, 1
    %s89 = scalar_select %p86, %s87, %s88
    %p92 = pneg %p86
    %p93 = scmp.eq.s32.totalorder %s9, 1
    %p94 = por %p92, %p93
    %p95 = scmp.ne.s32.totalorder %s87, %s90
    %p96 = scmp.eq.s32.totalorder %s9, 0
    %p97 = por %p95, %p96
    %p98 = scmp.ne.s32.totalorder %s87, %s90
    %p99 = scmp.eq.s32.totalorder %s14, 1
    %p100 = por %p98, %p99
    %p101 = scmp.ne.s32.totalorder %s90, %s91
    %p102 = scmp.eq.s32.totalorder %s14, 0
    %p103 = por %p101, %p102
    %p104 = scmp.ne.s32.totalorder %s90, %s91
    %p105 = scmp.eq.s32.totalorder %s15, 1
    %p106 = por %p104, %p105
    %p108 = scmp.ne.s32.totalorder %s91, %s107
    %p109 = scmp.eq.s32.totalorder %s15, 0
    %p110 = por %p108, %p109
    %p111 = scmp.le.s32.totalorder 1, %s9
    %p112 = scmp.lt.s32.totalorder %s9, 3
    %p113 = pnand %p111, %p112
    %p114 = pneg %p113
    // Predicated region
    $region9: #{agent_forward_pallas.5} parent=5 // pred_check
      _
    $region10: #{agent_forward_pallas.5} parent=5 // pred_check_branch
      %116 = sbr.rel (%p113) target = $region12
    $region11: #{agent_forward_pallas.5} parent=5 // pred_region
      %s117 = ssub.s32 %s9, 1
      // Predicated region
      $region13: #{agent_forward_pallas.5} parent=11 // pred_check
        %p118 = pneg %p56
      $region14: #{agent_forward_pallas.5} parent=11 // pred_check_branch
        %120 = sbr.rel (%p118) target = $region16
      $region15: #{agent_forward_pallas.5} parent=11 // pred_region
        _
      $region16: #{agent_forward_pallas.5} parent=11 // pred_fallthru
        _
      // Predicated region
      $region17: #{agent_forward_pallas.5} parent=11 // pred_check
        %p121 = pneg %p77
      $region18: #{agent_forward_pallas.5} parent=11 // pred_check_branch
        %123 = sbr.rel (%p121) target = $region20
      $region19: #{agent_forward_pallas.5} parent=11 // pred_region
        _
      $region20: #{agent_forward_pallas.5} parent=11 // pred_fallthru
        _
    $region12: #{agent_forward_pallas.5} parent=5 // pred_fallthru
      _
    %p124 = scmp.lt.s32.totalorder %s9, 2
    // Predicated region
    $region21: #{agent_forward_pallas.5} parent=5 // pred_check
      %p125 = pneg %p124
    $region22: #{agent_forward_pallas.5} parent=5 // pred_check_branch
      %127 = sbr.rel (%p125) target = $region24
    $region23: #{agent_forward_pallas.5} parent=5 // pred_region
      // Predicated region
      $region25: #{agent_forward_pallas.5} parent=23 // pred_check
        %p128 = pneg %p29
      $region26: #{agent_forward_pallas.5} parent=23 // pred_check_branch
        %130 = sbr.rel (%p128) target = $region28
      $region27: #{agent_forward_pallas.5} parent=23 // pred_region
        %s131 = smul.u32 11, %s9
        %p132 = scmp.lt.s32.totalorder %s131, 21
        %s133 = scalar_select %p132, %s131, 21
        %s134 = smul.addr %s133, 4
        %s135 = smul.addr %s134, 4
        %s136 = scalar_lea.vmem %s0, %s135
        %s137 = smul.u32 11, %s9
      $region28: #{agent_forward_pallas.5} parent=23 // pred_fallthru
        _
    $region24: #{agent_forward_pallas.5} parent=5 // pred_fallthru
      _
    %p138 = scmp.le.s32.totalorder 1, %s9
    %p139 = scmp.lt.s32.totalorder %s9, 3
    %p140 = pnand %p138, %p139
    %p141 = pneg %p140
    // Predicated region
    $region29: #{agent_forward_pallas.5} parent=5 // pred_check
      _
    $region30: #{agent_forward_pallas.5} parent=5 // pred_check_branch
      %143 = sbr.rel (%p140) target = $region32
    $region31: #{agent_forward_pallas.5} parent=5 // pred_region
      %s144 = ssub.s32 %s9, 1
      %s145 = smul.u32 11, %s14
      %p146 = scmp.lt.s32.totalorder %s145, 21
      %s147 = scalar_select %p146, %s145, 21
      %s148 = smul.addr %s147, 4
      %s149 = smul.addr %s148, 4
      %s150 = scalar_lea.vmem %s0, %s149
      %p151 = pneg %p35
      %p152 = pneg %p32
      %p153 = pneg %p56
      %p154 = pneg %p53
      %p155 = pneg %p77
      %p156 = pneg %p74
      %p157 = pneg %p103
      %p158 = pneg %p100
      %s159 = smul.u32 11, %s14
      %p160 = scmp.lt.s32.totalorder %s159, 21
      %s161 = scalar_select %p160, %s159, 21
      %s162 = smul.addr %s161, 4
      %s163 = scalar_lea.vmem %s3, %s162
      %s164 = smul.u32 11, %s14
      %p165 = scmp.lt.s32.totalorder %s164, 21
      %s166 = scalar_select %p165, %s164, 21
      %s167 = smul.addr %s166, 4
      %s168 = smul.addr %s167, 4
      %s169 = scalar_lea.vmem %s0, %s168
      %s170 = smul.u32 11, %s14
      %s171 = smul.u32 11, %s14
      %p172 = scmp.lt.s32.totalorder %s171, 21
      %s173 = scalar_select %p172, %s171, 21
      %s174 = smul.addr %s173, 4
      %s175 = scalar_lea.vmem %s3, %s174
      %s176 = smul.u32 11, %s14
      %v177 = vld [vmem:[%s169] sm:$0xff]
      %v178 = vld [vmem:[%s169 + $0x8] sm:$0xff]
      %v179 = vld [vmem:[%s169 + $0x10] sm:$0xff]
      %v180 = vld [vmem:[%s169 + $0x18] sm:$0xff]
      %v181 = vld [vmem:[%s169 + $0x20] sm:$0xff]
      %v182 = vld [vmem:[%s169 + $0x28] sm:$0xff]
      %v183 = vld [vmem:[%s169 + $0x30] sm:$0xff]
      %v184 = vld [vmem:[%s169 + $0x38] sm:$0xff]
      %v185 = vld [vmem:[%s169 + $0x40] sm:$0xff]
      %v186 = vld [vmem:[%s169 + $0x48] sm:$0xff]
      %v187 = vld [vmem:[%s169 + $0x50] sm:$0xff]
      %v188 = vld [vmem:[%s169 + $0x58] sm:$0xff]
      %v189 = vld [vmem:[%s169 + $0x60] sm:$0xff]
      %v190 = vld [vmem:[%s169 + $0x68] sm:$0xff]
      %v191 = vld [vmem:[%s169 + $0x70] sm:$0xff]
      %v192 = vld [vmem:[%s169 + $0x78] sm:$0xff]
      %v193 = vld [vmem:[%s169 + $0x80] sm:$0xff]
      %v194 = vld [vmem:[%s169 + $0x88] sm:$0xff]
      %v195 = vld [vmem:[%s169 + $0x90] sm:$0xff]
      %v196 = vld [vmem:[%s169 + $0x98] sm:$0xff]
      %v197 = vld [vmem:[%s169 + $0xa0] sm:$0xff]
      %v198 = vld [vmem:[%s169 + $0xa8] sm:$0xff]
      %v199 = vld [vmem:[%s1] sm:$0xf]
      %v200 = vld [vmem:[%s1 + $0x4] sm:$0xf]
      %v201 = vld [vmem:[%s1 + $0x8] sm:$0xf]
      %v202 = vld [vmem:[%s1 + $0xc] sm:$0xf]
      %v203 = vld [vmem:[%s1 + $0x10] sm:$0xf]
      %v204 = vld [vmem:[%s1 + $0x14] sm:$0xf]
      %v205 = vld [vmem:[%s1 + $0x18] sm:$0xf]
      %v206 = vld [vmem:[%s1 + $0x1c] sm:$0xf]
      %v207 = vld [vmem:[%s1 + $0x20] sm:$0xf]
      %v208 = vld [vmem:[%s1 + $0x24] sm:$0xf]
      %v209 = vld [vmem:[%s1 + $0x28] sm:$0xf]
      %v210 = vld [vmem:[%s1 + $0x2c] sm:$0xf]
      %v211 = vld [vmem:[%s1 + $0x30] sm:$0xf]
      %v212 = vld [vmem:[%s1 + $0x34] sm:$0xf]
      %v213 = vld [vmem:[%s1 + $0x38] sm:$0xf]
      %v214 = vld [vmem:[%s1 + $0x3c] sm:$0xf]
      %v215 = vld [vmem:[%s1 + $0x40] sm:$0xf]
      %v216 = vld [vmem:[%s1 + $0x44] sm:$0xf]
      %v217 = vld [vmem:[%s1 + $0x48] sm:$0xf]
      %v218 = vld [vmem:[%s1 + $0x4c] sm:$0xf]
      %v219 = vld [vmem:[%s1 + $0x50] sm:$0xf]
      %v220 = vld [vmem:[%s1 + $0x54] sm:$0xf]
      %v221 = vld [vmem:[%s1 + $0x58] sm:$0xf]
      %v222 = vld [vmem:[%s1 + $0x5c] sm:$0xf]
      %v223 = vld [vmem:[%s1 + $0x60] sm:$0xf]
      %v224 = vld [vmem:[%s1 + $0x64] sm:$0xf]
      %v225 = vld [vmem:[%s1 + $0x68] sm:$0xf]
      %v226 = vld [vmem:[%s1 + $0x6c] sm:$0xf]
      %v227 = vld [vmem:[%s1 + $0x70] sm:$0xf]
      %v228 = vld [vmem:[%s1 + $0x74] sm:$0xf]
      %v229 = vld [vmem:[%s1 + $0x78] sm:$0xf]
      %v230 = vld [vmem:[%s1 + $0x7c] sm:$0xf]
      %v231 = vld [vmem:[%s1 + $0x80] sm:$0xf]
      %v232 = vld [vmem:[%s1 + $0x84] sm:$0xf]
      %v233 = vld [vmem:[%s1 + $0x88] sm:$0xf]
      %v234 = vld [vmem:[%s1 + $0x8c] sm:$0xf]
      %v235 = vld [vmem:[%s1 + $0x90] sm:$0xf]
      %v236 = vld [vmem:[%s1 + $0x94] sm:$0xf]
      %v237 = vld [vmem:[%s1 + $0x98] sm:$0xf]
      %v238 = vld [vmem:[%s1 + $0x9c] sm:$0xf]
      %v239 = vld [vmem:[%s1 + $0xa0] sm:$0xf]
      %v240 = vld [vmem:[%s1 + $0xa4] sm:$0xf]
      %v241 = vld [vmem:[%s1 + $0xa8] sm:$0xf]
      %v242 = vld [vmem:[%s1 + $0xac] sm:$0xf]
      %v243 = vld [vmem:[%s1 + $0xb0] sm:$0xf]
      %v244 = vld [vmem:[%s1 + $0xb4] sm:$0xf]
      %v245 = vld [vmem:[%s1 + $0xb8] sm:$0xf]
      %v246 = vld [vmem:[%s1 + $0xbc] sm:$0xf]
      %v247 = vld [vmem:[%s1 + $0xc0] sm:$0xf]
      %v248 = vld [vmem:[%s1 + $0xc4] sm:$0xf]
      %v249 = vld [vmem:[%s1 + $0xc8] sm:$0xf]
      %v250 = vld [vmem:[%s1 + $0xcc] sm:$0xf]
      %v251 = vld [vmem:[%s1 + $0xd0] sm:$0xf]
      %v252 = vld [vmem:[%s1 + $0xd4] sm:$0xf]
      %v253 = vld [vmem:[%s1 + $0xd8] sm:$0xf]
      %v254 = vld [vmem:[%s1 + $0xdc] sm:$0xf]
      %v255 = vld [vmem:[%s1 + $0xe0] sm:$0xf]
      %v256 = vld [vmem:[%s1 + $0xe4] sm:$0xf]
      %v257 = vld [vmem:[%s1 + $0xe8] sm:$0xf]
      %v258 = vld [vmem:[%s1 + $0xec] sm:$0xf]
      %v259 = vld [vmem:[%s1 + $0xf0] sm:$0xf]
      %v260 = vld [vmem:[%s1 + $0xf4] sm:$0xf]
      %v261 = vld [vmem:[%s1 + $0xf8] sm:$0xf]
      %v262 = vld [vmem:[%s1 + $0xfc] sm:$0xf]
      %v263 = vld [vmem:[%s2] sm:$0x1]
      %v265 = vperm.slane %v263, 0
      %v289 = vunpack.c.l.b16 %v177
      %v290 = vunpack.c.h.b16 %v177
      %v291 = vunpack.c.l.b16 %v178
      %v292 = vunpack.c.h.b16 %v178
      %v293 = vunpack.c.l.b16 %v179
      %v294 = vunpack.c.h.b16 %v179
      %v295 = vunpack.c.l.b16 %v180
      %v296 = vunpack.c.h.b16 %v180
      %v297 = vunpack.c.l.b16 %v181
      %v298 = vunpack.c.h.b16 %v181
      %v299 = vunpack.c.l.b16 %v182
      %v300 = vunpack.c.h.b16 %v182
      %v301 = vunpack.c.l.b16 %v183
      %v302 = vunpack.c.h.b16 %v183
      %v303 = vunpack.c.l.b16 %v184
      %v304 = vunpack.c.h.b16 %v184
      %v305 = vunpack.c.l.b16 %v185
      %v306 = vunpack.c.h.b16 %v185
      %v307 = vunpack.c.l.b16 %v186
      %v308 = vunpack.c.h.b16 %v186
      %v309 = vunpack.c.l.b16 %v187
      %v310 = vunpack.c.h.b16 %v187
      %v311 = vunpack.c.l.b16 %v188
      %v312 = vunpack.c.h.b16 %v188
      %v313 = vunpack.c.l.b16 %v189
      %v314 = vunpack.c.h.b16 %v189
      %v315 = vunpack.c.l.b16 %v190
      %v316 = vunpack.c.h.b16 %v190
      %v317 = vunpack.c.l.b16 %v191
      %v318 = vunpack.c.h.b16 %v191
      %v319 = vunpack.c.l.b16 %v192
      %v320 = vunpack.c.h.b16 %v192
      %v321 = vunpack.c.l.b16 %v193
      %v322 = vunpack.c.h.b16 %v193
      %v323 = vunpack.c.l.b16 %v194
      %v324 = vunpack.c.h.b16 %v194
      %v325 = vunpack.c.l.b16 %v195
      %v326 = vunpack.c.h.b16 %v195
      %v327 = vunpack.c.l.b16 %v196
      %v328 = vunpack.c.h.b16 %v196
      %v329 = vunpack.c.l.b16 %v197
      %v330 = vunpack.c.h.b16 %v197
      %v331 = vunpack.c.l.b16 %v198
      %v332 = vunpack.c.h.b16 %v198
      %v333 = vpack.c.b16 %v293, %v289
      %v334 = vpack.c.b16 %v294, %v290
      %v335 = vpack.c.b16 %v295, %v291
      %v336 = vpack.c.b16 %v296, %v292
      %v337 = vpack.c.b16 %v301, %v297
      %v338 = vpack.c.b16 %v302, %v298
      %v339 = vpack.c.b16 %v303, %v299
      %v340 = vpack.c.b16 %v304, %v300
      %v341 = vpack.c.b16 %v309, %v305
      %v342 = vpack.c.b16 %v310, %v306
      %v343 = vpack.c.b16 %v311, %v307
      %v344 = vpack.c.b16 %v312, %v308
      %v345 = vpack.c.b16 %v317, %v313
      %v346 = vpack.c.b16 %v318, %v314
      %v347 = vpack.c.b16 %v319, %v315
      %v348 = vpack.c.b16 %v320, %v316
      %v349 = vpack.c.b16 %v325, %v321
      %v350 = vpack.c.b16 %v326, %v322
      %v351 = vpack.c.b16 %v327, %v323
      %v352 = vpack.c.b16 %v328, %v324
      %v353 = vpack.c.b16 %v329, %v329
      %v354 = vpack.c.b16 %v330, %v330
      %v355 = vpack.c.b16 %v331, %v331
      %v356 = vpack.c.b16 %v332, %v332
      %v445 = vunpack.c.l.b16 %v199
      %v446 = vunpack.c.l.b16 %v200
      %v447 = vunpack.c.l.b16 %v201
      %v448 = vunpack.c.l.b16 %v202
      %v449 = vunpack.c.l.b16 %v203
      %v450 = vunpack.c.l.b16 %v204
      %v451 = vunpack.c.l.b16 %v205
      %v452 = vunpack.c.l.b16 %v206
      %v453 = vunpack.c.l.b16 %v207
      %v454 = vunpack.c.l.b16 %v208
      %v455 = vunpack.c.l.b16 %v209
      %v456 = vunpack.c.l.b16 %v210
      %v457 = vunpack.c.l.b16 %v211
      %v458 = vunpack.c.l.b16 %v212
      %v459 = vunpack.c.l.b16 %v213
      %v460 = vunpack.c.l.b16 %v214
      %v461 = vunpack.c.l.b16 %v215
      %v462 = vunpack.c.l.b16 %v216
      %v463 = vunpack.c.l.b16 %v217
      %v464 = vunpack.c.l.b16 %v218
      %v465 = vunpack.c.l.b16 %v219
      %v466 = vunpack.c.l.b16 %v220
      %v467 = vunpack.c.l.b16 %v221
      %v468 = vunpack.c.l.b16 %v222
      %v469 = vunpack.c.l.b16 %v223
      %v470 = vunpack.c.l.b16 %v224
      %v471 = vunpack.c.l.b16 %v225
      %v472 = vunpack.c.l.b16 %v226
      %v473 = vunpack.c.l.b16 %v227
      %v474 = vunpack.c.l.b16 %v228
      %v475 = vunpack.c.l.b16 %v229
      %v476 = vunpack.c.l.b16 %v230
      %v477 = vunpack.c.l.b16 %v231
      %v478 = vunpack.c.l.b16 %v232
      %v479 = vunpack.c.l.b16 %v233
      %v480 = vunpack.c.l.b16 %v234
      %v481 = vunpack.c.l.b16 %v235
      %v482 = vunpack.c.l.b16 %v236
      %v483 = vunpack.c.l.b16 %v237
      %v484 = vunpack.c.l.b16 %v238
      %v485 = vunpack.c.l.b16 %v239
      %v486 = vunpack.c.l.b16 %v240
      %v487 = vunpack.c.l.b16 %v241
      %v488 = vunpack.c.l.b16 %v242
      %v489 = vunpack.c.l.b16 %v243
      %v490 = vunpack.c.l.b16 %v244
      %v491 = vunpack.c.l.b16 %v245
      %v492 = vunpack.c.l.b16 %v246
      %v493 = vunpack.c.l.b16 %v247
      %v494 = vunpack.c.l.b16 %v248
      %v495 = vunpack.c.l.b16 %v249
      %v496 = vunpack.c.l.b16 %v250
      %v497 = vunpack.c.l.b16 %v251
      %v498 = vunpack.c.l.b16 %v252
      %v499 = vunpack.c.l.b16 %v253
      %v500 = vunpack.c.l.b16 %v254
      %v501 = vunpack.c.l.b16 %v255
      %v502 = vunpack.c.l.b16 %v256
      %v503 = vunpack.c.l.b16 %v257
      %v504 = vunpack.c.l.b16 %v258
      %v505 = vunpack.c.l.b16 %v259
      %v506 = vunpack.c.l.b16 %v260
      %v507 = vunpack.c.l.b16 %v261
      %v508 = vunpack.c.l.b16 %v262
      %v509 = vpack.c.b16 %v446, %v445
      %v510 = vpack.c.b16 %v448, %v447
      %v511 = vpack.c.b16 %v450, %v449
      %v512 = vpack.c.b16 %v452, %v451
      %v513 = vpack.c.b16 %v454, %v453
      %v514 = vpack.c.b16 %v456, %v455
      %v515 = vpack.c.b16 %v458, %v457
      %v516 = vpack.c.b16 %v460, %v459
      %v517 = vpack.c.b16 %v462, %v461
      %v518 = vpack.c.b16 %v464, %v463
      %v519 = vpack.c.b16 %v466, %v465
      %v520 = vpack.c.b16 %v468, %v467
      %v521 = vpack.c.b16 %v470, %v469
      %v522 = vpack.c.b16 %v472, %v471
      %v523 = vpack.c.b16 %v474, %v473
      %v524 = vpack.c.b16 %v476, %v475
      %v525 = vpack.c.b16 %v478, %v477
      %v526 = vpack.c.b16 %v480, %v479
      %v527 = vpack.c.b16 %v482, %v481
      %v528 = vpack.c.b16 %v484, %v483
      %v529 = vpack.c.b16 %v486, %v485
      %v530 = vpack.c.b16 %v488, %v487
      %v531 = vpack.c.b16 %v490, %v489
      %v532 = vpack.c.b16 %v492, %v491
      %v533 = vpack.c.b16 %v494, %v493
      %v534 = vpack.c.b16 %v496, %v495
      %v535 = vpack.c.b16 %v498, %v497
      %v536 = vpack.c.b16 %v500, %v499
      %v537 = vpack.c.b16 %v502, %v501
      %v538 = vpack.c.b16 %v504, %v503
      %v539 = vpack.c.b16 %v506, %v505
      %v540 = vpack.c.b16 %v508, %v507
      %573 = vmatpush.bf16.msra.mxu0 %v516
      %574 = vmatpush.bf16.msra.mxu0 %v515
      %575 = vmatpush.bf16.msra.mxu0 %v514
      %576 = vmatpush.bf16.msra.mxu0 %v513
      %577 = vmatpush.bf16.msra.mxu0 %v512
      %578 = vmatpush.bf16.msra.mxu0 %v511
      %579 = vmatpush.bf16.msra.mxu0 %v510
      %580 = vmatpush.bf16.msra.mxu0 %v509
      %581 = vmatmul.bf16.gmra.mxu0 %v333
      %v582 = vpop.f32.mrf.mxu0
      %v583 = vadd.f32 %v265, %v582
      %v584 = vpop.f32.mrf.mxu0
      %v585 = vadd.f32 %v265, %v584
      %586 = vmatmul.bf16.gmra.mxu0 %v337
      %v587 = vpop.f32.mrf.mxu0
      %v588 = vadd.f32 %v265, %v587
      %v589 = vpop.f32.mrf.mxu0
      %v590 = vadd.f32 %v265, %v589
      %591 = vmatmul.bf16.gmra.mxu0 %v341
      %v592 = vpop.f32.mrf.mxu0
      %v593 = vadd.f32 %v265, %v592
      %v594 = vpop.f32.mrf.mxu0
      %v595 = vadd.f32 %v265, %v594
      %596 = vmatmul.bf16.gmra.mxu0 %v345
      %v597 = vpop.f32.mrf.mxu0
      %v598 = vadd.f32 %v265, %v597
      %v599 = vpop.f32.mrf.mxu0
      %v600 = vadd.f32 %v265, %v599
      %601 = vmatmul.bf16.gmra.mxu0 %v349
      %v602 = vpop.f32.mrf.mxu0
      %v603 = vadd.f32 %v265, %v602
      %v604 = vpop.f32.mrf.mxu0
      %v605 = vadd.f32 %v265, %v604
      %606 = vmatmul.bf16.gmra.mxu0 %v353
      %v607 = vpop.f32.mrf.mxu0
      %v608 = vadd.f32 %v265, %v607
      %v609 = vpop.f32.mrf.mxu0
      %610 = vdwg.mxu0
      %611 = vmatpush.bf16.msra.mxu0 %v524
      %612 = vmatpush.bf16.msra.mxu0 %v523
      %613 = vmatpush.bf16.msra.mxu0 %v522
      %614 = vmatpush.bf16.msra.mxu0 %v521
      %615 = vmatpush.bf16.msra.mxu0 %v520
      %616 = vmatpush.bf16.msra.mxu0 %v519
      %617 = vmatpush.bf16.msra.mxu0 %v518
      %618 = vmatpush.bf16.msra.mxu0 %v517
      %619 = vmatmul.bf16.gmra.mxu0 %v334
      %v620 = vpop.f32.mrf.mxu0
      %v621 = vadd.f32 %v583, %v620
      %v622 = vpop.f32.mrf.mxu0
      %v623 = vadd.f32 %v585, %v622
      %624 = vmatmul.bf16.gmra.mxu0 %v338
      %v625 = vpop.f32.mrf.mxu0
      %v626 = vadd.f32 %v588, %v625
      %v627 = vpop.f32.mrf.mxu0
      %v628 = vadd.f32 %v590, %v627
      %629 = vmatmul.bf16.gmra.mxu0 %v342
      %v630 = vpop.f32.mrf.mxu0
      %v631 = vadd.f32 %v593, %v630
      %v632 = vpop.f32.mrf.mxu0
      %v633 = vadd.f32 %v595, %v632
      %634 = vmatmul.bf16.gmra.mxu0 %v346
      %v635 = vpop.f32.mrf.mxu0
      %v636 = vadd.f32 %v598, %v635
      %v637 = vpop.f32.mrf.mxu0
      %v638 = vadd.f32 %v600, %v637
      %639 = vmatmul.bf16.gmra.mxu0 %v350
      %v640 = vpop.f32.mrf.mxu0
      %v641 = vadd.f32 %v603, %v640
      %v642 = vpop.f32.mrf.mxu0
      %v643 = vadd.f32 %v605, %v642
      %644 = vmatmul.bf16.gmra.mxu0 %v354
      %v645 = vpop.f32.mrf.mxu0
      %v646 = vadd.f32 %v608, %v645
      %v647 = vpop.f32.mrf.mxu0
      %648 = vdwg.mxu0
      %649 = vmatpush.bf16.msra.mxu0 %v532
      %650 = vmatpush.bf16.msra.mxu0 %v531
      %651 = vmatpush.bf16.msra.mxu0 %v530
      %652 = vmatpush.bf16.msra.mxu0 %v529
      %653 = vmatpush.bf16.msra.mxu0 %v528
      %654 = vmatpush.bf16.msra.mxu0 %v527
      %655 = vmatpush.bf16.msra.mxu0 %v526
      %656 = vmatpush.bf16.msra.mxu0 %v525
      %657 = vmatmul.bf16.gmra.mxu0 %v335
      %v658 = vpop.f32.mrf.mxu0
      %v659 = vadd.f32 %v621, %v658
      %v660 = vpop.f32.mrf.mxu0
      %v661 = vadd.f32 %v623, %v660
      %662 = vmatmul.bf16.gmra.mxu0 %v339
      %v663 = vpop.f32.mrf.mxu0
      %v664 = vadd.f32 %v626, %v663
      %v665 = vpop.f32.mrf.mxu0
      %v666 = vadd.f32 %v628, %v665
      %667 = vmatmul.bf16.gmra.mxu0 %v343
      %v668 = vpop.f32.mrf.mxu0
      %v669 = vadd.f32 %v631, %v668
      %v670 = vpop.f32.mrf.mxu0
      %v671 = vadd.f32 %v633, %v670
      %672 = vmatmul.bf16.gmra.mxu0 %v347
      %v673 = vpop.f32.mrf.mxu0
      %v674 = vadd.f32 %v636, %v673
      %v675 = vpop.f32.mrf.mxu0
      %v676 = vadd.f32 %v638, %v675
      %677 = vmatmul.bf16.gmra.mxu0 %v351
      %v678 = vpop.f32.mrf.mxu0
      %v679 = vadd.f32 %v641, %v678
      %v680 = vpop.f32.mrf.mxu0
      %v681 = vadd.f32 %v643, %v680
      %682 = vmatmul.bf16.gmra.mxu0 %v355
      %v683 = vpop.f32.mrf.mxu0
      %v684 = vadd.f32 %v646, %v683
      %v685 = vpop.f32.mrf.mxu0
      %686 = vdwg.mxu0
      %687 = vmatpush.bf16.msra.mxu0 %v540
      %688 = vmatpush.bf16.msra.mxu0 %v539
      %689 = vmatpush.bf16.msra.mxu0 %v538
      %690 = vmatpush.bf16.msra.mxu0 %v537
      %691 = vmatpush.bf16.msra.mxu0 %v536
      %692 = vmatpush.bf16.msra.mxu0 %v535
      %693 = vmatpush.bf16.msra.mxu0 %v534
      %694 = vmatpush.bf16.msra.mxu0 %v533
      %695 = vmatmul.bf16.gmra.mxu0 %v336
      %v696 = vpop.f32.mrf.mxu0
      %v697 = vadd.f32 %v659, %v696
      %v698 = vpop.f32.mrf.mxu0
      %v699 = vadd.f32 %v661, %v698
      %700 = vmatmul.bf16.gmra.mxu0 %v340
      %v701 = vpop.f32.mrf.mxu0
      %v702 = vadd.f32 %v664, %v701
      %v703 = vpop.f32.mrf.mxu0
      %v704 = vadd.f32 %v666, %v703
      %705 = vmatmul.bf16.gmra.mxu0 %v344
      %v706 = vpop.f32.mrf.mxu0
      %v707 = vadd.f32 %v669, %v706
      %v708 = vpop.f32.mrf.mxu0
      %v709 = vadd.f32 %v671, %v708
      %710 = vmatmul.bf16.gmra.mxu0 %v348
      %v711 = vpop.f32.mrf.mxu0
      %v712 = vadd.f32 %v674, %v711
      %v713 = vpop.f32.mrf.mxu0
      %v714 = vadd.f32 %v676, %v713
      %715 = vmatmul.bf16.gmra.mxu0 %v352
      %v716 = vpop.f32.mrf.mxu0
      %v717 = vadd.f32 %v679, %v716
      %v718 = vpop.f32.mrf.mxu0
      %v719 = vadd.f32 %v681, %v718
      %720 = vmatmul.bf16.gmra.mxu0 %v356
      %v721 = vpop.f32.mrf.mxu0
      %v722 = vadd.f32 %v684, %v721
      %v723 = vpop.f32.mrf.mxu0
      %724 = vdwg.mxu0
      %v725 = vmax.f32 %v697, 0.0
      %v726 = vmax.f32 %v699, 0.0
      %v727 = vmax.f32 %v702, 0.0
      %v728 = vmax.f32 %v704, 0.0
      %v729 = vmax.f32 %v707, 0.0
      %v730 = vmax.f32 %v709, 0.0
      %v731 = vmax.f32 %v712, 0.0
      %v732 = vmax.f32 %v714, 0.0
      %v733 = vmax.f32 %v717, 0.0
      %v734 = vmax.f32 %v719, 0.0
      %v735 = vmax.f32 %v722, 0.0
      %v736 = vpack.c.bf16 %v725, %v725
      %v737 = vpack.c.bf16 %v726, %v726
      %v738 = vpack.c.bf16 %v727, %v727
      %v739 = vpack.c.bf16 %v728, %v728
      %v740 = vpack.c.bf16 %v729, %v729
      %v741 = vpack.c.bf16 %v730, %v730
      %v742 = vpack.c.bf16 %v731, %v731
      %v743 = vpack.c.bf16 %v732, %v732
      %v744 = vpack.c.bf16 %v733, %v733
      %v745 = vpack.c.bf16 %v734, %v734
      %v746 = vpack.c.bf16 %v735, %v735
      %747 = vst [vmem:[%s175] sm:$0xf] %v736
      %748 = vst [vmem:[%s175 + $0x4] sm:$0xf] %v737
      %749 = vst [vmem:[%s175 + $0x8] sm:$0xf] %v738
      %750 = vst [vmem:[%s175 + $0xc] sm:$0xf] %v739
      %751 = vst [vmem:[%s175 + $0x10] sm:$0xf] %v740
      %752 = vst [vmem:[%s175 + $0x14] sm:$0xf] %v741
      %753 = vst [vmem:[%s175 + $0x18] sm:$0xf] %v742
      %754 = vst [vmem:[%s175 + $0x1c] sm:$0xf] %v743
      %755 = vst [vmem:[%s175 + $0x20] sm:$0xf] %v744
      %756 = vst [vmem:[%s175 + $0x24] sm:$0xf] %v745
      %757 = vst [vmem:[%s175 + $0x28] sm:$0xf] %v746
      %s758 = smul.u32 11, %s14
      %p759 = scmp.lt.s32.totalorder %s758, 21
      %s760 = scalar_select %p759, %s758, 21
      %s761 = smul.addr %s760, 4
      %s762 = scalar_lea.vmem %s3, %s761
      // Predicated region
      $region33: #{agent_forward_pallas.5} parent=31 // pred_check
        %p763 = pneg %p100
      $region34: #{agent_forward_pallas.5} parent=31 // pred_check_branch
        %765 = sbr.rel (%p763) target = $region36
      $region35: #{agent_forward_pallas.5} parent=31 // pred_region
        %s766 = smul.u32 11, %s14
      $region36: #{agent_forward_pallas.5} parent=31 // pred_fallthru
        _
    $region32: #{agent_forward_pallas.5} parent=5 // pred_fallthru
      _
    %p767 = scmp.le.s32.totalorder 2, %s9
    // Predicated region
    $region37: #{agent_forward_pallas.5} parent=5 // pred_check
      %p768 = pneg %p767
    $region38: #{agent_forward_pallas.5} parent=5 // pred_check_branch
      %770 = sbr.rel (%p768) target = $region40
    $region39: #{agent_forward_pallas.5} parent=5 // pred_region
      %s771 = ssub.s32 %s9, 2
      // Predicated region
      $region41: #{agent_forward_pallas.5} parent=39 // pred_check
        %p772 = pneg %p106
      $region42: #{agent_forward_pallas.5} parent=39 // pred_check_branch
        %774 = sbr.rel (%p772) target = $region44
      $region43: #{agent_forward_pallas.5} parent=39 // pred_region
        %s775 = smul.u32 11, %s15
        %p776 = scmp.lt.s32.totalorder %s775, 21
        %s777 = scalar_select %p776, %s775, 21
        %s778 = smul.addr %s777, 4
        %s779 = scalar_lea.vmem %s3, %s778
      $region44: #{agent_forward_pallas.5} parent=39 // pred_fallthru
        _
    $region40: #{agent_forward_pallas.5} parent=5 // pred_fallthru
      _
  $region6: #{agent_forward_pallas.5} parent=0 // loop_footer
    %s13 = sadd.s32 1, %s9
  $region7: #{agent_forward_pallas.5} parent=0 // loop_footer_branch
    %8 = sbr.rel target = $region3
  $region8: #{agent_forward_pallas.5} parent=0 // loop_exit
    _

// kernel: agent_forward_pallas.6
$region0: #{agent_forward_pallas.6}
  #allocation0 [shape = 'u32[]', space=smem, size = 0x4, offset = 0x4, fixed_abs, tag = 'smem constant byte address 0x4 - core index']
  #allocation1 [shape = 'u32[72,128]{1,0:T(1,128)}', space=vmem, size = 0x9000, scoped, tag = 'internal scratch']
  %s0 = inlined_call_operand.vmem [shape: bf16[112,640], index: 0, kind: input, shape index: {}]
  %s1 = inlined_call_operand.vmem [shape: bf16[640,128], index: 1, kind: input, shape index: {}]
  %s2 = inlined_call_operand.vmem [shape: f32[1,128], index: 2, kind: input, shape index: {}]
  %s3 = inlined_call_operand.vmem [shape: bf16[112,128], index: 3, kind: output, shape index: {}]
  %s4 = sld [smem:[#allocation0]]
  $region45: #{agent_forward_pallas.6} parent=0
    _
  %s6 = ssub.s32 1, %s4
  %s7 = scalar_select 0, %s6, %s4
  loop: start=0, step=1, limit=4
  $region2: #{agent_forward_pallas.6} parent=0 // loop_pre_header
    _
  $region3: #{agent_forward_pallas.6} parent=0 // loop_header
    %s9 = sphi 0, %s13
    %p10 = scmp.ge.s32.totalorder %s9, 4
    %s19 = sphi 0, %s21
    %s22 = sphi 0, %s19
    %s23 = sphi 0, %s22
    %s39 = sphi 0, %s23
    %s43 = sphi 0, %s43
    %s45 = sphi 0, %s43
    %s46 = sphi 0, %s45
    %s60 = sphi 0, %s46
    %s64 = sphi 0, %s64
    %s66 = sphi 0, %s64
    %s67 = sphi 0, %s66
    %s81 = sphi 0, %s67
    %s87 = sphi 0, %s89
    %s90 = sphi 0, %s87
    %s91 = sphi 0, %s90
    %s107 = sphi 0, %s91
  $region4: #{agent_forward_pallas.6} parent=0 // loop_header_branch
    %12 = sbr.rel (%p10) target = $region8
  $region5: #{agent_forward_pallas.6} parent=0 // loop_body
    %s14 = ssub.s32 %s9, 1
    %s15 = ssub.s32 %s9, 2
    %s16 = sadd.s32 %s9, 1
    %s17 = ssub.s32 %s9, %s16
    %p18 = scmp.eq.s32.totalorder %s17, 0
    %s20 = sadd.s32 %s19, 1
    %s21 = scalar_select %p18, %s19, %s20
    %p24 = pneg %p18
    %p25 = scmp.eq.s32.totalorder %s9, 1
    %p26 = por %p24, %p25
    %p27 = scmp.ne.s32.totalorder %s19, %s22
    %p28 = scmp.eq.s32.totalorder %s9, 0
    %p29 = por %p27, %p28
    %p30 = scmp.ne.s32.totalorder %s19, %s22
    %p31 = scmp.eq.s32.totalorder %s14, 1
    %p32 = por %p30, %p31
    %p33 = scmp.ne.s32.totalorder %s22, %s23
    %p34 = scmp.eq.s32.totalorder %s14, 0
    %p35 = por %p33, %p34
    %p36 = scmp.ne.s32.totalorder %s22, %s23
    %p37 = scmp.eq.s32.totalorder %s15, 1
    %p38 = por %p36, %p37
    %p40 = scmp.ne.s32.totalorder %s23, %s39
    %p41 = scmp.eq.s32.totalorder %s15, 0
    %p42 = por %p40, %p41
    %s44 = sadd.s32 %s43, 1
    %p47 = scmp.eq.s32.totalorder %s9, 1
    %p48 = scmp.ne.s32.totalorder %s43, %s45
    %p49 = scmp.eq.s32.totalorder %s9, 0
    %p50 = por %p48, %p49
    %p51 = scmp.ne.s32.totalorder %s43, %s45
    %p52 = scmp.eq.s32.totalorder %s14, 1
    %p53 = por %p51, %p52
    %p54 = scmp.ne.s32.totalorder %s45, %s46
    %p55 = scmp.eq.s32.totalorder %s14, 0
    %p56 = por %p54, %p55
    %p57 = scmp.ne.s32.totalorder %s45, %s46
    %p58 = scmp.eq.s32.totalorder %s15, 1
    %p59 = por %p57, %p58
    %p61 = scmp.ne.s32.totalorder %s46, %s60
    %p62 = scmp.eq.s32.totalorder %s15, 0
    %p63 = por %p61, %p62
    %s65 = sadd.s32 %s64, 1
    %p68 = scmp.eq.s32.totalorder %s9, 1
    %p69 = scmp.ne.s32.totalorder %s64, %s66
    %p70 = scmp.eq.s32.totalorder %s9, 0
    %p71 = por %p69, %p70
    %p72 = scmp.ne.s32.totalorder %s64, %s66
    %p73 = scmp.eq.s32.totalorder %s14, 1
    %p74 = por %p72, %p73
    %p75 = scmp.ne.s32.totalorder %s66, %s67
    %p76 = scmp.eq.s32.totalorder %s14, 0
    %p77 = por %p75, %p76
    %p78 = scmp.ne.s32.totalorder %s66, %s67
    %p79 = scmp.eq.s32.totalorder %s15, 1
    %p80 = por %p78, %p79
    %p82 = scmp.ne.s32.totalorder %s67, %s81
    %p83 = scmp.eq.s32.totalorder %s15, 0
    %p84 = por %p82, %p83
    %s85 = ssub.s32 %s9, %s16
    %p86 = scmp.eq.s32.totalorder %s85, 0
    %s88 = sadd.s32 %s87, 1
    %s89 = scalar_select %p86, %s87, %s88
    %p92 = pneg %p86
    %p93 = scmp.eq.s32.totalorder %s9, 1
    %p94 = por %p92, %p93
    %p95 = scmp.ne.s32.totalorder %s87, %s90
    %p96 = scmp.eq.s32.totalorder %s9, 0
    %p97 = por %p95, %p96
    %p98 = scmp.ne.s32.totalorder %s87, %s90
    %p99 = scmp.eq.s32.totalorder %s14, 1
    %p100 = por %p98, %p99
    %p101 = scmp.ne.s32.totalorder %s90, %s91
    %p102 = scmp.eq.s32.totalorder %s14, 0
    %p103 = por %p101, %p102
    %p104 = scmp.ne.s32.totalorder %s90, %s91
    %p105 = scmp.eq.s32.totalorder %s15, 1
    %p106 = por %p104, %p105
    %p108 = scmp.ne.s32.totalorder %s91, %s107
    %p109 = scmp.eq.s32.totalorder %s15, 0
    %p110 = por %p108, %p109
    %p111 = scmp.le.s32.totalorder 1, %s9
    %p112 = scmp.lt.s32.totalorder %s9, 3
    %p113 = pnand %p111, %p112
    %p114 = pneg %p113
    // Predicated region
    $region9: #{agent_forward_pallas.6} parent=5 // pred_check
      _
    $region10: #{agent_forward_pallas.6} parent=5 // pred_check_branch
      %116 = sbr.rel (%p113) target = $region12
    $region11: #{agent_forward_pallas.6} parent=5 // pred_region
      %s117 = ssub.s32 %s9, 1
      // Predicated region
      $region13: #{agent_forward_pallas.6} parent=11 // pred_check
        %p118 = pneg %p56
      $region14: #{agent_forward_pallas.6} parent=11 // pred_check_branch
        %120 = sbr.rel (%p118) target = $region16
      $region15: #{agent_forward_pallas.6} parent=11 // pred_region
        _
      $region16: #{agent_forward_pallas.6} parent=11 // pred_fallthru
        _
      // Predicated region
      $region17: #{agent_forward_pallas.6} parent=11 // pred_check
        %p121 = pneg %p77
      $region18: #{agent_forward_pallas.6} parent=11 // pred_check_branch
        %123 = sbr.rel (%p121) target = $region20
      $region19: #{agent_forward_pallas.6} parent=11 // pred_region
        _
      $region20: #{agent_forward_pallas.6} parent=11 // pred_fallthru
        _
    $region12: #{agent_forward_pallas.6} parent=5 // pred_fallthru
      _
    %p124 = scmp.lt.s32.totalorder %s9, 2
    // Predicated region
    $region21: #{agent_forward_pallas.6} parent=5 // pred_check
      %p125 = pneg %p124
    $region22: #{agent_forward_pallas.6} parent=5 // pred_check_branch
      %127 = sbr.rel (%p125) target = $region24
    $region23: #{agent_forward_pallas.6} parent=5 // pred_region
      // Predicated region
      $region25: #{agent_forward_pallas.6} parent=23 // pred_check
        %p128 = pneg %p29
      $region26: #{agent_forward_pallas.6} parent=23 // pred_check_branch
        %130 = sbr.rel (%p128) target = $region28
      $region27: #{agent_forward_pallas.6} parent=23 // pred_region
        %s131 = smul.u32 7, %s9
        %p132 = scmp.lt.s32.totalorder %s131, 13
        %s133 = scalar_select %p132, %s131, 13
        %s134 = smul.addr %s133, 5
        %s135 = smul.addr %s134, 4
        %s136 = scalar_lea.vmem %s0, %s135
        %s137 = smul.u32 7, %s9
      $region28: #{agent_forward_pallas.6} parent=23 // pred_fallthru
        _
    $region24: #{agent_forward_pallas.6} parent=5 // pred_fallthru
      _
    %p138 = scmp.le.s32.totalorder 1, %s9
    %p139 = scmp.lt.s32.totalorder %s9, 3
    %p140 = pnand %p138, %p139
    %p141 = pneg %p140
    // Predicated region
    $region29: #{agent_forward_pallas.6} parent=5 // pred_check
      _
    $region30: #{agent_forward_pallas.6} parent=5 // pred_check_branch
      %143 = sbr.rel (%p140) target = $region32
    $region31: #{agent_forward_pallas.6} parent=5 // pred_region
      %s144 = ssub.s32 %s9, 1
      %s145 = smul.u32 7, %s14
      %p146 = scmp.lt.s32.totalorder %s145, 13
      %s147 = scalar_select %p146, %s145, 13
      %s148 = smul.addr %s147, 5
      %s149 = smul.addr %s148, 4
      %s150 = scalar_lea.vmem %s0, %s149
      %p151 = pneg %p35
      %p152 = pneg %p32
      %p153 = pneg %p56
      %p154 = pneg %p53
      %p155 = pneg %p77
      %p156 = pneg %p74
      %p157 = pneg %p103
      %p158 = pneg %p100
      %s159 = smul.u32 7, %s14
      %p160 = scmp.lt.s32.totalorder %s159, 13
      %s161 = scalar_select %p160, %s159, 13
      %s162 = smul.addr %s161, 4
      %s163 = scalar_lea.vmem %s3, %s162
      %s164 = smul.u32 7, %s14
      %p165 = scmp.lt.s32.totalorder %s164, 13
      %s166 = scalar_select %p165, %s164, 13
      %s167 = smul.addr %s166, 5
      %s168 = smul.addr %s167, 4
      %s169 = scalar_lea.vmem %s0, %s168
      %s170 = smul.u32 7, %s14
      %s171 = smul.u32 7, %s14
      %p172 = scmp.lt.s32.totalorder %s171, 13
      %s173 = scalar_select %p172, %s171, 13
      %s174 = smul.addr %s173, 4
      %s175 = scalar_lea.vmem %s3, %s174
      %s176 = smul.u32 7, %s14
      %v177 = vld [vmem:[%s169] sm:$0xff]
      %v178 = vld [vmem:[%s169 + $0x8] sm:$0xff]
      %v179 = vld [vmem:[%s169 + $0x10] sm:$0xf]
      %v180 = vld [vmem:[%s169 + $0x14] sm:$0xff]
      %v181 = vld [vmem:[%s169 + $0x1c] sm:$0xff]
      %v182 = vld [vmem:[%s169 + $0x24] sm:$0xf]
      %v183 = vld [vmem:[%s169 + $0x28] sm:$0xff]
      %v184 = vld [vmem:[%s169 + $0x30] sm:$0xff]
      %v185 = vld [vmem:[%s169 + $0x38] sm:$0xf]
      %v186 = vld [vmem:[%s169 + $0x3c] sm:$0xff]
      %v187 = vld [vmem:[%s169 + $0x44] sm:$0xff]
      %v188 = vld [vmem:[%s169 + $0x4c] sm:$0xf]
      %v189 = vld [vmem:[%s169 + $0x50] sm:$0xff]
      %v190 = vld [vmem:[%s169 + $0x58] sm:$0xff]
      %v191 = vld [vmem:[%s169 + $0x60] sm:$0xf]
      %v192 = vld [vmem:[%s169 + $0x64] sm:$0xff]
      %v193 = vld [vmem:[%s169 + $0x6c] sm:$0xff]
      %v194 = vld [vmem:[%s169 + $0x74] sm:$0xf]
      %v195 = vld [vmem:[%s169 + $0x78] sm:$0xff]
      %v196 = vld [vmem:[%s169 + $0x80] sm:$0xff]
      %v197 = vld [vmem:[%s169 + $0x88] sm:$0xf]
      %v198 = vld [vmem:[%s1] sm:$0xf]
      %v199 = vld [vmem:[%s1 + $0x4] sm:$0xf]
      %v200 = vld [vmem:[%s1 + $0x8] sm:$0xf]
      %v201 = vld [vmem:[%s1 + $0xc] sm:$0xf]
      %v202 = vld [vmem:[%s1 + $0x10] sm:$0xf]
      %v203 = vld [vmem:[%s1 + $0x14] sm:$0xf]
      %v204 = vld [vmem:[%s1 + $0x18] sm:$0xf]
      %v205 = vld [vmem:[%s1 + $0x1c] sm:$0xf]
      %v206 = vld [vmem:[%s1 + $0x20] sm:$0xf]
      %v207 = vld [vmem:[%s1 + $0x24] sm:$0xf]
      %v208 = vld [vmem:[%s1 + $0x28] sm:$0xf]
      %v209 = vld [vmem:[%s1 + $0x2c] sm:$0xf]
      %v210 = vld [vmem:[%s1 + $0x30] sm:$0xf]
      %v211 = vld [vmem:[%s1 + $0x34] sm:$0xf]
      %v212 = vld [vmem:[%s1 + $0x38] sm:$0xf]
      %v213 = vld [vmem:[%s1 + $0x3c] sm:$0xf]
      %v214 = vld [vmem:[%s1 + $0x40] sm:$0xf]
      %v215 = vld [vmem:[%s1 + $0x44] sm:$0xf]
      %v216 = vld [vmem:[%s1 + $0x48] sm:$0xf]
      %v217 = vld [vmem:[%s1 + $0x4c] sm:$0xf]
      %v218 = vld [vmem:[%s1 + $0x50] sm:$0xf]
      %v219 = vld [vmem:[%s1 + $0x54] sm:$0xf]
      %v220 = vld [vmem:[%s1 + $0x58] sm:$0xf]
      %v221 = vld [vmem:[%s1 + $0x5c] sm:$0xf]
      %v222 = vld [vmem:[%s1 + $0x60] sm:$0xf]
      %v223 = vld [vmem:[%s1 + $0x64] sm:$0xf]
      %v224 = vld [vmem:[%s1 + $0x68] sm:$0xf]
      %v225 = vld [vmem:[%s1 + $0x6c] sm:$0xf]
      %v226 = vld [vmem:[%s1 + $0x70] sm:$0xf]
      %v227 = vld [vmem:[%s1 + $0x74] sm:$0xf]
      %v228 = vld [vmem:[%s1 + $0x78] sm:$0xf]
      %v229 = vld [vmem:[%s1 + $0x7c] sm:$0xf]
      %v230 = vld [vmem:[%s1 + $0x80] sm:$0xf]
      %v231 = vld [vmem:[%s1 + $0x84] sm:$0xf]
      %v232 = vld [vmem:[%s1 + $0x88] sm:$0xf]
      %v233 = vld [vmem:[%s1 + $0x8c] sm:$0xf]
      %v234 = vld [vmem:[%s1 + $0x90] sm:$0xf]
      %v235 = vld [vmem:[%s1 + $0x94] sm:$0xf]
      %v236 = vld [vmem:[%s1 + $0x98] sm:$0xf]
      %v237 = vld [vmem:[%s1 + $0x9c] sm:$0xf]
      %v238 = vld [vmem:[%s1 + $0xa0] sm:$0xf]
      %v239 = vld [vmem:[%s1 + $0xa4] sm:$0xf]
      %v240 = vld [vmem:[%s1 + $0xa8] sm:$0xf]
      %v241 = vld [vmem:[%s1 + $0xac] sm:$0xf]
      %v242 = vld [vmem:[%s1 + $0xb0] sm:$0xf]
      %v243 = vld [vmem:[%s1 + $0xb4] sm:$0xf]
      %v244 = vld [vmem:[%s1 + $0xb8] sm:$0xf]
      %v245 = vld [vmem:[%s1 + $0xbc] sm:$0xf]
      %v246 = vld [vmem:[%s1 + $0xc0] sm:$0xf]
      %v247 = vld [vmem:[%s1 + $0xc4] sm:$0xf]
      %v248 = vld [vmem:[%s1 + $0xc8] sm:$0xf]
      %v249 = vld [vmem:[%s1 + $0xcc] sm:$0xf]
      %v250 = vld [vmem:[%s1 + $0xd0] sm:$0xf]
      %v251 = vld [vmem:[%s1 + $0xd4] sm:$0xf]
      %v252 = vld [vmem:[%s1 + $0xd8] sm:$0xf]
      %v253 = vld [vmem:[%s1 + $0xdc] sm:$0xf]
      %v254 = vld [vmem:[%s1 + $0xe0] sm:$0xf]
      %v255 = vld [vmem:[%s1 + $0xe4] sm:$0xf]
      %v256 = vld [vmem:[%s1 + $0xe8] sm:$0xf]
      %v257 = vld [vmem:[%s1 + $0xec] sm:$0xf]
      %v258 = vld [vmem:[%s1 + $0xf0] sm:$0xf]
      %v259 = vld [vmem:[%s1 + $0xf4] sm:$0xf]
      %v260 = vld [vmem:[%s1 + $0xf8] sm:$0xf]
      %v261 = vld [vmem:[%s1 + $0xfc] sm:$0xf]
      %v262 = vld [vmem:[%s1 + $0x100] sm:$0xf]
      %v263 = vld [vmem:[%s1 + $0x104] sm:$0xf]
      %v264 = vld [vmem:[%s1 + $0x108] sm:$0xf]
      %v265 = vld [vmem:[%s1 + $0x10c] sm:$0xf]
      %v266 = vld [vmem:[%s1 + $0x110] sm:$0xf]
      %v267 = vld [vmem:[%s1 + $0x114] sm:$0xf]
      %v268 = vld [vmem:[%s1 + $0x118] sm:$0xf]
      %v269 = vld [vmem:[%s1 + $0x11c] sm:$0xf]
      %v270 = vld [vmem:[%s1 + $0x120] sm:$0xf]
      %v271 = vld [vmem:[%s1 + $0x124] sm:$0xf]
      %v272 = vld [vmem:[%s1 + $0x128] sm:$0xf]
      %v273 = vld [vmem:[%s1 + $0x12c] sm:$0xf]
      %v274 = vld [vmem:[%s1 + $0x130] sm:$0xf]
      %v275 = vld [vmem:[%s1 + $0x134] sm:$0xf]
      %v276 = vld [vmem:[%s1 + $0x138] sm:$0xf]
      %v277 = vld [vmem:[%s1 + $0x13c] sm:$0xf]
      %v278 = vld [vmem:[%s2] sm:$0x1]
      %v280 = vperm.slane %v278, 0
      %v303 = vunpack.c.l.b16 %v177
      %v304 = vunpack.c.h.b16 %v177
      %v305 = vunpack.c.l.b16 %v178
      %v306 = vunpack.c.h.b16 %v178
      %v307 = vunpack.c.l.b16 %v179
      %v308 = vunpack.c.l.b16 %v180
      %v309 = vunpack.c.h.b16 %v180
      %v310 = vunpack.c.l.b16 %v181
      %v311 = vunpack.c.h.b16 %v181
      %v312 = vunpack.c.l.b16 %v182
      %v313 = vunpack.c.l.b16 %v183
      %v314 = vunpack.c.h.b16 %v183
      %v315 = vunpack.c.l.b16 %v184
      %v316 = vunpack.c.h.b16 %v184
      %v317 = vunpack.c.l.b16 %v185
      %v318 = vunpack.c.l.b16 %v186
      %v319 = vunpack.c.h.b16 %v186
      %v320 = vunpack.c.l.b16 %v187
      %v321 = vunpack.c.h.b16 %v187
      %v322 = vunpack.c.l.b16 %v188
      %v323 = vunpack.c.l.b16 %v189
      %v324 = vunpack.c.h.b16 %v189
      %v325 = vunpack.c.l.b16 %v190
      %v326 = vunpack.c.h.b16 %v190
      %v327 = vunpack.c.l.b16 %v191
      %v328 = vunpack.c.l.b16 %v192
      %v329 = vunpack.c.h.b16 %v192
      %v330 = vunpack.c.l.b16 %v193
      %v331 = vunpack.c.h.b16 %v193
      %v332 = vunpack.c.l.b16 %v194
      %v333 = vunpack.c.l.b16 %v195
      %v334 = vunpack.c.h.b16 %v195
      %v335 = vunpack.c.l.b16 %v196
      %v336 = vunpack.c.h.b16 %v196
      %v337 = vunpack.c.l.b16 %v197
      %v338 = vpack.c.b16 %v308, %v303
      %v339 = vpack.c.b16 %v309, %v304
      %v340 = vpack.c.b16 %v310, %v305
      %v341 = vpack.c.b16 %v311, %v306
      %v342 = vpack.c.b16 %v312, %v307
      %v343 = vpack.c.b16 %v318, %v313
      %v344 = vpack.c.b16 %v319, %v314
      %v345 = vpack.c.b16 %v320, %v315
      %v346 = vpack.c.b16 %v321, %v316
      %v347 = vpack.c.b16 %v322, %v317
      %v348 = vpack.c.b16 %v328, %v323
      %v349 = vpack.c.b16 %v329, %v324
      %v350 = vpack.c.b16 %v330, %v325
      %v351 = vpack.c.b16 %v331, %v326
      %v352 = vpack.c.b16 %v332, %v327
      %v353 = vpack.c.b16 %v333, %v333
      %v354 = vpack.c.b16 %v334, %v334
      %v355 = vpack.c.b16 %v335, %v335
      %v356 = vpack.c.b16 %v336, %v336
      %v357 = vpack.c.b16 %v337, %v337
      %v458 = vunpack.c.l.b16 %v198
      %v459 = vunpack.c.l.b16 %v199
      %v460 = vunpack.c.l.b16 %v200
      %v461 = vunpack.c.l.b16 %v201
      %v462 = vunpack.c.l.b16 %v202
      %v463 = vunpack.c.l.b16 %v203
      %v464 = vunpack.c.l.b16 %v204
      %v465 = vunpack.c.l.b16 %v205
      %v466 = vunpack.c.l.b16 %v206
      %v467 = vunpack.c.l.b16 %v207
      %v468 = vunpack.c.l.b16 %v208
      %v469 = vunpack.c.l.b16 %v209
      %v470 = vunpack.c.l.b16 %v210
      %v471 = vunpack.c.l.b16 %v211
      %v472 = vunpack.c.l.b16 %v212
      %v473 = vunpack.c.l.b16 %v213
      %v474 = vunpack.c.l.b16 %v214
      %v475 = vunpack.c.l.b16 %v215
      %v476 = vunpack.c.l.b16 %v216
      %v477 = vunpack.c.l.b16 %v217
      %v478 = vunpack.c.l.b16 %v218
      %v479 = vunpack.c.l.b16 %v219
      %v480 = vunpack.c.l.b16 %v220
      %v481 = vunpack.c.l.b16 %v221
      %v482 = vunpack.c.l.b16 %v222
      %v483 = vunpack.c.l.b16 %v223
      %v484 = vunpack.c.l.b16 %v224
      %v485 = vunpack.c.l.b16 %v225
      %v486 = vunpack.c.l.b16 %v226
      %v487 = vunpack.c.l.b16 %v227
      %v488 = vunpack.c.l.b16 %v228
      %v489 = vunpack.c.l.b16 %v229
      %v490 = vunpack.c.l.b16 %v230
      %v491 = vunpack.c.l.b16 %v231
      %v492 = vunpack.c.l.b16 %v232
      %v493 = vunpack.c.l.b16 %v233
      %v494 = vunpack.c.l.b16 %v234
      %v495 = vunpack.c.l.b16 %v235
      %v496 = vunpack.c.l.b16 %v236
      %v497 = vunpack.c.l.b16 %v237
      %v498 = vunpack.c.l.b16 %v238
      %v499 = vunpack.c.l.b16 %v239
      %v500 = vunpack.c.l.b16 %v240
      %v501 = vunpack.c.l.b16 %v241
      %v502 = vunpack.c.l.b16 %v242
      %v503 = vunpack.c.l.b16 %v243
      %v504 = vunpack.c.l.b16 %v244
      %v505 = vunpack.c.l.b16 %v245
      %v506 = vunpack.c.l.b16 %v246
      %v507 = vunpack.c.l.b16 %v247
      %v508 = vunpack.c.l.b16 %v248
      %v509 = vunpack.c.l.b16 %v249
      %v510 = vunpack.c.l.b16 %v250
      %v511 = vunpack.c.l.b16 %v251
      %v512 = vunpack.c.l.b16 %v252
      %v513 = vunpack.c.l.b16 %v253
      %v514 = vunpack.c.l.b16 %v254
      %v515 = vunpack.c.l.b16 %v255
      %v516 = vunpack.c.l.b16 %v256
      %v517 = vunpack.c.l.b16 %v257
      %v518 = vunpack.c.l.b16 %v258
      %v519 = vunpack.c.l.b16 %v259
      %v520 = vunpack.c.l.b16 %v260
      %v521 = vunpack.c.l.b16 %v261
      %v522 = vunpack.c.l.b16 %v262
      %v523 = vunpack.c.l.b16 %v263
      %v524 = vunpack.c.l.b16 %v264
      %v525 = vunpack.c.l.b16 %v265
      %v526 = vunpack.c.l.b16 %v266
      %v527 = vunpack.c.l.b16 %v267
      %v528 = vunpack.c.l.b16 %v268
      %v529 = vunpack.c.l.b16 %v269
      %v530 = vunpack.c.l.b16 %v270
      %v531 = vunpack.c.l.b16 %v271
      %v532 = vunpack.c.l.b16 %v272
      %v533 = vunpack.c.l.b16 %v273
      %v534 = vunpack.c.l.b16 %v274
      %v535 = vunpack.c.l.b16 %v275
      %v536 = vunpack.c.l.b16 %v276
      %v537 = vunpack.c.l.b16 %v277
      %v538 = vpack.c.b16 %v459, %v458
      %v539 = vpack.c.b16 %v461, %v460
      %v540 = vpack.c.b16 %v463, %v462
      %v541 = vpack.c.b16 %v465, %v464
      %v542 = vpack.c.b16 %v467, %v466
      %v543 = vpack.c.b16 %v469, %v468
      %v544 = vpack.c.b16 %v471, %v470
      %v545 = vpack.c.b16 %v473, %v472
      %v546 = vpack.c.b16 %v475, %v474
      %v547 = vpack.c.b16 %v477, %v476
      %v548 = vpack.c.b16 %v479, %v478
      %v549 = vpack.c.b16 %v481, %v480
      %v550 = vpack.c.b16 %v483, %v482
      %v551 = vpack.c.b16 %v485, %v484
      %v552 = vpack.c.b16 %v487, %v486
      %v553 = vpack.c.b16 %v489, %v488
      %v554 = vpack.c.b16 %v491, %v490
      %v555 = vpack.c.b16 %v493, %v492
      %v556 = vpack.c.b16 %v495, %v494
      %v557 = vpack.c.b16 %v497, %v496
      %v558 = vpack.c.b16 %v499, %v498
      %v559 = vpack.c.b16 %v501, %v500
      %v560 = vpack.c.b16 %v503, %v502
      %v561 = vpack.c.b16 %v505, %v504
      %v562 = vpack.c.b16 %v507, %v506
      %v563 = vpack.c.b16 %v509, %v508
      %v564 = vpack.c.b16 %v511, %v510
      %v565 = vpack.c.b16 %v513, %v512
      %v566 = vpack.c.b16 %v515, %v514
      %v567 = vpack.c.b16 %v517, %v516
      %v568 = vpack.c.b16 %v519, %v518
      %v569 = vpack.c.b16 %v521, %v520
      %v570 = vpack.c.b16 %v523, %v522
      %v571 = vpack.c.b16 %v525, %v524
      %v572 = vpack.c.b16 %v527, %v526
      %v573 = vpack.c.b16 %v529, %v528
      %v574 = vpack.c.b16 %v531, %v530
      %v575 = vpack.c.b16 %v533, %v532
      %v576 = vpack.c.b16 %v535, %v534
      %v577 = vpack.c.b16 %v537, %v536
      %618 = vmatpush.bf16.msra.mxu0 %v545
      %619 = vmatpush.bf16.msra.mxu0 %v544
      %620 = vmatpush.bf16.msra.mxu0 %v543
      %621 = vmatpush.bf16.msra.mxu0 %v542
      %622 = vmatpush.bf16.msra.mxu0 %v541
      %623 = vmatpush.bf16.msra.mxu0 %v540
      %624 = vmatpush.bf16.msra.mxu0 %v539
      %625 = vmatpush.bf16.msra.mxu0 %v538
      %626 = vmatmul.bf16.gmra.mxu0 %v338
      %v627 = vpop.f32.mrf.mxu0
      %v628 = vadd.f32 %v280, %v627
      %v629 = vpop.f32.mrf.mxu0
      %v630 = vadd.f32 %v280, %v629
      %631 = vmatmul.bf16.gmra.mxu0 %v343
      %v632 = vpop.f32.mrf.mxu0
      %v633 = vadd.f32 %v280, %v632
      %v634 = vpop.f32.mrf.mxu0
      %v635 = vadd.f32 %v280, %v634
      %636 = vmatmul.bf16.gmra.mxu0 %v348
      %v637 = vpop.f32.mrf.mxu0
      %v638 = vadd.f32 %v280, %v637
      %v639 = vpop.f32.mrf.mxu0
      %v640 = vadd.f32 %v280, %v639
      %641 = vmatmul.bf16.gmra.mxu0 %v353
      %v642 = vpop.f32.mrf.mxu0
      %v643 = vadd.f32 %v280, %v642
      %v644 = vpop.f32.mrf.mxu0
      %645 = vdwg.mxu0
      %646 = vmatpush.bf16.msra.mxu0 %v553
      %647 = vmatpush.bf16.msra.mxu0 %v552
      %648 = vmatpush.bf16.msra.mxu0 %v551
      %649 = vmatpush.bf16.msra.mxu0 %v550
      %650 = vmatpush.bf16.msra.mxu0 %v549
      %651 = vmatpush.bf16.msra.mxu0 %v548
      %652 = vmatpush.bf16.msra.mxu0 %v547
      %653 = vmatpush.bf16.msra.mxu0 %v546
      %654 = vmatmul.bf16.gmra.mxu0 %v339
      %v655 = vpop.f32.mrf.mxu0
      %v656 = vadd.f32 %v628, %v655
      %v657 = vpop.f32.mrf.mxu0
      %v658 = vadd.f32 %v630, %v657
      %659 = vmatmul.bf16.gmra.mxu0 %v344
      %v660 = vpop.f32.mrf.mxu0
      %v661 = vadd.f32 %v633, %v660
      %v662 = vpop.f32.mrf.mxu0
      %v663 = vadd.f32 %v635, %v662
      %664 = vmatmul.bf16.gmra.mxu0 %v349
      %v665 = vpop.f32.mrf.mxu0
      %v666 = vadd.f32 %v638, %v665
      %v667 = vpop.f32.mrf.mxu0
      %v668 = vadd.f32 %v640, %v667
      %669 = vmatmul.bf16.gmra.mxu0 %v354
      %v670 = vpop.f32.mrf.mxu0
      %v671 = vadd.f32 %v643, %v670
      %v672 = vpop.f32.mrf.mxu0
      %673 = vdwg.mxu0
      %674 = vmatpush.bf16.msra.mxu0 %v561
      %675 = vmatpush.bf16.msra.mxu0 %v560
      %676 = vmatpush.bf16.msra.mxu0 %v559
      %677 = vmatpush.bf16.msra.mxu0 %v558
      %678 = vmatpush.bf16.msra.mxu0 %v557
      %679 = vmatpush.bf16.msra.mxu0 %v556
      %680 = vmatpush.bf16.msra.mxu0 %v555
      %681 = vmatpush.bf16.msra.mxu0 %v554
      %682 = vmatmul.bf16.gmra.mxu0 %v340
      %v683 = vpop.f32.mrf.mxu0
      %v684 = vadd.f32 %v656, %v683
      %v685 = vpop.f32.mrf.mxu0
      %v686 = vadd.f32 %v658, %v685
      %687 = vmatmul.bf16.gmra.mxu0 %v345
      %v688 = vpop.f32.mrf.mxu0
      %v689 = vadd.f32 %v661, %v688
      %v690 = vpop.f32.mrf.mxu0
      %v691 = vadd.f32 %v663, %v690
      %692 = vmatmul.bf16.gmra.mxu0 %v350
      %v693 = vpop.f32.mrf.mxu0
      %v694 = vadd.f32 %v666, %v693
      %v695 = vpop.f32.mrf.mxu0
      %v696 = vadd.f32 %v668, %v695
      %697 = vmatmul.bf16.gmra.mxu0 %v355
      %v698 = vpop.f32.mrf.mxu0
      %v699 = vadd.f32 %v671, %v698
      %v700 = vpop.f32.mrf.mxu0
      %701 = vdwg.mxu0
      %702 = vmatpush.bf16.msra.mxu0 %v569
      %703 = vmatpush.bf16.msra.mxu0 %v568
      %704 = vmatpush.bf16.msra.mxu0 %v567
      %705 = vmatpush.bf16.msra.mxu0 %v566
      %706 = vmatpush.bf16.msra.mxu0 %v565
      %707 = vmatpush.bf16.msra.mxu0 %v564
      %708 = vmatpush.bf16.msra.mxu0 %v563
      %709 = vmatpush.bf16.msra.mxu0 %v562
      %710 = vmatmul.bf16.gmra.mxu0 %v341
      %v711 = vpop.f32.mrf.mxu0
      %v712 = vadd.f32 %v684, %v711
      %v713 = vpop.f32.mrf.mxu0
      %v714 = vadd.f32 %v686, %v713
      %715 = vmatmul.bf16.gmra.mxu0 %v346
      %v716 = vpop.f32.mrf.mxu0
      %v717 = vadd.f32 %v689, %v716
      %v718 = vpop.f32.mrf.mxu0
      %v719 = vadd.f32 %v691, %v718
      %720 = vmatmul.bf16.gmra.mxu0 %v351
      %v721 = vpop.f32.mrf.mxu0
      %v722 = vadd.f32 %v694, %v721
      %v723 = vpop.f32.mrf.mxu0
      %v724 = vadd.f32 %v696, %v723
      %725 = vmatmul.bf16.gmra.mxu0 %v356
      %v726 = vpop.f32.mrf.mxu0
      %v727 = vadd.f32 %v699, %v726
      %v728 = vpop.f32.mrf.mxu0
      %729 = vdwg.mxu0
      %730 = vmatpush.bf16.msra.mxu0 %v577
      %731 = vmatpush.bf16.msra.mxu0 %v576
      %732 = vmatpush.bf16.msra.mxu0 %v575
      %733 = vmatpush.bf16.msra.mxu0 %v574
      %734 = vmatpush.bf16.msra.mxu0 %v573
      %735 = vmatpush.bf16.msra.mxu0 %v572
      %736 = vmatpush.bf16.msra.mxu0 %v571
      %737 = vmatpush.bf16.msra.mxu0 %v570
      %738 = vmatmul.bf16.gmra.mxu0 %v342
      %v739 = vpop.f32.mrf.mxu0
      %v740 = vadd.f32 %v712, %v739
      %v741 = vpop.f32.mrf.mxu0
      %v742 = vadd.f32 %v714, %v741
      %743 = vmatmul.bf16.gmra.mxu0 %v347
      %v744 = vpop.f32.mrf.mxu0
      %v745 = vadd.f32 %v717, %v744
      %v746 = vpop.f32.mrf.mxu0
      %v747 = vadd.f32 %v719, %v746
      %748 = vmatmul.bf16.gmra.mxu0 %v352
      %v749 = vpop.f32.mrf.mxu0
      %v750 = vadd.f32 %v722, %v749
      %v751 = vpop.f32.mrf.mxu0
      %v752 = vadd.f32 %v724, %v751
      %753 = vmatmul.bf16.gmra.mxu0 %v357
      %v754 = vpop.f32.mrf.mxu0
      %v755 = vadd.f32 %v727, %v754
      %v756 = vpop.f32.mrf.mxu0
      %757 = vdwg.mxu0
      %v758 = vmax.f32 %v740, 0.0
      %v759 = vmax.f32 %v742, 0.0
      %v760 = vmax.f32 %v745, 0.0
      %v761 = vmax.f32 %v747, 0.0
      %v762 = vmax.f32 %v750, 0.0
      %v763 = vmax.f32 %v752, 0.0
      %v764 = vmax.f32 %v755, 0.0
      %v765 = vpack.c.bf16 %v758, %v758
      %v766 = vpack.c.bf16 %v759, %v759
      %v767 = vpack.c.bf16 %v760, %v760
      %v768 = vpack.c.bf16 %v761, %v761
      %v769 = vpack.c.bf16 %v762, %v762
      %v770 = vpack.c.bf16 %v763, %v763
      %v771 = vpack.c.bf16 %v764, %v764
      %772 = vst [vmem:[%s175] sm:$0xf] %v765
      %773 = vst [vmem:[%s175 + $0x4] sm:$0xf] %v766
      %774 = vst [vmem:[%s175 + $0x8] sm:$0xf] %v767
      %775 = vst [vmem:[%s175 + $0xc] sm:$0xf] %v768
      %776 = vst [vmem:[%s175 + $0x10] sm:$0xf] %v769
      %777 = vst [vmem:[%s175 + $0x14] sm:$0xf] %v770
      %778 = vst [vmem:[%s175 + $0x18] sm:$0xf] %v771
      %s779 = smul.u32 7, %s14
      %p780 = scmp.lt.s32.totalorder %s779, 13
      %s781 = scalar_select %p780, %s779, 13
      %s782 = smul.addr %s781, 4
      %s783 = scalar_lea.vmem %s3, %s782
      // Predicated region
      $region33: #{agent_forward_pallas.6} parent=31 // pred_check
        %p784 = pneg %p100
      $region34: #{agent_forward_pallas.6} parent=31 // pred_check_branch
        %786 = sbr.rel (%p784) target = $region36
      $region35: #{agent_forward_pallas.6} parent=31 // pred_region
        %s787 = smul.u32 7, %s14
      $region36: #{agent_forward_pallas.6} parent=31 // pred_fallthru
        _
    $region32: #{agent_forward_pallas.6} parent=5 // pred_fallthru
      _
    %p788 = scmp.le.s32.totalorder 2, %s9
    // Predicated region
    $region37: #{agent_forward_pallas.6} parent=5 // pred_check
      %p789 = pneg %p788
    $region38: #{agent_forward_pallas.6} parent=5 // pred_check_branch
      %791 = sbr.rel (%p789) target = $region40
    $region39: #{agent_forward_pallas.6} parent=5 // pred_region
      %s792 = ssub.s32 %s9, 2
      // Predicated region
      $region41: #{agent_forward_pallas.6} parent=39 // pred_check
        %p793 = pneg %p106
      $region42: #{agent_forward_pallas.6} parent=39 // pred_check_branch
        %795 = sbr.rel (%p793) target = $region44
      $region43: #{agent_forward_pallas.6} parent=39 // pred_region
        %s796 = smul.u32 7, %s15
        %p797 = scmp.lt.s32.totalorder %s796, 13
        %s798 = scalar_select %p797, %s796, 13
        %s799 = smul.addr %s798, 4
        %s800 = scalar_lea.vmem %s3, %s799
      $region44: #{agent_forward_pallas.6} parent=39 // pred_fallthru
        _
    $region40: #{agent_forward_pallas.6} parent=5 // pred_fallthru
      _
  $region6: #{agent_forward_pallas.6} parent=0 // loop_footer
    %s13 = sadd.s32 1, %s9
  $region7: #{agent_forward_pallas.6} parent=0 // loop_footer_branch
    %8 = sbr.rel target = $region3
  $region8: #{agent_forward_pallas.6} parent=0 // loop_exit
    _

// kernel: agent_forward_pallas.7
$region0: #{agent_forward_pallas.7}
  #allocation0 [shape = 'u32[]', space=smem, size = 0x4, offset = 0x4, fixed_abs, tag = 'smem constant byte address 0x4 - core index']
  #allocation1 [shape = 'u32[72,128]{1,0:T(1,128)}', space=vmem, size = 0x9000, scoped, tag = 'internal scratch']
  %s0 = inlined_call_operand.vmem [shape: bf16[8,3200], index: 0, kind: input, shape index: {}]
  %s1 = inlined_call_operand.vmem [shape: bf16[3200,512], index: 1, kind: input, shape index: {}]
  %s2 = inlined_call_operand.vmem [shape: f32[1,512], index: 2, kind: input, shape index: {}]
  %s3 = inlined_call_operand.vmem [shape: bf16[512,128], index: 3, kind: input, shape index: {}]
  %s4 = inlined_call_operand.vmem [shape: f32[1,128], index: 4, kind: input, shape index: {}]
  %s5 = inlined_call_operand.vmem [shape: f32[8,512], index: 5, kind: output, shape index: {0}]
  %s6 = inlined_call_operand.vmem [shape: f32[8,128], index: 6, kind: output, shape index: {1}]
  %7 = xla_tuple %s5, %s6
  %s8 = sld [smem:[#allocation0]]
  $region38: #{agent_forward_pallas.7} parent=0
    _
  %s10 = ssub.s32 1, %s8
  %s11 = scalar_select 0, %s10, %s8
  // Predicated region
  $region2: #{agent_forward_pallas.7} parent=0 // pred_check
    _
  $region3: #{agent_forward_pallas.7} parent=0 // pred_check_branch
    %13 = sbr.rel (0) target = $region5
  $region4: #{agent_forward_pallas.7} parent=0 // pred_region
    _
  $region5: #{agent_forward_pallas.7} parent=0 // pred_fallthru
    _
  // Predicated region
  $region6: #{agent_forward_pallas.7} parent=0 // pred_check
    _
  $region7: #{agent_forward_pallas.7} parent=0 // pred_check_branch
    %15 = sbr.rel (0) target = $region9
  $region8: #{agent_forward_pallas.7} parent=0 // pred_region
    _
  $region9: #{agent_forward_pallas.7} parent=0 // pred_fallthru
    _
  // Predicated region
  $region10: #{agent_forward_pallas.7} parent=0 // pred_check
    _
  $region11: #{agent_forward_pallas.7} parent=0 // pred_check_branch
    %17 = sbr.rel (0) target = $region13
  $region12: #{agent_forward_pallas.7} parent=0 // pred_region
    _
  $region13: #{agent_forward_pallas.7} parent=0 // pred_fallthru
    _
  // Predicated region
  $region14: #{agent_forward_pallas.7} parent=0 // pred_check
    _
  $region15: #{agent_forward_pallas.7} parent=0 // pred_check_branch
    %19 = sbr.rel (0) target = $region17
  $region16: #{agent_forward_pallas.7} parent=0 // pred_region
    _
  $region17: #{agent_forward_pallas.7} parent=0 // pred_fallthru
    _
  // Predicated region
  $region18: #{agent_forward_pallas.7} parent=0 // pred_check
    _
  $region19: #{agent_forward_pallas.7} parent=0 // pred_check_branch
    %21 = sbr.rel (0) target = $region21
  $region20: #{agent_forward_pallas.7} parent=0 // pred_region
    _
  $region21: #{agent_forward_pallas.7} parent=0 // pred_fallthru
    _
  %v22 = vld [vmem:[%s0] sm:$0xff]
  %v23 = vld [vmem:[%s0 + $0x8] sm:$0xff]
  %v24 = vld [vmem:[%s0 + $0x10] sm:$0xff]
  %v25 = vld [vmem:[%s0 + $0x18] sm:$0xff]
  %v26 = vld [vmem:[%s0 + $0x20] sm:$0xff]
  %v27 = vld [vmem:[%s0 + $0x28] sm:$0xff]
  %v28 = vld [vmem:[%s0 + $0x30] sm:$0xff]
  %v29 = vld [vmem:[%s0 + $0x38] sm:$0xff]
  %v30 = vld [vmem:[%s0 + $0x40] sm:$0xff]
  %v31 = vld [vmem:[%s0 + $0x48] sm:$0xff]
  %v32 = vld [vmem:[%s0 + $0x50] sm:$0xff]
  %v33 = vld [vmem:[%s0 + $0x58] sm:$0xff]
  %v34 = vld [vmem:[%s0 + $0x60] sm:$0xf]
  %v35 = vld [vmem:[%s1] sm:$0xff]
  %v36 = vld [vmem:[%s1 + $0x8] sm:$0xff]
  %v37 = vld [vmem:[%s1 + $0x10] sm:$0xff]
  %v38 = vld [vmem:[%s1 + $0x18] sm:$0xff]
  %v39 = vld [vmem:[%s1 + $0x20] sm:$0xff]
  %v40 = vld [vmem:[%s1 + $0x28] sm:$0xff]
  %v41 = vld [vmem:[%s1 + $0x30] sm:$0xff]
  %v42 = vld [vmem:[%s1 + $0x38] sm:$0xff]
  %v43 = vld [vmem:[%s1 + $0x40] sm:$0xff]
  %v44 = vld [vmem:[%s1 + $0x48] sm:$0xff]
  %v45 = vld [vmem:[%s1 + $0x50] sm:$0xff]
  %v46 = vld [vmem:[%s1 + $0x58] sm:$0xff]
  %v47 = vld [vmem:[%s1 + $0x60] sm:$0xff]
  %v48 = vld [vmem:[%s1 + $0x68] sm:$0xff]
  %v49 = vld [vmem:[%s1 + $0x70] sm:$0xff]
  %v50 = vld [vmem:[%s1 + $0x78] sm:$0xff]
  %v51 = vld [vmem:[%s1 + $0x80] sm:$0xff]
  %v52 = vld [vmem:[%s1 + $0x88] sm:$0xff]
  %v53 = vld [vmem:[%s1 + $0x90] sm:$0xff]
  %v54 = vld [vmem:[%s1 + $0x98] sm:$0xff]
  %v55 = vld [vmem:[%s1 + $0xa0] sm:$0xff]
  %v56 = vld [vmem:[%s1 + $0xa8] sm:$0xff]
  %v57 = vld [vmem:[%s1 + $0xb0] sm:$0xff]
  %v58 = vld [vmem:[%s1 + $0xb8] sm:$0xff]
  %v59 = vld [vmem:[%s1 + $0xc0] sm:$0xff]
  %v60 = vld [vmem:[%s1 + $0xc8] sm:$0xff]
  %v61 = vld [vmem:[%s1 + $0xd0] sm:$0xff]
  %v62 = vld [vmem:[%s1 + $0xd8] sm:$0xff]
  %v63 = vld [vmem:[%s1 + $0xe0] sm:$0xff]
  %v64 = vld [vmem:[%s1 + $0xe8] sm:$0xff]
  %v65 = vld [vmem:[%s1 + $0xf0] sm:$0xff]
  %v66 = vld [vmem:[%s1 + $0xf8] sm:$0xff]
  %v67 = vld [vmem:[%s1 + $0x100] sm:$0xff]
  %v68 = vld [vmem:[%s1 + $0x108] sm:$0xff]
  %v69 = vld [vmem:[%s1 + $0x110] sm:$0xff]
  %v70 = vld [vmem:[%s1 + $0x118] sm:$0xff]
  %v71 = vld [vmem:[%s1 + $0x120] sm:$0xff]
  %v72 = vld [vmem:[%s1 + $0x128] sm:$0xff]
  %v73 = vld [vmem:[%s1 + $0x130] sm:$0xff]
  %v74 = vld [vmem:[%s1 + $0x138] sm:$0xff]
  %v75 = vld [vmem:[%s1 + $0x140] sm:$0xff]
  %v76 = vld [vmem:[%s1 + $0x148] sm:$0xff]
  %v77 = vld [vmem:[%s1 + $0x150] sm:$0xff]
  %v78 = vld [vmem:[%s1 + $0x158] sm:$0xff]
  %v79 = vld [vmem:[%s1 + $0x160] sm:$0xff]
  %v80 = vld [vmem:[%s1 + $0x168] sm:$0xff]
  %v81 = vld [vmem:[%s1 + $0x170] sm:$0xff]
  %v82 = vld [vmem:[%s1 + $0x178] sm:$0xff]
  %v83 = vld [vmem:[%s1 + $0x180] sm:$0xff]
  %v84 = vld [vmem:[%s1 + $0x188] sm:$0xff]
  %v85 = vld [vmem:[%s1 + $0x190] sm:$0xff]
  %v86 = vld [vmem:[%s1 + $0x198] sm:$0xff]
  %v87 = vld [vmem:[%s1 + $0x1a0] sm:$0xff]
  %v88 = vld [vmem:[%s1 + $0x1a8] sm:$0xff]
  %v89 = vld [vmem:[%s1 + $0x1b0] sm:$0xff]
  %v90 = vld [vmem:[%s1 + $0x1b8] sm:$0xff]
  %v91 = vld [vmem:[%s1 + $0x1c0] sm:$0xff]
  %v92 = vld [vmem:[%s1 + $0x1c8] sm:$0xff]
  %v93 = vld [vmem:[%s1 + $0x1d0] sm:$0xff]
  %v94 = vld [vmem:[%s1 + $0x1d8] sm:$0xff]
  %v95 = vld [vmem:[%s1 + $0x1e0] sm:$0xff]
  %v96 = vld [vmem:[%s1 + $0x1e8] sm:$0xff]
  %v97 = vld [vmem:[%s1 + $0x1f0] sm:$0xff]
  %v98 = vld [vmem:[%s1 + $0x1f8] sm:$0xff]
  %v99 = vld [vmem:[%s1 + $0x200] sm:$0xff]
  %v100 = vld [vmem:[%s1 + $0x208] sm:$0xff]
  %v101 = vld [vmem:[%s1 + $0x210] sm:$0xff]
  %v102 = vld [vmem:[%s1 + $0x218] sm:$0xff]
  %v103 = vld [vmem:[%s1 + $0x220] sm:$0xff]
  %v104 = vld [vmem:[%s1 + $0x228] sm:$0xff]
  %v105 = vld [vmem:[%s1 + $0x230] sm:$0xff]
  %v106 = vld [vmem:[%s1 + $0x238] sm:$0xff]
  %v107 = vld [vmem:[%s1 + $0x240] sm:$0xff]
  %v108 = vld [vmem:[%s1 + $0x248] sm:$0xff]
  %v109 = vld [vmem:[%s1 + $0x250] sm:$0xff]
  %v110 = vld [vmem:[%s1 + $0x258] sm:$0xff]
  %v111 = vld [vmem:[%s1 + $0x260] sm:$0xff]
  %v112 = vld [vmem:[%s1 + $0x268] sm:$0xff]
  %v113 = vld [vmem:[%s1 + $0x270] sm:$0xff]
  %v114 = vld [vmem:[%s1 + $0x278] sm:$0xff]
  %v115 = vld [vmem:[%s1 + $0x280] sm:$0xff]
  %v116 = vld [vmem:[%s1 + $0x288] sm:$0xff]
  %v117 = vld [vmem:[%s1 + $0x290] sm:$0xff]
  %v118 = vld [vmem:[%s1 + $0x298] sm:$0xff]
  %v119 = vld [vmem:[%s1 + $0x2a0] sm:$0xff]
  %v120 = vld [vmem:[%s1 + $0x2a8] sm:$0xff]
  %v121 = vld [vmem:[%s1 + $0x2b0] sm:$0xff]
  %v122 = vld [vmem:[%s1 + $0x2b8] sm:$0xff]
  %v123 = vld [vmem:[%s1 + $0x2c0] sm:$0xff]
  %v124 = vld [vmem:[%s1 + $0x2c8] sm:$0xff]
  %v125 = vld [vmem:[%s1 + $0x2d0] sm:$0xff]
  %v126 = vld [vmem:[%s1 + $0x2d8] sm:$0xff]
  %v127 = vld [vmem:[%s1 + $0x2e0] sm:$0xff]
  %v128 = vld [vmem:[%s1 + $0x2e8] sm:$0xff]
  %v129 = vld [vmem:[%s1 + $0x2f0] sm:$0xff]
  %v130 = vld [vmem:[%s1 + $0x2f8] sm:$0xff]
  %v131 = vld [vmem:[%s1 + $0x300] sm:$0xff]
  %v132 = vld [vmem:[%s1 + $0x308] sm:$0xff]
  %v133 = vld [vmem:[%s1 + $0x310] sm:$0xff]
  %v134 = vld [vmem:[%s1 + $0x318] sm:$0xff]
  %v135 = vld [vmem:[%s1 + $0x320] sm:$0xff]
  %v136 = vld [vmem:[%s1 + $0x328] sm:$0xff]
  %v137 = vld [vmem:[%s1 + $0x330] sm:$0xff]
  %v138 = vld [vmem:[%s1 + $0x338] sm:$0xff]
  %v139 = vld [vmem:[%s1 + $0x340] sm:$0xff]
  %v140 = vld [vmem:[%s1 + $0x348] sm:$0xff]
  %v141 = vld [vmem:[%s1 + $0x350] sm:$0xff]
  %v142 = vld [vmem:[%s1 + $0x358] sm:$0xff]
  %v143 = vld [vmem:[%s1 + $0x360] sm:$0xff]
  %v144 = vld [vmem:[%s1 + $0x368] sm:$0xff]
  %v145 = vld [vmem:[%s1 + $0x370] sm:$0xff]
  %v146 = vld [vmem:[%s1 + $0x378] sm:$0xff]
  %v147 = vld [vmem:[%s1 + $0x380] sm:$0xff]
  %v148 = vld [vmem:[%s1 + $0x388] sm:$0xff]
  %v149 = vld [vmem:[%s1 + $0x390] sm:$0xff]
  %v150 = vld [vmem:[%s1 + $0x398] sm:$0xff]
  %v151 = vld [vmem:[%s1 + $0x3a0] sm:$0xff]
  %v152 = vld [vmem:[%s1 + $0x3a8] sm:$0xff]
  %v153 = vld [vmem:[%s1 + $0x3b0] sm:$0xff]
  %v154 = vld [vmem:[%s1 + $0x3b8] sm:$0xff]
  %v155 = vld [vmem:[%s1 + $0x3c0] sm:$0xff]
  %v156 = vld [vmem:[%s1 + $0x3c8] sm:$0xff]
  %v157 = vld [vmem:[%s1 + $0x3d0] sm:$0xff]
  %v158 = vld [vmem:[%s1 + $0x3d8] sm:$0xff]
  %v159 = vld [vmem:[%s1 + $0x3e0] sm:$0xff]
  %v160 = vld [vmem:[%s1 + $0x3e8] sm:$0xff]
  %v161 = vld [vmem:[%s1 + $0x3f0] sm:$0xff]
  %v162 = vld [vmem:[%s1 + $0x3f8] sm:$0xff]
  %v163 = vld [vmem:[%s1 + $0x400] sm:$0xff]
  %v164 = vld [vmem:[%s1 + $0x408] sm:$0xff]
  %v165 = vld [vmem:[%s1 + $0x410] sm:$0xff]
  %v166 = vld [vmem:[%s1 + $0x418] sm:$0xff]
  %v167 = vld [vmem:[%s1 + $0x420] sm:$0xff]
  %v168 = vld [vmem:[%s1 + $0x428] sm:$0xff]
  %v169 = vld [vmem:[%s1 + $0x430] sm:$0xff]
  %v170 = vld [vmem:[%s1 + $0x438] sm:$0xff]
  %v171 = vld [vmem:[%s1 + $0x440] sm:$0xff]
  %v172 = vld [vmem:[%s1 + $0x448] sm:$0xff]
  %v173 = vld [vmem:[%s1 + $0x450] sm:$0xff]
  %v174 = vld [vmem:[%s1 + $0x458] sm:$0xff]
  %v175 = vld [vmem:[%s1 + $0x460] sm:$0xff]
  %v176 = vld [vmem:[%s1 + $0x468] sm:$0xff]
  %v177 = vld [vmem:[%s1 + $0x470] sm:$0xff]
  %v178 = vld [vmem:[%s1 + $0x478] sm:$0xff]
  %v179 = vld [vmem:[%s1 + $0x480] sm:$0xff]
  %v180 = vld [vmem:[%s1 + $0x488] sm:$0xff]
  %v181 = vld [vmem:[%s1 + $0x490] sm:$0xff]
  %v182 = vld [vmem:[%s1 + $0x498] sm:$0xff]
  %v183 = vld [vmem:[%s1 + $0x4a0] sm:$0xff]
  %v184 = vld [vmem:[%s1 + $0x4a8] sm:$0xff]
  %v185 = vld [vmem:[%s1 + $0x4b0] sm:$0xff]
  %v186 = vld [vmem:[%s1 + $0x4b8] sm:$0xff]
  %v187 = vld [vmem:[%s1 + $0x4c0] sm:$0xff]
  %v188 = vld [vmem:[%s1 + $0x4c8] sm:$0xff]
  %v189 = vld [vmem:[%s1 + $0x4d0] sm:$0xff]
  %v190 = vld [vmem:[%s1 + $0x4d8] sm:$0xff]
  %v191 = vld [vmem:[%s1 + $0x4e0] sm:$0xff]
  %v192 = vld [vmem:[%s1 + $0x4e8] sm:$0xff]
  %v193 = vld [vmem:[%s1 + $0x4f0] sm:$0xff]
  %v194 = vld [vmem:[%s1 + $0x4f8] sm:$0xff]
  %v195 = vld [vmem:[%s1 + $0x500] sm:$0xff]
  %v196 = vld [vmem:[%s1 + $0x508] sm:$0xff]
  %v197 = vld [vmem:[%s1 + $0x510] sm:$0xff]
  %v198 = vld [vmem:[%s1 + $0x518] sm:$0xff]
  %v199 = vld [vmem:[%s1 + $0x520] sm:$0xff]
  %v200 = vld [vmem:[%s1 + $0x528] sm:$0xff]
  %v201 = vld [vmem:[%s1 + $0x530] sm:$0xff]
  %v202 = vld [vmem:[%s1 + $0x538] sm:$0xff]
  %v203 = vld [vmem:[%s1 + $0x540] sm:$0xff]
  %v204 = vld [vmem:[%s1 + $0x548] sm:$0xff]
  %v205 = vld [vmem:[%s1 + $0x550] sm:$0xff]
  %v206 = vld [vmem:[%s1 + $0x558] sm:$0xff]
  %v207 = vld [vmem:[%s1 + $0x560] sm:$0xff]
  %v208 = vld [vmem:[%s1 + $0x568] sm:$0xff]
  %v209 = vld [vmem:[%s1 + $0x570] sm:$0xff]
  %v210 = vld [vmem:[%s1 + $0x578] sm:$0xff]
  %v211 = vld [vmem:[%s1 + $0x580] sm:$0xff]
  %v212 = vld [vmem:[%s1 + $0x588] sm:$0xff]
  %v213 = vld [vmem:[%s1 + $0x590] sm:$0xff]
  %v214 = vld [vmem:[%s1 + $0x598] sm:$0xff]
  %v215 = vld [vmem:[%s1 + $0x5a0] sm:$0xff]
  %v216 = vld [vmem:[%s1 + $0x5a8] sm:$0xff]
  %v217 = vld [vmem:[%s1 + $0x5b0] sm:$0xff]
  %v218 = vld [vmem:[%s1 + $0x5b8] sm:$0xff]
  %v219 = vld [vmem:[%s1 + $0x5c0] sm:$0xff]
  %v220 = vld [vmem:[%s1 + $0x5c8] sm:$0xff]
  %v221 = vld [vmem:[%s1 + $0x5d0] sm:$0xff]
  %v222 = vld [vmem:[%s1 + $0x5d8] sm:$0xff]
  %v223 = vld [vmem:[%s1 + $0x5e0] sm:$0xff]
  %v224 = vld [vmem:[%s1 + $0x5e8] sm:$0xff]
  %v225 = vld [vmem:[%s1 + $0x5f0] sm:$0xff]
  %v226 = vld [vmem:[%s1 + $0x5f8] sm:$0xff]
  %v227 = vld [vmem:[%s1 + $0x600] sm:$0xff]
  %v228 = vld [vmem:[%s1 + $0x608] sm:$0xff]
  %v229 = vld [vmem:[%s1 + $0x610] sm:$0xff]
  %v230 = vld [vmem:[%s1 + $0x618] sm:$0xff]
  %v231 = vld [vmem:[%s1 + $0x620] sm:$0xff]
  %v232 = vld [vmem:[%s1 + $0x628] sm:$0xff]
  %v233 = vld [vmem:[%s1 + $0x630] sm:$0xff]
  %v234 = vld [vmem:[%s1 + $0x638] sm:$0xff]
  %v235 = vld [vmem:[%s1 + $0x640] sm:$0xff]
  %v236 = vld [vmem:[%s1 + $0x648] sm:$0xff]
  %v237 = vld [vmem:[%s1 + $0x650] sm:$0xff]
  %v238 = vld [vmem:[%s1 + $0x658] sm:$0xff]
  %v239 = vld [vmem:[%s1 + $0x660] sm:$0xff]
  %v240 = vld [vmem:[%s1 + $0x668] sm:$0xff]
  %v241 = vld [vmem:[%s1 + $0x670] sm:$0xff]
  %v242 = vld [vmem:[%s1 + $0x678] sm:$0xff]
  %v243 = vld [vmem:[%s1 + $0x680] sm:$0xff]
  %v244 = vld [vmem:[%s1 + $0x688] sm:$0xff]
  %v245 = vld [vmem:[%s1 + $0x690] sm:$0xff]
  %v246 = vld [vmem:[%s1 + $0x698] sm:$0xff]
  %v247 = vld [vmem:[%s1 + $0x6a0] sm:$0xff]
  %v248 = vld [vmem:[%s1 + $0x6a8] sm:$0xff]
  %v249 = vld [vmem:[%s1 + $0x6b0] sm:$0xff]
  %v250 = vld [vmem:[%s1 + $0x6b8] sm:$0xff]
  %v251 = vld [vmem:[%s1 + $0x6c0] sm:$0xff]
  %v252 = vld [vmem:[%s1 + $0x6c8] sm:$0xff]
  %v253 = vld [vmem:[%s1 + $0x6d0] sm:$0xff]
  %v254 = vld [vmem:[%s1 + $0x6d8] sm:$0xff]
  %v255 = vld [vmem:[%s1 + $0x6e0] sm:$0xff]
  %v256 = vld [vmem:[%s1 + $0x6e8] sm:$0xff]
  %v257 = vld [vmem:[%s1 + $0x6f0] sm:$0xff]
  %v258 = vld [vmem:[%s1 + $0x6f8] sm:$0xff]
  %v259 = vld [vmem:[%s1 + $0x700] sm:$0xff]
  %v260 = vld [vmem:[%s1 + $0x708] sm:$0xff]
  %v261 = vld [vmem:[%s1 + $0x710] sm:$0xff]
  %v262 = vld [vmem:[%s1 + $0x718] sm:$0xff]
  %v263 = vld [vmem:[%s1 + $0x720] sm:$0xff]
  %v264 = vld [vmem:[%s1 + $0x728] sm:$0xff]
  %v265 = vld [vmem:[%s1 + $0x730] sm:$0xff]
  %v266 = vld [vmem:[%s1 + $0x738] sm:$0xff]
  %v267 = vld [vmem:[%s1 + $0x740] sm:$0xff]
  %v268 = vld [vmem:[%s1 + $0x748] sm:$0xff]
  %v269 = vld [vmem:[%s1 + $0x750] sm:$0xff]
  %v270 = vld [vmem:[%s1 + $0x758] sm:$0xff]
  %v271 = vld [vmem:[%s1 + $0x760] sm:$0xff]
  %v272 = vld [vmem:[%s1 + $0x768] sm:$0xff]
  %v273 = vld [vmem:[%s1 + $0x770] sm:$0xff]
  %v274 = vld [vmem:[%s1 + $0x778] sm:$0xff]
  %v275 = vld [vmem:[%s1 + $0x780] sm:$0xff]
  %v276 = vld [vmem:[%s1 + $0x788] sm:$0xff]
  %v277 = vld [vmem:[%s1 + $0x790] sm:$0xff]
  %v278 = vld [vmem:[%s1 + $0x798] sm:$0xff]
  %v279 = vld [vmem:[%s1 + $0x7a0] sm:$0xff]
  %v280 = vld [vmem:[%s1 + $0x7a8] sm:$0xff]
  %v281 = vld [vmem:[%s1 + $0x7b0] sm:$0xff]
  %v282 = vld [vmem:[%s1 + $0x7b8] sm:$0xff]
  %v283 = vld [vmem:[%s1 + $0x7c0] sm:$0xff]
  %v284 = vld [vmem:[%s1 + $0x7c8] sm:$0xff]
  %v285 = vld [vmem:[%s1 + $0x7d0] sm:$0xff]
  %v286 = vld [vmem:[%s1 + $0x7d8] sm:$0xff]
  %v287 = vld [vmem:[%s1 + $0x7e0] sm:$0xff]
  %v288 = vld [vmem:[%s1 + $0x7e8] sm:$0xff]
  %v289 = vld [vmem:[%s1 + $0x7f0] sm:$0xff]
  %v290 = vld [vmem:[%s1 + $0x7f8] sm:$0xff]
  %v291 = vld [vmem:[%s1 + $0x800] sm:$0xff]
  %v292 = vld [vmem:[%s1 + $0x808] sm:$0xff]
  %v293 = vld [vmem:[%s1 + $0x810] sm:$0xff]
  %v294 = vld [vmem:[%s1 + $0x818] sm:$0xff]
  %v295 = vld [vmem:[%s1 + $0x820] sm:$0xff]
  %v296 = vld [vmem:[%s1 + $0x828] sm:$0xff]
  %v297 = vld [vmem:[%s1 + $0x830] sm:$0xff]
  %v298 = vld [vmem:[%s1 + $0x838] sm:$0xff]
  %v299 = vld [vmem:[%s1 + $0x840] sm:$0xff]
  %v300 = vld [vmem:[%s1 + $0x848] sm:$0xff]
  %v301 = vld [vmem:[%s1 + $0x850] sm:$0xff]
  %v302 = vld [vmem:[%s1 + $0x858] sm:$0xff]
  %v303 = vld [vmem:[%s1 + $0x860] sm:$0xff]
  %v304 = vld [vmem:[%s1 + $0x868] sm:$0xff]
  %v305 = vld [vmem:[%s1 + $0x870] sm:$0xff]
  %v306 = vld [vmem:[%s1 + $0x878] sm:$0xff]
  %v307 = vld [vmem:[%s1 + $0x880] sm:$0xff]
  %v308 = vld [vmem:[%s1 + $0x888] sm:$0xff]
  %v309 = vld [vmem:[%s1 + $0x890] sm:$0xff]
  %v310 = vld [vmem:[%s1 + $0x898] sm:$0xff]
  %v311 = vld [vmem:[%s1 + $0x8a0] sm:$0xff]
  %v312 = vld [vmem:[%s1 + $0x8a8] sm:$0xff]
  %v313 = vld [vmem:[%s1 + $0x8b0] sm:$0xff]
  %v314 = vld [vmem:[%s1 + $0x8b8] sm:$0xff]
  %v315 = vld [vmem:[%s1 + $0x8c0] sm:$0xff]
  %v316 = vld [vmem:[%s1 + $0x8c8] sm:$0xff]
  %v317 = vld [vmem:[%s1 + $0x8d0] sm:$0xff]
  %v318 = vld [vmem:[%s1 + $0x8d8] sm:$0xff]
  %v319 = vld [vmem:[%s1 + $0x8e0] sm:$0xff]
  %v320 = vld [vmem:[%s1 + $0x8e8] sm:$0xff]
  %v321 = vld [vmem:[%s1 + $0x8f0] sm:$0xff]
  %v322 = vld [vmem:[%s1 + $0x8f8] sm:$0xff]
  %v323 = vld [vmem:[%s1 + $0x900] sm:$0xff]
  %v324 = vld [vmem:[%s1 + $0x908] sm:$0xff]
  %v325 = vld [vmem:[%s1 + $0x910] sm:$0xff]
  %v326 = vld [vmem:[%s1 + $0x918] sm:$0xff]
  %v327 = vld [vmem:[%s1 + $0x920] sm:$0xff]
  %v328 = vld [vmem:[%s1 + $0x928] sm:$0xff]
  %v329 = vld [vmem:[%s1 + $0x930] sm:$0xff]
  %v330 = vld [vmem:[%s1 + $0x938] sm:$0xff]
  %v331 = vld [vmem:[%s1 + $0x940] sm:$0xff]
  %v332 = vld [vmem:[%s1 + $0x948] sm:$0xff]
  %v333 = vld [vmem:[%s1 + $0x950] sm:$0xff]
  %v334 = vld [vmem:[%s1 + $0x958] sm:$0xff]
  %v335 = vld [vmem:[%s1 + $0x960] sm:$0xff]
  %v336 = vld [vmem:[%s1 + $0x968] sm:$0xff]
  %v337 = vld [vmem:[%s1 + $0x970] sm:$0xff]
  %v338 = vld [vmem:[%s1 + $0x978] sm:$0xff]
  %v339 = vld [vmem:[%s1 + $0x980] sm:$0xff]
  %v340 = vld [vmem:[%s1 + $0x988] sm:$0xff]
  %v341 = vld [vmem:[%s1 + $0x990] sm:$0xff]
  %v342 = vld [vmem:[%s1 + $0x998] sm:$0xff]
  %v343 = vld [vmem:[%s1 + $0x9a0] sm:$0xff]
  %v344 = vld [vmem:[%s1 + $0x9a8] sm:$0xff]
  %v345 = vld [vmem:[%s1 + $0x9b0] sm:$0xff]
  %v346 = vld [vmem:[%s1 + $0x9b8] sm:$0xff]
  %v347 = vld [vmem:[%s1 + $0x9c0] sm:$0xff]
  %v348 = vld [vmem:[%s1 + $0x9c8] sm:$0xff]
  %v349 = vld [vmem:[%s1 + $0x9d0] sm:$0xff]
  %v350 = vld [vmem:[%s1 + $0x9d8] sm:$0xff]
  %v351 = vld [vmem:[%s1 + $0x9e0] sm:$0xff]
  %v352 = vld [vmem:[%s1 + $0x9e8] sm:$0xff]
  %v353 = vld [vmem:[%s1 + $0x9f0] sm:$0xff]
  %v354 = vld [vmem:[%s1 + $0x9f8] sm:$0xff]
  %v355 = vld [vmem:[%s1 + $0xa00] sm:$0xff]
  %v356 = vld [vmem:[%s1 + $0xa08] sm:$0xff]
  %v357 = vld [vmem:[%s1 + $0xa10] sm:$0xff]
  %v358 = vld [vmem:[%s1 + $0xa18] sm:$0xff]
  %v359 = vld [vmem:[%s1 + $0xa20] sm:$0xff]
  %v360 = vld [vmem:[%s1 + $0xa28] sm:$0xff]
  %v361 = vld [vmem:[%s1 + $0xa30] sm:$0xff]
  %v362 = vld [vmem:[%s1 + $0xa38] sm:$0xff]
  %v363 = vld [vmem:[%s1 + $0xa40] sm:$0xff]
  %v364 = vld [vmem:[%s1 + $0xa48] sm:$0xff]
  %v365 = vld [vmem:[%s1 + $0xa50] sm:$0xff]
  %v366 = vld [vmem:[%s1 + $0xa58] sm:$0xff]
  %v367 = vld [vmem:[%s1 + $0xa60] sm:$0xff]
  %v368 = vld [vmem:[%s1 + $0xa68] sm:$0xff]
  %v369 = vld [vmem:[%s1 + $0xa70] sm:$0xff]
  %v370 = vld [vmem:[%s1 + $0xa78] sm:$0xff]
  %v371 = vld [vmem:[%s1 + $0xa80] sm:$0xff]
  %v372 = vld [vmem:[%s1 + $0xa88] sm:$0xff]
  %v373 = vld [vmem:[%s1 + $0xa90] sm:$0xff]
  %v374 = vld [vmem:[%s1 + $0xa98] sm:$0xff]
  %v375 = vld [vmem:[%s1 + $0xaa0] sm:$0xff]
  %v376 = vld [vmem:[%s1 + $0xaa8] sm:$0xff]
  %v377 = vld [vmem:[%s1 + $0xab0] sm:$0xff]
  %v378 = vld [vmem:[%s1 + $0xab8] sm:$0xff]
  %v379 = vld [vmem:[%s1 + $0xac0] sm:$0xff]
  %v380 = vld [vmem:[%s1 + $0xac8] sm:$0xff]
  %v381 = vld [vmem:[%s1 + $0xad0] sm:$0xff]
  %v382 = vld [vmem:[%s1 + $0xad8] sm:$0xff]
  %v383 = vld [vmem:[%s1 + $0xae0] sm:$0xff]
  %v384 = vld [vmem:[%s1 + $0xae8] sm:$0xff]
  %v385 = vld [vmem:[%s1 + $0xaf0] sm:$0xff]
  %v386 = vld [vmem:[%s1 + $0xaf8] sm:$0xff]
  %v387 = vld [vmem:[%s1 + $0xb00] sm:$0xff]
  %v388 = vld [vmem:[%s1 + $0xb08] sm:$0xff]
  %v389 = vld [vmem:[%s1 + $0xb10] sm:$0xff]
  %v390 = vld [vmem:[%s1 + $0xb18] sm:$0xff]
  %v391 = vld [vmem:[%s1 + $0xb20] sm:$0xff]
  %v392 = vld [vmem:[%s1 + $0xb28] sm:$0xff]
  %v393 = vld [vmem:[%s1 + $0xb30] sm:$0xff]
  %v394 = vld [vmem:[%s1 + $0xb38] sm:$0xff]
  %v395 = vld [vmem:[%s1 + $0xb40] sm:$0xff]
  %v396 = vld [vmem:[%s1 + $0xb48] sm:$0xff]
  %v397 = vld [vmem:[%s1 + $0xb50] sm:$0xff]
  %v398 = vld [vmem:[%s1 + $0xb58] sm:$0xff]
  %v399 = vld [vmem:[%s1 + $0xb60] sm:$0xff]
  %v400 = vld [vmem:[%s1 + $0xb68] sm:$0xff]
  %v401 = vld [vmem:[%s1 + $0xb70] sm:$0xff]
  %v402 = vld [vmem:[%s1 + $0xb78] sm:$0xff]
  %v403 = vld [vmem:[%s1 + $0xb80] sm:$0xff]
  %v404 = vld [vmem:[%s1 + $0xb88] sm:$0xff]
  %v405 = vld [vmem:[%s1 + $0xb90] sm:$0xff]
  %v406 = vld [vmem:[%s1 + $0xb98] sm:$0xff]
  %v407 = vld [vmem:[%s1 + $0xba0] sm:$0xff]
  %v408 = vld [vmem:[%s1 + $0xba8] sm:$0xff]
  %v409 = vld [vmem:[%s1 + $0xbb0] sm:$0xff]
  %v410 = vld [vmem:[%s1 + $0xbb8] sm:$0xff]
  %v411 = vld [vmem:[%s1 + $0xbc0] sm:$0xff]
  %v412 = vld [vmem:[%s1 + $0xbc8] sm:$0xff]
  %v413 = vld [vmem:[%s1 + $0xbd0] sm:$0xff]
  %v414 = vld [vmem:[%s1 + $0xbd8] sm:$0xff]
  %v415 = vld [vmem:[%s1 + $0xbe0] sm:$0xff]
  %v416 = vld [vmem:[%s1 + $0xbe8] sm:$0xff]
  %v417 = vld [vmem:[%s1 + $0xbf0] sm:$0xff]
  %v418 = vld [vmem:[%s1 + $0xbf8] sm:$0xff]
  %v419 = vld [vmem:[%s1 + $0xc00] sm:$0xff]
  %v420 = vld [vmem:[%s1 + $0xc08] sm:$0xff]
  %v421 = vld [vmem:[%s1 + $0xc10] sm:$0xff]
  %v422 = vld [vmem:[%s1 + $0xc18] sm:$0xff]
  %v423 = vld [vmem:[%s1 + $0xc20] sm:$0xff]
  %v424 = vld [vmem:[%s1 + $0xc28] sm:$0xff]
  %v425 = vld [vmem:[%s1 + $0xc30] sm:$0xff]
  %v426 = vld [vmem:[%s1 + $0xc38] sm:$0xff]
  %v427 = vld [vmem:[%s1 + $0xc40] sm:$0xff]
  %v428 = vld [vmem:[%s1 + $0xc48] sm:$0xff]
  %v429 = vld [vmem:[%s1 + $0xc50] sm:$0xff]
  %v430 = vld [vmem:[%s1 + $0xc58] sm:$0xff]
  %v431 = vld [vmem:[%s1 + $0xc60] sm:$0xff]
  %v432 = vld [vmem:[%s1 + $0xc68] sm:$0xff]
  %v433 = vld [vmem:[%s1 + $0xc70] sm:$0xff]
  %v434 = vld [vmem:[%s1 + $0xc78] sm:$0xff]
  %v435 = vld [vmem:[%s1 + $0xc80] sm:$0xff]
  %v436 = vld [vmem:[%s1 + $0xc88] sm:$0xff]
  %v437 = vld [vmem:[%s1 + $0xc90] sm:$0xff]
  %v438 = vld [vmem:[%s1 + $0xc98] sm:$0xff]
  %v439 = vld [vmem:[%s1 + $0xca0] sm:$0xff]
  %v440 = vld [vmem:[%s1 + $0xca8] sm:$0xff]
  %v441 = vld [vmem:[%s1 + $0xcb0] sm:$0xff]
  %v442 = vld [vmem:[%s1 + $0xcb8] sm:$0xff]
  %v443 = vld [vmem:[%s1 + $0xcc0] sm:$0xff]
  %v444 = vld [vmem:[%s1 + $0xcc8] sm:$0xff]
  %v445 = vld [vmem:[%s1 + $0xcd0] sm:$0xff]
  %v446 = vld [vmem:[%s1 + $0xcd8] sm:$0xff]
  %v447 = vld [vmem:[%s1 + $0xce0] sm:$0xff]
  %v448 = vld [vmem:[%s1 + $0xce8] sm:$0xff]
  %v449 = vld [vmem:[%s1 + $0xcf0] sm:$0xff]
  %v450 = vld [vmem:[%s1 + $0xcf8] sm:$0xff]
  %v451 = vld [vmem:[%s1 + $0xd00] sm:$0xff]
  %v452 = vld [vmem:[%s1 + $0xd08] sm:$0xff]
  %v453 = vld [vmem:[%s1 + $0xd10] sm:$0xff]
  %v454 = vld [vmem:[%s1 + $0xd18] sm:$0xff]
  %v455 = vld [vmem:[%s1 + $0xd20] sm:$0xff]
  %v456 = vld [vmem:[%s1 + $0xd28] sm:$0xff]
  %v457 = vld [vmem:[%s1 + $0xd30] sm:$0xff]
  %v458 = vld [vmem:[%s1 + $0xd38] sm:$0xff]
  %v459 = vld [vmem:[%s1 + $0xd40] sm:$0xff]
  %v460 = vld [vmem:[%s1 + $0xd48] sm:$0xff]
  %v461 = vld [vmem:[%s1 + $0xd50] sm:$0xff]
  %v462 = vld [vmem:[%s1 + $0xd58] sm:$0xff]
  %v463 = vld [vmem:[%s1 + $0xd60] sm:$0xff]
  %v464 = vld [vmem:[%s1 + $0xd68] sm:$0xff]
  %v465 = vld [vmem:[%s1 + $0xd70] sm:$0xff]
  %v466 = vld [vmem:[%s1 + $0xd78] sm:$0xff]
  %v467 = vld [vmem:[%s1 + $0xd80] sm:$0xff]
  %v468 = vld [vmem:[%s1 + $0xd88] sm:$0xff]
  %v469 = vld [vmem:[%s1 + $0xd90] sm:$0xff]
  %v470 = vld [vmem:[%s1 + $0xd98] sm:$0xff]
  %v471 = vld [vmem:[%s1 + $0xda0] sm:$0xff]
  %v472 = vld [vmem:[%s1 + $0xda8] sm:$0xff]
  %v473 = vld [vmem:[%s1 + $0xdb0] sm:$0xff]
  %v474 = vld [vmem:[%s1 + $0xdb8] sm:$0xff]
  %v475 = vld [vmem:[%s1 + $0xdc0] sm:$0xff]
  %v476 = vld [vmem:[%s1 + $0xdc8] sm:$0xff]
  %v477 = vld [vmem:[%s1 + $0xdd0] sm:$0xff]
  %v478 = vld [vmem:[%s1 + $0xdd8] sm:$0xff]
  %v479 = vld [vmem:[%s1 + $0xde0] sm:$0xff]
  %v480 = vld [vmem:[%s1 + $0xde8] sm:$0xff]
  %v481 = vld [vmem:[%s1 + $0xdf0] sm:$0xff]
  %v482 = vld [vmem:[%s1 + $0xdf8] sm:$0xff]
  %v483 = vld [vmem:[%s1 + $0xe00] sm:$0xff]
  %v484 = vld [vmem:[%s1 + $0xe08] sm:$0xff]
  %v485 = vld [vmem:[%s1 + $0xe10] sm:$0xff]
  %v486 = vld [vmem:[%s1 + $0xe18] sm:$0xff]
  %v487 = vld [vmem:[%s1 + $0xe20] sm:$0xff]
  %v488 = vld [vmem:[%s1 + $0xe28] sm:$0xff]
  %v489 = vld [vmem:[%s1 + $0xe30] sm:$0xff]
  %v490 = vld [vmem:[%s1 + $0xe38] sm:$0xff]
  %v491 = vld [vmem:[%s1 + $0xe40] sm:$0xff]
  %v492 = vld [vmem:[%s1 + $0xe48] sm:$0xff]
  %v493 = vld [vmem:[%s1 + $0xe50] sm:$0xff]
  %v494 = vld [vmem:[%s1 + $0xe58] sm:$0xff]
  %v495 = vld [vmem:[%s1 + $0xe60] sm:$0xff]
  %v496 = vld [vmem:[%s1 + $0xe68] sm:$0xff]
  %v497 = vld [vmem:[%s1 + $0xe70] sm:$0xff]
  %v498 = vld [vmem:[%s1 + $0xe78] sm:$0xff]
  %v499 = vld [vmem:[%s1 + $0xe80] sm:$0xff]
  %v500 = vld [vmem:[%s1 + $0xe88] sm:$0xff]
  %v501 = vld [vmem:[%s1 + $0xe90] sm:$0xff]
  %v502 = vld [vmem:[%s1 + $0xe98] sm:$0xff]
  %v503 = vld [vmem:[%s1 + $0xea0] sm:$0xff]
  %v504 = vld [vmem:[%s1 + $0xea8] sm:$0xff]
  %v505 = vld [vmem:[%s1 + $0xeb0] sm:$0xff]
  %v506 = vld [vmem:[%s1 + $0xeb8] sm:$0xff]
  %v507 = vld [vmem:[%s1 + $0xec0] sm:$0xff]
  %v508 = vld [vmem:[%s1 + $0xec8] sm:$0xff]
  %v509 = vld [vmem:[%s1 + $0xed0] sm:$0xff]
  %v510 = vld [vmem:[%s1 + $0xed8] sm:$0xff]
  %v511 = vld [vmem:[%s1 + $0xee0] sm:$0xff]
  %v512 = vld [vmem:[%s1 + $0xee8] sm:$0xff]
  %v513 = vld [vmem:[%s1 + $0xef0] sm:$0xff]
  %v514 = vld [vmem:[%s1 + $0xef8] sm:$0xff]
  %v515 = vld [vmem:[%s1 + $0xf00] sm:$0xff]
  %v516 = vld [vmem:[%s1 + $0xf08] sm:$0xff]
  %v517 = vld [vmem:[%s1 + $0xf10] sm:$0xff]
  %v518 = vld [vmem:[%s1 + $0xf18] sm:$0xff]
  %v519 = vld [vmem:[%s1 + $0xf20] sm:$0xff]
  %v520 = vld [vmem:[%s1 + $0xf28] sm:$0xff]
  %v521 = vld [vmem:[%s1 + $0xf30] sm:$0xff]
  %v522 = vld [vmem:[%s1 + $0xf38] sm:$0xff]
  %v523 = vld [vmem:[%s1 + $0xf40] sm:$0xff]
  %v524 = vld [vmem:[%s1 + $0xf48] sm:$0xff]
  %v525 = vld [vmem:[%s1 + $0xf50] sm:$0xff]
  %v526 = vld [vmem:[%s1 + $0xf58] sm:$0xff]
  %v527 = vld [vmem:[%s1 + $0xf60] sm:$0xff]
  %v528 = vld [vmem:[%s1 + $0xf68] sm:$0xff]
  %v529 = vld [vmem:[%s1 + $0xf70] sm:$0xff]
  %v530 = vld [vmem:[%s1 + $0xf78] sm:$0xff]
  %v531 = vld [vmem:[%s1 + $0xf80] sm:$0xff]
  %v532 = vld [vmem:[%s1 + $0xf88] sm:$0xff]
  %v533 = vld [vmem:[%s1 + $0xf90] sm:$0xff]
  %v534 = vld [vmem:[%s1 + $0xf98] sm:$0xff]
  %v535 = vld [vmem:[%s1 + $0xfa0] sm:$0xff]
  %v536 = vld [vmem:[%s1 + $0xfa8] sm:$0xff]
  %v537 = vld [vmem:[%s1 + $0xfb0] sm:$0xff]
  %v538 = vld [vmem:[%s1 + $0xfb8] sm:$0xff]
  %v539 = vld [vmem:[%s1 + $0xfc0] sm:$0xff]
  %v540 = vld [vmem:[%s1 + $0xfc8] sm:$0xff]
  %v541 = vld [vmem:[%s1 + $0xfd0] sm:$0xff]
  %v542 = vld [vmem:[%s1 + $0xfd8] sm:$0xff]
  %v543 = vld [vmem:[%s1 + $0xfe0] sm:$0xff]
  %v544 = vld [vmem:[%s1 + $0xfe8] sm:$0xff]
  %v545 = vld [vmem:[%s1 + $0xff0] sm:$0xff]
  %v546 = vld [vmem:[%s1 + $0xff8] sm:$0xff]
  %v547 = vld [vmem:[%s1 + $0x1000] sm:$0xff]
  %v548 = vld [vmem:[%s1 + $0x1008] sm:$0xff]
  %v549 = vld [vmem:[%s1 + $0x1010] sm:$0xff]
  %v550 = vld [vmem:[%s1 + $0x1018] sm:$0xff]
  %v551 = vld [vmem:[%s1 + $0x1020] sm:$0xff]
  %v552 = vld [vmem:[%s1 + $0x1028] sm:$0xff]
  %v553 = vld [vmem:[%s1 + $0x1030] sm:$0xff]
  %v554 = vld [vmem:[%s1 + $0x1038] sm:$0xff]
  %v555 = vld [vmem:[%s1 + $0x1040] sm:$0xff]
  %v556 = vld [vmem:[%s1 + $0x1048] sm:$0xff]
  %v557 = vld [vmem:[%s1 + $0x1050] sm:$0xff]
  %v558 = vld [vmem:[%s1 + $0x1058] sm:$0xff]
  %v559 = vld [vmem:[%s1 + $0x1060] sm:$0xff]
  %v560 = vld [vmem:[%s1 + $0x1068] sm:$0xff]
  %v561 = vld [vmem:[%s1 + $0x1070] sm:$0xff]
  %v562 = vld [vmem:[%s1 + $0x1078] sm:$0xff]
  %v563 = vld [vmem:[%s1 + $0x1080] sm:$0xff]
  %v564 = vld [vmem:[%s1 + $0x1088] sm:$0xff]
  %v565 = vld [vmem:[%s1 + $0x1090] sm:$0xff]
  %v566 = vld [vmem:[%s1 + $0x1098] sm:$0xff]
  %v567 = vld [vmem:[%s1 + $0x10a0] sm:$0xff]
  %v568 = vld [vmem:[%s1 + $0x10a8] sm:$0xff]
  %v569 = vld [vmem:[%s1 + $0x10b0] sm:$0xff]
  %v570 = vld [vmem:[%s1 + $0x10b8] sm:$0xff]
  %v571 = vld [vmem:[%s1 + $0x10c0] sm:$0xff]
  %v572 = vld [vmem:[%s1 + $0x10c8] sm:$0xff]
  %v573 = vld [vmem:[%s1 + $0x10d0] sm:$0xff]
  %v574 = vld [vmem:[%s1 + $0x10d8] sm:$0xff]
  %v575 = vld [vmem:[%s1 + $0x10e0] sm:$0xff]
  %v576 = vld [vmem:[%s1 + $0x10e8] sm:$0xff]
  %v577 = vld [vmem:[%s1 + $0x10f0] sm:$0xff]
  %v578 = vld [vmem:[%s1 + $0x10f8] sm:$0xff]
  %v579 = vld [vmem:[%s1 + $0x1100] sm:$0xff]
  %v580 = vld [vmem:[%s1 + $0x1108] sm:$0xff]
  %v581 = vld [vmem:[%s1 + $0x1110] sm:$0xff]
  %v582 = vld [vmem:[%s1 + $0x1118] sm:$0xff]
  %v583 = vld [vmem:[%s1 + $0x1120] sm:$0xff]
  %v584 = vld [vmem:[%s1 + $0x1128] sm:$0xff]
  %v585 = vld [vmem:[%s1 + $0x1130] sm:$0xff]
  %v586 = vld [vmem:[%s1 + $0x1138] sm:$0xff]
  %v587 = vld [vmem:[%s1 + $0x1140] sm:$0xff]
  %v588 = vld [vmem:[%s1 + $0x1148] sm:$0xff]
  %v589 = vld [vmem:[%s1 + $0x1150] sm:$0xff]
  %v590 = vld [vmem:[%s1 + $0x1158] sm:$0xff]
  %v591 = vld [vmem:[%s1 + $0x1160] sm:$0xff]
  %v592 = vld [vmem:[%s1 + $0x1168] sm:$0xff]
  %v593 = vld [vmem:[%s1 + $0x1170] sm:$0xff]
  %v594 = vld [vmem:[%s1 + $0x1178] sm:$0xff]
  %v595 = vld [vmem:[%s1 + $0x1180] sm:$0xff]
  %v596 = vld [vmem:[%s1 + $0x1188] sm:$0xff]
  %v597 = vld [vmem:[%s1 + $0x1190] sm:$0xff]
  %v598 = vld [vmem:[%s1 + $0x1198] sm:$0xff]
  %v599 = vld [vmem:[%s1 + $0x11a0] sm:$0xff]
  %v600 = vld [vmem:[%s1 + $0x11a8] sm:$0xff]
  %v601 = vld [vmem:[%s1 + $0x11b0] sm:$0xff]
  %v602 = vld [vmem:[%s1 + $0x11b8] sm:$0xff]
  %v603 = vld [vmem:[%s1 + $0x11c0] sm:$0xff]
  %v604 = vld [vmem:[%s1 + $0x11c8] sm:$0xff]
  %v605 = vld [vmem:[%s1 + $0x11d0] sm:$0xff]
  %v606 = vld [vmem:[%s1 + $0x11d8] sm:$0xff]
  %v607 = vld [vmem:[%s1 + $0x11e0] sm:$0xff]
  %v608 = vld [vmem:[%s1 + $0x11e8] sm:$0xff]
  %v609 = vld [vmem:[%s1 + $0x11f0] sm:$0xff]
  %v610 = vld [vmem:[%s1 + $0x11f8] sm:$0xff]
  %v611 = vld [vmem:[%s1 + $0x1200] sm:$0xff]
  %v612 = vld [vmem:[%s1 + $0x1208] sm:$0xff]
  %v613 = vld [vmem:[%s1 + $0x1210] sm:$0xff]
  %v614 = vld [vmem:[%s1 + $0x1218] sm:$0xff]
  %v615 = vld [vmem:[%s1 + $0x1220] sm:$0xff]
  %v616 = vld [vmem:[%s1 + $0x1228] sm:$0xff]
  %v617 = vld [vmem:[%s1 + $0x1230] sm:$0xff]
  %v618 = vld [vmem:[%s1 + $0x1238] sm:$0xff]
  %v619 = vld [vmem:[%s1 + $0x1240] sm:$0xff]
  %v620 = vld [vmem:[%s1 + $0x1248] sm:$0xff]
  %v621 = vld [vmem:[%s1 + $0x1250] sm:$0xff]
  %v622 = vld [vmem:[%s1 + $0x1258] sm:$0xff]
  %v623 = vld [vmem:[%s1 + $0x1260] sm:$0xff]
  %v624 = vld [vmem:[%s1 + $0x1268] sm:$0xff]
  %v625 = vld [vmem:[%s1 + $0x1270] sm:$0xff]
  %v626 = vld [vmem:[%s1 + $0x1278] sm:$0xff]
  %v627 = vld [vmem:[%s1 + $0x1280] sm:$0xff]
  %v628 = vld [vmem:[%s1 + $0x1288] sm:$0xff]
  %v629 = vld [vmem:[%s1 + $0x1290] sm:$0xff]
  %v630 = vld [vmem:[%s1 + $0x1298] sm:$0xff]
  %v631 = vld [vmem:[%s1 + $0x12a0] sm:$0xff]
  %v632 = vld [vmem:[%s1 + $0x12a8] sm:$0xff]
  %v633 = vld [vmem:[%s1 + $0x12b0] sm:$0xff]
  %v634 = vld [vmem:[%s1 + $0x12b8] sm:$0xff]
  %v635 = vld [vmem:[%s1 + $0x12c0] sm:$0xff]
  %v636 = vld [vmem:[%s1 + $0x12c8] sm:$0xff]
  %v637 = vld [vmem:[%s1 + $0x12d0] sm:$0xff]
  %v638 = vld [vmem:[%s1 + $0x12d8] sm:$0xff]
  %v639 = vld [vmem:[%s1 + $0x12e0] sm:$0xff]
  %v640 = vld [vmem:[%s1 + $0x12e8] sm:$0xff]
  %v641 = vld [vmem:[%s1 + $0x12f0] sm:$0xff]
  %v642 = vld [vmem:[%s1 + $0x12f8] sm:$0xff]
  %v643 = vld [vmem:[%s1 + $0x1300] sm:$0xff]
  %v644 = vld [vmem:[%s1 + $0x1308] sm:$0xff]
  %v645 = vld [vmem:[%s1 + $0x1310] sm:$0xff]
  %v646 = vld [vmem:[%s1 + $0x1318] sm:$0xff]
  %v647 = vld [vmem:[%s1 + $0x1320] sm:$0xff]
  %v648 = vld [vmem:[%s1 + $0x1328] sm:$0xff]
  %v649 = vld [vmem:[%s1 + $0x1330] sm:$0xff]
  %v650 = vld [vmem:[%s1 + $0x1338] sm:$0xff]
  %v651 = vld [vmem:[%s1 + $0x1340] sm:$0xff]
  %v652 = vld [vmem:[%s1 + $0x1348] sm:$0xff]
  %v653 = vld [vmem:[%s1 + $0x1350] sm:$0xff]
  %v654 = vld [vmem:[%s1 + $0x1358] sm:$0xff]
  %v655 = vld [vmem:[%s1 + $0x1360] sm:$0xff]
  %v656 = vld [vmem:[%s1 + $0x1368] sm:$0xff]
  %v657 = vld [vmem:[%s1 + $0x1370] sm:$0xff]
  %v658 = vld [vmem:[%s1 + $0x1378] sm:$0xff]
  %v659 = vld [vmem:[%s1 + $0x1380] sm:$0xff]
  %v660 = vld [vmem:[%s1 + $0x1388] sm:$0xff]
  %v661 = vld [vmem:[%s1 + $0x1390] sm:$0xff]
  %v662 = vld [vmem:[%s1 + $0x1398] sm:$0xff]
  %v663 = vld [vmem:[%s1 + $0x13a0] sm:$0xff]
  %v664 = vld [vmem:[%s1 + $0x13a8] sm:$0xff]
  %v665 = vld [vmem:[%s1 + $0x13b0] sm:$0xff]
  %v666 = vld [vmem:[%s1 + $0x13b8] sm:$0xff]
  %v667 = vld [vmem:[%s1 + $0x13c0] sm:$0xff]
  %v668 = vld [vmem:[%s1 + $0x13c8] sm:$0xff]
  %v669 = vld [vmem:[%s1 + $0x13d0] sm:$0xff]
  %v670 = vld [vmem:[%s1 + $0x13d8] sm:$0xff]
  %v671 = vld [vmem:[%s1 + $0x13e0] sm:$0xff]
  %v672 = vld [vmem:[%s1 + $0x13e8] sm:$0xff]
  %v673 = vld [vmem:[%s1 + $0x13f0] sm:$0xff]
  %v674 = vld [vmem:[%s1 + $0x13f8] sm:$0xff]
  %v675 = vld [vmem:[%s1 + $0x1400] sm:$0xff]
  %v676 = vld [vmem:[%s1 + $0x1408] sm:$0xff]
  %v677 = vld [vmem:[%s1 + $0x1410] sm:$0xff]
  %v678 = vld [vmem:[%s1 + $0x1418] sm:$0xff]
  %v679 = vld [vmem:[%s1 + $0x1420] sm:$0xff]
  %v680 = vld [vmem:[%s1 + $0x1428] sm:$0xff]
  %v681 = vld [vmem:[%s1 + $0x1430] sm:$0xff]
  %v682 = vld [vmem:[%s1 + $0x1438] sm:$0xff]
  %v683 = vld [vmem:[%s1 + $0x1440] sm:$0xff]
  %v684 = vld [vmem:[%s1 + $0x1448] sm:$0xff]
  %v685 = vld [vmem:[%s1 + $0x1450] sm:$0xff]
  %v686 = vld [vmem:[%s1 + $0x1458] sm:$0xff]
  %v687 = vld [vmem:[%s1 + $0x1460] sm:$0xff]
  %v688 = vld [vmem:[%s1 + $0x1468] sm:$0xff]
  %v689 = vld [vmem:[%s1 + $0x1470] sm:$0xff]
  %v690 = vld [vmem:[%s1 + $0x1478] sm:$0xff]
  %v691 = vld [vmem:[%s1 + $0x1480] sm:$0xff]
  %v692 = vld [vmem:[%s1 + $0x1488] sm:$0xff]
  %v693 = vld [vmem:[%s1 + $0x1490] sm:$0xff]
  %v694 = vld [vmem:[%s1 + $0x1498] sm:$0xff]
  %v695 = vld [vmem:[%s1 + $0x14a0] sm:$0xff]
  %v696 = vld [vmem:[%s1 + $0x14a8] sm:$0xff]
  %v697 = vld [vmem:[%s1 + $0x14b0] sm:$0xff]
  %v698 = vld [vmem:[%s1 + $0x14b8] sm:$0xff]
  %v699 = vld [vmem:[%s1 + $0x14c0] sm:$0xff]
  %v700 = vld [vmem:[%s1 + $0x14c8] sm:$0xff]
  %v701 = vld [vmem:[%s1 + $0x14d0] sm:$0xff]
  %v702 = vld [vmem:[%s1 + $0x14d8] sm:$0xff]
  %v703 = vld [vmem:[%s1 + $0x14e0] sm:$0xff]
  %v704 = vld [vmem:[%s1 + $0x14e8] sm:$0xff]
  %v705 = vld [vmem:[%s1 + $0x14f0] sm:$0xff]
  %v706 = vld [vmem:[%s1 + $0x14f8] sm:$0xff]
  %v707 = vld [vmem:[%s1 + $0x1500] sm:$0xff]
  %v708 = vld [vmem:[%s1 + $0x1508] sm:$0xff]
  %v709 = vld [vmem:[%s1 + $0x1510] sm:$0xff]
  %v710 = vld [vmem:[%s1 + $0x1518] sm:$0xff]
  %v711 = vld [vmem:[%s1 + $0x1520] sm:$0xff]
  %v712 = vld [vmem:[%s1 + $0x1528] sm:$0xff]
  %v713 = vld [vmem:[%s1 + $0x1530] sm:$0xff]
  %v714 = vld [vmem:[%s1 + $0x1538] sm:$0xff]
  %v715 = vld [vmem:[%s1 + $0x1540] sm:$0xff]
  %v716 = vld [vmem:[%s1 + $0x1548] sm:$0xff]
  %v717 = vld [vmem:[%s1 + $0x1550] sm:$0xff]
  %v718 = vld [vmem:[%s1 + $0x1558] sm:$0xff]
  %v719 = vld [vmem:[%s1 + $0x1560] sm:$0xff]
  %v720 = vld [vmem:[%s1 + $0x1568] sm:$0xff]
  %v721 = vld [vmem:[%s1 + $0x1570] sm:$0xff]
  %v722 = vld [vmem:[%s1 + $0x1578] sm:$0xff]
  %v723 = vld [vmem:[%s1 + $0x1580] sm:$0xff]
  %v724 = vld [vmem:[%s1 + $0x1588] sm:$0xff]
  %v725 = vld [vmem:[%s1 + $0x1590] sm:$0xff]
  %v726 = vld [vmem:[%s1 + $0x1598] sm:$0xff]
  %v727 = vld [vmem:[%s1 + $0x15a0] sm:$0xff]
  %v728 = vld [vmem:[%s1 + $0x15a8] sm:$0xff]
  %v729 = vld [vmem:[%s1 + $0x15b0] sm:$0xff]
  %v730 = vld [vmem:[%s1 + $0x15b8] sm:$0xff]
  %v731 = vld [vmem:[%s1 + $0x15c0] sm:$0xff]
  %v732 = vld [vmem:[%s1 + $0x15c8] sm:$0xff]
  %v733 = vld [vmem:[%s1 + $0x15d0] sm:$0xff]
  %v734 = vld [vmem:[%s1 + $0x15d8] sm:$0xff]
  %v735 = vld [vmem:[%s1 + $0x15e0] sm:$0xff]
  %v736 = vld [vmem:[%s1 + $0x15e8] sm:$0xff]
  %v737 = vld [vmem:[%s1 + $0x15f0] sm:$0xff]
  %v738 = vld [vmem:[%s1 + $0x15f8] sm:$0xff]
  %v739 = vld [vmem:[%s1 + $0x1600] sm:$0xff]
  %v740 = vld [vmem:[%s1 + $0x1608] sm:$0xff]
  %v741 = vld [vmem:[%s1 + $0x1610] sm:$0xff]
  %v742 = vld [vmem:[%s1 + $0x1618] sm:$0xff]
  %v743 = vld [vmem:[%s1 + $0x1620] sm:$0xff]
  %v744 = vld [vmem:[%s1 + $0x1628] sm:$0xff]
  %v745 = vld [vmem:[%s1 + $0x1630] sm:$0xff]
  %v746 = vld [vmem:[%s1 + $0x1638] sm:$0xff]
  %v747 = vld [vmem:[%s1 + $0x1640] sm:$0xff]
  %v748 = vld [vmem:[%s1 + $0x1648] sm:$0xff]
  %v749 = vld [vmem:[%s1 + $0x1650] sm:$0xff]
  %v750 = vld [vmem:[%s1 + $0x1658] sm:$0xff]
  %v751 = vld [vmem:[%s1 + $0x1660] sm:$0xff]
  %v752 = vld [vmem:[%s1 + $0x1668] sm:$0xff]
  %v753 = vld [vmem:[%s1 + $0x1670] sm:$0xff]
  %v754 = vld [vmem:[%s1 + $0x1678] sm:$0xff]
  %v755 = vld [vmem:[%s1 + $0x1680] sm:$0xff]
  %v756 = vld [vmem:[%s1 + $0x1688] sm:$0xff]
  %v757 = vld [vmem:[%s1 + $0x1690] sm:$0xff]
  %v758 = vld [vmem:[%s1 + $0x1698] sm:$0xff]
  %v759 = vld [vmem:[%s1 + $0x16a0] sm:$0xff]
  %v760 = vld [vmem:[%s1 + $0x16a8] sm:$0xff]
  %v761 = vld [vmem:[%s1 + $0x16b0] sm:$0xff]
  %v762 = vld [vmem:[%s1 + $0x16b8] sm:$0xff]
  %v763 = vld [vmem:[%s1 + $0x16c0] sm:$0xff]
  %v764 = vld [vmem:[%s1 + $0x16c8] sm:$0xff]
  %v765 = vld [vmem:[%s1 + $0x16d0] sm:$0xff]
  %v766 = vld [vmem:[%s1 + $0x16d8] sm:$0xff]
  %v767 = vld [vmem:[%s1 + $0x16e0] sm:$0xff]
  %v768 = vld [vmem:[%s1 + $0x16e8] sm:$0xff]
  %v769 = vld [vmem:[%s1 + $0x16f0] sm:$0xff]
  %v770 = vld [vmem:[%s1 + $0x16f8] sm:$0xff]
  %v771 = vld [vmem:[%s1 + $0x1700] sm:$0xff]
  %v772 = vld [vmem:[%s1 + $0x1708] sm:$0xff]
  %v773 = vld [vmem:[%s1 + $0x1710] sm:$0xff]
  %v774 = vld [vmem:[%s1 + $0x1718] sm:$0xff]
  %v775 = vld [vmem:[%s1 + $0x1720] sm:$0xff]
  %v776 = vld [vmem:[%s1 + $0x1728] sm:$0xff]
  %v777 = vld [vmem:[%s1 + $0x1730] sm:$0xff]
  %v778 = vld [vmem:[%s1 + $0x1738] sm:$0xff]
  %v779 = vld [vmem:[%s1 + $0x1740] sm:$0xff]
  %v780 = vld [vmem:[%s1 + $0x1748] sm:$0xff]
  %v781 = vld [vmem:[%s1 + $0x1750] sm:$0xff]
  %v782 = vld [vmem:[%s1 + $0x1758] sm:$0xff]
  %v783 = vld [vmem:[%s1 + $0x1760] sm:$0xff]
  %v784 = vld [vmem:[%s1 + $0x1768] sm:$0xff]
  %v785 = vld [vmem:[%s1 + $0x1770] sm:$0xff]
  %v786 = vld [vmem:[%s1 + $0x1778] sm:$0xff]
  %v787 = vld [vmem:[%s1 + $0x1780] sm:$0xff]
  %v788 = vld [vmem:[%s1 + $0x1788] sm:$0xff]
  %v789 = vld [vmem:[%s1 + $0x1790] sm:$0xff]
  %v790 = vld [vmem:[%s1 + $0x1798] sm:$0xff]
  %v791 = vld [vmem:[%s1 + $0x17a0] sm:$0xff]
  %v792 = vld [vmem:[%s1 + $0x17a8] sm:$0xff]
  %v793 = vld [vmem:[%s1 + $0x17b0] sm:$0xff]
  %v794 = vld [vmem:[%s1 + $0x17b8] sm:$0xff]
  %v795 = vld [vmem:[%s1 + $0x17c0] sm:$0xff]
  %v796 = vld [vmem:[%s1 + $0x17c8] sm:$0xff]
  %v797 = vld [vmem:[%s1 + $0x17d0] sm:$0xff]
  %v798 = vld [vmem:[%s1 + $0x17d8] sm:$0xff]
  %v799 = vld [vmem:[%s1 + $0x17e0] sm:$0xff]
  %v800 = vld [vmem:[%s1 + $0x17e8] sm:$0xff]
  %v801 = vld [vmem:[%s1 + $0x17f0] sm:$0xff]
  %v802 = vld [vmem:[%s1 + $0x17f8] sm:$0xff]
  %v803 = vld [vmem:[%s1 + $0x1800] sm:$0xff]
  %v804 = vld [vmem:[%s1 + $0x1808] sm:$0xff]
  %v805 = vld [vmem:[%s1 + $0x1810] sm:$0xff]
  %v806 = vld [vmem:[%s1 + $0x1818] sm:$0xff]
  %v807 = vld [vmem:[%s1 + $0x1820] sm:$0xff]
  %v808 = vld [vmem:[%s1 + $0x1828] sm:$0xff]
  %v809 = vld [vmem:[%s1 + $0x1830] sm:$0xff]
  %v810 = vld [vmem:[%s1 + $0x1838] sm:$0xff]
  %v811 = vld [vmem:[%s1 + $0x1840] sm:$0xff]
  %v812 = vld [vmem:[%s1 + $0x1848] sm:$0xff]
  %v813 = vld [vmem:[%s1 + $0x1850] sm:$0xff]
  %v814 = vld [vmem:[%s1 + $0x1858] sm:$0xff]
  %v815 = vld [vmem:[%s1 + $0x1860] sm:$0xff]
  %v816 = vld [vmem:[%s1 + $0x1868] sm:$0xff]
  %v817 = vld [vmem:[%s1 + $0x1870] sm:$0xff]
  %v818 = vld [vmem:[%s1 + $0x1878] sm:$0xff]
  %v819 = vld [vmem:[%s1 + $0x1880] sm:$0xff]
  %v820 = vld [vmem:[%s1 + $0x1888] sm:$0xff]
  %v821 = vld [vmem:[%s1 + $0x1890] sm:$0xff]
  %v822 = vld [vmem:[%s1 + $0x1898] sm:$0xff]
  %v823 = vld [vmem:[%s1 + $0x18a0] sm:$0xff]
  %v824 = vld [vmem:[%s1 + $0x18a8] sm:$0xff]
  %v825 = vld [vmem:[%s1 + $0x18b0] sm:$0xff]
  %v826 = vld [vmem:[%s1 + $0x18b8] sm:$0xff]
  %v827 = vld [vmem:[%s1 + $0x18c0] sm:$0xff]
  %v828 = vld [vmem:[%s1 + $0x18c8] sm:$0xff]
  %v829 = vld [vmem:[%s1 + $0x18d0] sm:$0xff]
  %v830 = vld [vmem:[%s1 + $0x18d8] sm:$0xff]
  %v831 = vld [vmem:[%s1 + $0x18e0] sm:$0xff]
  %v832 = vld [vmem:[%s1 + $0x18e8] sm:$0xff]
  %v833 = vld [vmem:[%s1 + $0x18f0] sm:$0xff]
  %v834 = vld [vmem:[%s1 + $0x18f8] sm:$0xff]
  %v835 = vld [vmem:[%s2] sm:$0xf]
  %v837 = vperm.slane %v835, 0
  %v838 = vperm.slane %v835, 1
  %v839 = vperm.slane %v835, 2
  %v840 = vperm.slane %v835, 3
  %v858 = vunpack.c.l.b16 %v22
  %v859 = vunpack.c.h.b16 %v22
  %v860 = vunpack.c.l.b16 %v23
  %v861 = vunpack.c.h.b16 %v23
  %v862 = vunpack.c.l.b16 %v24
  %v863 = vunpack.c.h.b16 %v24
  %v864 = vunpack.c.l.b16 %v25
  %v865 = vunpack.c.h.b16 %v25
  %v866 = vunpack.c.l.b16 %v26
  %v867 = vunpack.c.h.b16 %v26
  %v868 = vunpack.c.l.b16 %v27
  %v869 = vunpack.c.h.b16 %v27
  %v870 = vunpack.c.l.b16 %v28
  %v871 = vunpack.c.h.b16 %v28
  %v872 = vunpack.c.l.b16 %v29
  %v873 = vunpack.c.h.b16 %v29
  %v874 = vunpack.c.l.b16 %v30
  %v875 = vunpack.c.h.b16 %v30
  %v876 = vunpack.c.l.b16 %v31
  %v877 = vunpack.c.h.b16 %v31
  %v878 = vunpack.c.l.b16 %v32
  %v879 = vunpack.c.h.b16 %v32
  %v880 = vunpack.c.l.b16 %v33
  %v881 = vunpack.c.h.b16 %v33
  %v882 = vunpack.c.l.b16 %v34
  %v883 = vpack.c.b16 %v858, %v858
  %v884 = vpack.c.b16 %v859, %v859
  %v885 = vpack.c.b16 %v860, %v860
  %v886 = vpack.c.b16 %v861, %v861
  %v887 = vpack.c.b16 %v862, %v862
  %v888 = vpack.c.b16 %v863, %v863
  %v889 = vpack.c.b16 %v864, %v864
  %v890 = vpack.c.b16 %v865, %v865
  %v891 = vpack.c.b16 %v866, %v866
  %v892 = vpack.c.b16 %v867, %v867
  %v893 = vpack.c.b16 %v868, %v868
  %v894 = vpack.c.b16 %v869, %v869
  %v895 = vpack.c.b16 %v870, %v870
  %v896 = vpack.c.b16 %v871, %v871
  %v897 = vpack.c.b16 %v872, %v872
  %v898 = vpack.c.b16 %v873, %v873
  %v899 = vpack.c.b16 %v874, %v874
  %v900 = vpack.c.b16 %v875, %v875
  %v901 = vpack.c.b16 %v876, %v876
  %v902 = vpack.c.b16 %v877, %v877
  %v903 = vpack.c.b16 %v878, %v878
  %v904 = vpack.c.b16 %v879, %v879
  %v905 = vpack.c.b16 %v880, %v880
  %v906 = vpack.c.b16 %v881, %v881
  %v907 = vpack.c.b16 %v882, %v882
  %v1733 = vunpack.c.l.b16 %v35
  %v1734 = vunpack.c.h.b16 %v35
  %v1735 = vunpack.c.l.b16 %v36
  %v1736 = vunpack.c.h.b16 %v36
  %v1737 = vunpack.c.l.b16 %v37
  %v1738 = vunpack.c.h.b16 %v37
  %v1739 = vunpack.c.l.b16 %v38
  %v1740 = vunpack.c.h.b16 %v38
  %v1741 = vunpack.c.l.b16 %v39
  %v1742 = vunpack.c.h.b16 %v39
  %v1743 = vunpack.c.l.b16 %v40
  %v1744 = vunpack.c.h.b16 %v40
  %v1745 = vunpack.c.l.b16 %v41
  %v1746 = vunpack.c.h.b16 %v41
  %v1747 = vunpack.c.l.b16 %v42
  %v1748 = vunpack.c.h.b16 %v42
  %v1749 = vunpack.c.l.b16 %v43
  %v1750 = vunpack.c.h.b16 %v43
  %v1751 = vunpack.c.l.b16 %v44
  %v1752 = vunpack.c.h.b16 %v44
  %v1753 = vunpack.c.l.b16 %v45
  %v1754 = vunpack.c.h.b16 %v45
  %v1755 = vunpack.c.l.b16 %v46
  %v1756 = vunpack.c.h.b16 %v46
  %v1757 = vunpack.c.l.b16 %v47
  %v1758 = vunpack.c.h.b16 %v47
  %v1759 = vunpack.c.l.b16 %v48
  %v1760 = vunpack.c.h.b16 %v48
  %v1761 = vunpack.c.l.b16 %v49
  %v1762 = vunpack.c.h.b16 %v49
  %v1763 = vunpack.c.l.b16 %v50
  %v1764 = vunpack.c.h.b16 %v50
  %v1765 = vunpack.c.l.b16 %v51
  %v1766 = vunpack.c.h.b16 %v51
  %v1767 = vunpack.c.l.b16 %v52
  %v1768 = vunpack.c.h.b16 %v52
  %v1769 = vunpack.c.l.b16 %v53
  %v1770 = vunpack.c.h.b16 %v53
  %v1771 = vunpack.c.l.b16 %v54
  %v1772 = vunpack.c.h.b16 %v54
  %v1773 = vunpack.c.l.b16 %v55
  %v1774 = vunpack.c.h.b16 %v55
  %v1775 = vunpack.c.l.b16 %v56
  %v1776 = vunpack.c.h.b16 %v56
  %v1777 = vunpack.c.l.b16 %v57
  %v1778 = vunpack.c.h.b16 %v57
  %v1779 = vunpack.c.l.b16 %v58
  %v1780 = vunpack.c.h.b16 %v58
  %v1781 = vunpack.c.l.b16 %v59
  %v1782 = vunpack.c.h.b16 %v59
  %v1783 = vunpack.c.l.b16 %v60
  %v1784 = vunpack.c.h.b16 %v60
  %v1785 = vunpack.c.l.b16 %v61
  %v1786 = vunpack.c.h.b16 %v61
  %v1787 = vunpack.c.l.b16 %v62
  %v1788 = vunpack.c.h.b16 %v62
  %v1789 = vunpack.c.l.b16 %v63
  %v1790 = vunpack.c.h.b16 %v63
  %v1791 = vunpack.c.l.b16 %v64
  %v1792 = vunpack.c.h.b16 %v64
  %v1793 = vunpack.c.l.b16 %v65
  %v1794 = vunpack.c.h.b16 %v65
  %v1795 = vunpack.c.l.b16 %v66
  %v1796 = vunpack.c.h.b16 %v66
  %v1797 = vunpack.c.l.b16 %v67
  %v1798 = vunpack.c.h.b16 %v67
  %v1799 = vunpack.c.l.b16 %v68
  %v1800 = vunpack.c.h.b16 %v68
  %v1801 = vunpack.c.l.b16 %v69
  %v1802 = vunpack.c.h.b16 %v69
  %v1803 = vunpack.c.l.b16 %v70
  %v1804 = vunpack.c.h.b16 %v70
  %v1805 = vunpack.c.l.b16 %v71
  %v1806 = vunpack.c.h.b16 %v71
  %v1807 = vunpack.c.l.b16 %v72
  %v1808 = vunpack.c.h.b16 %v72
  %v1809 = vunpack.c.l.b16 %v73
  %v1810 = vunpack.c.h.b16 %v73
  %v1811 = vunpack.c.l.b16 %v74
  %v1812 = vunpack.c.h.b16 %v74
  %v1813 = vunpack.c.l.b16 %v75
  %v1814 = vunpack.c.h.b16 %v75
  %v1815 = vunpack.c.l.b16 %v76
  %v1816 = vunpack.c.h.b16 %v76
  %v1817 = vunpack.c.l.b16 %v77
  %v1818 = vunpack.c.h.b16 %v77
  %v1819 = vunpack.c.l.b16 %v78
  %v1820 = vunpack.c.h.b16 %v78
  %v1821 = vunpack.c.l.b16 %v79
  %v1822 = vunpack.c.h.b16 %v79
  %v1823 = vunpack.c.l.b16 %v80
  %v1824 = vunpack.c.h.b16 %v80
  %v1825 = vunpack.c.l.b16 %v81
  %v1826 = vunpack.c.h.b16 %v81
  %v1827 = vunpack.c.l.b16 %v82
  %v1828 = vunpack.c.h.b16 %v82
  %v1829 = vunpack.c.l.b16 %v83
  %v1830 = vunpack.c.h.b16 %v83
  %v1831 = vunpack.c.l.b16 %v84
  %v1832 = vunpack.c.h.b16 %v84
  %v1833 = vunpack.c.l.b16 %v85
  %v1834 = vunpack.c.h.b16 %v85
  %v1835 = vunpack.c.l.b16 %v86
  %v1836 = vunpack.c.h.b16 %v86
  %v1837 = vunpack.c.l.b16 %v87
  %v1838 = vunpack.c.h.b16 %v87
  %v1839 = vunpack.c.l.b16 %v88
  %v1840 = vunpack.c.h.b16 %v88
  %v1841 = vunpack.c.l.b16 %v89
  %v1842 = vunpack.c.h.b16 %v89
  %v1843 = vunpack.c.l.b16 %v90
  %v1844 = vunpack.c.h.b16 %v90
  %v1845 = vunpack.c.l.b16 %v91
  %v1846 = vunpack.c.h.b16 %v91
  %v1847 = vunpack.c.l.b16 %v92
  %v1848 = vunpack.c.h.b16 %v92
  %v1849 = vunpack.c.l.b16 %v93
  %v1850 = vunpack.c.h.b16 %v93
  %v1851 = vunpack.c.l.b16 %v94
  %v1852 = vunpack.c.h.b16 %v94
  %v1853 = vunpack.c.l.b16 %v95
  %v1854 = vunpack.c.h.b16 %v95
  %v1855 = vunpack.c.l.b16 %v96
  %v1856 = vunpack.c.h.b16 %v96
  %v1857 = vunpack.c.l.b16 %v97
  %v1858 = vunpack.c.h.b16 %v97
  %v1859 = vunpack.c.l.b16 %v98
  %v1860 = vunpack.c.h.b16 %v98
  %v1861 = vunpack.c.l.b16 %v99
  %v1862 = vunpack.c.h.b16 %v99
  %v1863 = vunpack.c.l.b16 %v100
  %v1864 = vunpack.c.h.b16 %v100
  %v1865 = vunpack.c.l.b16 %v101
  %v1866 = vunpack.c.h.b16 %v101
  %v1867 = vunpack.c.l.b16 %v102
  %v1868 = vunpack.c.h.b16 %v102
  %v1869 = vunpack.c.l.b16 %v103
  %v1870 = vunpack.c.h.b16 %v103
  %v1871 = vunpack.c.l.b16 %v104
  %v1872 = vunpack.c.h.b16 %v104
  %v1873 = vunpack.c.l.b16 %v105
  %v1874 = vunpack.c.h.b16 %v105
  %v1875 = vunpack.c.l.b16 %v106
  %v1876 = vunpack.c.h.b16 %v106
  %v1877 = vunpack.c.l.b16 %v107
  %v1878 = vunpack.c.h.b16 %v107
  %v1879 = vunpack.c.l.b16 %v108
  %v1880 = vunpack.c.h.b16 %v108
  %v1881 = vunpack.c.l.b16 %v109
  %v1882 = vunpack.c.h.b16 %v109
  %v1883 = vunpack.c.l.b16 %v110
  %v1884 = vunpack.c.h.b16 %v110
  %v1885 = vunpack.c.l.b16 %v111
  %v1886 = vunpack.c.h.b16 %v111
  %v1887 = vunpack.c.l.b16 %v112
  %v1888 = vunpack.c.h.b16 %v112
  %v1889 = vunpack.c.l.b16 %v113
  %v1890 = vunpack.c.h.b16 %v113
  %v1891 = vunpack.c.l.b16 %v114
  %v1892 = vunpack.c.h.b16 %v114
  %v1893 = vunpack.c.l.b16 %v115
  %v1894 = vunpack.c.h.b16 %v115
  %v1895 = vunpack.c.l.b16 %v116
  %v1896 = vunpack.c.h.b16 %v116
  %v1897 = vunpack.c.l.b16 %v117
  %v1898 = vunpack.c.h.b16 %v117
  %v1899 = vunpack.c.l.b16 %v118
  %v1900 = vunpack.c.h.b16 %v118
  %v1901 = vunpack.c.l.b16 %v119
  %v1902 = vunpack.c.h.b16 %v119
  %v1903 = vunpack.c.l.b16 %v120
  %v1904 = vunpack.c.h.b16 %v120
  %v1905 = vunpack.c.l.b16 %v121
  %v1906 = vunpack.c.h.b16 %v121
  %v1907 = vunpack.c.l.b16 %v122
  %v1908 = vunpack.c.h.b16 %v122
  %v1909 = vunpack.c.l.b16 %v123
  %v1910 = vunpack.c.h.b16 %v123
  %v1911 = vunpack.c.l.b16 %v124
  %v1912 = vunpack.c.h.b16 %v124
  %v1913 = vunpack.c.l.b16 %v125
  %v1914 = vunpack.c.h.b16 %v125
  %v1915 = vunpack.c.l.b16 %v126
  %v1916 = vunpack.c.h.b16 %v126
  %v1917 = vunpack.c.l.b16 %v127
  %v1918 = vunpack.c.h.b16 %v127
  %v1919 = vunpack.c.l.b16 %v128
  %v1920 = vunpack.c.h.b16 %v128
  %v1921 = vunpack.c.l.b16 %v129
  %v1922 = vunpack.c.h.b16 %v129
  %v1923 = vunpack.c.l.b16 %v130
  %v1924 = vunpack.c.h.b16 %v130
  %v1925 = vunpack.c.l.b16 %v131
  %v1926 = vunpack.c.h.b16 %v131
  %v1927 = vunpack.c.l.b16 %v132
  %v1928 = vunpack.c.h.b16 %v132
  %v1929 = vunpack.c.l.b16 %v133
  %v1930 = vunpack.c.h.b16 %v133
  %v1931 = vunpack.c.l.b16 %v134
  %v1932 = vunpack.c.h.b16 %v134
  %v1933 = vunpack.c.l.b16 %v135
  %v1934 = vunpack.c.h.b16 %v135
  %v1935 = vunpack.c.l.b16 %v136
  %v1936 = vunpack.c.h.b16 %v136
  %v1937 = vunpack.c.l.b16 %v137
  %v1938 = vunpack.c.h.b16 %v137
  %v1939 = vunpack.c.l.b16 %v138
  %v1940 = vunpack.c.h.b16 %v138
  %v1941 = vunpack.c.l.b16 %v139
  %v1942 = vunpack.c.h.b16 %v139
  %v1943 = vunpack.c.l.b16 %v140
  %v1944 = vunpack.c.h.b16 %v140
  %v1945 = vunpack.c.l.b16 %v141
  %v1946 = vunpack.c.h.b16 %v141
  %v1947 = vunpack.c.l.b16 %v142
  %v1948 = vunpack.c.h.b16 %v142
  %v1949 = vunpack.c.l.b16 %v143
  %v1950 = vunpack.c.h.b16 %v143
  %v1951 = vunpack.c.l.b16 %v144
  %v1952 = vunpack.c.h.b16 %v144
  %v1953 = vunpack.c.l.b16 %v145
  %v1954 = vunpack.c.h.b16 %v145
  %v1955 = vunpack.c.l.b16 %v146
  %v1956 = vunpack.c.h.b16 %v146
  %v1957 = vunpack.c.l.b16 %v147
  %v1958 = vunpack.c.h.b16 %v147
  %v1959 = vunpack.c.l.b16 %v148
  %v1960 = vunpack.c.h.b16 %v148
  %v1961 = vunpack.c.l.b16 %v149
  %v1962 = vunpack.c.h.b16 %v149
  %v1963 = vunpack.c.l.b16 %v150
  %v1964 = vunpack.c.h.b16 %v150
  %v1965 = vunpack.c.l.b16 %v151
  %v1966 = vunpack.c.h.b16 %v151
  %v1967 = vunpack.c.l.b16 %v152
  %v1968 = vunpack.c.h.b16 %v152
  %v1969 = vunpack.c.l.b16 %v153
  %v1970 = vunpack.c.h.b16 %v153
  %v1971 = vunpack.c.l.b16 %v154
  %v1972 = vunpack.c.h.b16 %v154
  %v1973 = vunpack.c.l.b16 %v155
  %v1974 = vunpack.c.h.b16 %v155
  %v1975 = vunpack.c.l.b16 %v156
  %v1976 = vunpack.c.h.b16 %v156
  %v1977 = vunpack.c.l.b16 %v157
  %v1978 = vunpack.c.h.b16 %v157
  %v1979 = vunpack.c.l.b16 %v158
  %v1980 = vunpack.c.h.b16 %v158
  %v1981 = vunpack.c.l.b16 %v159
  %v1982 = vunpack.c.h.b16 %v159
  %v1983 = vunpack.c.l.b16 %v160
  %v1984 = vunpack.c.h.b16 %v160
  %v1985 = vunpack.c.l.b16 %v161
  %v1986 = vunpack.c.h.b16 %v161
  %v1987 = vunpack.c.l.b16 %v162
  %v1988 = vunpack.c.h.b16 %v162
  %v1989 = vunpack.c.l.b16 %v163
  %v1990 = vunpack.c.h.b16 %v163
  %v1991 = vunpack.c.l.b16 %v164
  %v1992 = vunpack.c.h.b16 %v164
  %v1993 = vunpack.c.l.b16 %v165
  %v1994 = vunpack.c.h.b16 %v165
  %v1995 = vunpack.c.l.b16 %v166
  %v1996 = vunpack.c.h.b16 %v166
  %v1997 = vunpack.c.l.b16 %v167
  %v1998 = vunpack.c.h.b16 %v167
  %v1999 = vunpack.c.l.b16 %v168
  %v2000 = vunpack.c.h.b16 %v168
  %v2001 = vunpack.c.l.b16 %v169
  %v2002 = vunpack.c.h.b16 %v169
  %v2003 = vunpack.c.l.b16 %v170
  %v2004 = vunpack.c.h.b16 %v170
  %v2005 = vunpack.c.l.b16 %v171
  %v2006 = vunpack.c.h.b16 %v171
  %v2007 = vunpack.c.l.b16 %v172
  %v2008 = vunpack.c.h.b16 %v172
  %v2009 = vunpack.c.l.b16 %v173
  %v2010 = vunpack.c.h.b16 %v173
  %v2011 = vunpack.c.l.b16 %v174
  %v2012 = vunpack.c.h.b16 %v174
  %v2013 = vunpack.c.l.b16 %v175
  %v2014 = vunpack.c.h.b16 %v175
  %v2015 = vunpack.c.l.b16 %v176
  %v2016 = vunpack.c.h.b16 %v176
  %v2017 = vunpack.c.l.b16 %v177
  %v2018 = vunpack.c.h.b16 %v177
  %v2019 = vunpack.c.l.b16 %v178
  %v2020 = vunpack.c.h.b16 %v178
  %v2021 = vunpack.c.l.b16 %v179
  %v2022 = vunpack.c.h.b16 %v179
  %v2023 = vunpack.c.l.b16 %v180
  %v2024 = vunpack.c.h.b16 %v180
  %v2025 = vunpack.c.l.b16 %v181
  %v2026 = vunpack.c.h.b16 %v181
  %v2027 = vunpack.c.l.b16 %v182
  %v2028 = vunpack.c.h.b16 %v182
  %v2029 = vunpack.c.l.b16 %v183
  %v2030 = vunpack.c.h.b16 %v183
  %v2031 = vunpack.c.l.b16 %v184
  %v2032 = vunpack.c.h.b16 %v184
  %v2033 = vunpack.c.l.b16 %v185
  %v2034 = vunpack.c.h.b16 %v185
  %v2035 = vunpack.c.l.b16 %v186
  %v2036 = vunpack.c.h.b16 %v186
  %v2037 = vunpack.c.l.b16 %v187
  %v2038 = vunpack.c.h.b16 %v187
  %v2039 = vunpack.c.l.b16 %v188
  %v2040 = vunpack.c.h.b16 %v188
  %v2041 = vunpack.c.l.b16 %v189
  %v2042 = vunpack.c.h.b16 %v189
  %v2043 = vunpack.c.l.b16 %v190
  %v2044 = vunpack.c.h.b16 %v190
  %v2045 = vunpack.c.l.b16 %v191
  %v2046 = vunpack.c.h.b16 %v191
  %v2047 = vunpack.c.l.b16 %v192
  %v2048 = vunpack.c.h.b16 %v192
  %v2049 = vunpack.c.l.b16 %v193
  %v2050 = vunpack.c.h.b16 %v193
  %v2051 = vunpack.c.l.b16 %v194
  %v2052 = vunpack.c.h.b16 %v194
  %v2053 = vunpack.c.l.b16 %v195
  %v2054 = vunpack.c.h.b16 %v195
  %v2055 = vunpack.c.l.b16 %v196
  %v2056 = vunpack.c.h.b16 %v196
  %v2057 = vunpack.c.l.b16 %v197
  %v2058 = vunpack.c.h.b16 %v197
  %v2059 = vunpack.c.l.b16 %v198
  %v2060 = vunpack.c.h.b16 %v198
  %v2061 = vunpack.c.l.b16 %v199
  %v2062 = vunpack.c.h.b16 %v199
  %v2063 = vunpack.c.l.b16 %v200
  %v2064 = vunpack.c.h.b16 %v200
  %v2065 = vunpack.c.l.b16 %v201
  %v2066 = vunpack.c.h.b16 %v201
  %v2067 = vunpack.c.l.b16 %v202
  %v2068 = vunpack.c.h.b16 %v202
  %v2069 = vunpack.c.l.b16 %v203
  %v2070 = vunpack.c.h.b16 %v203
  %v2071 = vunpack.c.l.b16 %v204
  %v2072 = vunpack.c.h.b16 %v204
  %v2073 = vunpack.c.l.b16 %v205
  %v2074 = vunpack.c.h.b16 %v205
  %v2075 = vunpack.c.l.b16 %v206
  %v2076 = vunpack.c.h.b16 %v206
  %v2077 = vunpack.c.l.b16 %v207
  %v2078 = vunpack.c.h.b16 %v207
  %v2079 = vunpack.c.l.b16 %v208
  %v2080 = vunpack.c.h.b16 %v208
  %v2081 = vunpack.c.l.b16 %v209
  %v2082 = vunpack.c.h.b16 %v209
  %v2083 = vunpack.c.l.b16 %v210
  %v2084 = vunpack.c.h.b16 %v210
  %v2085 = vunpack.c.l.b16 %v211
  %v2086 = vunpack.c.h.b16 %v211
  %v2087 = vunpack.c.l.b16 %v212
  %v2088 = vunpack.c.h.b16 %v212
  %v2089 = vunpack.c.l.b16 %v213
  %v2090 = vunpack.c.h.b16 %v213
  %v2091 = vunpack.c.l.b16 %v214
  %v2092 = vunpack.c.h.b16 %v214
  %v2093 = vunpack.c.l.b16 %v215
  %v2094 = vunpack.c.h.b16 %v215
  %v2095 = vunpack.c.l.b16 %v216
  %v2096 = vunpack.c.h.b16 %v216
  %v2097 = vunpack.c.l.b16 %v217
  %v2098 = vunpack.c.h.b16 %v217
  %v2099 = vunpack.c.l.b16 %v218
  %v2100 = vunpack.c.h.b16 %v218
  %v2101 = vunpack.c.l.b16 %v219
  %v2102 = vunpack.c.h.b16 %v219
  %v2103 = vunpack.c.l.b16 %v220
  %v2104 = vunpack.c.h.b16 %v220
  %v2105 = vunpack.c.l.b16 %v221
  %v2106 = vunpack.c.h.b16 %v221
  %v2107 = vunpack.c.l.b16 %v222
  %v2108 = vunpack.c.h.b16 %v222
  %v2109 = vunpack.c.l.b16 %v223
  %v2110 = vunpack.c.h.b16 %v223
  %v2111 = vunpack.c.l.b16 %v224
  %v2112 = vunpack.c.h.b16 %v224
  %v2113 = vunpack.c.l.b16 %v225
  %v2114 = vunpack.c.h.b16 %v225
  %v2115 = vunpack.c.l.b16 %v226
  %v2116 = vunpack.c.h.b16 %v226
  %v2117 = vunpack.c.l.b16 %v227
  %v2118 = vunpack.c.h.b16 %v227
  %v2119 = vunpack.c.l.b16 %v228
  %v2120 = vunpack.c.h.b16 %v228
  %v2121 = vunpack.c.l.b16 %v229
  %v2122 = vunpack.c.h.b16 %v229
  %v2123 = vunpack.c.l.b16 %v230
  %v2124 = vunpack.c.h.b16 %v230
  %v2125 = vunpack.c.l.b16 %v231
  %v2126 = vunpack.c.h.b16 %v231
  %v2127 = vunpack.c.l.b16 %v232
  %v2128 = vunpack.c.h.b16 %v232
  %v2129 = vunpack.c.l.b16 %v233
  %v2130 = vunpack.c.h.b16 %v233
  %v2131 = vunpack.c.l.b16 %v234
  %v2132 = vunpack.c.h.b16 %v234
  %v2133 = vunpack.c.l.b16 %v235
  %v2134 = vunpack.c.h.b16 %v235
  %v2135 = vunpack.c.l.b16 %v236
  %v2136 = vunpack.c.h.b16 %v236
  %v2137 = vunpack.c.l.b16 %v237
  %v2138 = vunpack.c.h.b16 %v237
  %v2139 = vunpack.c.l.b16 %v238
  %v2140 = vunpack.c.h.b16 %v238
  %v2141 = vunpack.c.l.b16 %v239
  %v2142 = vunpack.c.h.b16 %v239
  %v2143 = vunpack.c.l.b16 %v240
  %v2144 = vunpack.c.h.b16 %v240
  %v2145 = vunpack.c.l.b16 %v241
  %v2146 = vunpack.c.h.b16 %v241
  %v2147 = vunpack.c.l.b16 %v242
  %v2148 = vunpack.c.h.b16 %v242
  %v2149 = vunpack.c.l.b16 %v243
  %v2150 = vunpack.c.h.b16 %v243
  %v2151 = vunpack.c.l.b16 %v244
  %v2152 = vunpack.c.h.b16 %v244
  %v2153 = vunpack.c.l.b16 %v245
  %v2154 = vunpack.c.h.b16 %v245
  %v2155 = vunpack.c.l.b16 %v246
  %v2156 = vunpack.c.h.b16 %v246
  %v2157 = vunpack.c.l.b16 %v247
  %v2158 = vunpack.c.h.b16 %v247
  %v2159 = vunpack.c.l.b16 %v248
  %v2160 = vunpack.c.h.b16 %v248
  %v2161 = vunpack.c.l.b16 %v249
  %v2162 = vunpack.c.h.b16 %v249
  %v2163 = vunpack.c.l.b16 %v250
  %v2164 = vunpack.c.h.b16 %v250
  %v2165 = vunpack.c.l.b16 %v251
  %v2166 = vunpack.c.h.b16 %v251
  %v2167 = vunpack.c.l.b16 %v252
  %v2168 = vunpack.c.h.b16 %v252
  %v2169 = vunpack.c.l.b16 %v253
  %v2170 = vunpack.c.h.b16 %v253
  %v2171 = vunpack.c.l.b16 %v254
  %v2172 = vunpack.c.h.b16 %v254
  %v2173 = vunpack.c.l.b16 %v255
  %v2174 = vunpack.c.h.b16 %v255
  %v2175 = vunpack.c.l.b16 %v256
  %v2176 = vunpack.c.h.b16 %v256
  %v2177 = vunpack.c.l.b16 %v257
  %v2178 = vunpack.c.h.b16 %v257
  %v2179 = vunpack.c.l.b16 %v258
  %v2180 = vunpack.c.h.b16 %v258
  %v2181 = vunpack.c.l.b16 %v259
  %v2182 = vunpack.c.h.b16 %v259
  %v2183 = vunpack.c.l.b16 %v260
  %v2184 = vunpack.c.h.b16 %v260
  %v2185 = vunpack.c.l.b16 %v261
  %v2186 = vunpack.c.h.b16 %v261
  %v2187 = vunpack.c.l.b16 %v262
  %v2188 = vunpack.c.h.b16 %v262
  %v2189 = vunpack.c.l.b16 %v263
  %v2190 = vunpack.c.h.b16 %v263
  %v2191 = vunpack.c.l.b16 %v264
  %v2192 = vunpack.c.h.b16 %v264
  %v2193 = vunpack.c.l.b16 %v265
  %v2194 = vunpack.c.h.b16 %v265
  %v2195 = vunpack.c.l.b16 %v266
  %v2196 = vunpack.c.h.b16 %v266
  %v2197 = vunpack.c.l.b16 %v267
  %v2198 = vunpack.c.h.b16 %v267
  %v2199 = vunpack.c.l.b16 %v268
  %v2200 = vunpack.c.h.b16 %v268
  %v2201 = vunpack.c.l.b16 %v269
  %v2202 = vunpack.c.h.b16 %v269
  %v2203 = vunpack.c.l.b16 %v270
  %v2204 = vunpack.c.h.b16 %v270
  %v2205 = vunpack.c.l.b16 %v271
  %v2206 = vunpack.c.h.b16 %v271
  %v2207 = vunpack.c.l.b16 %v272
  %v2208 = vunpack.c.h.b16 %v272
  %v2209 = vunpack.c.l.b16 %v273
  %v2210 = vunpack.c.h.b16 %v273
  %v2211 = vunpack.c.l.b16 %v274
  %v2212 = vunpack.c.h.b16 %v274
  %v2213 = vunpack.c.l.b16 %v275
  %v2214 = vunpack.c.h.b16 %v275
  %v2215 = vunpack.c.l.b16 %v276
  %v2216 = vunpack.c.h.b16 %v276
  %v2217 = vunpack.c.l.b16 %v277
  %v2218 = vunpack.c.h.b16 %v277
  %v2219 = vunpack.c.l.b16 %v278
  %v2220 = vunpack.c.h.b16 %v278
  %v2221 = vunpack.c.l.b16 %v279
  %v2222 = vunpack.c.h.b16 %v279
  %v2223 = vunpack.c.l.b16 %v280
  %v2224 = vunpack.c.h.b16 %v280
  %v2225 = vunpack.c.l.b16 %v281
  %v2226 = vunpack.c.h.b16 %v281
  %v2227 = vunpack.c.l.b16 %v282
  %v2228 = vunpack.c.h.b16 %v282
  %v2229 = vunpack.c.l.b16 %v283
  %v2230 = vunpack.c.h.b16 %v283
  %v2231 = vunpack.c.l.b16 %v284
  %v2232 = vunpack.c.h.b16 %v284
  %v2233 = vunpack.c.l.b16 %v285
  %v2234 = vunpack.c.h.b16 %v285
  %v2235 = vunpack.c.l.b16 %v286
  %v2236 = vunpack.c.h.b16 %v286
  %v2237 = vunpack.c.l.b16 %v287
  %v2238 = vunpack.c.h.b16 %v287
  %v2239 = vunpack.c.l.b16 %v288
  %v2240 = vunpack.c.h.b16 %v288
  %v2241 = vunpack.c.l.b16 %v289
  %v2242 = vunpack.c.h.b16 %v289
  %v2243 = vunpack.c.l.b16 %v290
  %v2244 = vunpack.c.h.b16 %v290
  %v2245 = vunpack.c.l.b16 %v291
  %v2246 = vunpack.c.h.b16 %v291
  %v2247 = vunpack.c.l.b16 %v292
  %v2248 = vunpack.c.h.b16 %v292
  %v2249 = vunpack.c.l.b16 %v293
  %v2250 = vunpack.c.h.b16 %v293
  %v2251 = vunpack.c.l.b16 %v294
  %v2252 = vunpack.c.h.b16 %v294
  %v2253 = vunpack.c.l.b16 %v295
  %v2254 = vunpack.c.h.b16 %v295
  %v2255 = vunpack.c.l.b16 %v296
  %v2256 = vunpack.c.h.b16 %v296
  %v2257 = vunpack.c.l.b16 %v297
  %v2258 = vunpack.c.h.b16 %v297
  %v2259 = vunpack.c.l.b16 %v298
  %v2260 = vunpack.c.h.b16 %v298
  %v2261 = vunpack.c.l.b16 %v299
  %v2262 = vunpack.c.h.b16 %v299
  %v2263 = vunpack.c.l.b16 %v300
  %v2264 = vunpack.c.h.b16 %v300
  %v2265 = vunpack.c.l.b16 %v301
  %v2266 = vunpack.c.h.b16 %v301
  %v2267 = vunpack.c.l.b16 %v302
  %v2268 = vunpack.c.h.b16 %v302
  %v2269 = vunpack.c.l.b16 %v303
  %v2270 = vunpack.c.h.b16 %v303
  %v2271 = vunpack.c.l.b16 %v304
  %v2272 = vunpack.c.h.b16 %v304
  %v2273 = vunpack.c.l.b16 %v305
  %v2274 = vunpack.c.h.b16 %v305
  %v2275 = vunpack.c.l.b16 %v306
  %v2276 = vunpack.c.h.b16 %v306
  %v2277 = vunpack.c.l.b16 %v307
  %v2278 = vunpack.c.h.b16 %v307
  %v2279 = vunpack.c.l.b16 %v308
  %v2280 = vunpack.c.h.b16 %v308
  %v2281 = vunpack.c.l.b16 %v309
  %v2282 = vunpack.c.h.b16 %v309
  %v2283 = vunpack.c.l.b16 %v310
  %v2284 = vunpack.c.h.b16 %v310
  %v2285 = vunpack.c.l.b16 %v311
  %v2286 = vunpack.c.h.b16 %v311
  %v2287 = vunpack.c.l.b16 %v312
  %v2288 = vunpack.c.h.b16 %v312
  %v2289 = vunpack.c.l.b16 %v313
  %v2290 = vunpack.c.h.b16 %v313
  %v2291 = vunpack.c.l.b16 %v314
  %v2292 = vunpack.c.h.b16 %v314
  %v2293 = vunpack.c.l.b16 %v315
  %v2294 = vunpack.c.h.b16 %v315
  %v2295 = vunpack.c.l.b16 %v316
  %v2296 = vunpack.c.h.b16 %v316
  %v2297 = vunpack.c.l.b16 %v317
  %v2298 = vunpack.c.h.b16 %v317
  %v2299 = vunpack.c.l.b16 %v318
  %v2300 = vunpack.c.h.b16 %v318
  %v2301 = vunpack.c.l.b16 %v319
  %v2302 = vunpack.c.h.b16 %v319
  %v2303 = vunpack.c.l.b16 %v320
  %v2304 = vunpack.c.h.b16 %v320
  %v2305 = vunpack.c.l.b16 %v321
  %v2306 = vunpack.c.h.b16 %v321
  %v2307 = vunpack.c.l.b16 %v322
  %v2308 = vunpack.c.h.b16 %v322
  %v2309 = vunpack.c.l.b16 %v323
  %v2310 = vunpack.c.h.b16 %v323
  %v2311 = vunpack.c.l.b16 %v324
  %v2312 = vunpack.c.h.b16 %v324
  %v2313 = vunpack.c.l.b16 %v325
  %v2314 = vunpack.c.h.b16 %v325
  %v2315 = vunpack.c.l.b16 %v326
  %v2316 = vunpack.c.h.b16 %v326
  %v2317 = vunpack.c.l.b16 %v327
  %v2318 = vunpack.c.h.b16 %v327
  %v2319 = vunpack.c.l.b16 %v328
  %v2320 = vunpack.c.h.b16 %v328
  %v2321 = vunpack.c.l.b16 %v329
  %v2322 = vunpack.c.h.b16 %v329
  %v2323 = vunpack.c.l.b16 %v330
  %v2324 = vunpack.c.h.b16 %v330
  %v2325 = vunpack.c.l.b16 %v331
  %v2326 = vunpack.c.h.b16 %v331
  %v2327 = vunpack.c.l.b16 %v332
  %v2328 = vunpack.c.h.b16 %v332
  %v2329 = vunpack.c.l.b16 %v333
  %v2330 = vunpack.c.h.b16 %v333
  %v2331 = vunpack.c.l.b16 %v334
  %v2332 = vunpack.c.h.b16 %v334
  %v2333 = vunpack.c.l.b16 %v335
  %v2334 = vunpack.c.h.b16 %v335
  %v2335 = vunpack.c.l.b16 %v336
  %v2336 = vunpack.c.h.b16 %v336
  %v2337 = vunpack.c.l.b16 %v337
  %v2338 = vunpack.c.h.b16 %v337
  %v2339 = vunpack.c.l.b16 %v338
  %v2340 = vunpack.c.h.b16 %v338
  %v2341 = vunpack.c.l.b16 %v339
  %v2342 = vunpack.c.h.b16 %v339
  %v2343 = vunpack.c.l.b16 %v340
  %v2344 = vunpack.c.h.b16 %v340
  %v2345 = vunpack.c.l.b16 %v341
  %v2346 = vunpack.c.h.b16 %v341
  %v2347 = vunpack.c.l.b16 %v342
  %v2348 = vunpack.c.h.b16 %v342
  %v2349 = vunpack.c.l.b16 %v343
  %v2350 = vunpack.c.h.b16 %v343
  %v2351 = vunpack.c.l.b16 %v344
  %v2352 = vunpack.c.h.b16 %v344
  %v2353 = vunpack.c.l.b16 %v345
  %v2354 = vunpack.c.h.b16 %v345
  %v2355 = vunpack.c.l.b16 %v346
  %v2356 = vunpack.c.h.b16 %v346
  %v2357 = vunpack.c.l.b16 %v347
  %v2358 = vunpack.c.h.b16 %v347
  %v2359 = vunpack.c.l.b16 %v348
  %v2360 = vunpack.c.h.b16 %v348
  %v2361 = vunpack.c.l.b16 %v349
  %v2362 = vunpack.c.h.b16 %v349
  %v2363 = vunpack.c.l.b16 %v350
  %v2364 = vunpack.c.h.b16 %v350
  %v2365 = vunpack.c.l.b16 %v351
  %v2366 = vunpack.c.h.b16 %v351
  %v2367 = vunpack.c.l.b16 %v352
  %v2368 = vunpack.c.h.b16 %v352
  %v2369 = vunpack.c.l.b16 %v353
  %v2370 = vunpack.c.h.b16 %v353
  %v2371 = vunpack.c.l.b16 %v354
  %v2372 = vunpack.c.h.b16 %v354
  %v2373 = vunpack.c.l.b16 %v355
  %v2374 = vunpack.c.h.b16 %v355
  %v2375 = vunpack.c.l.b16 %v356
  %v2376 = vunpack.c.h.b16 %v356
  %v2377 = vunpack.c.l.b16 %v357
  %v2378 = vunpack.c.h.b16 %v357
  %v2379 = vunpack.c.l.b16 %v358
  %v2380 = vunpack.c.h.b16 %v358
  %v2381 = vunpack.c.l.b16 %v359
  %v2382 = vunpack.c.h.b16 %v359
  %v2383 = vunpack.c.l.b16 %v360
  %v2384 = vunpack.c.h.b16 %v360
  %v2385 = vunpack.c.l.b16 %v361
  %v2386 = vunpack.c.h.b16 %v361
  %v2387 = vunpack.c.l.b16 %v362
  %v2388 = vunpack.c.h.b16 %v362
  %v2389 = vunpack.c.l.b16 %v363
  %v2390 = vunpack.c.h.b16 %v363
  %v2391 = vunpack.c.l.b16 %v364
  %v2392 = vunpack.c.h.b16 %v364
  %v2393 = vunpack.c.l.b16 %v365
  %v2394 = vunpack.c.h.b16 %v365
  %v2395 = vunpack.c.l.b16 %v366
  %v2396 = vunpack.c.h.b16 %v366
  %v2397 = vunpack.c.l.b16 %v367
  %v2398 = vunpack.c.h.b16 %v367
  %v2399 = vunpack.c.l.b16 %v368
  %v2400 = vunpack.c.h.b16 %v368
  %v2401 = vunpack.c.l.b16 %v369
  %v2402 = vunpack.c.h.b16 %v369
  %v2403 = vunpack.c.l.b16 %v370
  %v2404 = vunpack.c.h.b16 %v370
  %v2405 = vunpack.c.l.b16 %v371
  %v2406 = vunpack.c.h.b16 %v371
  %v2407 = vunpack.c.l.b16 %v372
  %v2408 = vunpack.c.h.b16 %v372
  %v2409 = vunpack.c.l.b16 %v373
  %v2410 = vunpack.c.h.b16 %v373
  %v2411 = vunpack.c.l.b16 %v374
  %v2412 = vunpack.c.h.b16 %v374
  %v2413 = vunpack.c.l.b16 %v375
  %v2414 = vunpack.c.h.b16 %v375
  %v2415 = vunpack.c.l.b16 %v376
  %v2416 = vunpack.c.h.b16 %v376
  %v2417 = vunpack.c.l.b16 %v377
  %v2418 = vunpack.c.h.b16 %v377
  %v2419 = vunpack.c.l.b16 %v378
  %v2420 = vunpack.c.h.b16 %v378
  %v2421 = vunpack.c.l.b16 %v379
  %v2422 = vunpack.c.h.b16 %v379
  %v2423 = vunpack.c.l.b16 %v380
  %v2424 = vunpack.c.h.b16 %v380
  %v2425 = vunpack.c.l.b16 %v381
  %v2426 = vunpack.c.h.b16 %v381
  %v2427 = vunpack.c.l.b16 %v382
  %v2428 = vunpack.c.h.b16 %v382
  %v2429 = vunpack.c.l.b16 %v383
  %v2430 = vunpack.c.h.b16 %v383
  %v2431 = vunpack.c.l.b16 %v384
  %v2432 = vunpack.c.h.b16 %v384
  %v2433 = vunpack.c.l.b16 %v385
  %v2434 = vunpack.c.h.b16 %v385
  %v2435 = vunpack.c.l.b16 %v386
  %v2436 = vunpack.c.h.b16 %v386
  %v2437 = vunpack.c.l.b16 %v387
  %v2438 = vunpack.c.h.b16 %v387
  %v2439 = vunpack.c.l.b16 %v388
  %v2440 = vunpack.c.h.b16 %v388
  %v2441 = vunpack.c.l.b16 %v389
  %v2442 = vunpack.c.h.b16 %v389
  %v2443 = vunpack.c.l.b16 %v390
  %v2444 = vunpack.c.h.b16 %v390
  %v2445 = vunpack.c.l.b16 %v391
  %v2446 = vunpack.c.h.b16 %v391
  %v2447 = vunpack.c.l.b16 %v392
  %v2448 = vunpack.c.h.b16 %v392
  %v2449 = vunpack.c.l.b16 %v393
  %v2450 = vunpack.c.h.b16 %v393
  %v2451 = vunpack.c.l.b16 %v394
  %v2452 = vunpack.c.h.b16 %v394
  %v2453 = vunpack.c.l.b16 %v395
  %v2454 = vunpack.c.h.b16 %v395
  %v2455 = vunpack.c.l.b16 %v396
  %v2456 = vunpack.c.h.b16 %v396
  %v2457 = vunpack.c.l.b16 %v397
  %v2458 = vunpack.c.h.b16 %v397
  %v2459 = vunpack.c.l.b16 %v398
  %v2460 = vunpack.c.h.b16 %v398
  %v2461 = vunpack.c.l.b16 %v399
  %v2462 = vunpack.c.h.b16 %v399
  %v2463 = vunpack.c.l.b16 %v400
  %v2464 = vunpack.c.h.b16 %v400
  %v2465 = vunpack.c.l.b16 %v401
  %v2466 = vunpack.c.h.b16 %v401
  %v2467 = vunpack.c.l.b16 %v402
  %v2468 = vunpack.c.h.b16 %v402
  %v2469 = vunpack.c.l.b16 %v403
  %v2470 = vunpack.c.h.b16 %v403
  %v2471 = vunpack.c.l.b16 %v404
  %v2472 = vunpack.c.h.b16 %v404
  %v2473 = vunpack.c.l.b16 %v405
  %v2474 = vunpack.c.h.b16 %v405
  %v2475 = vunpack.c.l.b16 %v406
  %v2476 = vunpack.c.h.b16 %v406
  %v2477 = vunpack.c.l.b16 %v407
  %v2478 = vunpack.c.h.b16 %v407
  %v2479 = vunpack.c.l.b16 %v408
  %v2480 = vunpack.c.h.b16 %v408
  %v2481 = vunpack.c.l.b16 %v409
  %v2482 = vunpack.c.h.b16 %v409
  %v2483 = vunpack.c.l.b16 %v410
  %v2484 = vunpack.c.h.b16 %v410
  %v2485 = vunpack.c.l.b16 %v411
  %v2486 = vunpack.c.h.b16 %v411
  %v2487 = vunpack.c.l.b16 %v412
  %v2488 = vunpack.c.h.b16 %v412
  %v2489 = vunpack.c.l.b16 %v413
  %v2490 = vunpack.c.h.b16 %v413
  %v2491 = vunpack.c.l.b16 %v414
  %v2492 = vunpack.c.h.b16 %v414
  %v2493 = vunpack.c.l.b16 %v415
  %v2494 = vunpack.c.h.b16 %v415
  %v2495 = vunpack.c.l.b16 %v416
  %v2496 = vunpack.c.h.b16 %v416
  %v2497 = vunpack.c.l.b16 %v417
  %v2498 = vunpack.c.h.b16 %v417
  %v2499 = vunpack.c.l.b16 %v418
  %v2500 = vunpack.c.h.b16 %v418
  %v2501 = vunpack.c.l.b16 %v419
  %v2502 = vunpack.c.h.b16 %v419
  %v2503 = vunpack.c.l.b16 %v420
  %v2504 = vunpack.c.h.b16 %v420
  %v2505 = vunpack.c.l.b16 %v421
  %v2506 = vunpack.c.h.b16 %v421
  %v2507 = vunpack.c.l.b16 %v422
  %v2508 = vunpack.c.h.b16 %v422
  %v2509 = vunpack.c.l.b16 %v423
  %v2510 = vunpack.c.h.b16 %v423
  %v2511 = vunpack.c.l.b16 %v424
  %v2512 = vunpack.c.h.b16 %v424
  %v2513 = vunpack.c.l.b16 %v425
  %v2514 = vunpack.c.h.b16 %v425
  %v2515 = vunpack.c.l.b16 %v426
  %v2516 = vunpack.c.h.b16 %v426
  %v2517 = vunpack.c.l.b16 %v427
  %v2518 = vunpack.c.h.b16 %v427
  %v2519 = vunpack.c.l.b16 %v428
  %v2520 = vunpack.c.h.b16 %v428
  %v2521 = vunpack.c.l.b16 %v429
  %v2522 = vunpack.c.h.b16 %v429
  %v2523 = vunpack.c.l.b16 %v430
  %v2524 = vunpack.c.h.b16 %v430
  %v2525 = vunpack.c.l.b16 %v431
  %v2526 = vunpack.c.h.b16 %v431
  %v2527 = vunpack.c.l.b16 %v432
  %v2528 = vunpack.c.h.b16 %v432
  %v2529 = vunpack.c.l.b16 %v433
  %v2530 = vunpack.c.h.b16 %v433
  %v2531 = vunpack.c.l.b16 %v434
  %v2532 = vunpack.c.h.b16 %v434
  %v2533 = vunpack.c.l.b16 %v435
  %v2534 = vunpack.c.h.b16 %v435
  %v2535 = vunpack.c.l.b16 %v436
  %v2536 = vunpack.c.h.b16 %v436
  %v2537 = vunpack.c.l.b16 %v437
  %v2538 = vunpack.c.h.b16 %v437
  %v2539 = vunpack.c.l.b16 %v438
  %v2540 = vunpack.c.h.b16 %v438
  %v2541 = vunpack.c.l.b16 %v439
  %v2542 = vunpack.c.h.b16 %v439
  %v2543 = vunpack.c.l.b16 %v440
  %v2544 = vunpack.c.h.b16 %v440
  %v2545 = vunpack.c.l.b16 %v441
  %v2546 = vunpack.c.h.b16 %v441
  %v2547 = vunpack.c.l.b16 %v442
  %v2548 = vunpack.c.h.b16 %v442
  %v2549 = vunpack.c.l.b16 %v443
  %v2550 = vunpack.c.h.b16 %v443
  %v2551 = vunpack.c.l.b16 %v444
  %v2552 = vunpack.c.h.b16 %v444
  %v2553 = vunpack.c.l.b16 %v445
  %v2554 = vunpack.c.h.b16 %v445
  %v2555 = vunpack.c.l.b16 %v446
  %v2556 = vunpack.c.h.b16 %v446
  %v2557 = vunpack.c.l.b16 %v447
  %v2558 = vunpack.c.h.b16 %v447
  %v2559 = vunpack.c.l.b16 %v448
  %v2560 = vunpack.c.h.b16 %v448
  %v2561 = vunpack.c.l.b16 %v449
  %v2562 = vunpack.c.h.b16 %v449
  %v2563 = vunpack.c.l.b16 %v450
  %v2564 = vunpack.c.h.b16 %v450
  %v2565 = vunpack.c.l.b16 %v451
  %v2566 = vunpack.c.h.b16 %v451
  %v2567 = vunpack.c.l.b16 %v452
  %v2568 = vunpack.c.h.b16 %v452
  %v2569 = vunpack.c.l.b16 %v453
  %v2570 = vunpack.c.h.b16 %v453
  %v2571 = vunpack.c.l.b16 %v454
  %v2572 = vunpack.c.h.b16 %v454
  %v2573 = vunpack.c.l.b16 %v455
  %v2574 = vunpack.c.h.b16 %v455
  %v2575 = vunpack.c.l.b16 %v456
  %v2576 = vunpack.c.h.b16 %v456
  %v2577 = vunpack.c.l.b16 %v457
  %v2578 = vunpack.c.h.b16 %v457
  %v2579 = vunpack.c.l.b16 %v458
  %v2580 = vunpack.c.h.b16 %v458
  %v2581 = vunpack.c.l.b16 %v459
  %v2582 = vunpack.c.h.b16 %v459
  %v2583 = vunpack.c.l.b16 %v460
  %v2584 = vunpack.c.h.b16 %v460
  %v2585 = vunpack.c.l.b16 %v461
  %v2586 = vunpack.c.h.b16 %v461
  %v2587 = vunpack.c.l.b16 %v462
  %v2588 = vunpack.c.h.b16 %v462
  %v2589 = vunpack.c.l.b16 %v463
  %v2590 = vunpack.c.h.b16 %v463
  %v2591 = vunpack.c.l.b16 %v464
  %v2592 = vunpack.c.h.b16 %v464
  %v2593 = vunpack.c.l.b16 %v465
  %v2594 = vunpack.c.h.b16 %v465
  %v2595 = vunpack.c.l.b16 %v466
  %v2596 = vunpack.c.h.b16 %v466
  %v2597 = vunpack.c.l.b16 %v467
  %v2598 = vunpack.c.h.b16 %v467
  %v2599 = vunpack.c.l.b16 %v468
  %v2600 = vunpack.c.h.b16 %v468
  %v2601 = vunpack.c.l.b16 %v469
  %v2602 = vunpack.c.h.b16 %v469
  %v2603 = vunpack.c.l.b16 %v470
  %v2604 = vunpack.c.h.b16 %v470
  %v2605 = vunpack.c.l.b16 %v471
  %v2606 = vunpack.c.h.b16 %v471
  %v2607 = vunpack.c.l.b16 %v472
  %v2608 = vunpack.c.h.b16 %v472
  %v2609 = vunpack.c.l.b16 %v473
  %v2610 = vunpack.c.h.b16 %v473
  %v2611 = vunpack.c.l.b16 %v474
  %v2612 = vunpack.c.h.b16 %v474
  %v2613 = vunpack.c.l.b16 %v475
  %v2614 = vunpack.c.h.b16 %v475
  %v2615 = vunpack.c.l.b16 %v476
  %v2616 = vunpack.c.h.b16 %v476
  %v2617 = vunpack.c.l.b16 %v477
  %v2618 = vunpack.c.h.b16 %v477
  %v2619 = vunpack.c.l.b16 %v478
  %v2620 = vunpack.c.h.b16 %v478
  %v2621 = vunpack.c.l.b16 %v479
  %v2622 = vunpack.c.h.b16 %v479
  %v2623 = vunpack.c.l.b16 %v480
  %v2624 = vunpack.c.h.b16 %v480
  %v2625 = vunpack.c.l.b16 %v481
  %v2626 = vunpack.c.h.b16 %v481
  %v2627 = vunpack.c.l.b16 %v482
  %v2628 = vunpack.c.h.b16 %v482
  %v2629 = vunpack.c.l.b16 %v483
  %v2630 = vunpack.c.h.b16 %v483
  %v2631 = vunpack.c.l.b16 %v484
  %v2632 = vunpack.c.h.b16 %v484
  %v2633 = vunpack.c.l.b16 %v485
  %v2634 = vunpack.c.h.b16 %v485
  %v2635 = vunpack.c.l.b16 %v486
  %v2636 = vunpack.c.h.b16 %v486
  %v2637 = vunpack.c.l.b16 %v487
  %v2638 = vunpack.c.h.b16 %v487
  %v2639 = vunpack.c.l.b16 %v488
  %v2640 = vunpack.c.h.b16 %v488
  %v2641 = vunpack.c.l.b16 %v489
  %v2642 = vunpack.c.h.b16 %v489
  %v2643 = vunpack.c.l.b16 %v490
  %v2644 = vunpack.c.h.b16 %v490
  %v2645 = vunpack.c.l.b16 %v491
  %v2646 = vunpack.c.h.b16 %v491
  %v2647 = vunpack.c.l.b16 %v492
  %v2648 = vunpack.c.h.b16 %v492
  %v2649 = vunpack.c.l.b16 %v493
  %v2650 = vunpack.c.h.b16 %v493
  %v2651 = vunpack.c.l.b16 %v494
  %v2652 = vunpack.c.h.b16 %v494
  %v2653 = vunpack.c.l.b16 %v495
  %v2654 = vunpack.c.h.b16 %v495
  %v2655 = vunpack.c.l.b16 %v496
  %v2656 = vunpack.c.h.b16 %v496
  %v2657 = vunpack.c.l.b16 %v497
  %v2658 = vunpack.c.h.b16 %v497
  %v2659 = vunpack.c.l.b16 %v498
  %v2660 = vunpack.c.h.b16 %v498
  %v2661 = vunpack.c.l.b16 %v499
  %v2662 = vunpack.c.h.b16 %v499
  %v2663 = vunpack.c.l.b16 %v500
  %v2664 = vunpack.c.h.b16 %v500
  %v2665 = vunpack.c.l.b16 %v501
  %v2666 = vunpack.c.h.b16 %v501
  %v2667 = vunpack.c.l.b16 %v502
  %v2668 = vunpack.c.h.b16 %v502
  %v2669 = vunpack.c.l.b16 %v503
  %v2670 = vunpack.c.h.b16 %v503
  %v2671 = vunpack.c.l.b16 %v504
  %v2672 = vunpack.c.h.b16 %v504
  %v2673 = vunpack.c.l.b16 %v505
  %v2674 = vunpack.c.h.b16 %v505
  %v2675 = vunpack.c.l.b16 %v506
  %v2676 = vunpack.c.h.b16 %v506
  %v2677 = vunpack.c.l.b16 %v507
  %v2678 = vunpack.c.h.b16 %v507
  %v2679 = vunpack.c.l.b16 %v508
  %v2680 = vunpack.c.h.b16 %v508
  %v2681 = vunpack.c.l.b16 %v509
  %v2682 = vunpack.c.h.b16 %v509
  %v2683 = vunpack.c.l.b16 %v510
  %v2684 = vunpack.c.h.b16 %v510
  %v2685 = vunpack.c.l.b16 %v511
  %v2686 = vunpack.c.h.b16 %v511
  %v2687 = vunpack.c.l.b16 %v512
  %v2688 = vunpack.c.h.b16 %v512
  %v2689 = vunpack.c.l.b16 %v513
  %v2690 = vunpack.c.h.b16 %v513
  %v2691 = vunpack.c.l.b16 %v514
  %v2692 = vunpack.c.h.b16 %v514
  %v2693 = vunpack.c.l.b16 %v515
  %v2694 = vunpack.c.h.b16 %v515
  %v2695 = vunpack.c.l.b16 %v516
  %v2696 = vunpack.c.h.b16 %v516
  %v2697 = vunpack.c.l.b16 %v517
  %v2698 = vunpack.c.h.b16 %v517
  %v2699 = vunpack.c.l.b16 %v518
  %v2700 = vunpack.c.h.b16 %v518
  %v2701 = vunpack.c.l.b16 %v519
  %v2702 = vunpack.c.h.b16 %v519
  %v2703 = vunpack.c.l.b16 %v520
  %v2704 = vunpack.c.h.b16 %v520
  %v2705 = vunpack.c.l.b16 %v521
  %v2706 = vunpack.c.h.b16 %v521
  %v2707 = vunpack.c.l.b16 %v522
  %v2708 = vunpack.c.h.b16 %v522
  %v2709 = vunpack.c.l.b16 %v523
  %v2710 = vunpack.c.h.b16 %v523
  %v2711 = vunpack.c.l.b16 %v524
  %v2712 = vunpack.c.h.b16 %v524
  %v2713 = vunpack.c.l.b16 %v525
  %v2714 = vunpack.c.h.b16 %v525
  %v2715 = vunpack.c.l.b16 %v526
  %v2716 = vunpack.c.h.b16 %v526
  %v2717 = vunpack.c.l.b16 %v527
  %v2718 = vunpack.c.h.b16 %v527
  %v2719 = vunpack.c.l.b16 %v528
  %v2720 = vunpack.c.h.b16 %v528
  %v2721 = vunpack.c.l.b16 %v529
  %v2722 = vunpack.c.h.b16 %v529
  %v2723 = vunpack.c.l.b16 %v530
  %v2724 = vunpack.c.h.b16 %v530
  %v2725 = vunpack.c.l.b16 %v531
  %v2726 = vunpack.c.h.b16 %v531
  %v2727 = vunpack.c.l.b16 %v532
  %v2728 = vunpack.c.h.b16 %v532
  %v2729 = vunpack.c.l.b16 %v533
  %v2730 = vunpack.c.h.b16 %v533
  %v2731 = vunpack.c.l.b16 %v534
  %v2732 = vunpack.c.h.b16 %v534
  %v2733 = vunpack.c.l.b16 %v535
  %v2734 = vunpack.c.h.b16 %v535
  %v2735 = vunpack.c.l.b16 %v536
  %v2736 = vunpack.c.h.b16 %v536
  %v2737 = vunpack.c.l.b16 %v537
  %v2738 = vunpack.c.h.b16 %v537
  %v2739 = vunpack.c.l.b16 %v538
  %v2740 = vunpack.c.h.b16 %v538
  %v2741 = vunpack.c.l.b16 %v539
  %v2742 = vunpack.c.h.b16 %v539
  %v2743 = vunpack.c.l.b16 %v540
  %v2744 = vunpack.c.h.b16 %v540
  %v2745 = vunpack.c.l.b16 %v541
  %v2746 = vunpack.c.h.b16 %v541
  %v2747 = vunpack.c.l.b16 %v542
  %v2748 = vunpack.c.h.b16 %v542
  %v2749 = vunpack.c.l.b16 %v543
  %v2750 = vunpack.c.h.b16 %v543
  %v2751 = vunpack.c.l.b16 %v544
  %v2752 = vunpack.c.h.b16 %v544
  %v2753 = vunpack.c.l.b16 %v545
  %v2754 = vunpack.c.h.b16 %v545
  %v2755 = vunpack.c.l.b16 %v546
  %v2756 = vunpack.c.h.b16 %v546
  %v2757 = vunpack.c.l.b16 %v547
  %v2758 = vunpack.c.h.b16 %v547
  %v2759 = vunpack.c.l.b16 %v548
  %v2760 = vunpack.c.h.b16 %v548
  %v2761 = vunpack.c.l.b16 %v549
  %v2762 = vunpack.c.h.b16 %v549
  %v2763 = vunpack.c.l.b16 %v550
  %v2764 = vunpack.c.h.b16 %v550
  %v2765 = vunpack.c.l.b16 %v551
  %v2766 = vunpack.c.h.b16 %v551
  %v2767 = vunpack.c.l.b16 %v552
  %v2768 = vunpack.c.h.b16 %v552
  %v2769 = vunpack.c.l.b16 %v553
  %v2770 = vunpack.c.h.b16 %v553
  %v2771 = vunpack.c.l.b16 %v554
  %v2772 = vunpack.c.h.b16 %v554
  %v2773 = vunpack.c.l.b16 %v555
  %v2774 = vunpack.c.h.b16 %v555
  %v2775 = vunpack.c.l.b16 %v556
  %v2776 = vunpack.c.h.b16 %v556
  %v2777 = vunpack.c.l.b16 %v557
  %v2778 = vunpack.c.h.b16 %v557
  %v2779 = vunpack.c.l.b16 %v558
  %v2780 = vunpack.c.h.b16 %v558
  %v2781 = vunpack.c.l.b16 %v559
  %v2782 = vunpack.c.h.b16 %v559
  %v2783 = vunpack.c.l.b16 %v560
  %v2784 = vunpack.c.h.b16 %v560
  %v2785 = vunpack.c.l.b16 %v561
  %v2786 = vunpack.c.h.b16 %v561
  %v2787 = vunpack.c.l.b16 %v562
  %v2788 = vunpack.c.h.b16 %v562
  %v2789 = vunpack.c.l.b16 %v563
  %v2790 = vunpack.c.h.b16 %v563
  %v2791 = vunpack.c.l.b16 %v564
  %v2792 = vunpack.c.h.b16 %v564
  %v2793 = vunpack.c.l.b16 %v565
  %v2794 = vunpack.c.h.b16 %v565
  %v2795 = vunpack.c.l.b16 %v566
  %v2796 = vunpack.c.h.b16 %v566
  %v2797 = vunpack.c.l.b16 %v567
  %v2798 = vunpack.c.h.b16 %v567
  %v2799 = vunpack.c.l.b16 %v568
  %v2800 = vunpack.c.h.b16 %v568
  %v2801 = vunpack.c.l.b16 %v569
  %v2802 = vunpack.c.h.b16 %v569
  %v2803 = vunpack.c.l.b16 %v570
  %v2804 = vunpack.c.h.b16 %v570
  %v2805 = vunpack.c.l.b16 %v571
  %v2806 = vunpack.c.h.b16 %v571
  %v2807 = vunpack.c.l.b16 %v572
  %v2808 = vunpack.c.h.b16 %v572
  %v2809 = vunpack.c.l.b16 %v573
  %v2810 = vunpack.c.h.b16 %v573
  %v2811 = vunpack.c.l.b16 %v574
  %v2812 = vunpack.c.h.b16 %v574
  %v2813 = vunpack.c.l.b16 %v575
  %v2814 = vunpack.c.h.b16 %v575
  %v2815 = vunpack.c.l.b16 %v576
  %v2816 = vunpack.c.h.b16 %v576
  %v2817 = vunpack.c.l.b16 %v577
  %v2818 = vunpack.c.h.b16 %v577
  %v2819 = vunpack.c.l.b16 %v578
  %v2820 = vunpack.c.h.b16 %v578
  %v2821 = vunpack.c.l.b16 %v579
  %v2822 = vunpack.c.h.b16 %v579
  %v2823 = vunpack.c.l.b16 %v580
  %v2824 = vunpack.c.h.b16 %v580
  %v2825 = vunpack.c.l.b16 %v581
  %v2826 = vunpack.c.h.b16 %v581
  %v2827 = vunpack.c.l.b16 %v582
  %v2828 = vunpack.c.h.b16 %v582
  %v2829 = vunpack.c.l.b16 %v583
  %v2830 = vunpack.c.h.b16 %v583
  %v2831 = vunpack.c.l.b16 %v584
  %v2832 = vunpack.c.h.b16 %v584
  %v2833 = vunpack.c.l.b16 %v585
  %v2834 = vunpack.c.h.b16 %v585
  %v2835 = vunpack.c.l.b16 %v586
  %v2836 = vunpack.c.h.b16 %v586
  %v2837 = vunpack.c.l.b16 %v587
  %v2838 = vunpack.c.h.b16 %v587
  %v2839 = vunpack.c.l.b16 %v588
  %v2840 = vunpack.c.h.b16 %v588
  %v2841 = vunpack.c.l.b16 %v589
  %v2842 = vunpack.c.h.b16 %v589
  %v2843 = vunpack.c.l.b16 %v590
  %v2844 = vunpack.c.h.b16 %v590
  %v2845 = vunpack.c.l.b16 %v591
  %v2846 = vunpack.c.h.b16 %v591
  %v2847 = vunpack.c.l.b16 %v592
  %v2848 = vunpack.c.h.b16 %v592
  %v2849 = vunpack.c.l.b16 %v593
  %v2850 = vunpack.c.h.b16 %v593
  %v2851 = vunpack.c.l.b16 %v594
  %v2852 = vunpack.c.h.b16 %v594
  %v2853 = vunpack.c.l.b16 %v595
  %v2854 = vunpack.c.h.b16 %v595
  %v2855 = vunpack.c.l.b16 %v596
  %v2856 = vunpack.c.h.b16 %v596
  %v2857 = vunpack.c.l.b16 %v597
  %v2858 = vunpack.c.h.b16 %v597
  %v2859 = vunpack.c.l.b16 %v598
  %v2860 = vunpack.c.h.b16 %v598
  %v2861 = vunpack.c.l.b16 %v599
  %v2862 = vunpack.c.h.b16 %v599
  %v2863 = vunpack.c.l.b16 %v600
  %v2864 = vunpack.c.h.b16 %v600
  %v2865 = vunpack.c.l.b16 %v601
  %v2866 = vunpack.c.h.b16 %v601
  %v2867 = vunpack.c.l.b16 %v602
  %v2868 = vunpack.c.h.b16 %v602
  %v2869 = vunpack.c.l.b16 %v603
  %v2870 = vunpack.c.h.b16 %v603
  %v2871 = vunpack.c.l.b16 %v604
  %v2872 = vunpack.c.h.b16 %v604
  %v2873 = vunpack.c.l.b16 %v605
  %v2874 = vunpack.c.h.b16 %v605
  %v2875 = vunpack.c.l.b16 %v606
  %v2876 = vunpack.c.h.b16 %v606
  %v2877 = vunpack.c.l.b16 %v607
  %v2878 = vunpack.c.h.b16 %v607
  %v2879 = vunpack.c.l.b16 %v608
  %v2880 = vunpack.c.h.b16 %v608
  %v2881 = vunpack.c.l.b16 %v609
  %v2882 = vunpack.c.h.b16 %v609
  %v2883 = vunpack.c.l.b16 %v610
  %v2884 = vunpack.c.h.b16 %v610
  %v2885 = vunpack.c.l.b16 %v611
  %v2886 = vunpack.c.h.b16 %v611
  %v2887 = vunpack.c.l.b16 %v612
  %v2888 = vunpack.c.h.b16 %v612
  %v2889 = vunpack.c.l.b16 %v613
  %v2890 = vunpack.c.h.b16 %v613
  %v2891 = vunpack.c.l.b16 %v614
  %v2892 = vunpack.c.h.b16 %v614
  %v2893 = vunpack.c.l.b16 %v615
  %v2894 = vunpack.c.h.b16 %v615
  %v2895 = vunpack.c.l.b16 %v616
  %v2896 = vunpack.c.h.b16 %v616
  %v2897 = vunpack.c.l.b16 %v617
  %v2898 = vunpack.c.h.b16 %v617
  %v2899 = vunpack.c.l.b16 %v618
  %v2900 = vunpack.c.h.b16 %v618
  %v2901 = vunpack.c.l.b16 %v619
  %v2902 = vunpack.c.h.b16 %v619
  %v2903 = vunpack.c.l.b16 %v620
  %v2904 = vunpack.c.h.b16 %v620
  %v2905 = vunpack.c.l.b16 %v621
  %v2906 = vunpack.c.h.b16 %v621
  %v2907 = vunpack.c.l.b16 %v622
  %v2908 = vunpack.c.h.b16 %v622
  %v2909 = vunpack.c.l.b16 %v623
  %v2910 = vunpack.c.h.b16 %v623
  %v2911 = vunpack.c.l.b16 %v624
  %v2912 = vunpack.c.h.b16 %v624
  %v2913 = vunpack.c.l.b16 %v625
  %v2914 = vunpack.c.h.b16 %v625
  %v2915 = vunpack.c.l.b16 %v626
  %v2916 = vunpack.c.h.b16 %v626
  %v2917 = vunpack.c.l.b16 %v627
  %v2918 = vunpack.c.h.b16 %v627
  %v2919 = vunpack.c.l.b16 %v628
  %v2920 = vunpack.c.h.b16 %v628
  %v2921 = vunpack.c.l.b16 %v629
  %v2922 = vunpack.c.h.b16 %v629
  %v2923 = vunpack.c.l.b16 %v630
  %v2924 = vunpack.c.h.b16 %v630
  %v2925 = vunpack.c.l.b16 %v631
  %v2926 = vunpack.c.h.b16 %v631
  %v2927 = vunpack.c.l.b16 %v632
  %v2928 = vunpack.c.h.b16 %v632
  %v2929 = vunpack.c.l.b16 %v633
  %v2930 = vunpack.c.h.b16 %v633
  %v2931 = vunpack.c.l.b16 %v634
  %v2932 = vunpack.c.h.b16 %v634
  %v2933 = vunpack.c.l.b16 %v635
  %v2934 = vunpack.c.h.b16 %v635
  %v2935 = vunpack.c.l.b16 %v636
  %v2936 = vunpack.c.h.b16 %v636
  %v2937 = vunpack.c.l.b16 %v637
  %v2938 = vunpack.c.h.b16 %v637
  %v2939 = vunpack.c.l.b16 %v638
  %v2940 = vunpack.c.h.b16 %v638
  %v2941 = vunpack.c.l.b16 %v639
  %v2942 = vunpack.c.h.b16 %v639
  %v2943 = vunpack.c.l.b16 %v640
  %v2944 = vunpack.c.h.b16 %v640
  %v2945 = vunpack.c.l.b16 %v641
  %v2946 = vunpack.c.h.b16 %v641
  %v2947 = vunpack.c.l.b16 %v642
  %v2948 = vunpack.c.h.b16 %v642
  %v2949 = vunpack.c.l.b16 %v643
  %v2950 = vunpack.c.h.b16 %v643
  %v2951 = vunpack.c.l.b16 %v644
  %v2952 = vunpack.c.h.b16 %v644
  %v2953 = vunpack.c.l.b16 %v645
  %v2954 = vunpack.c.h.b16 %v645
  %v2955 = vunpack.c.l.b16 %v646
  %v2956 = vunpack.c.h.b16 %v646
  %v2957 = vunpack.c.l.b16 %v647
  %v2958 = vunpack.c.h.b16 %v647
  %v2959 = vunpack.c.l.b16 %v648
  %v2960 = vunpack.c.h.b16 %v648
  %v2961 = vunpack.c.l.b16 %v649
  %v2962 = vunpack.c.h.b16 %v649
  %v2963 = vunpack.c.l.b16 %v650
  %v2964 = vunpack.c.h.b16 %v650
  %v2965 = vunpack.c.l.b16 %v651
  %v2966 = vunpack.c.h.b16 %v651
  %v2967 = vunpack.c.l.b16 %v652
  %v2968 = vunpack.c.h.b16 %v652
  %v2969 = vunpack.c.l.b16 %v653
  %v2970 = vunpack.c.h.b16 %v653
  %v2971 = vunpack.c.l.b16 %v654
  %v2972 = vunpack.c.h.b16 %v654
  %v2973 = vunpack.c.l.b16 %v655
  %v2974 = vunpack.c.h.b16 %v655
  %v2975 = vunpack.c.l.b16 %v656
  %v2976 = vunpack.c.h.b16 %v656
  %v2977 = vunpack.c.l.b16 %v657
  %v2978 = vunpack.c.h.b16 %v657
  %v2979 = vunpack.c.l.b16 %v658
  %v2980 = vunpack.c.h.b16 %v658
  %v2981 = vunpack.c.l.b16 %v659
  %v2982 = vunpack.c.h.b16 %v659
  %v2983 = vunpack.c.l.b16 %v660
  %v2984 = vunpack.c.h.b16 %v660
  %v2985 = vunpack.c.l.b16 %v661
  %v2986 = vunpack.c.h.b16 %v661
  %v2987 = vunpack.c.l.b16 %v662
  %v2988 = vunpack.c.h.b16 %v662
  %v2989 = vunpack.c.l.b16 %v663
  %v2990 = vunpack.c.h.b16 %v663
  %v2991 = vunpack.c.l.b16 %v664
  %v2992 = vunpack.c.h.b16 %v664
  %v2993 = vunpack.c.l.b16 %v665
  %v2994 = vunpack.c.h.b16 %v665
  %v2995 = vunpack.c.l.b16 %v666
  %v2996 = vunpack.c.h.b16 %v666
  %v2997 = vunpack.c.l.b16 %v667
  %v2998 = vunpack.c.h.b16 %v667
  %v2999 = vunpack.c.l.b16 %v668
  %v3000 = vunpack.c.h.b16 %v668
  %v3001 = vunpack.c.l.b16 %v669
  %v3002 = vunpack.c.h.b16 %v669
  %v3003 = vunpack.c.l.b16 %v670
  %v3004 = vunpack.c.h.b16 %v670
  %v3005 = vunpack.c.l.b16 %v671
  %v3006 = vunpack.c.h.b16 %v671
  %v3007 = vunpack.c.l.b16 %v672
  %v3008 = vunpack.c.h.b16 %v672
  %v3009 = vunpack.c.l.b16 %v673
  %v3010 = vunpack.c.h.b16 %v673
  %v3011 = vunpack.c.l.b16 %v674
  %v3012 = vunpack.c.h.b16 %v674
  %v3013 = vunpack.c.l.b16 %v675
  %v3014 = vunpack.c.h.b16 %v675
  %v3015 = vunpack.c.l.b16 %v676
  %v3016 = vunpack.c.h.b16 %v676
  %v3017 = vunpack.c.l.b16 %v677
  %v3018 = vunpack.c.h.b16 %v677
  %v3019 = vunpack.c.l.b16 %v678
  %v3020 = vunpack.c.h.b16 %v678
  %v3021 = vunpack.c.l.b16 %v679
  %v3022 = vunpack.c.h.b16 %v679
  %v3023 = vunpack.c.l.b16 %v680
  %v3024 = vunpack.c.h.b16 %v680
  %v3025 = vunpack.c.l.b16 %v681
  %v3026 = vunpack.c.h.b16 %v681
  %v3027 = vunpack.c.l.b16 %v682
  %v3028 = vunpack.c.h.b16 %v682
  %v3029 = vunpack.c.l.b16 %v683
  %v3030 = vunpack.c.h.b16 %v683
  %v3031 = vunpack.c.l.b16 %v684
  %v3032 = vunpack.c.h.b16 %v684
  %v3033 = vunpack.c.l.b16 %v685
  %v3034 = vunpack.c.h.b16 %v685
  %v3035 = vunpack.c.l.b16 %v686
  %v3036 = vunpack.c.h.b16 %v686
  %v3037 = vunpack.c.l.b16 %v687
  %v3038 = vunpack.c.h.b16 %v687
  %v3039 = vunpack.c.l.b16 %v688
  %v3040 = vunpack.c.h.b16 %v688
  %v3041 = vunpack.c.l.b16 %v689
  %v3042 = vunpack.c.h.b16 %v689
  %v3043 = vunpack.c.l.b16 %v690
  %v3044 = vunpack.c.h.b16 %v690
  %v3045 = vunpack.c.l.b16 %v691
  %v3046 = vunpack.c.h.b16 %v691
  %v3047 = vunpack.c.l.b16 %v692
  %v3048 = vunpack.c.h.b16 %v692
  %v3049 = vunpack.c.l.b16 %v693
  %v3050 = vunpack.c.h.b16 %v693
  %v3051 = vunpack.c.l.b16 %v694
  %v3052 = vunpack.c.h.b16 %v694
  %v3053 = vunpack.c.l.b16 %v695
  %v3054 = vunpack.c.h.b16 %v695
  %v3055 = vunpack.c.l.b16 %v696
  %v3056 = vunpack.c.h.b16 %v696
  %v3057 = vunpack.c.l.b16 %v697
  %v3058 = vunpack.c.h.b16 %v697
  %v3059 = vunpack.c.l.b16 %v698
  %v3060 = vunpack.c.h.b16 %v698
  %v3061 = vunpack.c.l.b16 %v699
  %v3062 = vunpack.c.h.b16 %v699
  %v3063 = vunpack.c.l.b16 %v700
  %v3064 = vunpack.c.h.b16 %v700
  %v3065 = vunpack.c.l.b16 %v701
  %v3066 = vunpack.c.h.b16 %v701
  %v3067 = vunpack.c.l.b16 %v702
  %v3068 = vunpack.c.h.b16 %v702
  %v3069 = vunpack.c.l.b16 %v703
  %v3070 = vunpack.c.h.b16 %v703
  %v3071 = vunpack.c.l.b16 %v704
  %v3072 = vunpack.c.h.b16 %v704
  %v3073 = vunpack.c.l.b16 %v705
  %v3074 = vunpack.c.h.b16 %v705
  %v3075 = vunpack.c.l.b16 %v706
  %v3076 = vunpack.c.h.b16 %v706
  %v3077 = vunpack.c.l.b16 %v707
  %v3078 = vunpack.c.h.b16 %v707
  %v3079 = vunpack.c.l.b16 %v708
  %v3080 = vunpack.c.h.b16 %v708
  %v3081 = vunpack.c.l.b16 %v709
  %v3082 = vunpack.c.h.b16 %v709
  %v3083 = vunpack.c.l.b16 %v710
  %v3084 = vunpack.c.h.b16 %v710
  %v3085 = vunpack.c.l.b16 %v711
  %v3086 = vunpack.c.h.b16 %v711
  %v3087 = vunpack.c.l.b16 %v712
  %v3088 = vunpack.c.h.b16 %v712
  %v3089 = vunpack.c.l.b16 %v713
  %v3090 = vunpack.c.h.b16 %v713
  %v3091 = vunpack.c.l.b16 %v714
  %v3092 = vunpack.c.h.b16 %v714
  %v3093 = vunpack.c.l.b16 %v715
  %v3094 = vunpack.c.h.b16 %v715
  %v3095 = vunpack.c.l.b16 %v716
  %v3096 = vunpack.c.h.b16 %v716
  %v3097 = vunpack.c.l.b16 %v717
  %v3098 = vunpack.c.h.b16 %v717
  %v3099 = vunpack.c.l.b16 %v718
  %v3100 = vunpack.c.h.b16 %v718
  %v3101 = vunpack.c.l.b16 %v719
  %v3102 = vunpack.c.h.b16 %v719
  %v3103 = vunpack.c.l.b16 %v720
  %v3104 = vunpack.c.h.b16 %v720
  %v3105 = vunpack.c.l.b16 %v721
  %v3106 = vunpack.c.h.b16 %v721
  %v3107 = vunpack.c.l.b16 %v722
  %v3108 = vunpack.c.h.b16 %v722
  %v3109 = vunpack.c.l.b16 %v723
  %v3110 = vunpack.c.h.b16 %v723
  %v3111 = vunpack.c.l.b16 %v724
  %v3112 = vunpack.c.h.b16 %v724
  %v3113 = vunpack.c.l.b16 %v725
  %v3114 = vunpack.c.h.b16 %v725
  %v3115 = vunpack.c.l.b16 %v726
  %v3116 = vunpack.c.h.b16 %v726
  %v3117 = vunpack.c.l.b16 %v727
  %v3118 = vunpack.c.h.b16 %v727
  %v3119 = vunpack.c.l.b16 %v728
  %v3120 = vunpack.c.h.b16 %v728
  %v3121 = vunpack.c.l.b16 %v729
  %v3122 = vunpack.c.h.b16 %v729
  %v3123 = vunpack.c.l.b16 %v730
  %v3124 = vunpack.c.h.b16 %v730
  %v3125 = vunpack.c.l.b16 %v731
  %v3126 = vunpack.c.h.b16 %v731
  %v3127 = vunpack.c.l.b16 %v732
  %v3128 = vunpack.c.h.b16 %v732
  %v3129 = vunpack.c.l.b16 %v733
  %v3130 = vunpack.c.h.b16 %v733
  %v3131 = vunpack.c.l.b16 %v734
  %v3132 = vunpack.c.h.b16 %v734
  %v3133 = vunpack.c.l.b16 %v735
  %v3134 = vunpack.c.h.b16 %v735
  %v3135 = vunpack.c.l.b16 %v736
  %v3136 = vunpack.c.h.b16 %v736
  %v3137 = vunpack.c.l.b16 %v737
  %v3138 = vunpack.c.h.b16 %v737
  %v3139 = vunpack.c.l.b16 %v738
  %v3140 = vunpack.c.h.b16 %v738
  %v3141 = vunpack.c.l.b16 %v739
  %v3142 = vunpack.c.h.b16 %v739
  %v3143 = vunpack.c.l.b16 %v740
  %v3144 = vunpack.c.h.b16 %v740
  %v3145 = vunpack.c.l.b16 %v741
  %v3146 = vunpack.c.h.b16 %v741
  %v3147 = vunpack.c.l.b16 %v742
  %v3148 = vunpack.c.h.b16 %v742
  %v3149 = vunpack.c.l.b16 %v743
  %v3150 = vunpack.c.h.b16 %v743
  %v3151 = vunpack.c.l.b16 %v744
  %v3152 = vunpack.c.h.b16 %v744
  %v3153 = vunpack.c.l.b16 %v745
  %v3154 = vunpack.c.h.b16 %v745
  %v3155 = vunpack.c.l.b16 %v746
  %v3156 = vunpack.c.h.b16 %v746
  %v3157 = vunpack.c.l.b16 %v747
  %v3158 = vunpack.c.h.b16 %v747
  %v3159 = vunpack.c.l.b16 %v748
  %v3160 = vunpack.c.h.b16 %v748
  %v3161 = vunpack.c.l.b16 %v749
  %v3162 = vunpack.c.h.b16 %v749
  %v3163 = vunpack.c.l.b16 %v750
  %v3164 = vunpack.c.h.b16 %v750
  %v3165 = vunpack.c.l.b16 %v751
  %v3166 = vunpack.c.h.b16 %v751
  %v3167 = vunpack.c.l.b16 %v752
  %v3168 = vunpack.c.h.b16 %v752
  %v3169 = vunpack.c.l.b16 %v753
  %v3170 = vunpack.c.h.b16 %v753
  %v3171 = vunpack.c.l.b16 %v754
  %v3172 = vunpack.c.h.b16 %v754
  %v3173 = vunpack.c.l.b16 %v755
  %v3174 = vunpack.c.h.b16 %v755
  %v3175 = vunpack.c.l.b16 %v756
  %v3176 = vunpack.c.h.b16 %v756
  %v3177 = vunpack.c.l.b16 %v757
  %v3178 = vunpack.c.h.b16 %v757
  %v3179 = vunpack.c.l.b16 %v758
  %v3180 = vunpack.c.h.b16 %v758
  %v3181 = vunpack.c.l.b16 %v759
  %v3182 = vunpack.c.h.b16 %v759
  %v3183 = vunpack.c.l.b16 %v760
  %v3184 = vunpack.c.h.b16 %v760
  %v3185 = vunpack.c.l.b16 %v761
  %v3186 = vunpack.c.h.b16 %v761
  %v3187 = vunpack.c.l.b16 %v762
  %v3188 = vunpack.c.h.b16 %v762
  %v3189 = vunpack.c.l.b16 %v763
  %v3190 = vunpack.c.h.b16 %v763
  %v3191 = vunpack.c.l.b16 %v764
  %v3192 = vunpack.c.h.b16 %v764
  %v3193 = vunpack.c.l.b16 %v765
  %v3194 = vunpack.c.h.b16 %v765
  %v3195 = vunpack.c.l.b16 %v766
  %v3196 = vunpack.c.h.b16 %v766
  %v3197 = vunpack.c.l.b16 %v767
  %v3198 = vunpack.c.h.b16 %v767
  %v3199 = vunpack.c.l.b16 %v768
  %v3200 = vunpack.c.h.b16 %v768
  %v3201 = vunpack.c.l.b16 %v769
  %v3202 = vunpack.c.h.b16 %v769
  %v3203 = vunpack.c.l.b16 %v770
  %v3204 = vunpack.c.h.b16 %v770
  %v3205 = vunpack.c.l.b16 %v771
  %v3206 = vunpack.c.h.b16 %v771
  %v3207 = vunpack.c.l.b16 %v772
  %v3208 = vunpack.c.h.b16 %v772
  %v3209 = vunpack.c.l.b16 %v773
  %v3210 = vunpack.c.h.b16 %v773
  %v3211 = vunpack.c.l.b16 %v774
  %v3212 = vunpack.c.h.b16 %v774
  %v3213 = vunpack.c.l.b16 %v775
  %v3214 = vunpack.c.h.b16 %v775
  %v3215 = vunpack.c.l.b16 %v776
  %v3216 = vunpack.c.h.b16 %v776
  %v3217 = vunpack.c.l.b16 %v777
  %v3218 = vunpack.c.h.b16 %v777
  %v3219 = vunpack.c.l.b16 %v778
  %v3220 = vunpack.c.h.b16 %v778
  %v3221 = vunpack.c.l.b16 %v779
  %v3222 = vunpack.c.h.b16 %v779
  %v3223 = vunpack.c.l.b16 %v780
  %v3224 = vunpack.c.h.b16 %v780
  %v3225 = vunpack.c.l.b16 %v781
  %v3226 = vunpack.c.h.b16 %v781
  %v3227 = vunpack.c.l.b16 %v782
  %v3228 = vunpack.c.h.b16 %v782
  %v3229 = vunpack.c.l.b16 %v783
  %v3230 = vunpack.c.h.b16 %v783
  %v3231 = vunpack.c.l.b16 %v784
  %v3232 = vunpack.c.h.b16 %v784
  %v3233 = vunpack.c.l.b16 %v785
  %v3234 = vunpack.c.h.b16 %v785
  %v3235 = vunpack.c.l.b16 %v786
  %v3236 = vunpack.c.h.b16 %v786
  %v3237 = vunpack.c.l.b16 %v787
  %v3238 = vunpack.c.h.b16 %v787
  %v3239 = vunpack.c.l.b16 %v788
  %v3240 = vunpack.c.h.b16 %v788
  %v3241 = vunpack.c.l.b16 %v789
  %v3242 = vunpack.c.h.b16 %v789
  %v3243 = vunpack.c.l.b16 %v790
  %v3244 = vunpack.c.h.b16 %v790
  %v3245 = vunpack.c.l.b16 %v791
  %v3246 = vunpack.c.h.b16 %v791
  %v3247 = vunpack.c.l.b16 %v792
  %v3248 = vunpack.c.h.b16 %v792
  %v3249 = vunpack.c.l.b16 %v793
  %v3250 = vunpack.c.h.b16 %v793
  %v3251 = vunpack.c.l.b16 %v794
  %v3252 = vunpack.c.h.b16 %v794
  %v3253 = vunpack.c.l.b16 %v795
  %v3254 = vunpack.c.h.b16 %v795
  %v3255 = vunpack.c.l.b16 %v796
  %v3256 = vunpack.c.h.b16 %v796
  %v3257 = vunpack.c.l.b16 %v797
  %v3258 = vunpack.c.h.b16 %v797
  %v3259 = vunpack.c.l.b16 %v798
  %v3260 = vunpack.c.h.b16 %v798
  %v3261 = vunpack.c.l.b16 %v799
  %v3262 = vunpack.c.h.b16 %v799
  %v3263 = vunpack.c.l.b16 %v800
  %v3264 = vunpack.c.h.b16 %v800
  %v3265 = vunpack.c.l.b16 %v801
  %v3266 = vunpack.c.h.b16 %v801
  %v3267 = vunpack.c.l.b16 %v802
  %v3268 = vunpack.c.h.b16 %v802
  %v3269 = vunpack.c.l.b16 %v803
  %v3270 = vunpack.c.h.b16 %v803
  %v3271 = vunpack.c.l.b16 %v804
  %v3272 = vunpack.c.h.b16 %v804
  %v3273 = vunpack.c.l.b16 %v805
  %v3274 = vunpack.c.h.b16 %v805
  %v3275 = vunpack.c.l.b16 %v806
  %v3276 = vunpack.c.h.b16 %v806
  %v3277 = vunpack.c.l.b16 %v807
  %v3278 = vunpack.c.h.b16 %v807
  %v3279 = vunpack.c.l.b16 %v808
  %v3280 = vunpack.c.h.b16 %v808
  %v3281 = vunpack.c.l.b16 %v809
  %v3282 = vunpack.c.h.b16 %v809
  %v3283 = vunpack.c.l.b16 %v810
  %v3284 = vunpack.c.h.b16 %v810
  %v3285 = vunpack.c.l.b16 %v811
  %v3286 = vunpack.c.h.b16 %v811
  %v3287 = vunpack.c.l.b16 %v812
  %v3288 = vunpack.c.h.b16 %v812
  %v3289 = vunpack.c.l.b16 %v813
  %v3290 = vunpack.c.h.b16 %v813
  %v3291 = vunpack.c.l.b16 %v814
  %v3292 = vunpack.c.h.b16 %v814
  %v3293 = vunpack.c.l.b16 %v815
  %v3294 = vunpack.c.h.b16 %v815
  %v3295 = vunpack.c.l.b16 %v816
  %v3296 = vunpack.c.h.b16 %v816
  %v3297 = vunpack.c.l.b16 %v817
  %v3298 = vunpack.c.h.b16 %v817
  %v3299 = vunpack.c.l.b16 %v818
  %v3300 = vunpack.c.h.b16 %v818
  %v3301 = vunpack.c.l.b16 %v819
  %v3302 = vunpack.c.h.b16 %v819
  %v3303 = vunpack.c.l.b16 %v820
  %v3304 = vunpack.c.h.b16 %v820
  %v3305 = vunpack.c.l.b16 %v821
  %v3306 = vunpack.c.h.b16 %v821
  %v3307 = vunpack.c.l.b16 %v822
  %v3308 = vunpack.c.h.b16 %v822
  %v3309 = vunpack.c.l.b16 %v823
  %v3310 = vunpack.c.h.b16 %v823
  %v3311 = vunpack.c.l.b16 %v824
  %v3312 = vunpack.c.h.b16 %v824
  %v3313 = vunpack.c.l.b16 %v825
  %v3314 = vunpack.c.h.b16 %v825
  %v3315 = vunpack.c.l.b16 %v826
  %v3316 = vunpack.c.h.b16 %v826
  %v3317 = vunpack.c.l.b16 %v827
  %v3318 = vunpack.c.h.b16 %v827
  %v3319 = vunpack.c.l.b16 %v828
  %v3320 = vunpack.c.h.b16 %v828
  %v3321 = vunpack.c.l.b16 %v829
  %v3322 = vunpack.c.h.b16 %v829
  %v3323 = vunpack.c.l.b16 %v830
  %v3324 = vunpack.c.h.b16 %v830
  %v3325 = vunpack.c.l.b16 %v831
  %v3326 = vunpack.c.h.b16 %v831
  %v3327 = vunpack.c.l.b16 %v832
  %v3328 = vunpack.c.h.b16 %v832
  %v3329 = vunpack.c.l.b16 %v833
  %v3330 = vunpack.c.h.b16 %v833
  %v3331 = vunpack.c.l.b16 %v834
  %v3332 = vunpack.c.h.b16 %v834
  %v3333 = vpack.c.b16 %v1737, %v1733
  %v3334 = vpack.c.b16 %v1738, %v1734
  %v3335 = vpack.c.b16 %v1739, %v1735
  %v3336 = vpack.c.b16 %v1740, %v1736
  %v3337 = vpack.c.b16 %v1745, %v1741
  %v3338 = vpack.c.b16 %v1746, %v1742
  %v3339 = vpack.c.b16 %v1747, %v1743
  %v3340 = vpack.c.b16 %v1748, %v1744
  %v3341 = vpack.c.b16 %v1753, %v1749
  %v3342 = vpack.c.b16 %v1754, %v1750
  %v3343 = vpack.c.b16 %v1755, %v1751
  %v3344 = vpack.c.b16 %v1756, %v1752
  %v3345 = vpack.c.b16 %v1761, %v1757
  %v3346 = vpack.c.b16 %v1762, %v1758
  %v3347 = vpack.c.b16 %v1763, %v1759
  %v3348 = vpack.c.b16 %v1764, %v1760
  %v3349 = vpack.c.b16 %v1769, %v1765
  %v3350 = vpack.c.b16 %v1770, %v1766
  %v3351 = vpack.c.b16 %v1771, %v1767
  %v3352 = vpack.c.b16 %v1772, %v1768
  %v3353 = vpack.c.b16 %v1777, %v1773
  %v3354 = vpack.c.b16 %v1778, %v1774
  %v3355 = vpack.c.b16 %v1779, %v1775
  %v3356 = vpack.c.b16 %v1780, %v1776
  %v3357 = vpack.c.b16 %v1785, %v1781
  %v3358 = vpack.c.b16 %v1786, %v1782
  %v3359 = vpack.c.b16 %v1787, %v1783
  %v3360 = vpack.c.b16 %v1788, %v1784
  %v3361 = vpack.c.b16 %v1793, %v1789
  %v3362 = vpack.c.b16 %v1794, %v1790
  %v3363 = vpack.c.b16 %v1795, %v1791
  %v3364 = vpack.c.b16 %v1796, %v1792
  %v3365 = vpack.c.b16 %v1801, %v1797
  %v3366 = vpack.c.b16 %v1802, %v1798
  %v3367 = vpack.c.b16 %v1803, %v1799
  %v3368 = vpack.c.b16 %v1804, %v1800
  %v3369 = vpack.c.b16 %v1809, %v1805
  %v3370 = vpack.c.b16 %v1810, %v1806
  %v3371 = vpack.c.b16 %v1811, %v1807
  %v3372 = vpack.c.b16 %v1812, %v1808
  %v3373 = vpack.c.b16 %v1817, %v1813
  %v3374 = vpack.c.b16 %v1818, %v1814
  %v3375 = vpack.c.b16 %v1819, %v1815
  %v3376 = vpack.c.b16 %v1820, %v1816
  %v3377 = vpack.c.b16 %v1825, %v1821
  %v3378 = vpack.c.b16 %v1826, %v1822
  %v3379 = vpack.c.b16 %v1827, %v1823
  %v3380 = vpack.c.b16 %v1828, %v1824
  %v3381 = vpack.c.b16 %v1833, %v1829
  %v3382 = vpack.c.b16 %v1834, %v1830
  %v3383 = vpack.c.b16 %v1835, %v1831
  %v3384 = vpack.c.b16 %v1836, %v1832
  %v3385 = vpack.c.b16 %v1841, %v1837
  %v3386 = vpack.c.b16 %v1842, %v1838
  %v3387 = vpack.c.b16 %v1843, %v1839
  %v3388 = vpack.c.b16 %v1844, %v1840
  %v3389 = vpack.c.b16 %v1849, %v1845
  %v3390 = vpack.c.b16 %v1850, %v1846
  %v3391 = vpack.c.b16 %v1851, %v1847
  %v3392 = vpack.c.b16 %v1852, %v1848
  %v3393 = vpack.c.b16 %v1857, %v1853
  %v3394 = vpack.c.b16 %v1858, %v1854
  %v3395 = vpack.c.b16 %v1859, %v1855
  %v3396 = vpack.c.b16 %v1860, %v1856
  %v3397 = vpack.c.b16 %v1865, %v1861
  %v3398 = vpack.c.b16 %v1866, %v1862
  %v3399 = vpack.c.b16 %v1867, %v1863
  %v3400 = vpack.c.b16 %v1868, %v1864
  %v3401 = vpack.c.b16 %v1873, %v1869
  %v3402 = vpack.c.b16 %v1874, %v1870
  %v3403 = vpack.c.b16 %v1875, %v1871
  %v3404 = vpack.c.b16 %v1876, %v1872
  %v3405 = vpack.c.b16 %v1881, %v1877
  %v3406 = vpack.c.b16 %v1882, %v1878
  %v3407 = vpack.c.b16 %v1883, %v1879
  %v3408 = vpack.c.b16 %v1884, %v1880
  %v3409 = vpack.c.b16 %v1889, %v1885
  %v3410 = vpack.c.b16 %v1890, %v1886
  %v3411 = vpack.c.b16 %v1891, %v1887
  %v3412 = vpack.c.b16 %v1892, %v1888
  %v3413 = vpack.c.b16 %v1897, %v1893
  %v3414 = vpack.c.b16 %v1898, %v1894
  %v3415 = vpack.c.b16 %v1899, %v1895
  %v3416 = vpack.c.b16 %v1900, %v1896
  %v3417 = vpack.c.b16 %v1905, %v1901
  %v3418 = vpack.c.b16 %v1906, %v1902
  %v3419 = vpack.c.b16 %v1907, %v1903
  %v3420 = vpack.c.b16 %v1908, %v1904
  %v3421 = vpack.c.b16 %v1913, %v1909
  %v3422 = vpack.c.b16 %v1914, %v1910
  %v3423 = vpack.c.b16 %v1915, %v1911
  %v3424 = vpack.c.b16 %v1916, %v1912
  %v3425 = vpack.c.b16 %v1921, %v1917
  %v3426 = vpack.c.b16 %v1922, %v1918
  %v3427 = vpack.c.b16 %v1923, %v1919
  %v3428 = vpack.c.b16 %v1924, %v1920
  %v3429 = vpack.c.b16 %v1929, %v1925
  %v3430 = vpack.c.b16 %v1930, %v1926
  %v3431 = vpack.c.b16 %v1931, %v1927
  %v3432 = vpack.c.b16 %v1932, %v1928
  %v3433 = vpack.c.b16 %v1937, %v1933
  %v3434 = vpack.c.b16 %v1938, %v1934
  %v3435 = vpack.c.b16 %v1939, %v1935
  %v3436 = vpack.c.b16 %v1940, %v1936
  %v3437 = vpack.c.b16 %v1945, %v1941
  %v3438 = vpack.c.b16 %v1946, %v1942
  %v3439 = vpack.c.b16 %v1947, %v1943
  %v3440 = vpack.c.b16 %v1948, %v1944
  %v3441 = vpack.c.b16 %v1953, %v1949
  %v3442 = vpack.c.b16 %v1954, %v1950
  %v3443 = vpack.c.b16 %v1955, %v1951
  %v3444 = vpack.c.b16 %v1956, %v1952
  %v3445 = vpack.c.b16 %v1961, %v1957
  %v3446 = vpack.c.b16 %v1962, %v1958
  %v3447 = vpack.c.b16 %v1963, %v1959
  %v3448 = vpack.c.b16 %v1964, %v1960
  %v3449 = vpack.c.b16 %v1969, %v1965
  %v3450 = vpack.c.b16 %v1970, %v1966
  %v3451 = vpack.c.b16 %v1971, %v1967
  %v3452 = vpack.c.b16 %v1972, %v1968
  %v3453 = vpack.c.b16 %v1977, %v1973
  %v3454 = vpack.c.b16 %v1978, %v1974
  %v3455 = vpack.c.b16 %v1979, %v1975
  %v3456 = vpack.c.b16 %v1980, %v1976
  %v3457 = vpack.c.b16 %v1985, %v1981
  %v3458 = vpack.c.b16 %v1986, %v1982
  %v3459 = vpack.c.b16 %v1987, %v1983
  %v3460 = vpack.c.b16 %v1988, %v1984
  %v3461 = vpack.c.b16 %v1993, %v1989
  %v3462 = vpack.c.b16 %v1994, %v1990
  %v3463 = vpack.c.b16 %v1995, %v1991
  %v3464 = vpack.c.b16 %v1996, %v1992
  %v3465 = vpack.c.b16 %v2001, %v1997
  %v3466 = vpack.c.b16 %v2002, %v1998
  %v3467 = vpack.c.b16 %v2003, %v1999
  %v3468 = vpack.c.b16 %v2004, %v2000
  %v3469 = vpack.c.b16 %v2009, %v2005
  %v3470 = vpack.c.b16 %v2010, %v2006
  %v3471 = vpack.c.b16 %v2011, %v2007
  %v3472 = vpack.c.b16 %v2012, %v2008
  %v3473 = vpack.c.b16 %v2017, %v2013
  %v3474 = vpack.c.b16 %v2018, %v2014
  %v3475 = vpack.c.b16 %v2019, %v2015
  %v3476 = vpack.c.b16 %v2020, %v2016
  %v3477 = vpack.c.b16 %v2025, %v2021
  %v3478 = vpack.c.b16 %v2026, %v2022
  %v3479 = vpack.c.b16 %v2027, %v2023
  %v3480 = vpack.c.b16 %v2028, %v2024
  %v3481 = vpack.c.b16 %v2033, %v2029
  %v3482 = vpack.c.b16 %v2034, %v2030
  %v3483 = vpack.c.b16 %v2035, %v2031
  %v3484 = vpack.c.b16 %v2036, %v2032
  %v3485 = vpack.c.b16 %v2041, %v2037
  %v3486 = vpack.c.b16 %v2042, %v2038
  %v3487 = vpack.c.b16 %v2043, %v2039
  %v3488 = vpack.c.b16 %v2044, %v2040
  %v3489 = vpack.c.b16 %v2049, %v2045
  %v3490 = vpack.c.b16 %v2050, %v2046
  %v3491 = vpack.c.b16 %v2051, %v2047
  %v3492 = vpack.c.b16 %v2052, %v2048
  %v3493 = vpack.c.b16 %v2057, %v2053
  %v3494 = vpack.c.b16 %v2058, %v2054
  %v3495 = vpack.c.b16 %v2059, %v2055
  %v3496 = vpack.c.b16 %v2060, %v2056
  %v3497 = vpack.c.b16 %v2065, %v2061
  %v3498 = vpack.c.b16 %v2066, %v2062
  %v3499 = vpack.c.b16 %v2067, %v2063
  %v3500 = vpack.c.b16 %v2068, %v2064
  %v3501 = vpack.c.b16 %v2073, %v2069
  %v3502 = vpack.c.b16 %v2074, %v2070
  %v3503 = vpack.c.b16 %v2075, %v2071
  %v3504 = vpack.c.b16 %v2076, %v2072
  %v3505 = vpack.c.b16 %v2081, %v2077
  %v3506 = vpack.c.b16 %v2082, %v2078
  %v3507 = vpack.c.b16 %v2083, %v2079
  %v3508 = vpack.c.b16 %v2084, %v2080
  %v3509 = vpack.c.b16 %v2089, %v2085
  %v3510 = vpack.c.b16 %v2090, %v2086
  %v3511 = vpack.c.b16 %v2091, %v2087
  %v3512 = vpack.c.b16 %v2092, %v2088
  %v3513 = vpack.c.b16 %v2097, %v2093
  %v3514 = vpack.c.b16 %v2098, %v2094
  %v3515 = vpack.c.b16 %v2099, %v2095
  %v3516 = vpack.c.b16 %v2100, %v2096
  %v3517 = vpack.c.b16 %v2105, %v2101
  %v3518 = vpack.c.b16 %v2106, %v2102
  %v3519 = vpack.c.b16 %v2107, %v2103
  %v3520 = vpack.c.b16 %v2108, %v2104
  %v3521 = vpack.c.b16 %v2113, %v2109
  %v3522 = vpack.c.b16 %v2114, %v2110
  %v3523 = vpack.c.b16 %v2115, %v2111
  %v3524 = vpack.c.b16 %v2116, %v2112
  %v3525 = vpack.c.b16 %v2121, %v2117
  %v3526 = vpack.c.b16 %v2122, %v2118
  %v3527 = vpack.c.b16 %v2123, %v2119
  %v3528 = vpack.c.b16 %v2124, %v2120
  %v3529 = vpack.c.b16 %v2129, %v2125
  %v3530 = vpack.c.b16 %v2130, %v2126
  %v3531 = vpack.c.b16 %v2131, %v2127
  %v3532 = vpack.c.b16 %v2132, %v2128
  %v3533 = vpack.c.b16 %v2137, %v2133
  %v3534 = vpack.c.b16 %v2138, %v2134
  %v3535 = vpack.c.b16 %v2139, %v2135
  %v3536 = vpack.c.b16 %v2140, %v2136
  %v3537 = vpack.c.b16 %v2145, %v2141
  %v3538 = vpack.c.b16 %v2146, %v2142
  %v3539 = vpack.c.b16 %v2147, %v2143
  %v3540 = vpack.c.b16 %v2148, %v2144
  %v3541 = vpack.c.b16 %v2153, %v2149
  %v3542 = vpack.c.b16 %v2154, %v2150
  %v3543 = vpack.c.b16 %v2155, %v2151
  %v3544 = vpack.c.b16 %v2156, %v2152
  %v3545 = vpack.c.b16 %v2161, %v2157
  %v3546 = vpack.c.b16 %v2162, %v2158
  %v3547 = vpack.c.b16 %v2163, %v2159
  %v3548 = vpack.c.b16 %v2164, %v2160
  %v3549 = vpack.c.b16 %v2169, %v2165
  %v3550 = vpack.c.b16 %v2170, %v2166
  %v3551 = vpack.c.b16 %v2171, %v2167
  %v3552 = vpack.c.b16 %v2172, %v2168
  %v3553 = vpack.c.b16 %v2177, %v2173
  %v3554 = vpack.c.b16 %v2178, %v2174
  %v3555 = vpack.c.b16 %v2179, %v2175
  %v3556 = vpack.c.b16 %v2180, %v2176
  %v3557 = vpack.c.b16 %v2185, %v2181
  %v3558 = vpack.c.b16 %v2186, %v2182
  %v3559 = vpack.c.b16 %v2187, %v2183
  %v3560 = vpack.c.b16 %v2188, %v2184
  %v3561 = vpack.c.b16 %v2193, %v2189
  %v3562 = vpack.c.b16 %v2194, %v2190
  %v3563 = vpack.c.b16 %v2195, %v2191
  %v3564 = vpack.c.b16 %v2196, %v2192
  %v3565 = vpack.c.b16 %v2201, %v2197
  %v3566 = vpack.c.b16 %v2202, %v2198
  %v3567 = vpack.c.b16 %v2203, %v2199
  %v3568 = vpack.c.b16 %v2204, %v2200
  %v3569 = vpack.c.b16 %v2209, %v2205
  %v3570 = vpack.c.b16 %v2210, %v2206
  %v3571 = vpack.c.b16 %v2211, %v2207
  %v3572 = vpack.c.b16 %v2212, %v2208
  %v3573 = vpack.c.b16 %v2217, %v2213
  %v3574 = vpack.c.b16 %v2218, %v2214
  %v3575 = vpack.c.b16 %v2219, %v2215
  %v3576 = vpack.c.b16 %v2220, %v2216
  %v3577 = vpack.c.b16 %v2225, %v2221
  %v3578 = vpack.c.b16 %v2226, %v2222
  %v3579 = vpack.c.b16 %v2227, %v2223
  %v3580 = vpack.c.b16 %v2228, %v2224
  %v3581 = vpack.c.b16 %v2233, %v2229
  %v3582 = vpack.c.b16 %v2234, %v2230
  %v3583 = vpack.c.b16 %v2235, %v2231
  %v3584 = vpack.c.b16 %v2236, %v2232
  %v3585 = vpack.c.b16 %v2241, %v2237
  %v3586 = vpack.c.b16 %v2242, %v2238
  %v3587 = vpack.c.b16 %v2243, %v2239
  %v3588 = vpack.c.b16 %v2244, %v2240
  %v3589 = vpack.c.b16 %v2249, %v2245
  %v3590 = vpack.c.b16 %v2250, %v2246
  %v3591 = vpack.c.b16 %v2251, %v2247
  %v3592 = vpack.c.b16 %v2252, %v2248
  %v3593 = vpack.c.b16 %v2257, %v2253
  %v3594 = vpack.c.b16 %v2258, %v2254
  %v3595 = vpack.c.b16 %v2259, %v2255
  %v3596 = vpack.c.b16 %v2260, %v2256
  %v3597 = vpack.c.b16 %v2265, %v2261
  %v3598 = vpack.c.b16 %v2266, %v2262
  %v3599 = vpack.c.b16 %v2267, %v2263
  %v3600 = vpack.c.b16 %v2268, %v2264
  %v3601 = vpack.c.b16 %v2273, %v2269
  %v3602 = vpack.c.b16 %v2274, %v2270
  %v3603 = vpack.c.b16 %v2275, %v2271
  %v3604 = vpack.c.b16 %v2276, %v2272
  %v3605 = vpack.c.b16 %v2281, %v2277
  %v3606 = vpack.c.b16 %v2282, %v2278
  %v3607 = vpack.c.b16 %v2283, %v2279
  %v3608 = vpack.c.b16 %v2284, %v2280
  %v3609 = vpack.c.b16 %v2289, %v2285
  %v3610 = vpack.c.b16 %v2290, %v2286
  %v3611 = vpack.c.b16 %v2291, %v2287
  %v3612 = vpack.c.b16 %v2292, %v2288
  %v3613 = vpack.c.b16 %v2297, %v2293
  %v3614 = vpack.c.b16 %v2298, %v2294
  %v3615 = vpack.c.b16 %v2299, %v2295
  %v3616 = vpack.c.b16 %v2300, %v2296
  %v3617 = vpack.c.b16 %v2305, %v2301
  %v3618 = vpack.c.b16 %v2306, %v2302
  %v3619 = vpack.c.b16 %v2307, %v2303
  %v3620 = vpack.c.b16 %v2308, %v2304
  %v3621 = vpack.c.b16 %v2313, %v2309
  %v3622 = vpack.c.b16 %v2314, %v2310
  %v3623 = vpack.c.b16 %v2315, %v2311
  %v3624 = vpack.c.b16 %v2316, %v2312
  %v3625 = vpack.c.b16 %v2321, %v2317
  %v3626 = vpack.c.b16 %v2322, %v2318
  %v3627 = vpack.c.b16 %v2323, %v2319
  %v3628 = vpack.c.b16 %v2324, %v2320
  %v3629 = vpack.c.b16 %v2329, %v2325
  %v3630 = vpack.c.b16 %v2330, %v2326
  %v3631 = vpack.c.b16 %v2331, %v2327
  %v3632 = vpack.c.b16 %v2332, %v2328
  %v3633 = vpack.c.b16 %v2337, %v2333
  %v3634 = vpack.c.b16 %v2338, %v2334
  %v3635 = vpack.c.b16 %v2339, %v2335
  %v3636 = vpack.c.b16 %v2340, %v2336
  %v3637 = vpack.c.b16 %v2345, %v2341
  %v3638 = vpack.c.b16 %v2346, %v2342
  %v3639 = vpack.c.b16 %v2347, %v2343
  %v3640 = vpack.c.b16 %v2348, %v2344
  %v3641 = vpack.c.b16 %v2353, %v2349
  %v3642 = vpack.c.b16 %v2354, %v2350
  %v3643 = vpack.c.b16 %v2355, %v2351
  %v3644 = vpack.c.b16 %v2356, %v2352
  %v3645 = vpack.c.b16 %v2361, %v2357
  %v3646 = vpack.c.b16 %v2362, %v2358
  %v3647 = vpack.c.b16 %v2363, %v2359
  %v3648 = vpack.c.b16 %v2364, %v2360
  %v3649 = vpack.c.b16 %v2369, %v2365
  %v3650 = vpack.c.b16 %v2370, %v2366
  %v3651 = vpack.c.b16 %v2371, %v2367
  %v3652 = vpack.c.b16 %v2372, %v2368
  %v3653 = vpack.c.b16 %v2377, %v2373
  %v3654 = vpack.c.b16 %v2378, %v2374
  %v3655 = vpack.c.b16 %v2379, %v2375
  %v3656 = vpack.c.b16 %v2380, %v2376
  %v3657 = vpack.c.b16 %v2385, %v2381
  %v3658 = vpack.c.b16 %v2386, %v2382
  %v3659 = vpack.c.b16 %v2387, %v2383
  %v3660 = vpack.c.b16 %v2388, %v2384
  %v3661 = vpack.c.b16 %v2393, %v2389
  %v3662 = vpack.c.b16 %v2394, %v2390
  %v3663 = vpack.c.b16 %v2395, %v2391
  %v3664 = vpack.c.b16 %v2396, %v2392
  %v3665 = vpack.c.b16 %v2401, %v2397
  %v3666 = vpack.c.b16 %v2402, %v2398
  %v3667 = vpack.c.b16 %v2403, %v2399
  %v3668 = vpack.c.b16 %v2404, %v2400
  %v3669 = vpack.c.b16 %v2409, %v2405
  %v3670 = vpack.c.b16 %v2410, %v2406
  %v3671 = vpack.c.b16 %v2411, %v2407
  %v3672 = vpack.c.b16 %v2412, %v2408
  %v3673 = vpack.c.b16 %v2417, %v2413
  %v3674 = vpack.c.b16 %v2418, %v2414
  %v3675 = vpack.c.b16 %v2419, %v2415
  %v3676 = vpack.c.b16 %v2420, %v2416
  %v3677 = vpack.c.b16 %v2425, %v2421
  %v3678 = vpack.c.b16 %v2426, %v2422
  %v3679 = vpack.c.b16 %v2427, %v2423
  %v3680 = vpack.c.b16 %v2428, %v2424
  %v3681 = vpack.c.b16 %v2433, %v2429
  %v3682 = vpack.c.b16 %v2434, %v2430
  %v3683 = vpack.c.b16 %v2435, %v2431
  %v3684 = vpack.c.b16 %v2436, %v2432
  %v3685 = vpack.c.b16 %v2441, %v2437
  %v3686 = vpack.c.b16 %v2442, %v2438
  %v3687 = vpack.c.b16 %v2443, %v2439
  %v3688 = vpack.c.b16 %v2444, %v2440
  %v3689 = vpack.c.b16 %v2449, %v2445
  %v3690 = vpack.c.b16 %v2450, %v2446
  %v3691 = vpack.c.b16 %v2451, %v2447
  %v3692 = vpack.c.b16 %v2452, %v2448
  %v3693 = vpack.c.b16 %v2457, %v2453
  %v3694 = vpack.c.b16 %v2458, %v2454
  %v3695 = vpack.c.b16 %v2459, %v2455
  %v3696 = vpack.c.b16 %v2460, %v2456
  %v3697 = vpack.c.b16 %v2465, %v2461
  %v3698 = vpack.c.b16 %v2466, %v2462
  %v3699 = vpack.c.b16 %v2467, %v2463
  %v3700 = vpack.c.b16 %v2468, %v2464
  %v3701 = vpack.c.b16 %v2473, %v2469
  %v3702 = vpack.c.b16 %v2474, %v2470
  %v3703 = vpack.c.b16 %v2475, %v2471
  %v3704 = vpack.c.b16 %v2476, %v2472
  %v3705 = vpack.c.b16 %v2481, %v2477
  %v3706 = vpack.c.b16 %v2482, %v2478
  %v3707 = vpack.c.b16 %v2483, %v2479
  %v3708 = vpack.c.b16 %v2484, %v2480
  %v3709 = vpack.c.b16 %v2489, %v2485
  %v3710 = vpack.c.b16 %v2490, %v2486
  %v3711 = vpack.c.b16 %v2491, %v2487
  %v3712 = vpack.c.b16 %v2492, %v2488
  %v3713 = vpack.c.b16 %v2497, %v2493
  %v3714 = vpack.c.b16 %v2498, %v2494
  %v3715 = vpack.c.b16 %v2499, %v2495
  %v3716 = vpack.c.b16 %v2500, %v2496
  %v3717 = vpack.c.b16 %v2505, %v2501
  %v3718 = vpack.c.b16 %v2506, %v2502
  %v3719 = vpack.c.b16 %v2507, %v2503
  %v3720 = vpack.c.b16 %v2508, %v2504
  %v3721 = vpack.c.b16 %v2513, %v2509
  %v3722 = vpack.c.b16 %v2514, %v2510
  %v3723 = vpack.c.b16 %v2515, %v2511
  %v3724 = vpack.c.b16 %v2516, %v2512
  %v3725 = vpack.c.b16 %v2521, %v2517
  %v3726 = vpack.c.b16 %v2522, %v2518
  %v3727 = vpack.c.b16 %v2523, %v2519
  %v3728 = vpack.c.b16 %v2524, %v2520
  %v3729 = vpack.c.b16 %v2529, %v2525
  %v3730 = vpack.c.b16 %v2530, %v2526
  %v3731 = vpack.c.b16 %v2531, %v2527
  %v3732 = vpack.c.b16 %v2532, %v2528
  %v3733 = vpack.c.b16 %v2537, %v2533
  %v3734 = vpack.c.b16 %v2538, %v2534
  %v3735 = vpack.c.b16 %v2539, %v2535
  %v3736 = vpack.c.b16 %v2540, %v2536
  %v3737 = vpack.c.b16 %v2545, %v2541
  %v3738 = vpack.c.b16 %v2546, %v2542
  %v3739 = vpack.c.b16 %v2547, %v2543
  %v3740 = vpack.c.b16 %v2548, %v2544
  %v3741 = vpack.c.b16 %v2553, %v2549
  %v3742 = vpack.c.b16 %v2554, %v2550
  %v3743 = vpack.c.b16 %v2555, %v2551
  %v3744 = vpack.c.b16 %v2556, %v2552
  %v3745 = vpack.c.b16 %v2561, %v2557
  %v3746 = vpack.c.b16 %v2562, %v2558
  %v3747 = vpack.c.b16 %v2563, %v2559
  %v3748 = vpack.c.b16 %v2564, %v2560
  %v3749 = vpack.c.b16 %v2569, %v2565
  %v3750 = vpack.c.b16 %v2570, %v2566
  %v3751 = vpack.c.b16 %v2571, %v2567
  %v3752 = vpack.c.b16 %v2572, %v2568
  %v3753 = vpack.c.b16 %v2577, %v2573
  %v3754 = vpack.c.b16 %v2578, %v2574
  %v3755 = vpack.c.b16 %v2579, %v2575
  %v3756 = vpack.c.b16 %v2580, %v2576
  %v3757 = vpack.c.b16 %v2585, %v2581
  %v3758 = vpack.c.b16 %v2586, %v2582
  %v3759 = vpack.c.b16 %v2587, %v2583
  %v3760 = vpack.c.b16 %v2588, %v2584
  %v3761 = vpack.c.b16 %v2593, %v2589
  %v3762 = vpack.c.b16 %v2594, %v2590
  %v3763 = vpack.c.b16 %v2595, %v2591
  %v3764 = vpack.c.b16 %v2596, %v2592
  %v3765 = vpack.c.b16 %v2601, %v2597
  %v3766 = vpack.c.b16 %v2602, %v2598
  %v3767 = vpack.c.b16 %v2603, %v2599
  %v3768 = vpack.c.b16 %v2604, %v2600
  %v3769 = vpack.c.b16 %v2609, %v2605
  %v3770 = vpack.c.b16 %v2610, %v2606
  %v3771 = vpack.c.b16 %v2611, %v2607
  %v3772 = vpack.c.b16 %v2612, %v2608
  %v3773 = vpack.c.b16 %v2617, %v2613
  %v3774 = vpack.c.b16 %v2618, %v2614
  %v3775 = vpack.c.b16 %v2619, %v2615
  %v3776 = vpack.c.b16 %v2620, %v2616
  %v3777 = vpack.c.b16 %v2625, %v2621
  %v3778 = vpack.c.b16 %v2626, %v2622
  %v3779 = vpack.c.b16 %v2627, %v2623
  %v3780 = vpack.c.b16 %v2628, %v2624
  %v3781 = vpack.c.b16 %v2633, %v2629
  %v3782 = vpack.c.b16 %v2634, %v2630
  %v3783 = vpack.c.b16 %v2635, %v2631
  %v3784 = vpack.c.b16 %v2636, %v2632
  %v3785 = vpack.c.b16 %v2641, %v2637
  %v3786 = vpack.c.b16 %v2642, %v2638
  %v3787 = vpack.c.b16 %v2643, %v2639
  %v3788 = vpack.c.b16 %v2644, %v2640
  %v3789 = vpack.c.b16 %v2649, %v2645
  %v3790 = vpack.c.b16 %v2650, %v2646
  %v3791 = vpack.c.b16 %v2651, %v2647
  %v3792 = vpack.c.b16 %v2652, %v2648
  %v3793 = vpack.c.b16 %v2657, %v2653
  %v3794 = vpack.c.b16 %v2658, %v2654
  %v3795 = vpack.c.b16 %v2659, %v2655
  %v3796 = vpack.c.b16 %v2660, %v2656
  %v3797 = vpack.c.b16 %v2665, %v2661
  %v3798 = vpack.c.b16 %v2666, %v2662
  %v3799 = vpack.c.b16 %v2667, %v2663
  %v3800 = vpack.c.b16 %v2668, %v2664
  %v3801 = vpack.c.b16 %v2673, %v2669
  %v3802 = vpack.c.b16 %v2674, %v2670
  %v3803 = vpack.c.b16 %v2675, %v2671
  %v3804 = vpack.c.b16 %v2676, %v2672
  %v3805 = vpack.c.b16 %v2681, %v2677
  %v3806 = vpack.c.b16 %v2682, %v2678
  %v3807 = vpack.c.b16 %v2683, %v2679
  %v3808 = vpack.c.b16 %v2684, %v2680
  %v3809 = vpack.c.b16 %v2689, %v2685
  %v3810 = vpack.c.b16 %v2690, %v2686
  %v3811 = vpack.c.b16 %v2691, %v2687
  %v3812 = vpack.c.b16 %v2692, %v2688
  %v3813 = vpack.c.b16 %v2697, %v2693
  %v3814 = vpack.c.b16 %v2698, %v2694
  %v3815 = vpack.c.b16 %v2699, %v2695
  %v3816 = vpack.c.b16 %v2700, %v2696
  %v3817 = vpack.c.b16 %v2705, %v2701
  %v3818 = vpack.c.b16 %v2706, %v2702
  %v3819 = vpack.c.b16 %v2707, %v2703
  %v3820 = vpack.c.b16 %v2708, %v2704
  %v3821 = vpack.c.b16 %v2713, %v2709
  %v3822 = vpack.c.b16 %v2714, %v2710
  %v3823 = vpack.c.b16 %v2715, %v2711
  %v3824 = vpack.c.b16 %v2716, %v2712
  %v3825 = vpack.c.b16 %v2721, %v2717
  %v3826 = vpack.c.b16 %v2722, %v2718
  %v3827 = vpack.c.b16 %v2723, %v2719
  %v3828 = vpack.c.b16 %v2724, %v2720
  %v3829 = vpack.c.b16 %v2729, %v2725
  %v3830 = vpack.c.b16 %v2730, %v2726
  %v3831 = vpack.c.b16 %v2731, %v2727
  %v3832 = vpack.c.b16 %v2732, %v2728
  %v3833 = vpack.c.b16 %v2737, %v2733
  %v3834 = vpack.c.b16 %v2738, %v2734
  %v3835 = vpack.c.b16 %v2739, %v2735
  %v3836 = vpack.c.b16 %v2740, %v2736
  %v3837 = vpack.c.b16 %v2745, %v2741
  %v3838 = vpack.c.b16 %v2746, %v2742
  %v3839 = vpack.c.b16 %v2747, %v2743
  %v3840 = vpack.c.b16 %v2748, %v2744
  %v3841 = vpack.c.b16 %v2753, %v2749
  %v3842 = vpack.c.b16 %v2754, %v2750
  %v3843 = vpack.c.b16 %v2755, %v2751
  %v3844 = vpack.c.b16 %v2756, %v2752
  %v3845 = vpack.c.b16 %v2761, %v2757
  %v3846 = vpack.c.b16 %v2762, %v2758
  %v3847 = vpack.c.b16 %v2763, %v2759
  %v3848 = vpack.c.b16 %v2764, %v2760
  %v3849 = vpack.c.b16 %v2769, %v2765
  %v3850 = vpack.c.b16 %v2770, %v2766
  %v3851 = vpack.c.b16 %v2771, %v2767
  %v3852 = vpack.c.b16 %v2772, %v2768
  %v3853 = vpack.c.b16 %v2777, %v2773
  %v3854 = vpack.c.b16 %v2778, %v2774
  %v3855 = vpack.c.b16 %v2779, %v2775
  %v3856 = vpack.c.b16 %v2780, %v2776
  %v3857 = vpack.c.b16 %v2785, %v2781
  %v3858 = vpack.c.b16 %v2786, %v2782
  %v3859 = vpack.c.b16 %v2787, %v2783
  %v3860 = vpack.c.b16 %v2788, %v2784
  %v3861 = vpack.c.b16 %v2793, %v2789
  %v3862 = vpack.c.b16 %v2794, %v2790
  %v3863 = vpack.c.b16 %v2795, %v2791
  %v3864 = vpack.c.b16 %v2796, %v2792
  %v3865 = vpack.c.b16 %v2801, %v2797
  %v3866 = vpack.c.b16 %v2802, %v2798
  %v3867 = vpack.c.b16 %v2803, %v2799
  %v3868 = vpack.c.b16 %v2804, %v2800
  %v3869 = vpack.c.b16 %v2809, %v2805
  %v3870 = vpack.c.b16 %v2810, %v2806
  %v3871 = vpack.c.b16 %v2811, %v2807
  %v3872 = vpack.c.b16 %v2812, %v2808
  %v3873 = vpack.c.b16 %v2817, %v2813
  %v3874 = vpack.c.b16 %v2818, %v2814
  %v3875 = vpack.c.b16 %v2819, %v2815
  %v3876 = vpack.c.b16 %v2820, %v2816
  %v3877 = vpack.c.b16 %v2825, %v2821
  %v3878 = vpack.c.b16 %v2826, %v2822
  %v3879 = vpack.c.b16 %v2827, %v2823
  %v3880 = vpack.c.b16 %v2828, %v2824
  %v3881 = vpack.c.b16 %v2833, %v2829
  %v3882 = vpack.c.b16 %v2834, %v2830
  %v3883 = vpack.c.b16 %v2835, %v2831
  %v3884 = vpack.c.b16 %v2836, %v2832
  %v3885 = vpack.c.b16 %v2841, %v2837
  %v3886 = vpack.c.b16 %v2842, %v2838
  %v3887 = vpack.c.b16 %v2843, %v2839
  %v3888 = vpack.c.b16 %v2844, %v2840
  %v3889 = vpack.c.b16 %v2849, %v2845
  %v3890 = vpack.c.b16 %v2850, %v2846
  %v3891 = vpack.c.b16 %v2851, %v2847
  %v3892 = vpack.c.b16 %v2852, %v2848
  %v3893 = vpack.c.b16 %v2857, %v2853
  %v3894 = vpack.c.b16 %v2858, %v2854
  %v3895 = vpack.c.b16 %v2859, %v2855
  %v3896 = vpack.c.b16 %v2860, %v2856
  %v3897 = vpack.c.b16 %v2865, %v2861
  %v3898 = vpack.c.b16 %v2866, %v2862
  %v3899 = vpack.c.b16 %v2867, %v2863
  %v3900 = vpack.c.b16 %v2868, %v2864
  %v3901 = vpack.c.b16 %v2873, %v2869
  %v3902 = vpack.c.b16 %v2874, %v2870
  %v3903 = vpack.c.b16 %v2875, %v2871
  %v3904 = vpack.c.b16 %v2876, %v2872
  %v3905 = vpack.c.b16 %v2881, %v2877
  %v3906 = vpack.c.b16 %v2882, %v2878
  %v3907 = vpack.c.b16 %v2883, %v2879
  %v3908 = vpack.c.b16 %v2884, %v2880
  %v3909 = vpack.c.b16 %v2889, %v2885
  %v3910 = vpack.c.b16 %v2890, %v2886
  %v3911 = vpack.c.b16 %v2891, %v2887
  %v3912 = vpack.c.b16 %v2892, %v2888
  %v3913 = vpack.c.b16 %v2897, %v2893
  %v3914 = vpack.c.b16 %v2898, %v2894
  %v3915 = vpack.c.b16 %v2899, %v2895
  %v3916 = vpack.c.b16 %v2900, %v2896
  %v3917 = vpack.c.b16 %v2905, %v2901
  %v3918 = vpack.c.b16 %v2906, %v2902
  %v3919 = vpack.c.b16 %v2907, %v2903
  %v3920 = vpack.c.b16 %v2908, %v2904
  %v3921 = vpack.c.b16 %v2913, %v2909
  %v3922 = vpack.c.b16 %v2914, %v2910
  %v3923 = vpack.c.b16 %v2915, %v2911
  %v3924 = vpack.c.b16 %v2916, %v2912
  %v3925 = vpack.c.b16 %v2921, %v2917
  %v3926 = vpack.c.b16 %v2922, %v2918
  %v3927 = vpack.c.b16 %v2923, %v2919
  %v3928 = vpack.c.b16 %v2924, %v2920
  %v3929 = vpack.c.b16 %v2929, %v2925
  %v3930 = vpack.c.b16 %v2930, %v2926
  %v3931 = vpack.c.b16 %v2931, %v2927
  %v3932 = vpack.c.b16 %v2932, %v2928
  %v3933 = vpack.c.b16 %v2937, %v2933
  %v3934 = vpack.c.b16 %v2938, %v2934
  %v3935 = vpack.c.b16 %v2939, %v2935
  %v3936 = vpack.c.b16 %v2940, %v2936
  %v3937 = vpack.c.b16 %v2945, %v2941
  %v3938 = vpack.c.b16 %v2946, %v2942
  %v3939 = vpack.c.b16 %v2947, %v2943
  %v3940 = vpack.c.b16 %v2948, %v2944
  %v3941 = vpack.c.b16 %v2953, %v2949
  %v3942 = vpack.c.b16 %v2954, %v2950
  %v3943 = vpack.c.b16 %v2955, %v2951
  %v3944 = vpack.c.b16 %v2956, %v2952
  %v3945 = vpack.c.b16 %v2961, %v2957
  %v3946 = vpack.c.b16 %v2962, %v2958
  %v3947 = vpack.c.b16 %v2963, %v2959
  %v3948 = vpack.c.b16 %v2964, %v2960
  %v3949 = vpack.c.b16 %v2969, %v2965
  %v3950 = vpack.c.b16 %v2970, %v2966
  %v3951 = vpack.c.b16 %v2971, %v2967
  %v3952 = vpack.c.b16 %v2972, %v2968
  %v3953 = vpack.c.b16 %v2977, %v2973
  %v3954 = vpack.c.b16 %v2978, %v2974
  %v3955 = vpack.c.b16 %v2979, %v2975
  %v3956 = vpack.c.b16 %v2980, %v2976
  %v3957 = vpack.c.b16 %v2985, %v2981
  %v3958 = vpack.c.b16 %v2986, %v2982
  %v3959 = vpack.c.b16 %v2987, %v2983
  %v3960 = vpack.c.b16 %v2988, %v2984
  %v3961 = vpack.c.b16 %v2993, %v2989
  %v3962 = vpack.c.b16 %v2994, %v2990
  %v3963 = vpack.c.b16 %v2995, %v2991
  %v3964 = vpack.c.b16 %v2996, %v2992
  %v3965 = vpack.c.b16 %v3001, %v2997
  %v3966 = vpack.c.b16 %v3002, %v2998
  %v3967 = vpack.c.b16 %v3003, %v2999
  %v3968 = vpack.c.b16 %v3004, %v3000
  %v3969 = vpack.c.b16 %v3009, %v3005
  %v3970 = vpack.c.b16 %v3010, %v3006
  %v3971 = vpack.c.b16 %v3011, %v3007
  %v3972 = vpack.c.b16 %v3012, %v3008
  %v3973 = vpack.c.b16 %v3017, %v3013
  %v3974 = vpack.c.b16 %v3018, %v3014
  %v3975 = vpack.c.b16 %v3019, %v3015
  %v3976 = vpack.c.b16 %v3020, %v3016
  %v3977 = vpack.c.b16 %v3025, %v3021
  %v3978 = vpack.c.b16 %v3026, %v3022
  %v3979 = vpack.c.b16 %v3027, %v3023
  %v3980 = vpack.c.b16 %v3028, %v3024
  %v3981 = vpack.c.b16 %v3033, %v3029
  %v3982 = vpack.c.b16 %v3034, %v3030
  %v3983 = vpack.c.b16 %v3035, %v3031
  %v3984 = vpack.c.b16 %v3036, %v3032
  %v3985 = vpack.c.b16 %v3041, %v3037
  %v3986 = vpack.c.b16 %v3042, %v3038
  %v3987 = vpack.c.b16 %v3043, %v3039
  %v3988 = vpack.c.b16 %v3044, %v3040
  %v3989 = vpack.c.b16 %v3049, %v3045
  %v3990 = vpack.c.b16 %v3050, %v3046
  %v3991 = vpack.c.b16 %v3051, %v3047
  %v3992 = vpack.c.b16 %v3052, %v3048
  %v3993 = vpack.c.b16 %v3057, %v3053
  %v3994 = vpack.c.b16 %v3058, %v3054
  %v3995 = vpack.c.b16 %v3059, %v3055
  %v3996 = vpack.c.b16 %v3060, %v3056
  %v3997 = vpack.c.b16 %v3065, %v3061
  %v3998 = vpack.c.b16 %v3066, %v3062
  %v3999 = vpack.c.b16 %v3067, %v3063
  %v4000 = vpack.c.b16 %v3068, %v3064
  %v4001 = vpack.c.b16 %v3073, %v3069
  %v4002 = vpack.c.b16 %v3074, %v3070
  %v4003 = vpack.c.b16 %v3075, %v3071
  %v4004 = vpack.c.b16 %v3076, %v3072
  %v4005 = vpack.c.b16 %v3081, %v3077
  %v4006 = vpack.c.b16 %v3082, %v3078
  %v4007 = vpack.c.b16 %v3083, %v3079
  %v4008 = vpack.c.b16 %v3084, %v3080
  %v4009 = vpack.c.b16 %v3089, %v3085
  %v4010 = vpack.c.b16 %v3090, %v3086
  %v4011 = vpack.c.b16 %v3091, %v3087
  %v4012 = vpack.c.b16 %v3092, %v3088
  %v4013 = vpack.c.b16 %v3097, %v3093
  %v4014 = vpack.c.b16 %v3098, %v3094
  %v4015 = vpack.c.b16 %v3099, %v3095
  %v4016 = vpack.c.b16 %v3100, %v3096
  %v4017 = vpack.c.b16 %v3105, %v3101
  %v4018 = vpack.c.b16 %v3106, %v3102
  %v4019 = vpack.c.b16 %v3107, %v3103
  %v4020 = vpack.c.b16 %v3108, %v3104
  %v4021 = vpack.c.b16 %v3113, %v3109
  %v4022 = vpack.c.b16 %v3114, %v3110
  %v4023 = vpack.c.b16 %v3115, %v3111
  %v4024 = vpack.c.b16 %v3116, %v3112
  %v4025 = vpack.c.b16 %v3121, %v3117
  %v4026 = vpack.c.b16 %v3122, %v3118
  %v4027 = vpack.c.b16 %v3123, %v3119
  %v4028 = vpack.c.b16 %v3124, %v3120
  %v4029 = vpack.c.b16 %v3129, %v3125
  %v4030 = vpack.c.b16 %v3130, %v3126
  %v4031 = vpack.c.b16 %v3131, %v3127
  %v4032 = vpack.c.b16 %v3132, %v3128
  %v4033 = vpack.c.b16 %v3137, %v3133
  %v4034 = vpack.c.b16 %v3138, %v3134
  %v4035 = vpack.c.b16 %v3139, %v3135
  %v4036 = vpack.c.b16 %v3140, %v3136
  %v4037 = vpack.c.b16 %v3145, %v3141
  %v4038 = vpack.c.b16 %v3146, %v3142
  %v4039 = vpack.c.b16 %v3147, %v3143
  %v4040 = vpack.c.b16 %v3148, %v3144
  %v4041 = vpack.c.b16 %v3153, %v3149
  %v4042 = vpack.c.b16 %v3154, %v3150
  %v4043 = vpack.c.b16 %v3155, %v3151
  %v4044 = vpack.c.b16 %v3156, %v3152
  %v4045 = vpack.c.b16 %v3161, %v3157
  %v4046 = vpack.c.b16 %v3162, %v3158
  %v4047 = vpack.c.b16 %v3163, %v3159
  %v4048 = vpack.c.b16 %v3164, %v3160
  %v4049 = vpack.c.b16 %v3169, %v3165
  %v4050 = vpack.c.b16 %v3170, %v3166
  %v4051 = vpack.c.b16 %v3171, %v3167
  %v4052 = vpack.c.b16 %v3172, %v3168
  %v4053 = vpack.c.b16 %v3177, %v3173
  %v4054 = vpack.c.b16 %v3178, %v3174
  %v4055 = vpack.c.b16 %v3179, %v3175
  %v4056 = vpack.c.b16 %v3180, %v3176
  %v4057 = vpack.c.b16 %v3185, %v3181
  %v4058 = vpack.c.b16 %v3186, %v3182
  %v4059 = vpack.c.b16 %v3187, %v3183
  %v4060 = vpack.c.b16 %v3188, %v3184
  %v4061 = vpack.c.b16 %v3193, %v3189
  %v4062 = vpack.c.b16 %v3194, %v3190
  %v4063 = vpack.c.b16 %v3195, %v3191
  %v4064 = vpack.c.b16 %v3196, %v3192
  %v4065 = vpack.c.b16 %v3201, %v3197
  %v4066 = vpack.c.b16 %v3202, %v3198
  %v4067 = vpack.c.b16 %v3203, %v3199
  %v4068 = vpack.c.b16 %v3204, %v3200
  %v4069 = vpack.c.b16 %v3209, %v3205
  %v4070 = vpack.c.b16 %v3210, %v3206
  %v4071 = vpack.c.b16 %v3211, %v3207
  %v4072 = vpack.c.b16 %v3212, %v3208
  %v4073 = vpack.c.b16 %v3217, %v3213
  %v4074 = vpack.c.b16 %v3218, %v3214
  %v4075 = vpack.c.b16 %v3219, %v3215
  %v4076 = vpack.c.b16 %v3220, %v3216
  %v4077 = vpack.c.b16 %v3225, %v3221
  %v4078 = vpack.c.b16 %v3226, %v3222
  %v4079 = vpack.c.b16 %v3227, %v3223
  %v4080 = vpack.c.b16 %v3228, %v3224
  %v4081 = vpack.c.b16 %v3233, %v3229
  %v4082 = vpack.c.b16 %v3234, %v3230
  %v4083 = vpack.c.b16 %v3235, %v3231
  %v4084 = vpack.c.b16 %v3236, %v3232
  %v4085 = vpack.c.b16 %v3241, %v3237
  %v4086 = vpack.c.b16 %v3242, %v3238
  %v4087 = vpack.c.b16 %v3243, %v3239
  %v4088 = vpack.c.b16 %v3244, %v3240
  %v4089 = vpack.c.b16 %v3249, %v3245
  %v4090 = vpack.c.b16 %v3250, %v3246
  %v4091 = vpack.c.b16 %v3251, %v3247
  %v4092 = vpack.c.b16 %v3252, %v3248
  %v4093 = vpack.c.b16 %v3257, %v3253
  %v4094 = vpack.c.b16 %v3258, %v3254
  %v4095 = vpack.c.b16 %v3259, %v3255
  %v4096 = vpack.c.b16 %v3260, %v3256
  %v4097 = vpack.c.b16 %v3265, %v3261
  %v4098 = vpack.c.b16 %v3266, %v3262
  %v4099 = vpack.c.b16 %v3267, %v3263
  %v4100 = vpack.c.b16 %v3268, %v3264
  %v4101 = vpack.c.b16 %v3273, %v3269
  %v4102 = vpack.c.b16 %v3274, %v3270
  %v4103 = vpack.c.b16 %v3275, %v3271
  %v4104 = vpack.c.b16 %v3276, %v3272
  %v4105 = vpack.c.b16 %v3281, %v3277
  %v4106 = vpack.c.b16 %v3282, %v3278
  %v4107 = vpack.c.b16 %v3283, %v3279
  %v4108 = vpack.c.b16 %v3284, %v3280
  %v4109 = vpack.c.b16 %v3289, %v3285
  %v4110 = vpack.c.b16 %v3290, %v3286
  %v4111 = vpack.c.b16 %v3291, %v3287
  %v4112 = vpack.c.b16 %v3292, %v3288
  %v4113 = vpack.c.b16 %v3297, %v3293
  %v4114 = vpack.c.b16 %v3298, %v3294
  %v4115 = vpack.c.b16 %v3299, %v3295
  %v4116 = vpack.c.b16 %v3300, %v3296
  %v4117 = vpack.c.b16 %v3305, %v3301
  %v4118 = vpack.c.b16 %v3306, %v3302
  %v4119 = vpack.c.b16 %v3307, %v3303
  %v4120 = vpack.c.b16 %v3308, %v3304
  %v4121 = vpack.c.b16 %v3313, %v3309
  %v4122 = vpack.c.b16 %v3314, %v3310
  %v4123 = vpack.c.b16 %v3315, %v3311
  %v4124 = vpack.c.b16 %v3316, %v3312
  %v4125 = vpack.c.b16 %v3321, %v3317
  %v4126 = vpack.c.b16 %v3322, %v3318
  %v4127 = vpack.c.b16 %v3323, %v3319
  %v4128 = vpack.c.b16 %v3324, %v3320
  %v4129 = vpack.c.b16 %v3329, %v3325
  %v4130 = vpack.c.b16 %v3330, %v3326
  %v4131 = vpack.c.b16 %v3331, %v3327
  %v4132 = vpack.c.b16 %v3332, %v3328
  %4933 = vmatpush.bf16.msra.mxu0 %v3361
  %4934 = vmatpush.bf16.msra.mxu0 %v3357
  %4935 = vmatpush.bf16.msra.mxu0 %v3353
  %4936 = vmatpush.bf16.msra.mxu0 %v3349
  %4937 = vmatpush.bf16.msra.mxu0 %v3345
  %4938 = vmatpush.bf16.msra.mxu0 %v3341
  %4939 = vmatpush.bf16.msra.mxu0 %v3337
  %4940 = vmatpush.bf16.msra.mxu0 %v3333
  %4941 = vmatmul.bf16.gmra.mxu0 %v883
  %v4942 = vpop.f32.mrf.mxu0
  %v4943 = vadd.f32 %v837, %v4942
  %v4944 = vpop.f32.mrf.mxu0
  %4945 = vdwg.mxu0
  %4946 = vmatpush.bf16.msra.mxu0 %v3393
  %4947 = vmatpush.bf16.msra.mxu0 %v3389
  %4948 = vmatpush.bf16.msra.mxu0 %v3385
  %4949 = vmatpush.bf16.msra.mxu0 %v3381
  %4950 = vmatpush.bf16.msra.mxu0 %v3377
  %4951 = vmatpush.bf16.msra.mxu0 %v3373
  %4952 = vmatpush.bf16.msra.mxu0 %v3369
  %4953 = vmatpush.bf16.msra.mxu0 %v3365
  %4954 = vmatmul.bf16.gmra.mxu0 %v884
  %v4955 = vpop.f32.mrf.mxu0
  %v4956 = vadd.f32 %v4943, %v4955
  %v4957 = vpop.f32.mrf.mxu0
  %4958 = vdwg.mxu0
  %4959 = vmatpush.bf16.msra.mxu0 %v3425
  %4960 = vmatpush.bf16.msra.mxu0 %v3421
  %4961 = vmatpush.bf16.msra.mxu0 %v3417
  %4962 = vmatpush.bf16.msra.mxu0 %v3413
  %4963 = vmatpush.bf16.msra.mxu0 %v3409
  %4964 = vmatpush.bf16.msra.mxu0 %v3405
  %4965 = vmatpush.bf16.msra.mxu0 %v3401
  %4966 = vmatpush.bf16.msra.mxu0 %v3397
  %4967 = vmatmul.bf16.gmra.mxu0 %v885
  %v4968 = vpop.f32.mrf.mxu0
  %v4969 = vadd.f32 %v4956, %v4968
  %v4970 = vpop.f32.mrf.mxu0
  %4971 = vdwg.mxu0
  %4972 = vmatpush.bf16.msra.mxu0 %v3457
  %4973 = vmatpush.bf16.msra.mxu0 %v3453
  %4974 = vmatpush.bf16.msra.mxu0 %v3449
  %4975 = vmatpush.bf16.msra.mxu0 %v3445
  %4976 = vmatpush.bf16.msra.mxu0 %v3441
  %4977 = vmatpush.bf16.msra.mxu0 %v3437
  %4978 = vmatpush.bf16.msra.mxu0 %v3433
  %4979 = vmatpush.bf16.msra.mxu0 %v3429
  %4980 = vmatmul.bf16.gmra.mxu0 %v886
  %v4981 = vpop.f32.mrf.mxu0
  %v4982 = vadd.f32 %v4969, %v4981
  %v4983 = vpop.f32.mrf.mxu0
  %4984 = vdwg.mxu0
  %4985 = vmatpush.bf16.msra.mxu0 %v3489
  %4986 = vmatpush.bf16.msra.mxu0 %v3485
  %4987 = vmatpush.bf16.msra.mxu0 %v3481
  %4988 = vmatpush.bf16.msra.mxu0 %v3477
  %4989 = vmatpush.bf16.msra.mxu0 %v3473
  %4990 = vmatpush.bf16.msra.mxu0 %v3469
  %4991 = vmatpush.bf16.msra.mxu0 %v3465
  %4992 = vmatpush.bf16.msra.mxu0 %v3461
  %4993 = vmatmul.bf16.gmra.mxu0 %v887
  %v4994 = vpop.f32.mrf.mxu0
  %v4995 = vadd.f32 %v4982, %v4994
  %v4996 = vpop.f32.mrf.mxu0
  %4997 = vdwg.mxu0
  %4998 = vmatpush.bf16.msra.mxu0 %v3521
  %4999 = vmatpush.bf16.msra.mxu0 %v3517
  %5000 = vmatpush.bf16.msra.mxu0 %v3513
  %5001 = vmatpush.bf16.msra.mxu0 %v3509
  %5002 = vmatpush.bf16.msra.mxu0 %v3505
  %5003 = vmatpush.bf16.msra.mxu0 %v3501
  %5004 = vmatpush.bf16.msra.mxu0 %v3497
  %5005 = vmatpush.bf16.msra.mxu0 %v3493
  %5006 = vmatmul.bf16.gmra.mxu0 %v888
  %v5007 = vpop.f32.mrf.mxu0
  %v5008 = vadd.f32 %v4995, %v5007
  %v5009 = vpop.f32.mrf.mxu0
  %5010 = vdwg.mxu0
  %5011 = vmatpush.bf16.msra.mxu0 %v3553
  %5012 = vmatpush.bf16.msra.mxu0 %v3549
  %5013 = vmatpush.bf16.msra.mxu0 %v3545
  %5014 = vmatpush.bf16.msra.mxu0 %v3541
  %5015 = vmatpush.bf16.msra.mxu0 %v3537
  %5016 = vmatpush.bf16.msra.mxu0 %v3533
  %5017 = vmatpush.bf16.msra.mxu0 %v3529
  %5018 = vmatpush.bf16.msra.mxu0 %v3525
  %5019 = vmatmul.bf16.gmra.mxu0 %v889
  %v5020 = vpop.f32.mrf.mxu0
  %v5021 = vadd.f32 %v5008, %v5020
  %v5022 = vpop.f32.mrf.mxu0
  %5023 = vdwg.mxu0
  %5024 = vmatpush.bf16.msra.mxu0 %v3585
  %5025 = vmatpush.bf16.msra.mxu0 %v3581
  %5026 = vmatpush.bf16.msra.mxu0 %v3577
  %5027 = vmatpush.bf16.msra.mxu0 %v3573
  %5028 = vmatpush.bf16.msra.mxu0 %v3569
  %5029 = vmatpush.bf16.msra.mxu0 %v3565
  %5030 = vmatpush.bf16.msra.mxu0 %v3561
  %5031 = vmatpush.bf16.msra.mxu0 %v3557
  %5032 = vmatmul.bf16.gmra.mxu0 %v890
  %v5033 = vpop.f32.mrf.mxu0
  %v5034 = vadd.f32 %v5021, %v5033
  %v5035 = vpop.f32.mrf.mxu0
  %5036 = vdwg.mxu0
  %5037 = vmatpush.bf16.msra.mxu0 %v3617
  %5038 = vmatpush.bf16.msra.mxu0 %v3613
  %5039 = vmatpush.bf16.msra.mxu0 %v3609
  %5040 = vmatpush.bf16.msra.mxu0 %v3605
  %5041 = vmatpush.bf16.msra.mxu0 %v3601
  %5042 = vmatpush.bf16.msra.mxu0 %v3597
  %5043 = vmatpush.bf16.msra.mxu0 %v3593
  %5044 = vmatpush.bf16.msra.mxu0 %v3589
  %5045 = vmatmul.bf16.gmra.mxu0 %v891
  %v5046 = vpop.f32.mrf.mxu0
  %v5047 = vadd.f32 %v5034, %v5046
  %v5048 = vpop.f32.mrf.mxu0
  %5049 = vdwg.mxu0
  %5050 = vmatpush.bf16.msra.mxu0 %v3649
  %5051 = vmatpush.bf16.msra.mxu0 %v3645
  %5052 = vmatpush.bf16.msra.mxu0 %v3641
  %5053 = vmatpush.bf16.msra.mxu0 %v3637
  %5054 = vmatpush.bf16.msra.mxu0 %v3633
  %5055 = vmatpush.bf16.msra.mxu0 %v3629
  %5056 = vmatpush.bf16.msra.mxu0 %v3625
  %5057 = vmatpush.bf16.msra.mxu0 %v3621
  %5058 = vmatmul.bf16.gmra.mxu0 %v892
  %v5059 = vpop.f32.mrf.mxu0
  %v5060 = vadd.f32 %v5047, %v5059
  %v5061 = vpop.f32.mrf.mxu0
  %5062 = vdwg.mxu0
  %5063 = vmatpush.bf16.msra.mxu0 %v3681
  %5064 = vmatpush.bf16.msra.mxu0 %v3677
  %5065 = vmatpush.bf16.msra.mxu0 %v3673
  %5066 = vmatpush.bf16.msra.mxu0 %v3669
  %5067 = vmatpush.bf16.msra.mxu0 %v3665
  %5068 = vmatpush.bf16.msra.mxu0 %v3661
  %5069 = vmatpush.bf16.msra.mxu0 %v3657
  %5070 = vmatpush.bf16.msra.mxu0 %v3653
  %5071 = vmatmul.bf16.gmra.mxu0 %v893
  %v5072 = vpop.f32.mrf.mxu0
  %v5073 = vadd.f32 %v5060, %v5072
  %v5074 = vpop.f32.mrf.mxu0
  %5075 = vdwg.mxu0
  %5076 = vmatpush.bf16.msra.mxu0 %v3713
  %5077 = vmatpush.bf16.msra.mxu0 %v3709
  %5078 = vmatpush.bf16.msra.mxu0 %v3705
  %5079 = vmatpush.bf16.msra.mxu0 %v3701
  %5080 = vmatpush.bf16.msra.mxu0 %v3697
  %5081 = vmatpush.bf16.msra.mxu0 %v3693
  %5082 = vmatpush.bf16.msra.mxu0 %v3689
  %5083 = vmatpush.bf16.msra.mxu0 %v3685
  %5084 = vmatmul.bf16.gmra.mxu0 %v894
  %v5085 = vpop.f32.mrf.mxu0
  %v5086 = vadd.f32 %v5073, %v5085
  %v5087 = vpop.f32.mrf.mxu0
  %5088 = vdwg.mxu0
  %5089 = vmatpush.bf16.msra.mxu0 %v3745
  %5090 = vmatpush.bf16.msra.mxu0 %v3741
  %5091 = vmatpush.bf16.msra.mxu0 %v3737
  %5092 = vmatpush.bf16.msra.mxu0 %v3733
  %5093 = vmatpush.bf16.msra.mxu0 %v3729
  %5094 = vmatpush.bf16.msra.mxu0 %v3725
  %5095 = vmatpush.bf16.msra.mxu0 %v3721
  %5096 = vmatpush.bf16.msra.mxu0 %v3717
  %5097 = vmatmul.bf16.gmra.mxu0 %v895
  %v5098 = vpop.f32.mrf.mxu0
  %v5099 = vadd.f32 %v5086, %v5098
  %v5100 = vpop.f32.mrf.mxu0
  %5101 = vdwg.mxu0
  %5102 = vmatpush.bf16.msra.mxu0 %v3777
  %5103 = vmatpush.bf16.msra.mxu0 %v3773
  %5104 = vmatpush.bf16.msra.mxu0 %v3769
  %5105 = vmatpush.bf16.msra.mxu0 %v3765
  %5106 = vmatpush.bf16.msra.mxu0 %v3761
  %5107 = vmatpush.bf16.msra.mxu0 %v3757
  %5108 = vmatpush.bf16.msra.mxu0 %v3753
  %5109 = vmatpush.bf16.msra.mxu0 %v3749
  %5110 = vmatmul.bf16.gmra.mxu0 %v896
  %v5111 = vpop.f32.mrf.mxu0
  %v5112 = vadd.f32 %v5099, %v5111
  %v5113 = vpop.f32.mrf.mxu0
  %5114 = vdwg.mxu0
  %5115 = vmatpush.bf16.msra.mxu0 %v3809
  %5116 = vmatpush.bf16.msra.mxu0 %v3805
  %5117 = vmatpush.bf16.msra.mxu0 %v3801
  %5118 = vmatpush.bf16.msra.mxu0 %v3797
  %5119 = vmatpush.bf16.msra.mxu0 %v3793
  %5120 = vmatpush.bf16.msra.mxu0 %v3789
  %5121 = vmatpush.bf16.msra.mxu0 %v3785
  %5122 = vmatpush.bf16.msra.mxu0 %v3781
  %5123 = vmatmul.bf16.gmra.mxu0 %v897
  %v5124 = vpop.f32.mrf.mxu0
  %v5125 = vadd.f32 %v5112, %v5124
  %v5126 = vpop.f32.mrf.mxu0
  %5127 = vdwg.mxu0
  %5128 = vmatpush.bf16.msra.mxu0 %v3841
  %5129 = vmatpush.bf16.msra.mxu0 %v3837
  %5130 = vmatpush.bf16.msra.mxu0 %v3833
  %5131 = vmatpush.bf16.msra.mxu0 %v3829
  %5132 = vmatpush.bf16.msra.mxu0 %v3825
  %5133 = vmatpush.bf16.msra.mxu0 %v3821
  %5134 = vmatpush.bf16.msra.mxu0 %v3817
  %5135 = vmatpush.bf16.msra.mxu0 %v3813
  %5136 = vmatmul.bf16.gmra.mxu0 %v898
  %v5137 = vpop.f32.mrf.mxu0
  %v5138 = vadd.f32 %v5125, %v5137
  %v5139 = vpop.f32.mrf.mxu0
  %5140 = vdwg.mxu0
  %5141 = vmatpush.bf16.msra.mxu0 %v3873
  %5142 = vmatpush.bf16.msra.mxu0 %v3869
  %5143 = vmatpush.bf16.msra.mxu0 %v3865
  %5144 = vmatpush.bf16.msra.mxu0 %v3861
  %5145 = vmatpush.bf16.msra.mxu0 %v3857
  %5146 = vmatpush.bf16.msra.mxu0 %v3853
  %5147 = vmatpush.bf16.msra.mxu0 %v3849
  %5148 = vmatpush.bf16.msra.mxu0 %v3845
  %5149 = vmatmul.bf16.gmra.mxu0 %v899
  %v5150 = vpop.f32.mrf.mxu0
  %v5151 = vadd.f32 %v5138, %v5150
  %v5152 = vpop.f32.mrf.mxu0
  %5153 = vdwg.mxu0
  %5154 = vmatpush.bf16.msra.mxu0 %v3905
  %5155 = vmatpush.bf16.msra.mxu0 %v3901
  %5156 = vmatpush.bf16.msra.mxu0 %v3897
  %5157 = vmatpush.bf16.msra.mxu0 %v3893
  %5158 = vmatpush.bf16.msra.mxu0 %v3889
  %5159 = vmatpush.bf16.msra.mxu0 %v3885
  %5160 = vmatpush.bf16.msra.mxu0 %v3881
  %5161 = vmatpush.bf16.msra.mxu0 %v3877
  %5162 = vmatmul.bf16.gmra.mxu0 %v900
  %v5163 = vpop.f32.mrf.mxu0
  %v5164 = vadd.f32 %v5151, %v5163
  %v5165 = vpop.f32.mrf.mxu0
  %5166 = vdwg.mxu0
  %5167 = vmatpush.bf16.msra.mxu0 %v3937
  %5168 = vmatpush.bf16.msra.mxu0 %v3933
  %5169 = vmatpush.bf16.msra.mxu0 %v3929
  %5170 = vmatpush.bf16.msra.mxu0 %v3925
  %5171 = vmatpush.bf16.msra.mxu0 %v3921
  %5172 = vmatpush.bf16.msra.mxu0 %v3917
  %5173 = vmatpush.bf16.msra.mxu0 %v3913
  %5174 = vmatpush.bf16.msra.mxu0 %v3909
  %5175 = vmatmul.bf16.gmra.mxu0 %v901
  %v5176 = vpop.f32.mrf.mxu0
  %v5177 = vadd.f32 %v5164, %v5176
  %v5178 = vpop.f32.mrf.mxu0
  %5179 = vdwg.mxu0
  %5180 = vmatpush.bf16.msra.mxu0 %v3969
  %5181 = vmatpush.bf16.msra.mxu0 %v3965
  %5182 = vmatpush.bf16.msra.mxu0 %v3961
  %5183 = vmatpush.bf16.msra.mxu0 %v3957
  %5184 = vmatpush.bf16.msra.mxu0 %v3953
  %5185 = vmatpush.bf16.msra.mxu0 %v3949
  %5186 = vmatpush.bf16.msra.mxu0 %v3945
  %5187 = vmatpush.bf16.msra.mxu0 %v3941
  %5188 = vmatmul.bf16.gmra.mxu0 %v902
  %v5189 = vpop.f32.mrf.mxu0
  %v5190 = vadd.f32 %v5177, %v5189
  %v5191 = vpop.f32.mrf.mxu0
  %5192 = vdwg.mxu0
  %5193 = vmatpush.bf16.msra.mxu0 %v4001
  %5194 = vmatpush.bf16.msra.mxu0 %v3997
  %5195 = vmatpush.bf16.msra.mxu0 %v3993
  %5196 = vmatpush.bf16.msra.mxu0 %v3989
  %5197 = vmatpush.bf16.msra.mxu0 %v3985
  %5198 = vmatpush.bf16.msra.mxu0 %v3981
  %5199 = vmatpush.bf16.msra.mxu0 %v3977
  %5200 = vmatpush.bf16.msra.mxu0 %v3973
  %5201 = vmatmul.bf16.gmra.mxu0 %v903
  %v5202 = vpop.f32.mrf.mxu0
  %v5203 = vadd.f32 %v5190, %v5202
  %v5204 = vpop.f32.mrf.mxu0
  %5205 = vdwg.mxu0
  %5206 = vmatpush.bf16.msra.mxu0 %v4033
  %5207 = vmatpush.bf16.msra.mxu0 %v4029
  %5208 = vmatpush.bf16.msra.mxu0 %v4025
  %5209 = vmatpush.bf16.msra.mxu0 %v4021
  %5210 = vmatpush.bf16.msra.mxu0 %v4017
  %5211 = vmatpush.bf16.msra.mxu0 %v4013
  %5212 = vmatpush.bf16.msra.mxu0 %v4009
  %5213 = vmatpush.bf16.msra.mxu0 %v4005
  %5214 = vmatmul.bf16.gmra.mxu0 %v904
  %v5215 = vpop.f32.mrf.mxu0
  %v5216 = vadd.f32 %v5203, %v5215
  %v5217 = vpop.f32.mrf.mxu0
  %5218 = vdwg.mxu0
  %5219 = vmatpush.bf16.msra.mxu0 %v4065
  %5220 = vmatpush.bf16.msra.mxu0 %v4061
  %5221 = vmatpush.bf16.msra.mxu0 %v4057
  %5222 = vmatpush.bf16.msra.mxu0 %v4053
  %5223 = vmatpush.bf16.msra.mxu0 %v4049
  %5224 = vmatpush.bf16.msra.mxu0 %v4045
  %5225 = vmatpush.bf16.msra.mxu0 %v4041
  %5226 = vmatpush.bf16.msra.mxu0 %v4037
  %5227 = vmatmul.bf16.gmra.mxu0 %v905
  %v5228 = vpop.f32.mrf.mxu0
  %v5229 = vadd.f32 %v5216, %v5228
  %v5230 = vpop.f32.mrf.mxu0
  %5231 = vdwg.mxu0
  %5232 = vmatpush.bf16.msra.mxu0 %v4097
  %5233 = vmatpush.bf16.msra.mxu0 %v4093
  %5234 = vmatpush.bf16.msra.mxu0 %v4089
  %5235 = vmatpush.bf16.msra.mxu0 %v4085
  %5236 = vmatpush.bf16.msra.mxu0 %v4081
  %5237 = vmatpush.bf16.msra.mxu0 %v4077
  %5238 = vmatpush.bf16.msra.mxu0 %v4073
  %5239 = vmatpush.bf16.msra.mxu0 %v4069
  %5240 = vmatmul.bf16.gmra.mxu0 %v906
  %v5241 = vpop.f32.mrf.mxu0
  %v5242 = vadd.f32 %v5229, %v5241
  %v5243 = vpop.f32.mrf.mxu0
  %5244 = vdwg.mxu0
  %5245 = vmatpush.bf16.msra.mxu0 %v4129
  %5246 = vmatpush.bf16.msra.mxu0 %v4125
  %5247 = vmatpush.bf16.msra.mxu0 %v4121
  %5248 = vmatpush.bf16.msra.mxu0 %v4117
  %5249 = vmatpush.bf16.msra.mxu0 %v4113
  %5250 = vmatpush.bf16.msra.mxu0 %v4109
  %5251 = vmatpush.bf16.msra.mxu0 %v4105
  %5252 = vmatpush.bf16.msra.mxu0 %v4101
  %5253 = vmatmul.bf16.gmra.mxu0 %v907
  %v5254 = vpop.f32.mrf.mxu0
  %v5255 = vadd.f32 %v5242, %v5254
  %v5256 = vpop.f32.mrf.mxu0
  %5257 = vdwg.mxu0
  %5258 = vmatpush.bf16.msra.mxu0 %v3362
  %5259 = vmatpush.bf16.msra.mxu0 %v3358
  %5260 = vmatpush.bf16.msra.mxu0 %v3354
  %5261 = vmatpush.bf16.msra.mxu0 %v3350
  %5262 = vmatpush.bf16.msra.mxu0 %v3346
  %5263 = vmatpush.bf16.msra.mxu0 %v3342
  %5264 = vmatpush.bf16.msra.mxu0 %v3338
  %5265 = vmatpush.bf16.msra.mxu0 %v3334
  %5266 = vmatmul.bf16.gmra.mxu0 %v883
  %v5267 = vpop.f32.mrf.mxu0
  %v5268 = vadd.f32 %v838, %v5267
  %v5269 = vpop.f32.mrf.mxu0
  %5270 = vdwg.mxu0
  %5271 = vmatpush.bf16.msra.mxu0 %v3394
  %5272 = vmatpush.bf16.msra.mxu0 %v3390
  %5273 = vmatpush.bf16.msra.mxu0 %v3386
  %5274 = vmatpush.bf16.msra.mxu0 %v3382
  %5275 = vmatpush.bf16.msra.mxu0 %v3378
  %5276 = vmatpush.bf16.msra.mxu0 %v3374
  %5277 = vmatpush.bf16.msra.mxu0 %v3370
  %5278 = vmatpush.bf16.msra.mxu0 %v3366
  %5279 = vmatmul.bf16.gmra.mxu0 %v884
  %v5280 = vpop.f32.mrf.mxu0
  %v5281 = vadd.f32 %v5268, %v5280
  %v5282 = vpop.f32.mrf.mxu0
  %5283 = vdwg.mxu0
  %5284 = vmatpush.bf16.msra.mxu0 %v3426
  %5285 = vmatpush.bf16.msra.mxu0 %v3422
  %5286 = vmatpush.bf16.msra.mxu0 %v3418
  %5287 = vmatpush.bf16.msra.mxu0 %v3414
  %5288 = vmatpush.bf16.msra.mxu0 %v3410
  %5289 = vmatpush.bf16.msra.mxu0 %v3406
  %5290 = vmatpush.bf16.msra.mxu0 %v3402
  %5291 = vmatpush.bf16.msra.mxu0 %v3398
  %5292 = vmatmul.bf16.gmra.mxu0 %v885
  %v5293 = vpop.f32.mrf.mxu0
  %v5294 = vadd.f32 %v5281, %v5293
  %v5295 = vpop.f32.mrf.mxu0
  %5296 = vdwg.mxu0
  %5297 = vmatpush.bf16.msra.mxu0 %v3458
  %5298 = vmatpush.bf16.msra.mxu0 %v3454
  %5299 = vmatpush.bf16.msra.mxu0 %v3450
  %5300 = vmatpush.bf16.msra.mxu0 %v3446
  %5301 = vmatpush.bf16.msra.mxu0 %v3442
  %5302 = vmatpush.bf16.msra.mxu0 %v3438
  %5303 = vmatpush.bf16.msra.mxu0 %v3434
  %5304 = vmatpush.bf16.msra.mxu0 %v3430
  %5305 = vmatmul.bf16.gmra.mxu0 %v886
  %v5306 = vpop.f32.mrf.mxu0
  %v5307 = vadd.f32 %v5294, %v5306
  %v5308 = vpop.f32.mrf.mxu0
  %5309 = vdwg.mxu0
  %5310 = vmatpush.bf16.msra.mxu0 %v3490
  %5311 = vmatpush.bf16.msra.mxu0 %v3486
  %5312 = vmatpush.bf16.msra.mxu0 %v3482
  %5313 = vmatpush.bf16.msra.mxu0 %v3478
  %5314 = vmatpush.bf16.msra.mxu0 %v3474
  %5315 = vmatpush.bf16.msra.mxu0 %v3470
  %5316 = vmatpush.bf16.msra.mxu0 %v3466
  %5317 = vmatpush.bf16.msra.mxu0 %v3462
  %5318 = vmatmul.bf16.gmra.mxu0 %v887
  %v5319 = vpop.f32.mrf.mxu0
  %v5320 = vadd.f32 %v5307, %v5319
  %v5321 = vpop.f32.mrf.mxu0
  %5322 = vdwg.mxu0
  %5323 = vmatpush.bf16.msra.mxu0 %v3522
  %5324 = vmatpush.bf16.msra.mxu0 %v3518
  %5325 = vmatpush.bf16.msra.mxu0 %v3514
  %5326 = vmatpush.bf16.msra.mxu0 %v3510
  %5327 = vmatpush.bf16.msra.mxu0 %v3506
  %5328 = vmatpush.bf16.msra.mxu0 %v3502
  %5329 = vmatpush.bf16.msra.mxu0 %v3498
  %5330 = vmatpush.bf16.msra.mxu0 %v3494
  %5331 = vmatmul.bf16.gmra.mxu0 %v888
  %v5332 = vpop.f32.mrf.mxu0
  %v5333 = vadd.f32 %v5320, %v5332
  %v5334 = vpop.f32.mrf.mxu0
  %5335 = vdwg.mxu0
  %5336 = vmatpush.bf16.msra.mxu0 %v3554
  %5337 = vmatpush.bf16.msra.mxu0 %v3550
  %5338 = vmatpush.bf16.msra.mxu0 %v3546
  %5339 = vmatpush.bf16.msra.mxu0 %v3542
  %5340 = vmatpush.bf16.msra.mxu0 %v3538
  %5341 = vmatpush.bf16.msra.mxu0 %v3534
  %5342 = vmatpush.bf16.msra.mxu0 %v3530
  %5343 = vmatpush.bf16.msra.mxu0 %v3526
  %5344 = vmatmul.bf16.gmra.mxu0 %v889
  %v5345 = vpop.f32.mrf.mxu0
  %v5346 = vadd.f32 %v5333, %v5345
  %v5347 = vpop.f32.mrf.mxu0
  %5348 = vdwg.mxu0
  %5349 = vmatpush.bf16.msra.mxu0 %v3586
  %5350 = vmatpush.bf16.msra.mxu0 %v3582
  %5351 = vmatpush.bf16.msra.mxu0 %v3578
  %5352 = vmatpush.bf16.msra.mxu0 %v3574
  %5353 = vmatpush.bf16.msra.mxu0 %v3570
  %5354 = vmatpush.bf16.msra.mxu0 %v3566
  %5355 = vmatpush.bf16.msra.mxu0 %v3562
  %5356 = vmatpush.bf16.msra.mxu0 %v3558
  %5357 = vmatmul.bf16.gmra.mxu0 %v890
  %v5358 = vpop.f32.mrf.mxu0
  %v5359 = vadd.f32 %v5346, %v5358
  %v5360 = vpop.f32.mrf.mxu0
  %5361 = vdwg.mxu0
  %5362 = vmatpush.bf16.msra.mxu0 %v3618
  %5363 = vmatpush.bf16.msra.mxu0 %v3614
  %5364 = vmatpush.bf16.msra.mxu0 %v3610
  %5365 = vmatpush.bf16.msra.mxu0 %v3606
  %5366 = vmatpush.bf16.msra.mxu0 %v3602
  %5367 = vmatpush.bf16.msra.mxu0 %v3598
  %5368 = vmatpush.bf16.msra.mxu0 %v3594
  %5369 = vmatpush.bf16.msra.mxu0 %v3590
  %5370 = vmatmul.bf16.gmra.mxu0 %v891
  %v5371 = vpop.f32.mrf.mxu0
  %v5372 = vadd.f32 %v5359, %v5371
  %v5373 = vpop.f32.mrf.mxu0
  %5374 = vdwg.mxu0
  %5375 = vmatpush.bf16.msra.mxu0 %v3650
  %5376 = vmatpush.bf16.msra.mxu0 %v3646
  %5377 = vmatpush.bf16.msra.mxu0 %v3642
  %5378 = vmatpush.bf16.msra.mxu0 %v3638
  %5379 = vmatpush.bf16.msra.mxu0 %v3634
  %5380 = vmatpush.bf16.msra.mxu0 %v3630
  %5381 = vmatpush.bf16.msra.mxu0 %v3626
  %5382 = vmatpush.bf16.msra.mxu0 %v3622
  %5383 = vmatmul.bf16.gmra.mxu0 %v892
  %v5384 = vpop.f32.mrf.mxu0
  %v5385 = vadd.f32 %v5372, %v5384
  %v5386 = vpop.f32.mrf.mxu0
  %5387 = vdwg.mxu0
  %5388 = vmatpush.bf16.msra.mxu0 %v3682
  %5389 = vmatpush.bf16.msra.mxu0 %v3678
  %5390 = vmatpush.bf16.msra.mxu0 %v3674
  %5391 = vmatpush.bf16.msra.mxu0 %v3670
  %5392 = vmatpush.bf16.msra.mxu0 %v3666
  %5393 = vmatpush.bf16.msra.mxu0 %v3662
  %5394 = vmatpush.bf16.msra.mxu0 %v3658
  %5395 = vmatpush.bf16.msra.mxu0 %v3654
  %5396 = vmatmul.bf16.gmra.mxu0 %v893
  %v5397 = vpop.f32.mrf.mxu0
  %v5398 = vadd.f32 %v5385, %v5397
  %v5399 = vpop.f32.mrf.mxu0
  %5400 = vdwg.mxu0
  %5401 = vmatpush.bf16.msra.mxu0 %v3714
  %5402 = vmatpush.bf16.msra.mxu0 %v3710
  %5403 = vmatpush.bf16.msra.mxu0 %v3706
  %5404 = vmatpush.bf16.msra.mxu0 %v3702
  %5405 = vmatpush.bf16.msra.mxu0 %v3698
  %5406 = vmatpush.bf16.msra.mxu0 %v3694
  %5407 = vmatpush.bf16.msra.mxu0 %v3690
  %5408 = vmatpush.bf16.msra.mxu0 %v3686
  %5409 = vmatmul.bf16.gmra.mxu0 %v894
  %v5410 = vpop.f32.mrf.mxu0
  %v5411 = vadd.f32 %v5398, %v5410
  %v5412 = vpop.f32.mrf.mxu0
  %5413 = vdwg.mxu0
  %5414 = vmatpush.bf16.msra.mxu0 %v3746
  %5415 = vmatpush.bf16.msra.mxu0 %v3742
  %5416 = vmatpush.bf16.msra.mxu0 %v3738
  %5417 = vmatpush.bf16.msra.mxu0 %v3734
  %5418 = vmatpush.bf16.msra.mxu0 %v3730
  %5419 = vmatpush.bf16.msra.mxu0 %v3726
  %5420 = vmatpush.bf16.msra.mxu0 %v3722
  %5421 = vmatpush.bf16.msra.mxu0 %v3718
  %5422 = vmatmul.bf16.gmra.mxu0 %v895
  %v5423 = vpop.f32.mrf.mxu0
  %v5424 = vadd.f32 %v5411, %v5423
  %v5425 = vpop.f32.mrf.mxu0
  %5426 = vdwg.mxu0
  %5427 = vmatpush.bf16.msra.mxu0 %v3778
  %5428 = vmatpush.bf16.msra.mxu0 %v3774
  %5429 = vmatpush.bf16.msra.mxu0 %v3770
  %5430 = vmatpush.bf16.msra.mxu0 %v3766
  %5431 = vmatpush.bf16.msra.mxu0 %v3762
  %5432 = vmatpush.bf16.msra.mxu0 %v3758
  %5433 = vmatpush.bf16.msra.mxu0 %v3754
  %5434 = vmatpush.bf16.msra.mxu0 %v3750
  %5435 = vmatmul.bf16.gmra.mxu0 %v896
  %v5436 = vpop.f32.mrf.mxu0
  %v5437 = vadd.f32 %v5424, %v5436
  %v5438 = vpop.f32.mrf.mxu0
  %5439 = vdwg.mxu0
  %5440 = vmatpush.bf16.msra.mxu0 %v3810
  %5441 = vmatpush.bf16.msra.mxu0 %v3806
  %5442 = vmatpush.bf16.msra.mxu0 %v3802
  %5443 = vmatpush.bf16.msra.mxu0 %v3798
  %5444 = vmatpush.bf16.msra.mxu0 %v3794
  %5445 = vmatpush.bf16.msra.mxu0 %v3790
  %5446 = vmatpush.bf16.msra.mxu0 %v3786
  %5447 = vmatpush.bf16.msra.mxu0 %v3782
  %5448 = vmatmul.bf16.gmra.mxu0 %v897
  %v5449 = vpop.f32.mrf.mxu0
  %v5450 = vadd.f32 %v5437, %v5449
  %v5451 = vpop.f32.mrf.mxu0
  %5452 = vdwg.mxu0
  %5453 = vmatpush.bf16.msra.mxu0 %v3842
  %5454 = vmatpush.bf16.msra.mxu0 %v3838
  %5455 = vmatpush.bf16.msra.mxu0 %v3834
  %5456 = vmatpush.bf16.msra.mxu0 %v3830
  %5457 = vmatpush.bf16.msra.mxu0 %v3826
  %5458 = vmatpush.bf16.msra.mxu0 %v3822
  %5459 = vmatpush.bf16.msra.mxu0 %v3818
  %5460 = vmatpush.bf16.msra.mxu0 %v3814
  %5461 = vmatmul.bf16.gmra.mxu0 %v898
  %v5462 = vpop.f32.mrf.mxu0
  %v5463 = vadd.f32 %v5450, %v5462
  %v5464 = vpop.f32.mrf.mxu0
  %5465 = vdwg.mxu0
  %5466 = vmatpush.bf16.msra.mxu0 %v3874
  %5467 = vmatpush.bf16.msra.mxu0 %v3870
  %5468 = vmatpush.bf16.msra.mxu0 %v3866
  %5469 = vmatpush.bf16.msra.mxu0 %v3862
  %5470 = vmatpush.bf16.msra.mxu0 %v3858
  %5471 = vmatpush.bf16.msra.mxu0 %v3854
  %5472 = vmatpush.bf16.msra.mxu0 %v3850
  %5473 = vmatpush.bf16.msra.mxu0 %v3846
  %5474 = vmatmul.bf16.gmra.mxu0 %v899
  %v5475 = vpop.f32.mrf.mxu0
  %v5476 = vadd.f32 %v5463, %v5475
  %v5477 = vpop.f32.mrf.mxu0
  %5478 = vdwg.mxu0
  %5479 = vmatpush.bf16.msra.mxu0 %v3906
  %5480 = vmatpush.bf16.msra.mxu0 %v3902
  %5481 = vmatpush.bf16.msra.mxu0 %v3898
  %5482 = vmatpush.bf16.msra.mxu0 %v3894
  %5483 = vmatpush.bf16.msra.mxu0 %v3890
  %5484 = vmatpush.bf16.msra.mxu0 %v3886
  %5485 = vmatpush.bf16.msra.mxu0 %v3882
  %5486 = vmatpush.bf16.msra.mxu0 %v3878
  %5487 = vmatmul.bf16.gmra.mxu0 %v900
  %v5488 = vpop.f32.mrf.mxu0
  %v5489 = vadd.f32 %v5476, %v5488
  %v5490 = vpop.f32.mrf.mxu0
  %5491 = vdwg.mxu0
  %5492 = vmatpush.bf16.msra.mxu0 %v3938
  %5493 = vmatpush.bf16.msra.mxu0 %v3934
  %5494 = vmatpush.bf16.msra.mxu0 %v3930
  %5495 = vmatpush.bf16.msra.mxu0 %v3926
  %5496 = vmatpush.bf16.msra.mxu0 %v3922
  %5497 = vmatpush.bf16.msra.mxu0 %v3918
  %5498 = vmatpush.bf16.msra.mxu0 %v3914
  %5499 = vmatpush.bf16.msra.mxu0 %v3910
  %5500 = vmatmul.bf16.gmra.mxu0 %v901
  %v5501 = vpop.f32.mrf.mxu0
  %v5502 = vadd.f32 %v5489, %v5501
  %v5503 = vpop.f32.mrf.mxu0
  %5504 = vdwg.mxu0
  %5505 = vmatpush.bf16.msra.mxu0 %v3970
  %5506 = vmatpush.bf16.msra.mxu0 %v3966
  %5507 = vmatpush.bf16.msra.mxu0 %v3962
  %5508 = vmatpush.bf16.msra.mxu0 %v3958
  %5509 = vmatpush.bf16.msra.mxu0 %v3954
  %5510 = vmatpush.bf16.msra.mxu0 %v3950
  %5511 = vmatpush.bf16.msra.mxu0 %v3946
  %5512 = vmatpush.bf16.msra.mxu0 %v3942
  %5513 = vmatmul.bf16.gmra.mxu0 %v902
  %v5514 = vpop.f32.mrf.mxu0
  %v5515 = vadd.f32 %v5502, %v5514
  %v5516 = vpop.f32.mrf.mxu0
  %5517 = vdwg.mxu0
  %5518 = vmatpush.bf16.msra.mxu0 %v4002
  %5519 = vmatpush.bf16.msra.mxu0 %v3998
  %5520 = vmatpush.bf16.msra.mxu0 %v3994
  %5521 = vmatpush.bf16.msra.mxu0 %v3990
  %5522 = vmatpush.bf16.msra.mxu0 %v3986
  %5523 = vmatpush.bf16.msra.mxu0 %v3982
  %5524 = vmatpush.bf16.msra.mxu0 %v3978
  %5525 = vmatpush.bf16.msra.mxu0 %v3974
  %5526 = vmatmul.bf16.gmra.mxu0 %v903
  %v5527 = vpop.f32.mrf.mxu0
  %v5528 = vadd.f32 %v5515, %v5527
  %v5529 = vpop.f32.mrf.mxu0
  %5530 = vdwg.mxu0
  %5531 = vmatpush.bf16.msra.mxu0 %v4034
  %5532 = vmatpush.bf16.msra.mxu0 %v4030
  %5533 = vmatpush.bf16.msra.mxu0 %v4026
  %5534 = vmatpush.bf16.msra.mxu0 %v4022
  %5535 = vmatpush.bf16.msra.mxu0 %v4018
  %5536 = vmatpush.bf16.msra.mxu0 %v4014
  %5537 = vmatpush.bf16.msra.mxu0 %v4010
  %5538 = vmatpush.bf16.msra.mxu0 %v4006
  %5539 = vmatmul.bf16.gmra.mxu0 %v904
  %v5540 = vpop.f32.mrf.mxu0
  %v5541 = vadd.f32 %v5528, %v5540
  %v5542 = vpop.f32.mrf.mxu0
  %5543 = vdwg.mxu0
  %5544 = vmatpush.bf16.msra.mxu0 %v4066
  %5545 = vmatpush.bf16.msra.mxu0 %v4062
  %5546 = vmatpush.bf16.msra.mxu0 %v4058
  %5547 = vmatpush.bf16.msra.mxu0 %v4054
  %5548 = vmatpush.bf16.msra.mxu0 %v4050
  %5549 = vmatpush.bf16.msra.mxu0 %v4046
  %5550 = vmatpush.bf16.msra.mxu0 %v4042
  %5551 = vmatpush.bf16.msra.mxu0 %v4038
  %5552 = vmatmul.bf16.gmra.mxu0 %v905
  %v5553 = vpop.f32.mrf.mxu0
  %v5554 = vadd.f32 %v5541, %v5553
  %v5555 = vpop.f32.mrf.mxu0
  %5556 = vdwg.mxu0
  %5557 = vmatpush.bf16.msra.mxu0 %v4098
  %5558 = vmatpush.bf16.msra.mxu0 %v4094
  %5559 = vmatpush.bf16.msra.mxu0 %v4090
  %5560 = vmatpush.bf16.msra.mxu0 %v4086
  %5561 = vmatpush.bf16.msra.mxu0 %v4082
  %5562 = vmatpush.bf16.msra.mxu0 %v4078
  %5563 = vmatpush.bf16.msra.mxu0 %v4074
  %5564 = vmatpush.bf16.msra.mxu0 %v4070
  %5565 = vmatmul.bf16.gmra.mxu0 %v906
  %v5566 = vpop.f32.mrf.mxu0
  %v5567 = vadd.f32 %v5554, %v5566
  %v5568 = vpop.f32.mrf.mxu0
  %5569 = vdwg.mxu0
  %5570 = vmatpush.bf16.msra.mxu0 %v4130
  %5571 = vmatpush.bf16.msra.mxu0 %v4126
  %5572 = vmatpush.bf16.msra.mxu0 %v4122
  %5573 = vmatpush.bf16.msra.mxu0 %v4118
  %5574 = vmatpush.bf16.msra.mxu0 %v4114
  %5575 = vmatpush.bf16.msra.mxu0 %v4110
  %5576 = vmatpush.bf16.msra.mxu0 %v4106
  %5577 = vmatpush.bf16.msra.mxu0 %v4102
  %5578 = vmatmul.bf16.gmra.mxu0 %v907
  %v5579 = vpop.f32.mrf.mxu0
  %v5580 = vadd.f32 %v5567, %v5579
  %v5581 = vpop.f32.mrf.mxu0
  %5582 = vdwg.mxu0
  %5583 = vmatpush.bf16.msra.mxu0 %v3363
  %5584 = vmatpush.bf16.msra.mxu0 %v3359
  %5585 = vmatpush.bf16.msra.mxu0 %v3355
  %5586 = vmatpush.bf16.msra.mxu0 %v3351
  %5587 = vmatpush.bf16.msra.mxu0 %v3347
  %5588 = vmatpush.bf16.msra.mxu0 %v3343
  %5589 = vmatpush.bf16.msra.mxu0 %v3339
  %5590 = vmatpush.bf16.msra.mxu0 %v3335
  %5591 = vmatmul.bf16.gmra.mxu0 %v883
  %v5592 = vpop.f32.mrf.mxu0
  %v5593 = vadd.f32 %v839, %v5592
  %v5594 = vpop.f32.mrf.mxu0
  %5595 = vdwg.mxu0
  %5596 = vmatpush.bf16.msra.mxu0 %v3395
  %5597 = vmatpush.bf16.msra.mxu0 %v3391
  %5598 = vmatpush.bf16.msra.mxu0 %v3387
  %5599 = vmatpush.bf16.msra.mxu0 %v3383
  %5600 = vmatpush.bf16.msra.mxu0 %v3379
  %5601 = vmatpush.bf16.msra.mxu0 %v3375
  %5602 = vmatpush.bf16.msra.mxu0 %v3371
  %5603 = vmatpush.bf16.msra.mxu0 %v3367
  %5604 = vmatmul.bf16.gmra.mxu0 %v884
  %v5605 = vpop.f32.mrf.mxu0
  %v5606 = vadd.f32 %v5593, %v5605
  %v5607 = vpop.f32.mrf.mxu0
  %5608 = vdwg.mxu0
  %5609 = vmatpush.bf16.msra.mxu0 %v3427
  %5610 = vmatpush.bf16.msra.mxu0 %v3423
  %5611 = vmatpush.bf16.msra.mxu0 %v3419
  %5612 = vmatpush.bf16.msra.mxu0 %v3415
  %5613 = vmatpush.bf16.msra.mxu0 %v3411
  %5614 = vmatpush.bf16.msra.mxu0 %v3407
  %5615 = vmatpush.bf16.msra.mxu0 %v3403
  %5616 = vmatpush.bf16.msra.mxu0 %v3399
  %5617 = vmatmul.bf16.gmra.mxu0 %v885
  %v5618 = vpop.f32.mrf.mxu0
  %v5619 = vadd.f32 %v5606, %v5618
  %v5620 = vpop.f32.mrf.mxu0
  %5621 = vdwg.mxu0
  %5622 = vmatpush.bf16.msra.mxu0 %v3459
  %5623 = vmatpush.bf16.msra.mxu0 %v3455
  %5624 = vmatpush.bf16.msra.mxu0 %v3451
  %5625 = vmatpush.bf16.msra.mxu0 %v3447
  %5626 = vmatpush.bf16.msra.mxu0 %v3443
  %5627 = vmatpush.bf16.msra.mxu0 %v3439
  %5628 = vmatpush.bf16.msra.mxu0 %v3435
  %5629 = vmatpush.bf16.msra.mxu0 %v3431
  %5630 = vmatmul.bf16.gmra.mxu0 %v886
  %v5631 = vpop.f32.mrf.mxu0
  %v5632 = vadd.f32 %v5619, %v5631
  %v5633 = vpop.f32.mrf.mxu0
  %5634 = vdwg.mxu0
  %5635 = vmatpush.bf16.msra.mxu0 %v3491
  %5636 = vmatpush.bf16.msra.mxu0 %v3487
  %5637 = vmatpush.bf16.msra.mxu0 %v3483
  %5638 = vmatpush.bf16.msra.mxu0 %v3479
  %5639 = vmatpush.bf16.msra.mxu0 %v3475
  %5640 = vmatpush.bf16.msra.mxu0 %v3471
  %5641 = vmatpush.bf16.msra.mxu0 %v3467
  %5642 = vmatpush.bf16.msra.mxu0 %v3463
  %5643 = vmatmul.bf16.gmra.mxu0 %v887
  %v5644 = vpop.f32.mrf.mxu0
  %v5645 = vadd.f32 %v5632, %v5644
  %v5646 = vpop.f32.mrf.mxu0
  %5647 = vdwg.mxu0
  %5648 = vmatpush.bf16.msra.mxu0 %v3523
  %5649 = vmatpush.bf16.msra.mxu0 %v3519
  %5650 = vmatpush.bf16.msra.mxu0 %v3515
  %5651 = vmatpush.bf16.msra.mxu0 %v3511
  %5652 = vmatpush.bf16.msra.mxu0 %v3507
  %5653 = vmatpush.bf16.msra.mxu0 %v3503
  %5654 = vmatpush.bf16.msra.mxu0 %v3499
  %5655 = vmatpush.bf16.msra.mxu0 %v3495
  %5656 = vmatmul.bf16.gmra.mxu0 %v888
  %v5657 = vpop.f32.mrf.mxu0
  %v5658 = vadd.f32 %v5645, %v5657
  %v5659 = vpop.f32.mrf.mxu0
  %5660 = vdwg.mxu0
  %5661 = vmatpush.bf16.msra.mxu0 %v3555
  %5662 = vmatpush.bf16.msra.mxu0 %v3551
  %5663 = vmatpush.bf16.msra.mxu0 %v3547
  %5664 = vmatpush.bf16.msra.mxu0 %v3543
  %5665 = vmatpush.bf16.msra.mxu0 %v3539
  %5666 = vmatpush.bf16.msra.mxu0 %v3535
  %5667 = vmatpush.bf16.msra.mxu0 %v3531
  %5668 = vmatpush.bf16.msra.mxu0 %v3527
  %5669 = vmatmul.bf16.gmra.mxu0 %v889
  %v5670 = vpop.f32.mrf.mxu0
  %v5671 = vadd.f32 %v5658, %v5670
  %v5672 = vpop.f32.mrf.mxu0
  %5673 = vdwg.mxu0
  %5674 = vmatpush.bf16.msra.mxu0 %v3587
  %5675 = vmatpush.bf16.msra.mxu0 %v3583
  %5676 = vmatpush.bf16.msra.mxu0 %v3579
  %5677 = vmatpush.bf16.msra.mxu0 %v3575
  %5678 = vmatpush.bf16.msra.mxu0 %v3571
  %5679 = vmatpush.bf16.msra.mxu0 %v3567
  %5680 = vmatpush.bf16.msra.mxu0 %v3563
  %5681 = vmatpush.bf16.msra.mxu0 %v3559
  %5682 = vmatmul.bf16.gmra.mxu0 %v890
  %v5683 = vpop.f32.mrf.mxu0
  %v5684 = vadd.f32 %v5671, %v5683
  %v5685 = vpop.f32.mrf.mxu0
  %5686 = vdwg.mxu0
  %5687 = vmatpush.bf16.msra.mxu0 %v3619
  %5688 = vmatpush.bf16.msra.mxu0 %v3615
  %5689 = vmatpush.bf16.msra.mxu0 %v3611
  %5690 = vmatpush.bf16.msra.mxu0 %v3607
  %5691 = vmatpush.bf16.msra.mxu0 %v3603
  %5692 = vmatpush.bf16.msra.mxu0 %v3599
  %5693 = vmatpush.bf16.msra.mxu0 %v3595
  %5694 = vmatpush.bf16.msra.mxu0 %v3591
  %5695 = vmatmul.bf16.gmra.mxu0 %v891
  %v5696 = vpop.f32.mrf.mxu0
  %v5697 = vadd.f32 %v5684, %v5696
  %v5698 = vpop.f32.mrf.mxu0
  %5699 = vdwg.mxu0
  %5700 = vmatpush.bf16.msra.mxu0 %v3651
  %5701 = vmatpush.bf16.msra.mxu0 %v3647
  %5702 = vmatpush.bf16.msra.mxu0 %v3643
  %5703 = vmatpush.bf16.msra.mxu0 %v3639
  %5704 = vmatpush.bf16.msra.mxu0 %v3635
  %5705 = vmatpush.bf16.msra.mxu0 %v3631
  %5706 = vmatpush.bf16.msra.mxu0 %v3627
  %5707 = vmatpush.bf16.msra.mxu0 %v3623
  %5708 = vmatmul.bf16.gmra.mxu0 %v892
  %v5709 = vpop.f32.mrf.mxu0
  %v5710 = vadd.f32 %v5697, %v5709
  %v5711 = vpop.f32.mrf.mxu0
  %5712 = vdwg.mxu0
  %5713 = vmatpush.bf16.msra.mxu0 %v3683
  %5714 = vmatpush.bf16.msra.mxu0 %v3679
  %5715 = vmatpush.bf16.msra.mxu0 %v3675
  %5716 = vmatpush.bf16.msra.mxu0 %v3671
  %5717 = vmatpush.bf16.msra.mxu0 %v3667
  %5718 = vmatpush.bf16.msra.mxu0 %v3663
  %5719 = vmatpush.bf16.msra.mxu0 %v3659
  %5720 = vmatpush.bf16.msra.mxu0 %v3655
  %5721 = vmatmul.bf16.gmra.mxu0 %v893
  %v5722 = vpop.f32.mrf.mxu0
  %v5723 = vadd.f32 %v5710, %v5722
  %v5724 = vpop.f32.mrf.mxu0
  %5725 = vdwg.mxu0
  %5726 = vmatpush.bf16.msra.mxu0 %v3715
  %5727 = vmatpush.bf16.msra.mxu0 %v3711
  %5728 = vmatpush.bf16.msra.mxu0 %v3707
  %5729 = vmatpush.bf16.msra.mxu0 %v3703
  %5730 = vmatpush.bf16.msra.mxu0 %v3699
  %5731 = vmatpush.bf16.msra.mxu0 %v3695
  %5732 = vmatpush.bf16.msra.mxu0 %v3691
  %5733 = vmatpush.bf16.msra.mxu0 %v3687
  %5734 = vmatmul.bf16.gmra.mxu0 %v894
  %v5735 = vpop.f32.mrf.mxu0
  %v5736 = vadd.f32 %v5723, %v5735
  %v5737 = vpop.f32.mrf.mxu0
  %5738 = vdwg.mxu0
  %5739 = vmatpush.bf16.msra.mxu0 %v3747
  %5740 = vmatpush.bf16.msra.mxu0 %v3743
  %5741 = vmatpush.bf16.msra.mxu0 %v3739
  %5742 = vmatpush.bf16.msra.mxu0 %v3735
  %5743 = vmatpush.bf16.msra.mxu0 %v3731
  %5744 = vmatpush.bf16.msra.mxu0 %v3727
  %5745 = vmatpush.bf16.msra.mxu0 %v3723
  %5746 = vmatpush.bf16.msra.mxu0 %v3719
  %5747 = vmatmul.bf16.gmra.mxu0 %v895
  %v5748 = vpop.f32.mrf.mxu0
  %v5749 = vadd.f32 %v5736, %v5748
  %v5750 = vpop.f32.mrf.mxu0
  %5751 = vdwg.mxu0
  %5752 = vmatpush.bf16.msra.mxu0 %v3779
  %5753 = vmatpush.bf16.msra.mxu0 %v3775
  %5754 = vmatpush.bf16.msra.mxu0 %v3771
  %5755 = vmatpush.bf16.msra.mxu0 %v3767
  %5756 = vmatpush.bf16.msra.mxu0 %v3763
  %5757 = vmatpush.bf16.msra.mxu0 %v3759
  %5758 = vmatpush.bf16.msra.mxu0 %v3755
  %5759 = vmatpush.bf16.msra.mxu0 %v3751
  %5760 = vmatmul.bf16.gmra.mxu0 %v896
  %v5761 = vpop.f32.mrf.mxu0
  %v5762 = vadd.f32 %v5749, %v5761
  %v5763 = vpop.f32.mrf.mxu0
  %5764 = vdwg.mxu0
  %5765 = vmatpush.bf16.msra.mxu0 %v3811
  %5766 = vmatpush.bf16.msra.mxu0 %v3807
  %5767 = vmatpush.bf16.msra.mxu0 %v3803
  %5768 = vmatpush.bf16.msra.mxu0 %v3799
  %5769 = vmatpush.bf16.msra.mxu0 %v3795
  %5770 = vmatpush.bf16.msra.mxu0 %v3791
  %5771 = vmatpush.bf16.msra.mxu0 %v3787
  %5772 = vmatpush.bf16.msra.mxu0 %v3783
  %5773 = vmatmul.bf16.gmra.mxu0 %v897
  %v5774 = vpop.f32.mrf.mxu0
  %v5775 = vadd.f32 %v5762, %v5774
  %v5776 = vpop.f32.mrf.mxu0
  %5777 = vdwg.mxu0
  %5778 = vmatpush.bf16.msra.mxu0 %v3843
  %5779 = vmatpush.bf16.msra.mxu0 %v3839
  %5780 = vmatpush.bf16.msra.mxu0 %v3835
  %5781 = vmatpush.bf16.msra.mxu0 %v3831
  %5782 = vmatpush.bf16.msra.mxu0 %v3827
  %5783 = vmatpush.bf16.msra.mxu0 %v3823
  %5784 = vmatpush.bf16.msra.mxu0 %v3819
  %5785 = vmatpush.bf16.msra.mxu0 %v3815
  %5786 = vmatmul.bf16.gmra.mxu0 %v898
  %v5787 = vpop.f32.mrf.mxu0
  %v5788 = vadd.f32 %v5775, %v5787
  %v5789 = vpop.f32.mrf.mxu0
  %5790 = vdwg.mxu0
  %5791 = vmatpush.bf16.msra.mxu0 %v3875
  %5792 = vmatpush.bf16.msra.mxu0 %v3871
  %5793 = vmatpush.bf16.msra.mxu0 %v3867
  %5794 = vmatpush.bf16.msra.mxu0 %v3863
  %5795 = vmatpush.bf16.msra.mxu0 %v3859
  %5796 = vmatpush.bf16.msra.mxu0 %v3855
  %5797 = vmatpush.bf16.msra.mxu0 %v3851
  %5798 = vmatpush.bf16.msra.mxu0 %v3847
  %5799 = vmatmul.bf16.gmra.mxu0 %v899
  %v5800 = vpop.f32.mrf.mxu0
  %v5801 = vadd.f32 %v5788, %v5800
  %v5802 = vpop.f32.mrf.mxu0
  %5803 = vdwg.mxu0
  %5804 = vmatpush.bf16.msra.mxu0 %v3907
  %5805 = vmatpush.bf16.msra.mxu0 %v3903
  %5806 = vmatpush.bf16.msra.mxu0 %v3899
  %5807 = vmatpush.bf16.msra.mxu0 %v3895
  %5808 = vmatpush.bf16.msra.mxu0 %v3891
  %5809 = vmatpush.bf16.msra.mxu0 %v3887
  %5810 = vmatpush.bf16.msra.mxu0 %v3883
  %5811 = vmatpush.bf16.msra.mxu0 %v3879
  %5812 = vmatmul.bf16.gmra.mxu0 %v900
  %v5813 = vpop.f32.mrf.mxu0
  %v5814 = vadd.f32 %v5801, %v5813
  %v5815 = vpop.f32.mrf.mxu0
  %5816 = vdwg.mxu0
  %5817 = vmatpush.bf16.msra.mxu0 %v3939
  %5818 = vmatpush.bf16.msra.mxu0 %v3935
  %5819 = vmatpush.bf16.msra.mxu0 %v3931
  %5820 = vmatpush.bf16.msra.mxu0 %v3927
  %5821 = vmatpush.bf16.msra.mxu0 %v3923
  %5822 = vmatpush.bf16.msra.mxu0 %v3919
  %5823 = vmatpush.bf16.msra.mxu0 %v3915
  %5824 = vmatpush.bf16.msra.mxu0 %v3911
  %5825 = vmatmul.bf16.gmra.mxu0 %v901
  %v5826 = vpop.f32.mrf.mxu0
  %v5827 = vadd.f32 %v5814, %v5826
  %v5828 = vpop.f32.mrf.mxu0
  %5829 = vdwg.mxu0
  %5830 = vmatpush.bf16.msra.mxu0 %v3971
  %5831 = vmatpush.bf16.msra.mxu0 %v3967
  %5832 = vmatpush.bf16.msra.mxu0 %v3963
  %5833 = vmatpush.bf16.msra.mxu0 %v3959
  %5834 = vmatpush.bf16.msra.mxu0 %v3955
  %5835 = vmatpush.bf16.msra.mxu0 %v3951
  %5836 = vmatpush.bf16.msra.mxu0 %v3947
  %5837 = vmatpush.bf16.msra.mxu0 %v3943
  %5838 = vmatmul.bf16.gmra.mxu0 %v902
  %v5839 = vpop.f32.mrf.mxu0
  %v5840 = vadd.f32 %v5827, %v5839
  %v5841 = vpop.f32.mrf.mxu0
  %5842 = vdwg.mxu0
  %5843 = vmatpush.bf16.msra.mxu0 %v4003
  %5844 = vmatpush.bf16.msra.mxu0 %v3999
  %5845 = vmatpush.bf16.msra.mxu0 %v3995
  %5846 = vmatpush.bf16.msra.mxu0 %v3991
  %5847 = vmatpush.bf16.msra.mxu0 %v3987
  %5848 = vmatpush.bf16.msra.mxu0 %v3983
  %5849 = vmatpush.bf16.msra.mxu0 %v3979
  %5850 = vmatpush.bf16.msra.mxu0 %v3975
  %5851 = vmatmul.bf16.gmra.mxu0 %v903
  %v5852 = vpop.f32.mrf.mxu0
  %v5853 = vadd.f32 %v5840, %v5852
  %v5854 = vpop.f32.mrf.mxu0
  %5855 = vdwg.mxu0
  %5856 = vmatpush.bf16.msra.mxu0 %v4035
  %5857 = vmatpush.bf16.msra.mxu0 %v4031
  %5858 = vmatpush.bf16.msra.mxu0 %v4027
  %5859 = vmatpush.bf16.msra.mxu0 %v4023
  %5860 = vmatpush.bf16.msra.mxu0 %v4019
  %5861 = vmatpush.bf16.msra.mxu0 %v4015
  %5862 = vmatpush.bf16.msra.mxu0 %v4011
  %5863 = vmatpush.bf16.msra.mxu0 %v4007
  %5864 = vmatmul.bf16.gmra.mxu0 %v904
  %v5865 = vpop.f32.mrf.mxu0
  %v5866 = vadd.f32 %v5853, %v5865
  %v5867 = vpop.f32.mrf.mxu0
  %5868 = vdwg.mxu0
  %5869 = vmatpush.bf16.msra.mxu0 %v4067
  %5870 = vmatpush.bf16.msra.mxu0 %v4063
  %5871 = vmatpush.bf16.msra.mxu0 %v4059
  %5872 = vmatpush.bf16.msra.mxu0 %v4055
  %5873 = vmatpush.bf16.msra.mxu0 %v4051
  %5874 = vmatpush.bf16.msra.mxu0 %v4047
  %5875 = vmatpush.bf16.msra.mxu0 %v4043
  %5876 = vmatpush.bf16.msra.mxu0 %v4039
  %5877 = vmatmul.bf16.gmra.mxu0 %v905
  %v5878 = vpop.f32.mrf.mxu0
  %v5879 = vadd.f32 %v5866, %v5878
  %v5880 = vpop.f32.mrf.mxu0
  %5881 = vdwg.mxu0
  %5882 = vmatpush.bf16.msra.mxu0 %v4099
  %5883 = vmatpush.bf16.msra.mxu0 %v4095
  %5884 = vmatpush.bf16.msra.mxu0 %v4091
  %5885 = vmatpush.bf16.msra.mxu0 %v4087
  %5886 = vmatpush.bf16.msra.mxu0 %v4083
  %5887 = vmatpush.bf16.msra.mxu0 %v4079
  %5888 = vmatpush.bf16.msra.mxu0 %v4075
  %5889 = vmatpush.bf16.msra.mxu0 %v4071
  %5890 = vmatmul.bf16.gmra.mxu0 %v906
  %v5891 = vpop.f32.mrf.mxu0
  %v5892 = vadd.f32 %v5879, %v5891
  %v5893 = vpop.f32.mrf.mxu0
  %5894 = vdwg.mxu0
  %5895 = vmatpush.bf16.msra.mxu0 %v4131
  %5896 = vmatpush.bf16.msra.mxu0 %v4127
  %5897 = vmatpush.bf16.msra.mxu0 %v4123
  %5898 = vmatpush.bf16.msra.mxu0 %v4119
  %5899 = vmatpush.bf16.msra.mxu0 %v4115
  %5900 = vmatpush.bf16.msra.mxu0 %v4111
  %5901 = vmatpush.bf16.msra.mxu0 %v4107
  %5902 = vmatpush.bf16.msra.mxu0 %v4103
  %5903 = vmatmul.bf16.gmra.mxu0 %v907
  %v5904 = vpop.f32.mrf.mxu0
  %v5905 = vadd.f32 %v5892, %v5904
  %v5906 = vpop.f32.mrf.mxu0
  %5907 = vdwg.mxu0
  %5908 = vmatpush.bf16.msra.mxu0 %v3364
  %5909 = vmatpush.bf16.msra.mxu0 %v3360
  %5910 = vmatpush.bf16.msra.mxu0 %v3356
  %5911 = vmatpush.bf16.msra.mxu0 %v3352
  %5912 = vmatpush.bf16.msra.mxu0 %v3348
  %5913 = vmatpush.bf16.msra.mxu0 %v3344
  %5914 = vmatpush.bf16.msra.mxu0 %v3340
  %5915 = vmatpush.bf16.msra.mxu0 %v3336
  %5916 = vmatmul.bf16.gmra.mxu0 %v883
  %v5917 = vpop.f32.mrf.mxu0
  %v5918 = vadd.f32 %v840, %v5917
  %v5919 = vpop.f32.mrf.mxu0
  %5920 = vdwg.mxu0
  %5921 = vmatpush.bf16.msra.mxu0 %v3396
  %5922 = vmatpush.bf16.msra.mxu0 %v3392
  %5923 = vmatpush.bf16.msra.mxu0 %v3388
  %5924 = vmatpush.bf16.msra.mxu0 %v3384
  %5925 = vmatpush.bf16.msra.mxu0 %v3380
  %5926 = vmatpush.bf16.msra.mxu0 %v3376
  %5927 = vmatpush.bf16.msra.mxu0 %v3372
  %5928 = vmatpush.bf16.msra.mxu0 %v3368
  %5929 = vmatmul.bf16.gmra.mxu0 %v884
  %v5930 = vpop.f32.mrf.mxu0
  %v5931 = vadd.f32 %v5918, %v5930
  %v5932 = vpop.f32.mrf.mxu0
  %5933 = vdwg.mxu0
  %5934 = vmatpush.bf16.msra.mxu0 %v3428
  %5935 = vmatpush.bf16.msra.mxu0 %v3424
  %5936 = vmatpush.bf16.msra.mxu0 %v3420
  %5937 = vmatpush.bf16.msra.mxu0 %v3416
  %5938 = vmatpush.bf16.msra.mxu0 %v3412
  %5939 = vmatpush.bf16.msra.mxu0 %v3408
  %5940 = vmatpush.bf16.msra.mxu0 %v3404
  %5941 = vmatpush.bf16.msra.mxu0 %v3400
  %5942 = vmatmul.bf16.gmra.mxu0 %v885
  %v5943 = vpop.f32.mrf.mxu0
  %v5944 = vadd.f32 %v5931, %v5943
  %v5945 = vpop.f32.mrf.mxu0
  %5946 = vdwg.mxu0
  %5947 = vmatpush.bf16.msra.mxu0 %v3460
  %5948 = vmatpush.bf16.msra.mxu0 %v3456
  %5949 = vmatpush.bf16.msra.mxu0 %v3452
  %5950 = vmatpush.bf16.msra.mxu0 %v3448
  %5951 = vmatpush.bf16.msra.mxu0 %v3444
  %5952 = vmatpush.bf16.msra.mxu0 %v3440
  %5953 = vmatpush.bf16.msra.mxu0 %v3436
  %5954 = vmatpush.bf16.msra.mxu0 %v3432
  %5955 = vmatmul.bf16.gmra.mxu0 %v886
  %v5956 = vpop.f32.mrf.mxu0
  %v5957 = vadd.f32 %v5944, %v5956
  %v5958 = vpop.f32.mrf.mxu0
  %5959 = vdwg.mxu0
  %5960 = vmatpush.bf16.msra.mxu0 %v3492
  %5961 = vmatpush.bf16.msra.mxu0 %v3488
  %5962 = vmatpush.bf16.msra.mxu0 %v3484
  %5963 = vmatpush.bf16.msra.mxu0 %v3480
  %5964 = vmatpush.bf16.msra.mxu0 %v3476
  %5965 = vmatpush.bf16.msra.mxu0 %v3472
  %5966 = vmatpush.bf16.msra.mxu0 %v3468
  %5967 = vmatpush.bf16.msra.mxu0 %v3464
  %5968 = vmatmul.bf16.gmra.mxu0 %v887
  %v5969 = vpop.f32.mrf.mxu0
  %v5970 = vadd.f32 %v5957, %v5969
  %v5971 = vpop.f32.mrf.mxu0
  %5972 = vdwg.mxu0
  %5973 = vmatpush.bf16.msra.mxu0 %v3524
  %5974 = vmatpush.bf16.msra.mxu0 %v3520
  %5975 = vmatpush.bf16.msra.mxu0 %v3516
  %5976 = vmatpush.bf16.msra.mxu0 %v3512
  %5977 = vmatpush.bf16.msra.mxu0 %v3508
  %5978 = vmatpush.bf16.msra.mxu0 %v3504
  %5979 = vmatpush.bf16.msra.mxu0 %v3500
  %5980 = vmatpush.bf16.msra.mxu0 %v3496
  %5981 = vmatmul.bf16.gmra.mxu0 %v888
  %v5982 = vpop.f32.mrf.mxu0
  %v5983 = vadd.f32 %v5970, %v5982
  %v5984 = vpop.f32.mrf.mxu0
  %5985 = vdwg.mxu0
  %5986 = vmatpush.bf16.msra.mxu0 %v3556
  %5987 = vmatpush.bf16.msra.mxu0 %v3552
  %5988 = vmatpush.bf16.msra.mxu0 %v3548
  %5989 = vmatpush.bf16.msra.mxu0 %v3544
  %5990 = vmatpush.bf16.msra.mxu0 %v3540
  %5991 = vmatpush.bf16.msra.mxu0 %v3536
  %5992 = vmatpush.bf16.msra.mxu0 %v3532
  %5993 = vmatpush.bf16.msra.mxu0 %v3528
  %5994 = vmatmul.bf16.gmra.mxu0 %v889
  %v5995 = vpop.f32.mrf.mxu0
  %v5996 = vadd.f32 %v5983, %v5995
  %v5997 = vpop.f32.mrf.mxu0
  %5998 = vdwg.mxu0
  %5999 = vmatpush.bf16.msra.mxu0 %v3588
  %6000 = vmatpush.bf16.msra.mxu0 %v3584
  %6001 = vmatpush.bf16.msra.mxu0 %v3580
  %6002 = vmatpush.bf16.msra.mxu0 %v3576
  %6003 = vmatpush.bf16.msra.mxu0 %v3572
  %6004 = vmatpush.bf16.msra.mxu0 %v3568
  %6005 = vmatpush.bf16.msra.mxu0 %v3564
  %6006 = vmatpush.bf16.msra.mxu0 %v3560
  %6007 = vmatmul.bf16.gmra.mxu0 %v890
  %v6008 = vpop.f32.mrf.mxu0
  %v6009 = vadd.f32 %v5996, %v6008
  %v6010 = vpop.f32.mrf.mxu0
  %6011 = vdwg.mxu0
  %6012 = vmatpush.bf16.msra.mxu0 %v3620
  %6013 = vmatpush.bf16.msra.mxu0 %v3616
  %6014 = vmatpush.bf16.msra.mxu0 %v3612
  %6015 = vmatpush.bf16.msra.mxu0 %v3608
  %6016 = vmatpush.bf16.msra.mxu0 %v3604
  %6017 = vmatpush.bf16.msra.mxu0 %v3600
  %6018 = vmatpush.bf16.msra.mxu0 %v3596
  %6019 = vmatpush.bf16.msra.mxu0 %v3592
  %6020 = vmatmul.bf16.gmra.mxu0 %v891
  %v6021 = vpop.f32.mrf.mxu0
  %v6022 = vadd.f32 %v6009, %v6021
  %v6023 = vpop.f32.mrf.mxu0
  %6024 = vdwg.mxu0
  %6025 = vmatpush.bf16.msra.mxu0 %v3652
  %6026 = vmatpush.bf16.msra.mxu0 %v3648
  %6027 = vmatpush.bf16.msra.mxu0 %v3644
  %6028 = vmatpush.bf16.msra.mxu0 %v3640
  %6029 = vmatpush.bf16.msra.mxu0 %v3636
  %6030 = vmatpush.bf16.msra.mxu0 %v3632
  %6031 = vmatpush.bf16.msra.mxu0 %v3628
  %6032 = vmatpush.bf16.msra.mxu0 %v3624
  %6033 = vmatmul.bf16.gmra.mxu0 %v892
  %v6034 = vpop.f32.mrf.mxu0
  %v6035 = vadd.f32 %v6022, %v6034
  %v6036 = vpop.f32.mrf.mxu0
  %6037 = vdwg.mxu0
  %6038 = vmatpush.bf16.msra.mxu0 %v3684
  %6039 = vmatpush.bf16.msra.mxu0 %v3680
  %6040 = vmatpush.bf16.msra.mxu0 %v3676
  %6041 = vmatpush.bf16.msra.mxu0 %v3672
  %6042 = vmatpush.bf16.msra.mxu0 %v3668
  %6043 = vmatpush.bf16.msra.mxu0 %v3664
  %6044 = vmatpush.bf16.msra.mxu0 %v3660
  %6045 = vmatpush.bf16.msra.mxu0 %v3656
  %6046 = vmatmul.bf16.gmra.mxu0 %v893
  %v6047 = vpop.f32.mrf.mxu0
  %v6048 = vadd.f32 %v6035, %v6047
  %v6049 = vpop.f32.mrf.mxu0
  %6050 = vdwg.mxu0
  %6051 = vmatpush.bf16.msra.mxu0 %v3716
  %6052 = vmatpush.bf16.msra.mxu0 %v3712
  %6053 = vmatpush.bf16.msra.mxu0 %v3708
  %6054 = vmatpush.bf16.msra.mxu0 %v3704
  %6055 = vmatpush.bf16.msra.mxu0 %v3700
  %6056 = vmatpush.bf16.msra.mxu0 %v3696
  %6057 = vmatpush.bf16.msra.mxu0 %v3692
  %6058 = vmatpush.bf16.msra.mxu0 %v3688
  %6059 = vmatmul.bf16.gmra.mxu0 %v894
  %v6060 = vpop.f32.mrf.mxu0
  %v6061 = vadd.f32 %v6048, %v6060
  %v6062 = vpop.f32.mrf.mxu0
  %6063 = vdwg.mxu0
  %6064 = vmatpush.bf16.msra.mxu0 %v3748
  %6065 = vmatpush.bf16.msra.mxu0 %v3744
  %6066 = vmatpush.bf16.msra.mxu0 %v3740
  %6067 = vmatpush.bf16.msra.mxu0 %v3736
  %6068 = vmatpush.bf16.msra.mxu0 %v3732
  %6069 = vmatpush.bf16.msra.mxu0 %v3728
  %6070 = vmatpush.bf16.msra.mxu0 %v3724
  %6071 = vmatpush.bf16.msra.mxu0 %v3720
  %6072 = vmatmul.bf16.gmra.mxu0 %v895
  %v6073 = vpop.f32.mrf.mxu0
  %v6074 = vadd.f32 %v6061, %v6073
  %v6075 = vpop.f32.mrf.mxu0
  %6076 = vdwg.mxu0
  %6077 = vmatpush.bf16.msra.mxu0 %v3780
  %6078 = vmatpush.bf16.msra.mxu0 %v3776
  %6079 = vmatpush.bf16.msra.mxu0 %v3772
  %6080 = vmatpush.bf16.msra.mxu0 %v3768
  %6081 = vmatpush.bf16.msra.mxu0 %v3764
  %6082 = vmatpush.bf16.msra.mxu0 %v3760
  %6083 = vmatpush.bf16.msra.mxu0 %v3756
  %6084 = vmatpush.bf16.msra.mxu0 %v3752
  %6085 = vmatmul.bf16.gmra.mxu0 %v896
  %v6086 = vpop.f32.mrf.mxu0
  %v6087 = vadd.f32 %v6074, %v6086
  %v6088 = vpop.f32.mrf.mxu0
  %6089 = vdwg.mxu0
  %6090 = vmatpush.bf16.msra.mxu0 %v3812
  %6091 = vmatpush.bf16.msra.mxu0 %v3808
  %6092 = vmatpush.bf16.msra.mxu0 %v3804
  %6093 = vmatpush.bf16.msra.mxu0 %v3800
  %6094 = vmatpush.bf16.msra.mxu0 %v3796
  %6095 = vmatpush.bf16.msra.mxu0 %v3792
  %6096 = vmatpush.bf16.msra.mxu0 %v3788
  %6097 = vmatpush.bf16.msra.mxu0 %v3784
  %6098 = vmatmul.bf16.gmra.mxu0 %v897
  %v6099 = vpop.f32.mrf.mxu0
  %v6100 = vadd.f32 %v6087, %v6099
  %v6101 = vpop.f32.mrf.mxu0
  %6102 = vdwg.mxu0
  %6103 = vmatpush.bf16.msra.mxu0 %v3844
  %6104 = vmatpush.bf16.msra.mxu0 %v3840
  %6105 = vmatpush.bf16.msra.mxu0 %v3836
  %6106 = vmatpush.bf16.msra.mxu0 %v3832
  %6107 = vmatpush.bf16.msra.mxu0 %v3828
  %6108 = vmatpush.bf16.msra.mxu0 %v3824
  %6109 = vmatpush.bf16.msra.mxu0 %v3820
  %6110 = vmatpush.bf16.msra.mxu0 %v3816
  %6111 = vmatmul.bf16.gmra.mxu0 %v898
  %v6112 = vpop.f32.mrf.mxu0
  %v6113 = vadd.f32 %v6100, %v6112
  %v6114 = vpop.f32.mrf.mxu0
  %6115 = vdwg.mxu0
  %6116 = vmatpush.bf16.msra.mxu0 %v3876
  %6117 = vmatpush.bf16.msra.mxu0 %v3872
  %6118 = vmatpush.bf16.msra.mxu0 %v3868
  %6119 = vmatpush.bf16.msra.mxu0 %v3864
  %6120 = vmatpush.bf16.msra.mxu0 %v3860
  %6121 = vmatpush.bf16.msra.mxu0 %v3856
  %6122 = vmatpush.bf16.msra.mxu0 %v3852
  %6123 = vmatpush.bf16.msra.mxu0 %v3848
  %6124 = vmatmul.bf16.gmra.mxu0 %v899
  %v6125 = vpop.f32.mrf.mxu0
  %v6126 = vadd.f32 %v6113, %v6125
  %v6127 = vpop.f32.mrf.mxu0
  %6128 = vdwg.mxu0
  %6129 = vmatpush.bf16.msra.mxu0 %v3908
  %6130 = vmatpush.bf16.msra.mxu0 %v3904
  %6131 = vmatpush.bf16.msra.mxu0 %v3900
  %6132 = vmatpush.bf16.msra.mxu0 %v3896
  %6133 = vmatpush.bf16.msra.mxu0 %v3892
  %6134 = vmatpush.bf16.msra.mxu0 %v3888
  %6135 = vmatpush.bf16.msra.mxu0 %v3884
  %6136 = vmatpush.bf16.msra.mxu0 %v3880
  %6137 = vmatmul.bf16.gmra.mxu0 %v900
  %v6138 = vpop.f32.mrf.mxu0
  %v6139 = vadd.f32 %v6126, %v6138
  %v6140 = vpop.f32.mrf.mxu0
  %6141 = vdwg.mxu0
  %6142 = vmatpush.bf16.msra.mxu0 %v3940
  %6143 = vmatpush.bf16.msra.mxu0 %v3936
  %6144 = vmatpush.bf16.msra.mxu0 %v3932
  %6145 = vmatpush.bf16.msra.mxu0 %v3928
  %6146 = vmatpush.bf16.msra.mxu0 %v3924
  %6147 = vmatpush.bf16.msra.mxu0 %v3920
  %6148 = vmatpush.bf16.msra.mxu0 %v3916
  %6149 = vmatpush.bf16.msra.mxu0 %v3912
  %6150 = vmatmul.bf16.gmra.mxu0 %v901
  %v6151 = vpop.f32.mrf.mxu0
  %v6152 = vadd.f32 %v6139, %v6151
  %v6153 = vpop.f32.mrf.mxu0
  %6154 = vdwg.mxu0
  %6155 = vmatpush.bf16.msra.mxu0 %v3972
  %6156 = vmatpush.bf16.msra.mxu0 %v3968
  %6157 = vmatpush.bf16.msra.mxu0 %v3964
  %6158 = vmatpush.bf16.msra.mxu0 %v3960
  %6159 = vmatpush.bf16.msra.mxu0 %v3956
  %6160 = vmatpush.bf16.msra.mxu0 %v3952
  %6161 = vmatpush.bf16.msra.mxu0 %v3948
  %6162 = vmatpush.bf16.msra.mxu0 %v3944
  %6163 = vmatmul.bf16.gmra.mxu0 %v902
  %v6164 = vpop.f32.mrf.mxu0
  %v6165 = vadd.f32 %v6152, %v6164
  %v6166 = vpop.f32.mrf.mxu0
  %6167 = vdwg.mxu0
  %6168 = vmatpush.bf16.msra.mxu0 %v4004
  %6169 = vmatpush.bf16.msra.mxu0 %v4000
  %6170 = vmatpush.bf16.msra.mxu0 %v3996
  %6171 = vmatpush.bf16.msra.mxu0 %v3992
  %6172 = vmatpush.bf16.msra.mxu0 %v3988
  %6173 = vmatpush.bf16.msra.mxu0 %v3984
  %6174 = vmatpush.bf16.msra.mxu0 %v3980
  %6175 = vmatpush.bf16.msra.mxu0 %v3976
  %6176 = vmatmul.bf16.gmra.mxu0 %v903
  %v6177 = vpop.f32.mrf.mxu0
  %v6178 = vadd.f32 %v6165, %v6177
  %v6179 = vpop.f32.mrf.mxu0
  %6180 = vdwg.mxu0
  %6181 = vmatpush.bf16.msra.mxu0 %v4036
  %6182 = vmatpush.bf16.msra.mxu0 %v4032
  %6183 = vmatpush.bf16.msra.mxu0 %v4028
  %6184 = vmatpush.bf16.msra.mxu0 %v4024
  %6185 = vmatpush.bf16.msra.mxu0 %v4020
  %6186 = vmatpush.bf16.msra.mxu0 %v4016
  %6187 = vmatpush.bf16.msra.mxu0 %v4012
  %6188 = vmatpush.bf16.msra.mxu0 %v4008
  %6189 = vmatmul.bf16.gmra.mxu0 %v904
  %v6190 = vpop.f32.mrf.mxu0
  %v6191 = vadd.f32 %v6178, %v6190
  %v6192 = vpop.f32.mrf.mxu0
  %6193 = vdwg.mxu0
  %6194 = vmatpush.bf16.msra.mxu0 %v4068
  %6195 = vmatpush.bf16.msra.mxu0 %v4064
  %6196 = vmatpush.bf16.msra.mxu0 %v4060
  %6197 = vmatpush.bf16.msra.mxu0 %v4056
  %6198 = vmatpush.bf16.msra.mxu0 %v4052
  %6199 = vmatpush.bf16.msra.mxu0 %v4048
  %6200 = vmatpush.bf16.msra.mxu0 %v4044
  %6201 = vmatpush.bf16.msra.mxu0 %v4040
  %6202 = vmatmul.bf16.gmra.mxu0 %v905
  %v6203 = vpop.f32.mrf.mxu0
  %v6204 = vadd.f32 %v6191, %v6203
  %v6205 = vpop.f32.mrf.mxu0
  %6206 = vdwg.mxu0
  %6207 = vmatpush.bf16.msra.mxu0 %v4100
  %6208 = vmatpush.bf16.msra.mxu0 %v4096
  %6209 = vmatpush.bf16.msra.mxu0 %v4092
  %6210 = vmatpush.bf16.msra.mxu0 %v4088
  %6211 = vmatpush.bf16.msra.mxu0 %v4084
  %6212 = vmatpush.bf16.msra.mxu0 %v4080
  %6213 = vmatpush.bf16.msra.mxu0 %v4076
  %6214 = vmatpush.bf16.msra.mxu0 %v4072
  %6215 = vmatmul.bf16.gmra.mxu0 %v906
  %v6216 = vpop.f32.mrf.mxu0
  %v6217 = vadd.f32 %v6204, %v6216
  %v6218 = vpop.f32.mrf.mxu0
  %6219 = vdwg.mxu0
  %6220 = vmatpush.bf16.msra.mxu0 %v4132
  %6221 = vmatpush.bf16.msra.mxu0 %v4128
  %6222 = vmatpush.bf16.msra.mxu0 %v4124
  %6223 = vmatpush.bf16.msra.mxu0 %v4120
  %6224 = vmatpush.bf16.msra.mxu0 %v4116
  %6225 = vmatpush.bf16.msra.mxu0 %v4112
  %6226 = vmatpush.bf16.msra.mxu0 %v4108
  %6227 = vmatpush.bf16.msra.mxu0 %v4104
  %6228 = vmatmul.bf16.gmra.mxu0 %v907
  %v6229 = vpop.f32.mrf.mxu0
  %v6230 = vadd.f32 %v6217, %v6229
  %v6231 = vpop.f32.mrf.mxu0
  %6232 = vdwg.mxu0
  %v6233 = vmax.f32 %v5255, 0.0
  %v6234 = vmax.f32 %v5580, 0.0
  %v6235 = vmax.f32 %v5905, 0.0
  %v6236 = vmax.f32 %v6230, 0.0
  %6237 = vst [vmem:[%s5] sm:$0xff] %v6233
  %6238 = vst [vmem:[%s5 + $0x8] sm:$0xff] %v6234
  %6239 = vst [vmem:[%s5 + $0x10] sm:$0xff] %v6235
  %6240 = vst [vmem:[%s5 + $0x18] sm:$0xff] %v6236
  %v6241 = vpack.c.bf16 %v6233, %v6233
  %v6242 = vpack.c.bf16 %v6234, %v6234
  %v6243 = vpack.c.bf16 %v6235, %v6235
  %v6244 = vpack.c.bf16 %v6236, %v6236
  %v6245 = vld [vmem:[%s3] sm:$0xf]
  %v6246 = vld [vmem:[%s3 + $0x4] sm:$0xf]
  %v6247 = vld [vmem:[%s3 + $0x8] sm:$0xf]
  %v6248 = vld [vmem:[%s3 + $0xc] sm:$0xf]
  %v6249 = vld [vmem:[%s3 + $0x10] sm:$0xf]
  %v6250 = vld [vmem:[%s3 + $0x14] sm:$0xf]
  %v6251 = vld [vmem:[%s3 + $0x18] sm:$0xf]
  %v6252 = vld [vmem:[%s3 + $0x1c] sm:$0xf]
  %v6253 = vld [vmem:[%s3 + $0x20] sm:$0xf]
  %v6254 = vld [vmem:[%s3 + $0x24] sm:$0xf]
  %v6255 = vld [vmem:[%s3 + $0x28] sm:$0xf]
  %v6256 = vld [vmem:[%s3 + $0x2c] sm:$0xf]
  %v6257 = vld [vmem:[%s3 + $0x30] sm:$0xf]
  %v6258 = vld [vmem:[%s3 + $0x34] sm:$0xf]
  %v6259 = vld [vmem:[%s3 + $0x38] sm:$0xf]
  %v6260 = vld [vmem:[%s3 + $0x3c] sm:$0xf]
  %v6261 = vld [vmem:[%s3 + $0x40] sm:$0xf]
  %v6262 = vld [vmem:[%s3 + $0x44] sm:$0xf]
  %v6263 = vld [vmem:[%s3 + $0x48] sm:$0xf]
  %v6264 = vld [vmem:[%s3 + $0x4c] sm:$0xf]
  %v6265 = vld [vmem:[%s3 + $0x50] sm:$0xf]
  %v6266 = vld [vmem:[%s3 + $0x54] sm:$0xf]
  %v6267 = vld [vmem:[%s3 + $0x58] sm:$0xf]
  %v6268 = vld [vmem:[%s3 + $0x5c] sm:$0xf]
  %v6269 = vld [vmem:[%s3 + $0x60] sm:$0xf]
  %v6270 = vld [vmem:[%s3 + $0x64] sm:$0xf]
  %v6271 = vld [vmem:[%s3 + $0x68] sm:$0xf]
  %v6272 = vld [vmem:[%s3 + $0x6c] sm:$0xf]
  %v6273 = vld [vmem:[%s3 + $0x70] sm:$0xf]
  %v6274 = vld [vmem:[%s3 + $0x74] sm:$0xf]
  %v6275 = vld [vmem:[%s3 + $0x78] sm:$0xf]
  %v6276 = vld [vmem:[%s3 + $0x7c] sm:$0xf]
  %v6277 = vld [vmem:[%s3 + $0x80] sm:$0xf]
  %v6278 = vld [vmem:[%s3 + $0x84] sm:$0xf]
  %v6279 = vld [vmem:[%s3 + $0x88] sm:$0xf]
  %v6280 = vld [vmem:[%s3 + $0x8c] sm:$0xf]
  %v6281 = vld [vmem:[%s3 + $0x90] sm:$0xf]
  %v6282 = vld [vmem:[%s3 + $0x94] sm:$0xf]
  %v6283 = vld [vmem:[%s3 + $0x98] sm:$0xf]
  %v6284 = vld [vmem:[%s3 + $0x9c] sm:$0xf]
  %v6285 = vld [vmem:[%s3 + $0xa0] sm:$0xf]
  %v6286 = vld [vmem:[%s3 + $0xa4] sm:$0xf]
  %v6287 = vld [vmem:[%s3 + $0xa8] sm:$0xf]
  %v6288 = vld [vmem:[%s3 + $0xac] sm:$0xf]
  %v6289 = vld [vmem:[%s3 + $0xb0] sm:$0xf]
  %v6290 = vld [vmem:[%s3 + $0xb4] sm:$0xf]
  %v6291 = vld [vmem:[%s3 + $0xb8] sm:$0xf]
  %v6292 = vld [vmem:[%s3 + $0xbc] sm:$0xf]
  %v6293 = vld [vmem:[%s3 + $0xc0] sm:$0xf]
  %v6294 = vld [vmem:[%s3 + $0xc4] sm:$0xf]
  %v6295 = vld [vmem:[%s3 + $0xc8] sm:$0xf]
  %v6296 = vld [vmem:[%s3 + $0xcc] sm:$0xf]
  %v6297 = vld [vmem:[%s3 + $0xd0] sm:$0xf]
  %v6298 = vld [vmem:[%s3 + $0xd4] sm:$0xf]
  %v6299 = vld [vmem:[%s3 + $0xd8] sm:$0xf]
  %v6300 = vld [vmem:[%s3 + $0xdc] sm:$0xf]
  %v6301 = vld [vmem:[%s3 + $0xe0] sm:$0xf]
  %v6302 = vld [vmem:[%s3 + $0xe4] sm:$0xf]
  %v6303 = vld [vmem:[%s3 + $0xe8] sm:$0xf]
  %v6304 = vld [vmem:[%s3 + $0xec] sm:$0xf]
  %v6305 = vld [vmem:[%s3 + $0xf0] sm:$0xf]
  %v6306 = vld [vmem:[%s3 + $0xf4] sm:$0xf]
  %v6307 = vld [vmem:[%s3 + $0xf8] sm:$0xf]
  %v6308 = vld [vmem:[%s3 + $0xfc] sm:$0xf]
  %v6309 = vld [vmem:[%s4] sm:$0x1]
  %v6311 = vperm.slane %v6309, 0
  %v6377 = vunpack.c.l.b16 %v6245
  %v6378 = vunpack.c.l.b16 %v6246
  %v6379 = vunpack.c.l.b16 %v6247
  %v6380 = vunpack.c.l.b16 %v6248
  %v6381 = vunpack.c.l.b16 %v6249
  %v6382 = vunpack.c.l.b16 %v6250
  %v6383 = vunpack.c.l.b16 %v6251
  %v6384 = vunpack.c.l.b16 %v6252
  %v6385 = vunpack.c.l.b16 %v6253
  %v6386 = vunpack.c.l.b16 %v6254
  %v6387 = vunpack.c.l.b16 %v6255
  %v6388 = vunpack.c.l.b16 %v6256
  %v6389 = vunpack.c.l.b16 %v6257
  %v6390 = vunpack.c.l.b16 %v6258
  %v6391 = vunpack.c.l.b16 %v6259
  %v6392 = vunpack.c.l.b16 %v6260
  %v6393 = vunpack.c.l.b16 %v6261
  %v6394 = vunpack.c.l.b16 %v6262
  %v6395 = vunpack.c.l.b16 %v6263
  %v6396 = vunpack.c.l.b16 %v6264
  %v6397 = vunpack.c.l.b16 %v6265
  %v6398 = vunpack.c.l.b16 %v6266
  %v6399 = vunpack.c.l.b16 %v6267
  %v6400 = vunpack.c.l.b16 %v6268
  %v6401 = vunpack.c.l.b16 %v6269
  %v6402 = vunpack.c.l.b16 %v6270
  %v6403 = vunpack.c.l.b16 %v6271
  %v6404 = vunpack.c.l.b16 %v6272
  %v6405 = vunpack.c.l.b16 %v6273
  %v6406 = vunpack.c.l.b16 %v6274
  %v6407 = vunpack.c.l.b16 %v6275
  %v6408 = vunpack.c.l.b16 %v6276
  %v6409 = vunpack.c.l.b16 %v6277
  %v6410 = vunpack.c.l.b16 %v6278
  %v6411 = vunpack.c.l.b16 %v6279
  %v6412 = vunpack.c.l.b16 %v6280
  %v6413 = vunpack.c.l.b16 %v6281
  %v6414 = vunpack.c.l.b16 %v6282
  %v6415 = vunpack.c.l.b16 %v6283
  %v6416 = vunpack.c.l.b16 %v6284
  %v6417 = vunpack.c.l.b16 %v6285
  %v6418 = vunpack.c.l.b16 %v6286
  %v6419 = vunpack.c.l.b16 %v6287
  %v6420 = vunpack.c.l.b16 %v6288
  %v6421 = vunpack.c.l.b16 %v6289
  %v6422 = vunpack.c.l.b16 %v6290
  %v6423 = vunpack.c.l.b16 %v6291
  %v6424 = vunpack.c.l.b16 %v6292
  %v6425 = vunpack.c.l.b16 %v6293
  %v6426 = vunpack.c.l.b16 %v6294
  %v6427 = vunpack.c.l.b16 %v6295
  %v6428 = vunpack.c.l.b16 %v6296
  %v6429 = vunpack.c.l.b16 %v6297
  %v6430 = vunpack.c.l.b16 %v6298
  %v6431 = vunpack.c.l.b16 %v6299
  %v6432 = vunpack.c.l.b16 %v6300
  %v6433 = vunpack.c.l.b16 %v6301
  %v6434 = vunpack.c.l.b16 %v6302
  %v6435 = vunpack.c.l.b16 %v6303
  %v6436 = vunpack.c.l.b16 %v6304
  %v6437 = vunpack.c.l.b16 %v6305
  %v6438 = vunpack.c.l.b16 %v6306
  %v6439 = vunpack.c.l.b16 %v6307
  %v6440 = vunpack.c.l.b16 %v6308
  %v6441 = vpack.c.b16 %v6378, %v6377
  %v6442 = vpack.c.b16 %v6380, %v6379
  %v6443 = vpack.c.b16 %v6382, %v6381
  %v6444 = vpack.c.b16 %v6384, %v6383
  %v6445 = vpack.c.b16 %v6386, %v6385
  %v6446 = vpack.c.b16 %v6388, %v6387
  %v6447 = vpack.c.b16 %v6390, %v6389
  %v6448 = vpack.c.b16 %v6392, %v6391
  %v6449 = vpack.c.b16 %v6394, %v6393
  %v6450 = vpack.c.b16 %v6396, %v6395
  %v6451 = vpack.c.b16 %v6398, %v6397
  %v6452 = vpack.c.b16 %v6400, %v6399
  %v6453 = vpack.c.b16 %v6402, %v6401
  %v6454 = vpack.c.b16 %v6404, %v6403
  %v6455 = vpack.c.b16 %v6406, %v6405
  %v6456 = vpack.c.b16 %v6408, %v6407
  %v6457 = vpack.c.b16 %v6410, %v6409
  %v6458 = vpack.c.b16 %v6412, %v6411
  %v6459 = vpack.c.b16 %v6414, %v6413
  %v6460 = vpack.c.b16 %v6416, %v6415
  %v6461 = vpack.c.b16 %v6418, %v6417
  %v6462 = vpack.c.b16 %v6420, %v6419
  %v6463 = vpack.c.b16 %v6422, %v6421
  %v6464 = vpack.c.b16 %v6424, %v6423
  %v6465 = vpack.c.b16 %v6426, %v6425
  %v6466 = vpack.c.b16 %v6428, %v6427
  %v6467 = vpack.c.b16 %v6430, %v6429
  %v6468 = vpack.c.b16 %v6432, %v6431
  %v6469 = vpack.c.b16 %v6434, %v6433
  %v6470 = vpack.c.b16 %v6436, %v6435
  %v6471 = vpack.c.b16 %v6438, %v6437
  %v6472 = vpack.c.b16 %v6440, %v6439
  %6505 = vmatpush.bf16.msra.mxu0 %v6448
  %6506 = vmatpush.bf16.msra.mxu0 %v6447
  %6507 = vmatpush.bf16.msra.mxu0 %v6446
  %6508 = vmatpush.bf16.msra.mxu0 %v6445
  %6509 = vmatpush.bf16.msra.mxu0 %v6444
  %6510 = vmatpush.bf16.msra.mxu0 %v6443
  %6511 = vmatpush.bf16.msra.mxu0 %v6442
  %6512 = vmatpush.bf16.msra.mxu0 %v6441
  %6513 = vmatmul.bf16.gmra.mxu0 %v6241
  %v6514 = vpop.f32.mrf.mxu0
  %v6515 = vadd.f32 %v6311, %v6514
  %v6516 = vpop.f32.mrf.mxu0
  %6517 = vdwg.mxu0
  %6518 = vmatpush.bf16.msra.mxu0 %v6456
  %6519 = vmatpush.bf16.msra.mxu0 %v6455
  %6520 = vmatpush.bf16.msra.mxu0 %v6454
  %6521 = vmatpush.bf16.msra.mxu0 %v6453
  %6522 = vmatpush.bf16.msra.mxu0 %v6452
  %6523 = vmatpush.bf16.msra.mxu0 %v6451
  %6524 = vmatpush.bf16.msra.mxu0 %v6450
  %6525 = vmatpush.bf16.msra.mxu0 %v6449
  %6526 = vmatmul.bf16.gmra.mxu0 %v6242
  %v6527 = vpop.f32.mrf.mxu0
  %v6528 = vadd.f32 %v6515, %v6527
  %v6529 = vpop.f32.mrf.mxu0
  %6530 = vdwg.mxu0
  %6531 = vmatpush.bf16.msra.mxu0 %v6464
  %6532 = vmatpush.bf16.msra.mxu0 %v6463
  %6533 = vmatpush.bf16.msra.mxu0 %v6462
  %6534 = vmatpush.bf16.msra.mxu0 %v6461
  %6535 = vmatpush.bf16.msra.mxu0 %v6460
  %6536 = vmatpush.bf16.msra.mxu0 %v6459
  %6537 = vmatpush.bf16.msra.mxu0 %v6458
  %6538 = vmatpush.bf16.msra.mxu0 %v6457
  %6539 = vmatmul.bf16.gmra.mxu0 %v6243
  %v6540 = vpop.f32.mrf.mxu0
  %v6541 = vadd.f32 %v6528, %v6540
  %v6542 = vpop.f32.mrf.mxu0
  %6543 = vdwg.mxu0
  %6544 = vmatpush.bf16.msra.mxu0 %v6472
  %6545 = vmatpush.bf16.msra.mxu0 %v6471
  %6546 = vmatpush.bf16.msra.mxu0 %v6470
  %6547 = vmatpush.bf16.msra.mxu0 %v6469
  %6548 = vmatpush.bf16.msra.mxu0 %v6468
  %6549 = vmatpush.bf16.msra.mxu0 %v6467
  %6550 = vmatpush.bf16.msra.mxu0 %v6466
  %6551 = vmatpush.bf16.msra.mxu0 %v6465
  %6552 = vmatmul.bf16.gmra.mxu0 %v6244
  %v6553 = vpop.f32.mrf.mxu0
  %v6554 = vadd.f32 %v6541, %v6553
  %v6555 = vpop.f32.mrf.mxu0
  %6556 = vdwg.mxu0
  %6557 = vst [vmem:[%s6] sm:$0xff] %v6554
  // Predicated region
  $region22: #{agent_forward_pallas.7} parent=0 // pred_check
    _
  $region23: #{agent_forward_pallas.7} parent=0 // pred_check_branch
    %6559 = sbr.rel (0) target = $region25
  $region24: #{agent_forward_pallas.7} parent=0 // pred_region
    _
  $region25: #{agent_forward_pallas.7} parent=0 // pred_fallthru
    _
  // Predicated region
  $region26: #{agent_forward_pallas.7} parent=0 // pred_check
    _
  $region27: #{agent_forward_pallas.7} parent=0 // pred_check_branch
    %6561 = sbr.rel (0) target = $region29
  $region28: #{agent_forward_pallas.7} parent=0 // pred_region
    _
  $region29: #{agent_forward_pallas.7} parent=0 // pred_fallthru
    _
  // Predicated region
  $region30: #{agent_forward_pallas.7} parent=0 // pred_check
    _
  $region31: #{agent_forward_pallas.7} parent=0 // pred_check_branch
    %6563 = sbr.rel (0) target = $region33
  $region32: #{agent_forward_pallas.7} parent=0 // pred_region
    _
  $region33: #{agent_forward_pallas.7} parent=0 // pred_fallthru
    _
  // Predicated region
  $region34: #{agent_forward_pallas.7} parent=0 // pred_check
    _
  $region35: #{agent_forward_pallas.7} parent=0 // pred_check_branch
    %6565 = sbr.rel (0) target = $region37
  $region36: #{agent_forward_pallas.7} parent=0 // pred_region
    _
  $region37: #{agent_forward_pallas.7} parent=0 // pred_fallthru
    _

</llo_original>
